<compile_context>
chip_gen: v7x
topology: tpu7x:2x2x1
jax: 0.10.0
libtpu: 0.0.40
codegen_flags: <defaults>
</compile_context>

<pallas_src>
import numpy as np
import jax
import jax.numpy as jnp
from jax.experimental import pallas as pl
from jax.experimental.pallas import tpu as pltpu

LEAKY_SLOPE = 0.2
INORM_EPS = 1e-5


def _leaky(x):
    return jnp.where(x >= 0, x, LEAKY_SLOPE * x)


def _full_spec(arr):
    zeros = (0,) * arr.ndim
    return pl.BlockSpec(arr.shape, lambda n, _z=zeros: _z)


# ----------------------------------------------------------------------------
# Fused whole-network kernel (B images per grid step).
# ----------------------------------------------------------------------------
def _build_fused_kernel(img_size, in_ch, dims, B):
    repeat_num = len(dims) - 1
    H0 = img_size

    def conv3x3_same(pad_ref, x4, w_ref, b_ref, Hs, Cin):
        """x4: (B, Hs, Hs, Cin) f32 -> (B*Hs*Hs, Cout) f32. im2col + 1 matmul."""
        # Zero only the 1-px border; the interior is fully rewritten below.
        zr = jnp.zeros((B, 1, Hs + 2, Cin), pad_ref.dtype)
        zc = jnp.zeros((B, Hs + 2, 1, Cin), pad_ref.dtype)
        pad_ref[:, 0:1, :, :] = zr
        pad_ref[:, Hs + 1:Hs + 2, :, :] = zr
        pad_ref[:, :, 0:1, :] = zc
        pad_ref[:, :, Hs + 1:Hs + 2, :] = zc
        pad_ref[:, 1:Hs + 1, 1:Hs + 1, :] = x4.astype(pad_ref.dtype)
        # im2col: concatenate the 9 shifted views along channels -> deep K.
        taps = [pad_ref[:, dy:dy + Hs, dx:dx + Hs, :]
                for dy in range(3) for dx in range(3)]
        col = jnp.concatenate(taps, axis=-1)                 # (B, Hs, Hs, 9*Cin)
        col = col.reshape(B * Hs * Hs, 9 * Cin).astype(jnp.bfloat16)
        out = jnp.dot(col, w_ref[...], preferred_element_type=jnp.float32)
        return out + b_ref[...]                              # bias (1, Cout)

    def inorm(a2, M, g_ref, b_ref):
        """Single-pass InstanceNorm on (B*M, C); per-image stats over M."""
        C = a2.shape[-1]
        a3 = a2.reshape(B, M, C)
        inv = 1.0 / M
        mean = jnp.sum(a3, axis=1, keepdims=True) * inv
        ex2 = jnp.sum(a3 * a3, axis=1, keepdims=True) * inv
        var = jnp.maximum(ex2 - mean * mean, 0.0)            # biased, like PyTorch
        y = (a3 - mean) * jax.lax.rsqrt(var + INORM_EPS)
        y = y * g_ref[...] + b_ref[...]                      # affine=True in ConvPool
        return y.reshape(B * M, C)

    def avgpool2(pool_ref, a2, Hs):
        """AvgPool2d(2) on (B*Hs*Hs, C) with VPU adds (no matmul)."""
        C = a2.shape[-1]
        Hh = Hs // 2
        x = a2.reshape(B * Hh, 2, Hs, C)                     # pair rows (leading dim)
        rowsum = x[:, 0, :, :] + x[:, 1, :, :]               # (B*Hh, Hs, C)
        pool_ref[...] = rowsum
        even = pool_ref[:, pl.ds(0, Hh, stride=2), :]        # pair columns via
        odd = pool_ref[:, pl.ds(1, Hh, stride=2), :]         # strided sublane loads
        return (even + odd) * 0.25                           # (B*Hh, Hh, C)

    def kernel(*refs):
        # ---- parse the flat ref list -------------------------------------
        it = 0
        x_ref = refs[it]; it += 1
        w0_ref, b0_ref = refs[it], refs[it + 1]; it += 2
        blocks = []
        for _ in range(repeat_num):
            blocks.append(refs[it:it + 4]); it += 4          # gamma, beta, w, b
        w4_ref, b4_ref, wk1_ref, bk1_ref = refs[it:it + 4]; it += 4
        o_ref = refs[it]; it += 1
        pads = refs[it:it + repeat_num + 1]; it += repeat_num + 1
        pools = refs[it:it + repeat_num]; it += repeat_num

        # ---- conv0: 3x3 same, in_ch -> dims[0] ----------------------------
        Hs = H0
        a2 = conv3x3_same(pads[0], x_ref[...], w0_ref, b0_ref, Hs, in_ch)

        # ---- ConvPool blocks: InstanceNorm -> Conv3x3 -> LeakyReLU -> Pool --
        a3 = None
        for i in range(repeat_num):
            g_ref, be_ref, wc_ref, bc_ref = blocks[i]
            Cin, Cout = dims[i], dims[i + 1]
            a2 = inorm(a2, Hs * Hs, g_ref, be_ref)           # (B*Hs*Hs, Cin)
            a2 = conv3x3_same(pads[i + 1], a2.reshape(B, Hs, Hs, Cin),
                              wc_ref, bc_ref, Hs, Cin)       # (B*Hs*Hs, Cout)
            a2 = _leaky(a2)
            a3 = avgpool2(pools[i], a2, Hs)                  # (B*Hh, Hh, Cout)
            Hs //= 2
            if i + 1 < repeat_num:
                a2 = a3.reshape(B * Hs * Hs, Cout)

        # ---- tail: LeakyReLU -> Conv4x4 valid (one matmul) -> LeakyReLU
        #            -> Conv1x1 ---------------------------------------------
        C = dims[-1]
        Ht = Hs                                              # == 4
        a3 = _leaky(a3)                                      # (B*Ht, Ht, C)
        rows = []
        for b in range(B):
            taps = []
            for h in range(Ht):
                r = a3[b * Ht + h]                           # (Ht, C)
                for w in range(Ht):
                    taps.append(r[w:w + 1, :])               # (1, C)
            rows.append(jnp.concatenate(taps, axis=-1))      # (1, Ht*Ht*C)
        flat = jnp.concatenate(rows, axis=0)                 # (B, 16*C)
        out = jnp.dot(flat.astype(jnp.bfloat16), w4_ref[...],
                      preferred_element_type=jnp.float32) + b4_ref[...]
        out = _leaky(out)
        out = jnp.dot(out.astype(jnp.bfloat16), wk1_ref[...],
                      preferred_element_type=jnp.float32) + bk1_ref[...]
        o_ref[0] = out.astype(o_ref.dtype)                   # (B, 1)

    return kernel


# ----------------------------------------------------------------------------
# Parameters. Spectral norm applied once as preprocessing (eval-style W/sigma).
# ----------------------------------------------------------------------------
def spectral_normalize(w, key, n_iter=10, eps=1e-12):
    cout = w.shape[0]
    wm = w.reshape(cout, -1)
    u = jax.random.normal(key, (cout,), dtype=jnp.float32)
    u = u / (jnp.linalg.norm(u) + eps)
    v = None
    for _ in range(n_iter):
        v = wm.T @ u
        v = v / (jnp.linalg.norm(v) + eps)
        u = wm @ v
        u = u / (jnp.linalg.norm(u) + eps)
    sigma = u @ (wm @ v)
    return w / sigma


def make_params(key, in_ch=3, img_size=16, dim_in=8, max_conv_dim=16):
    repeat_num = int(np.log2(img_size)) - 2
    keys = list(jax.random.split(key, 4 * (repeat_num + 4)))
    kit = iter(keys)

    def conv_param(cin, cout, k):
        w = 0.1 * jax.random.normal(next(kit), (cout, cin, k, k), jnp.float32)
        w = spectral_normalize(w, next(kit))
        b = 0.02 * jax.random.normal(next(kit), (cout,), jnp.float32)
        # (cout, cin, kh, kw) -> (kh, kw, cin, cout) -> (k*k*cin, cout), bf16.
        w = jnp.transpose(w, (2, 3, 1, 0)).reshape(k * k * cin, cout)
        return {"w": w.astype(jnp.bfloat16), "b": b.reshape(1, cout)}

    dims = [dim_in]
    params = {"conv0": conv_param(in_ch, dim_in, 3), "blocks": []}
    d_in = dim_in
    d_out = dim_in
    for _ in range(repeat_num):
        d_out = min(d_in * 2, max_conv_dim)
        cp = conv_param(d_in, d_out, 3)
        params["blocks"].append({
            "gamma": jnp.ones((1, d_in), jnp.float32),   # InstanceNorm2d(affine=True)
            "beta": jnp.zeros((1, d_in), jnp.float32),
            "w": cp["w"], "b": cp["b"],
        })
        dims.append(d_out)
        d_in = d_out
    params["conv_k4"] = conv_param(d_out, d_out, 4)          # (16*C, C)
    params["conv_k1"] = conv_param(d_out, 1, 1)              # (C, 1)
    params["cfg"] = {"img_size": img_size, "in_ch": in_ch, "dims": dims}
    return params


# ----------------------------------------------------------------------------
# Forward pass (mirrors Discriminator.forward / nn.Sequential ordering).
# ----------------------------------------------------------------------------
def discriminator_forward(params, x_nchw, batch_block=2):
    cfg = params["cfg"]
    img_size, in_ch, dims = cfg["img_size"], cfg["in_ch"], cfg["dims"]
    repeat_num = len(dims) - 1
    x = jnp.transpose(x_nchw, (0, 2, 3, 1)).astype(jnp.float32)   # NHWC
    N = x.shape[0]
    B = batch_block if N % batch_block == 0 else 1

    inputs = [x, params["conv0"]["w"], params["conv0"]["b"]]
    in_specs = [
        pl.BlockSpec((B, img_size, img_size, in_ch), lambda n: (n, 0, 0, 0)),
        _full_spec(params["conv0"]["w"]),
        _full_spec(params["conv0"]["b"]),
    ]
    for blk in params["blocks"]:
        for a in (blk["gamma"], blk["beta"], blk["w"], blk["b"]):
            inputs.append(a)
            in_specs.append(_full_spec(a))
    for a in (params["conv_k4"]["w"], params["conv_k4"]["b"],
              params["conv_k1"]["w"], params["conv_k1"]["b"]):
        inputs.append(a)
        in_specs.append(_full_spec(a))

    # Scratch: padded-conv buffers (conv0 + one per block) and pooling buffers.
    pad_scratch = [pltpu.VMEM((B, img_size + 2, img_size + 2, in_ch), jnp.float32)]
    pool_scratch = []
    Hs = img_size
    for i in range(repeat_num):
        pad_scratch.append(pltpu.VMEM((B, Hs + 2, Hs + 2, dims[i]), jnp.float32))
        pool_scratch.append(pltpu.VMEM((B * (Hs // 2), Hs, dims[i + 1]), jnp.float32))
        Hs //= 2
    scratch = pad_scratch + pool_scratch

    kernel = _build_fused_kernel(img_size, in_ch, dims, B)
    out = pl.pallas_call(
        kernel,
        out_shape=jax.ShapeDtypeStruct((N // B, B, 1), jnp.float32),
        grid=(N // B,),
        in_specs=in_specs,
        out_specs=pl.BlockSpec((1, B, 1), lambda n: (n, 0, 0)),
        scratch_shapes=scratch,
        compiler_params=pltpu.CompilerParams(
            dimension_semantics=("parallel",)),
    )(*inputs)
    return out.reshape(-1)                                   # == h.squeeze()


if __name__ == "__main__":
    key = jax.random.PRNGKey(0)
    pkey, xkey = jax.random.split(key)
    # 16x16 -> repeat_num = 2 ConvPool downsamples -> 4x4 -> 4x4 valid conv
    # -> 1x1 conv -> one score per image.  Batch 4, 2 images per grid step.
    img_size = 16
    params = make_params(pkey, in_ch=3, img_size=img_size, dim_in=8, max_conv_dim=16)
    x = jax.random.normal(xkey, (4, 3, img_size, img_size), jnp.float32)  # NCHW
    out = jax.block_until_ready(discriminator_forward(params, x))
    assert out.shape == (4,), out.shape
    assert bool(jnp.all(jnp.isfinite(out)))
    print("KERNEL_OK")
</pallas_src>

<mosaic_0001>
module attributes {stable_mosaic.version = 11 : i64} {
  func.func @kernel(%arg0: i32, %arg1: memref<2x16x16x3xf32, #tpu.memory_space<vmem>>, %arg2: memref<27x8xbf16, #tpu.memory_space<vmem>>, %arg3: memref<1x8xf32, #tpu.memory_space<vmem>>, %arg4: memref<1x8xf32, #tpu.memory_space<vmem>>, %arg5: memref<1x8xf32, #tpu.memory_space<vmem>>, %arg6: memref<72x16xbf16, #tpu.memory_space<vmem>>, %arg7: memref<1x16xf32, #tpu.memory_space<vmem>>, %arg8: memref<1x16xf32, #tpu.memory_space<vmem>>, %arg9: memref<1x16xf32, #tpu.memory_space<vmem>>, %arg10: memref<144x16xbf16, #tpu.memory_space<vmem>>, %arg11: memref<1x16xf32, #tpu.memory_space<vmem>>, %arg12: memref<256x16xbf16, #tpu.memory_space<vmem>>, %arg13: memref<1x16xf32, #tpu.memory_space<vmem>>, %arg14: memref<16x1xbf16, #tpu.memory_space<vmem>>, %arg15: memref<1x1xf32, #tpu.memory_space<vmem>>, %arg16: memref<1x2x1xf32, #tpu.memory_space<vmem>>, %arg17: memref<2x18x18x3xf32, #tpu.memory_space<vmem>>, %arg18: memref<2x18x18x8xf32, #tpu.memory_space<vmem>>, %arg19: memref<2x10x10x16xf32, #tpu.memory_space<vmem>>, %arg20: memref<16x16x16xf32, #tpu.memory_space<vmem>>, %arg21: memref<8x8x16xf32, #tpu.memory_space<vmem>>) attributes {dimension_semantics = [#tpu.dimension_semantics<parallel>], iteration_bounds = array<i64: 2>, scalar_prefetch = 0 : i64, scratch_operands = 5 : i64, tpu.core_type = #tpu.core_type<tc>, window_params = [{transform_indices = @transform_0, window_bounds = array<i64: 2, 16, 16, 3>}, {pipeline_mode = #tpu.pipeline_mode<synchronous>, transform_indices = @transform_1, window_bounds = array<i64: 27, 8>}, {pipeline_mode = #tpu.pipeline_mode<synchronous>, transform_indices = @transform_2, window_bounds = array<i64: 1, 8>}, {pipeline_mode = #tpu.pipeline_mode<synchronous>, transform_indices = @transform_3, window_bounds = array<i64: 1, 8>}, {pipeline_mode = #tpu.pipeline_mode<synchronous>, transform_indices = @transform_4, window_bounds = array<i64: 1, 8>}, {pipeline_mode = #tpu.pipeline_mode<synchronous>, transform_indices = @transform_5, window_bounds = array<i64: 72, 16>}, {pipeline_mode = #tpu.pipeline_mode<synchronous>, transform_indices = @transform_6, window_bounds = array<i64: 1, 16>}, {pipeline_mode = #tpu.pipeline_mode<synchronous>, transform_indices = @transform_7, window_bounds = array<i64: 1, 16>}, {pipeline_mode = #tpu.pipeline_mode<synchronous>, transform_indices = @transform_8, window_bounds = array<i64: 1, 16>}, {pipeline_mode = #tpu.pipeline_mode<synchronous>, transform_indices = @transform_9, window_bounds = array<i64: 144, 16>}, {pipeline_mode = #tpu.pipeline_mode<synchronous>, transform_indices = @transform_10, window_bounds = array<i64: 1, 16>}, {pipeline_mode = #tpu.pipeline_mode<synchronous>, transform_indices = @transform_11, window_bounds = array<i64: 256, 16>}, {pipeline_mode = #tpu.pipeline_mode<synchronous>, transform_indices = @transform_12, window_bounds = array<i64: 1, 16>}, {pipeline_mode = #tpu.pipeline_mode<synchronous>, transform_indices = @transform_13, window_bounds = array<i64: 16, 1>}, {pipeline_mode = #tpu.pipeline_mode<synchronous>, transform_indices = @transform_14, window_bounds = array<i64: 1, 1>}, {transform_indices = @transform_15, window_bounds = array<i64: 1, 2, 1>}]} {
    %c0 = arith.constant 0 : index
    %c0_0 = arith.constant 0 : index
    %c0_1 = arith.constant 0 : index
    %c0_2 = arith.constant 0 : index
    %0 = vector.load %arg1[%c0, %c0_0, %c0_1, %c0_2] : memref<2x16x16x3xf32, #tpu.memory_space<vmem>>, vector<2x16x16x3xf32>
    %cst = arith.constant 0.000000e+00 : f32
    %1 = vector.broadcast %cst : f32 to vector<2x1x18x3xf32>
    %cst_3 = arith.constant 0.000000e+00 : f32
    %2 = vector.broadcast %cst_3 : f32 to vector<2x18x1x3xf32>
    %c0_4 = arith.constant 0 : index
    %c0_5 = arith.constant 0 : index
    %c0_6 = arith.constant 0 : index
    %c0_7 = arith.constant 0 : index
    %3 = vector.load %arg17[%c0_4, %c0_5, %c0_6, %c0_7] : memref<2x18x18x3xf32, #tpu.memory_space<vmem>>, vector<2x1x18x3xf32>
    tpu.vector_store %arg17[%c0_4, %c0_5, %c0_6, %c0_7], %1 {strides = array<i32>} : memref<2x18x18x3xf32, #tpu.memory_space<vmem>>, vector<2x1x18x3xf32>,
    %c0_8 = arith.constant 0 : index
    %c17 = arith.constant 17 : index
    %c0_9 = arith.constant 0 : index
    %c0_10 = arith.constant 0 : index
    %4 = vector.load %arg17[%c0_8, %c17, %c0_9, %c0_10] : memref<2x18x18x3xf32, #tpu.memory_space<vmem>>, vector<2x1x18x3xf32>
    tpu.vector_store %arg17[%c0_8, %c17, %c0_9, %c0_10], %1 {strides = array<i32>} : memref<2x18x18x3xf32, #tpu.memory_space<vmem>>, vector<2x1x18x3xf32>,
    %c0_11 = arith.constant 0 : index
    %c0_12 = arith.constant 0 : index
    %c0_13 = arith.constant 0 : index
    %c0_14 = arith.constant 0 : index
    %5 = vector.load %arg17[%c0_11, %c0_12, %c0_13, %c0_14] : memref<2x18x18x3xf32, #tpu.memory_space<vmem>>, vector<2x18x1x3xf32>
    tpu.vector_store %arg17[%c0_11, %c0_12, %c0_13, %c0_14], %2 {strides = array<i32>} : memref<2x18x18x3xf32, #tpu.memory_space<vmem>>, vector<2x18x1x3xf32>,
    %c0_15 = arith.constant 0 : index
    %c0_16 = arith.constant 0 : index
    %c17_17 = arith.constant 17 : index
    %c0_18 = arith.constant 0 : index
    %6 = vector.load %arg17[%c0_15, %c0_16, %c17_17, %c0_18] : memref<2x18x18x3xf32, #tpu.memory_space<vmem>>, vector<2x18x1x3xf32>
    tpu.vector_store %arg17[%c0_15, %c0_16, %c17_17, %c0_18], %2 {strides = array<i32>} : memref<2x18x18x3xf32, #tpu.memory_space<vmem>>, vector<2x18x1x3xf32>,
    %c0_19 = arith.constant 0 : index
    %c1 = arith.constant 1 : index
    %c1_20 = arith.constant 1 : index
    %c0_21 = arith.constant 0 : index
    %7 = vector.load %arg17[%c0_19, %c1, %c1_20, %c0_21] : memref<2x18x18x3xf32, #tpu.memory_space<vmem>>, vector<2x16x16x3xf32>
    tpu.vector_store %arg17[%c0_19, %c1, %c1_20, %c0_21], %0 {strides = array<i32>} : memref<2x18x18x3xf32, #tpu.memory_space<vmem>>, vector<2x16x16x3xf32>,
    %c0_22 = arith.constant 0 : index
    %c0_23 = arith.constant 0 : index
    %c0_24 = arith.constant 0 : index
    %c0_25 = arith.constant 0 : index
    %8 = vector.load %arg17[%c0_22, %c0_23, %c0_24, %c0_25] : memref<2x18x18x3xf32, #tpu.memory_space<vmem>>, vector<2x16x16x3xf32>
    %c0_26 = arith.constant 0 : index
    %c0_27 = arith.constant 0 : index
    %c1_28 = arith.constant 1 : index
    %c0_29 = arith.constant 0 : index
    %9 = vector.load %arg17[%c0_26, %c0_27, %c1_28, %c0_29] : memref<2x18x18x3xf32, #tpu.memory_space<vmem>>, vector<2x16x16x3xf32>
    %c0_30 = arith.constant 0 : index
    %c0_31 = arith.constant 0 : index
    %c2 = arith.constant 2 : index
    %c0_32 = arith.constant 0 : index
    %10 = vector.load %arg17[%c0_30, %c0_31, %c2, %c0_32] : memref<2x18x18x3xf32, #tpu.memory_space<vmem>>, vector<2x16x16x3xf32>
    %c0_33 = arith.constant 0 : index
    %c1_34 = arith.constant 1 : index
    %c0_35 = arith.constant 0 : index
    %c0_36 = arith.constant 0 : index
    %11 = vector.load %arg17[%c0_33, %c1_34, %c0_35, %c0_36] : memref<2x18x18x3xf32, #tpu.memory_space<vmem>>, vector<2x16x16x3xf32>
    %c0_37 = arith.constant 0 : index
    %c1_38 = arith.constant 1 : index
    %c1_39 = arith.constant 1 : index
    %c0_40 = arith.constant 0 : index
    %12 = vector.load %arg17[%c0_37, %c1_38, %c1_39, %c0_40] : memref<2x18x18x3xf32, #tpu.memory_space<vmem>>, vector<2x16x16x3xf32>
    %c0_41 = arith.constant 0 : index
    %c1_42 = arith.constant 1 : index
    %c2_43 = arith.constant 2 : index
    %c0_44 = arith.constant 0 : index
    %13 = vector.load %arg17[%c0_41, %c1_42, %c2_43, %c0_44] : memref<2x18x18x3xf32, #tpu.memory_space<vmem>>, vector<2x16x16x3xf32>
    %c0_45 = arith.constant 0 : index
    %c2_46 = arith.constant 2 : index
    %c0_47 = arith.constant 0 : index
    %c0_48 = arith.constant 0 : index
    %14 = vector.load %arg17[%c0_45, %c2_46, %c0_47, %c0_48] : memref<2x18x18x3xf32, #tpu.memory_space<vmem>>, vector<2x16x16x3xf32>
    %c0_49 = arith.constant 0 : index
    %c2_50 = arith.constant 2 : index
    %c1_51 = arith.constant 1 : index
    %c0_52 = arith.constant 0 : index
    %15 = vector.load %arg17[%c0_49, %c2_50, %c1_51, %c0_52] : memref<2x18x18x3xf32, #tpu.memory_space<vmem>>, vector<2x16x16x3xf32>
    %c0_53 = arith.constant 0 : index
    %c2_54 = arith.constant 2 : index
    %c2_55 = arith.constant 2 : index
    %c0_56 = arith.constant 0 : index
    %16 = vector.load %arg17[%c0_53, %c2_54, %c2_55, %c0_56] : memref<2x18x18x3xf32, #tpu.memory_space<vmem>>, vector<2x16x16x3xf32>
    %17 = tpu.concatenate %8, %9, %10, %11, %12, %13, %14, %15, %16 in 3 : vector<2x16x16x3xf32>, vector<2x16x16x3xf32>, vector<2x16x16x3xf32>, vector<2x16x16x3xf32>, vector<2x16x16x3xf32>, vector<2x16x16x3xf32>, vector<2x16x16x3xf32>, vector<2x16x16x3xf32>, vector<2x16x16x3xf32> -> vector<2x16x16x27xf32>
    %18 = vector.shape_cast %17 : vector<2x16x16x27xf32> to vector<512x27xf32>
    %19 = arith.truncf %18 : vector<512x27xf32> to vector<512x27xbf16>
    %c0_57 = arith.constant 0 : index
    %c0_58 = arith.constant 0 : index
    %20 = vector.load %arg2[%c0_57, %c0_58] : memref<27x8xbf16, #tpu.memory_space<vmem>>, vector<27x8xbf16>
    %cst_59 = arith.constant dense<0.000000e+00> : vector<512x8xf32>
    %21 = tpu.matmul %19, %20, %cst_59 {dimension_numbers = #tpu.dot_dimension_numbers<[1], [0], [0], [1], [0, 0, 1, 1], [], []>} : vector<512x27xbf16>, vector<27x8xbf16>, vector<512x8xf32> -> vector<512x8xf32>
    %c0_60 = arith.constant 0 : index
    %c0_61 = arith.constant 0 : index
    %22 = vector.load %arg3[%c0_60, %c0_61] : memref<1x8xf32, #tpu.memory_space<vmem>>, vector<1x8xf32>
    %23 = vector.broadcast %22 : vector<1x8xf32> to vector<512x8xf32>
    %24 = arith.addf %21, %23 : vector<512x8xf32>
    %25 = vector.shape_cast %24 : vector<512x8xf32> to vector<2x256x8xf32>
    %cst_62 = arith.constant dense<0.000000e+00> : vector<2x8xf32>
    %26 = vector.multi_reduction <add>, %25, %cst_62 [1] : vector<2x256x8xf32> to vector<2x8xf32>
    %27 = vector.shape_cast %26 : vector<2x8xf32> to vector<2x1x8xf32>
    %cst_63 = arith.constant 3.906250e-03 : f32
    %28 = vector.broadcast %cst_63 : f32 to vector<2x1x8xf32>
    %29 = arith.mulf %27, %28 : vector<2x1x8xf32>
    %30 = arith.mulf %25, %25 : vector<2x256x8xf32>
    %cst_64 = arith.constant dense<0.000000e+00> : vector<2x8xf32>
    %31 = vector.multi_reduction <add>, %30, %cst_64 [1] : vector<2x256x8xf32> to vector<2x8xf32>
    %32 = vector.shape_cast %31 : vector<2x8xf32> to vector<2x1x8xf32>
    %cst_65 = arith.constant 3.906250e-03 : f32
    %33 = vector.broadcast %cst_65 : f32 to vector<2x1x8xf32>
    %34 = arith.mulf %32, %33 : vector<2x1x8xf32>
    %35 = arith.mulf %29, %29 : vector<2x1x8xf32>
    %36 = arith.subf %34, %35 : vector<2x1x8xf32>
    %cst_66 = arith.constant 0.000000e+00 : f32
    %37 = vector.broadcast %cst_66 : f32 to vector<2x1x8xf32>
    %38 = arith.maximumf %36, %37 : vector<2x1x8xf32>
    %39 = vector.broadcast %29 : vector<2x1x8xf32> to vector<2x256x8xf32>
    %40 = arith.subf %25, %39 : vector<2x256x8xf32>
    %cst_67 = arith.constant 9.99999974E-6 : f32
    %41 = vector.broadcast %cst_67 : f32 to vector<2x1x8xf32>
    %42 = arith.addf %38, %41 : vector<2x1x8xf32>
    %43 = math.rsqrt %42 : vector<2x1x8xf32>
    %44 = vector.broadcast %43 : vector<2x1x8xf32> to vector<2x256x8xf32>
    %45 = arith.mulf %40, %44 : vector<2x256x8xf32>
    %c0_68 = arith.constant 0 : index
    %c0_69 = arith.constant 0 : index
    %46 = vector.load %arg4[%c0_68, %c0_69] : memref<1x8xf32, #tpu.memory_space<vmem>>, vector<1x8xf32>
    %47 = vector.shape_cast %46 : vector<1x8xf32> to vector<1x1x8xf32>
    %48 = vector.broadcast %47 : vector<1x1x8xf32> to vector<2x256x8xf32>
    %49 = arith.mulf %45, %48 : vector<2x256x8xf32>
    %c0_70 = arith.constant 0 : index
    %c0_71 = arith.constant 0 : index
    %50 = vector.load %arg5[%c0_70, %c0_71] : memref<1x8xf32, #tpu.memory_space<vmem>>, vector<1x8xf32>
    %51 = vector.shape_cast %50 : vector<1x8xf32> to vector<1x1x8xf32>
    %52 = vector.broadcast %51 : vector<1x1x8xf32> to vector<2x256x8xf32>
    %53 = arith.addf %49, %52 : vector<2x256x8xf32>
    %54 = vector.shape_cast %53 : vector<2x256x8xf32> to vector<512x8xf32>
    %55 = vector.shape_cast %54 : vector<512x8xf32> to vector<2x16x16x8xf32>
    %cst_72 = arith.constant 0.000000e+00 : f32
    %56 = vector.broadcast %cst_72 : f32 to vector<2x1x18x8xf32>
    %cst_73 = arith.constant 0.000000e+00 : f32
    %57 = vector.broadcast %cst_73 : f32 to vector<2x18x1x8xf32>
    %c0_74 = arith.constant 0 : index
    %c0_75 = arith.constant 0 : index
    %c0_76 = arith.constant 0 : index
    %c0_77 = arith.constant 0 : index
    %58 = vector.load %arg18[%c0_74, %c0_75, %c0_76, %c0_77] : memref<2x18x18x8xf32, #tpu.memory_space<vmem>>, vector<2x1x18x8xf32>
    tpu.vector_store %arg18[%c0_74, %c0_75, %c0_76, %c0_77], %56 {strides = array<i32>} : memref<2x18x18x8xf32, #tpu.memory_space<vmem>>, vector<2x1x18x8xf32>,
    %c0_78 = arith.constant 0 : index
    %c17_79 = arith.constant 17 : index
    %c0_80 = arith.constant 0 : index
    %c0_81 = arith.constant 0 : index
    %59 = vector.load %arg18[%c0_78, %c17_79, %c0_80, %c0_81] : memref<2x18x18x8xf32, #tpu.memory_space<vmem>>, vector<2x1x18x8xf32>
    tpu.vector_store %arg18[%c0_78, %c17_79, %c0_80, %c0_81], %56 {strides = array<i32>} : memref<2x18x18x8xf32, #tpu.memory_space<vmem>>, vector<2x1x18x8xf32>,
    %c0_82 = arith.constant 0 : index
    %c0_83 = arith.constant 0 : index
    %c0_84 = arith.constant 0 : index
    %c0_85 = arith.constant 0 : index
    %60 = vector.load %arg18[%c0_82, %c0_83, %c0_84, %c0_85] : memref<2x18x18x8xf32, #tpu.memory_space<vmem>>, vector<2x18x1x8xf32>
    tpu.vector_store %arg18[%c0_82, %c0_83, %c0_84, %c0_85], %57 {strides = array<i32>} : memref<2x18x18x8xf32, #tpu.memory_space<vmem>>, vector<2x18x1x8xf32>,
    %c0_86 = arith.constant 0 : index
    %c0_87 = arith.constant 0 : index
    %c17_88 = arith.constant 17 : index
    %c0_89 = arith.constant 0 : index
    %61 = vector.load %arg18[%c0_86, %c0_87, %c17_88, %c0_89] : memref<2x18x18x8xf32, #tpu.memory_space<vmem>>, vector<2x18x1x8xf32>
    tpu.vector_store %arg18[%c0_86, %c0_87, %c17_88, %c0_89], %57 {strides = array<i32>} : memref<2x18x18x8xf32, #tpu.memory_space<vmem>>, vector<2x18x1x8xf32>,
    %c0_90 = arith.constant 0 : index
    %c1_91 = arith.constant 1 : index
    %c1_92 = arith.constant 1 : index
    %c0_93 = arith.constant 0 : index
    %62 = vector.load %arg18[%c0_90, %c1_91, %c1_92, %c0_93] : memref<2x18x18x8xf32, #tpu.memory_space<vmem>>, vector<2x16x16x8xf32>
    tpu.vector_store %arg18[%c0_90, %c1_91, %c1_92, %c0_93], %55 {strides = array<i32>} : memref<2x18x18x8xf32, #tpu.memory_space<vmem>>, vector<2x16x16x8xf32>,
    %c0_94 = arith.constant 0 : index
    %c0_95 = arith.constant 0 : index
    %c0_96 = arith.constant 0 : index
    %c0_97 = arith.constant 0 : index
    %63 = vector.load %arg18[%c0_94, %c0_95, %c0_96, %c0_97] : memref<2x18x18x8xf32, #tpu.memory_space<vmem>>, vector<2x16x16x8xf32>
    %c0_98 = arith.constant 0 : index
    %c0_99 = arith.constant 0 : index
    %c1_100 = arith.constant 1 : index
    %c0_101 = arith.constant 0 : index
    %64 = vector.load %arg18[%c0_98, %c0_99, %c1_100, %c0_101] : memref<2x18x18x8xf32, #tpu.memory_space<vmem>>, vector<2x16x16x8xf32>
    %c0_102 = arith.constant 0 : index
    %c0_103 = arith.constant 0 : index
    %c2_104 = arith.constant 2 : index
    %c0_105 = arith.constant 0 : index
    %65 = vector.load %arg18[%c0_102, %c0_103, %c2_104, %c0_105] : memref<2x18x18x8xf32, #tpu.memory_space<vmem>>, vector<2x16x16x8xf32>
    %c0_106 = arith.constant 0 : index
    %c1_107 = arith.constant 1 : index
    %c0_108 = arith.constant 0 : index
    %c0_109 = arith.constant 0 : index
    %66 = vector.load %arg18[%c0_106, %c1_107, %c0_108, %c0_109] : memref<2x18x18x8xf32, #tpu.memory_space<vmem>>, vector<2x16x16x8xf32>
    %c0_110 = arith.constant 0 : index
    %c1_111 = arith.constant 1 : index
    %c1_112 = arith.constant 1 : index
    %c0_113 = arith.constant 0 : index
    %67 = vector.load %arg18[%c0_110, %c1_111, %c1_112, %c0_113] : memref<2x18x18x8xf32, #tpu.memory_space<vmem>>, vector<2x16x16x8xf32>
    %c0_114 = arith.constant 0 : index
    %c1_115 = arith.constant 1 : index
    %c2_116 = arith.constant 2 : index
    %c0_117 = arith.constant 0 : index
    %68 = vector.load %arg18[%c0_114, %c1_115, %c2_116, %c0_117] : memref<2x18x18x8xf32, #tpu.memory_space<vmem>>, vector<2x16x16x8xf32>
    %c0_118 = arith.constant 0 : index
    %c2_119 = arith.constant 2 : index
    %c0_120 = arith.constant 0 : index
    %c0_121 = arith.constant 0 : index
    %69 = vector.load %arg18[%c0_118, %c2_119, %c0_120, %c0_121] : memref<2x18x18x8xf32, #tpu.memory_space<vmem>>, vector<2x16x16x8xf32>
    %c0_122 = arith.constant 0 : index
    %c2_123 = arith.constant 2 : index
    %c1_124 = arith.constant 1 : index
    %c0_125 = arith.constant 0 : index
    %70 = vector.load %arg18[%c0_122, %c2_123, %c1_124, %c0_125] : memref<2x18x18x8xf32, #tpu.memory_space<vmem>>, vector<2x16x16x8xf32>
    %c0_126 = arith.constant 0 : index
    %c2_127 = arith.constant 2 : index
    %c2_128 = arith.constant 2 : index
    %c0_129 = arith.constant 0 : index
    %71 = vector.load %arg18[%c0_126, %c2_127, %c2_128, %c0_129] : memref<2x18x18x8xf32, #tpu.memory_space<vmem>>, vector<2x16x16x8xf32>
    %72 = tpu.concatenate %63, %64, %65, %66, %67, %68, %69, %70, %71 in 3 : vector<2x16x16x8xf32>, vector<2x16x16x8xf32>, vector<2x16x16x8xf32>, vector<2x16x16x8xf32>, vector<2x16x16x8xf32>, vector<2x16x16x8xf32>, vector<2x16x16x8xf32>, vector<2x16x16x8xf32>, vector<2x16x16x8xf32> -> vector<2x16x16x72xf32>
    %73 = vector.shape_cast %72 : vector<2x16x16x72xf32> to vector<512x72xf32>
    %74 = arith.truncf %73 : vector<512x72xf32> to vector<512x72xbf16>
    %c0_130 = arith.constant 0 : index
    %c0_131 = arith.constant 0 : index
    %75 = vector.load %arg6[%c0_130, %c0_131] : memref<72x16xbf16, #tpu.memory_space<vmem>>, vector<72x16xbf16>
    %cst_132 = arith.constant dense<0.000000e+00> : vector<512x16xf32>
    %76 = tpu.matmul %74, %75, %cst_132 {dimension_numbers = #tpu.dot_dimension_numbers<[1], [0], [0], [1], [0, 0, 1, 1], [], []>} : vector<512x72xbf16>, vector<72x16xbf16>, vector<512x16xf32> -> vector<512x16xf32>
    %c0_133 = arith.constant 0 : index
    %c0_134 = arith.constant 0 : index
    %77 = vector.load %arg7[%c0_133, %c0_134] : memref<1x16xf32, #tpu.memory_space<vmem>>, vector<1x16xf32>
    %78 = vector.broadcast %77 : vector<1x16xf32> to vector<512x16xf32>
    %79 = arith.addf %76, %78 : vector<512x16xf32>
    %cst_135 = arith.constant 0.000000e+00 : f32
    %80 = vector.broadcast %cst_135 : f32 to vector<512x16xf32>
    %81 = arith.cmpf oge, %79, %80 : vector<512x16xf32>
    %cst_136 = arith.constant 2.000000e-01 : f32
    %82 = vector.broadcast %cst_136 : f32 to vector<512x16xf32>
    %83 = arith.mulf %82, %79 : vector<512x16xf32>
    %84 = arith.select %81, %79, %83 : vector<512x16xi1>, vector<512x16xf32>
    %85 = vector.shape_cast %84 : vector<512x16xf32> to vector<16x2x16x16xf32>
    %86 = vector.extract_strided_slice %85 {offsets = [0, 0, 0, 0], sizes = [16, 1, 16, 16], strides = [1, 1, 1, 1]} : vector<16x2x16x16xf32> to vector<16x1x16x16xf32>
    %87 = vector.shape_cast %86 : vector<16x1x16x16xf32> to vector<16x16x16xf32>
    %88 = vector.extract_strided_slice %85 {offsets = [0, 1, 0, 0], sizes = [16, 1, 16, 16], strides = [1, 1, 1, 1]} : vector<16x2x16x16xf32> to vector<16x1x16x16xf32>
    %89 = vector.shape_cast %88 : vector<16x1x16x16xf32> to vector<16x16x16xf32>
    %90 = arith.addf %87, %89 : vector<16x16x16xf32>
    %c0_137 = arith.constant 0 : index
    %c0_138 = arith.constant 0 : index
    %c0_139 = arith.constant 0 : index
    %91 = vector.load %arg20[%c0_137, %c0_138, %c0_139] : memref<16x16x16xf32, #tpu.memory_space<vmem>>, vector<16x16x16xf32>
    tpu.vector_store %arg20[%c0_137, %c0_138, %c0_139], %90 {strides = array<i32>} : memref<16x16x16xf32, #tpu.memory_space<vmem>>, vector<16x16x16xf32>,
    %c0_140 = arith.constant 0 : index
    %c0_141 = arith.constant 0 : index
    %c0_142 = arith.constant 0 : index
    %92 = tpu.strided_load %arg20[%c0_140, %c0_141, %c0_142] {strides = array<i32: 1, 2, 1>} : memref<16x16x16xf32, #tpu.memory_space<vmem>>, vector<16x8x16xf32>
    %c0_143 = arith.constant 0 : index
    %c1_144 = arith.constant 1 : index
    %c0_145 = arith.constant 0 : index
    %93 = tpu.strided_load %arg20[%c0_143, %c1_144, %c0_145] {strides = array<i32: 1, 2, 1>} : memref<16x16x16xf32, #tpu.memory_space<vmem>>, vector<16x8x16xf32>
    %94 = arith.addf %92, %93 : vector<16x8x16xf32>
    %cst_146 = arith.constant 2.500000e-01 : f32
    %95 = vector.broadcast %cst_146 : f32 to vector<16x8x16xf32>
    %96 = arith.mulf %94, %95 : vector<16x8x16xf32>
    %97 = vector.shape_cast %96 : vector<16x8x16xf32> to vector<128x16xf32>
    %98 = vector.shape_cast %97 : vector<128x16xf32> to vector<2x64x16xf32>
    %cst_147 = arith.constant dense<0.000000e+00> : vector<2x16xf32>
    %99 = vector.multi_reduction <add>, %98, %cst_147 [1] : vector<2x64x16xf32> to vector<2x16xf32>
    %100 = vector.shape_cast %99 : vector<2x16xf32> to vector<2x1x16xf32>
    %cst_148 = arith.constant 1.562500e-02 : f32
    %101 = vector.broadcast %cst_148 : f32 to vector<2x1x16xf32>
    %102 = arith.mulf %100, %101 : vector<2x1x16xf32>
    %103 = arith.mulf %98, %98 : vector<2x64x16xf32>
    %cst_149 = arith.constant dense<0.000000e+00> : vector<2x16xf32>
    %104 = vector.multi_reduction <add>, %103, %cst_149 [1] : vector<2x64x16xf32> to vector<2x16xf32>
    %105 = vector.shape_cast %104 : vector<2x16xf32> to vector<2x1x16xf32>
    %cst_150 = arith.constant 1.562500e-02 : f32
    %106 = vector.broadcast %cst_150 : f32 to vector<2x1x16xf32>
    %107 = arith.mulf %105, %106 : vector<2x1x16xf32>
    %108 = arith.mulf %102, %102 : vector<2x1x16xf32>
    %109 = arith.subf %107, %108 : vector<2x1x16xf32>
    %cst_151 = arith.constant 0.000000e+00 : f32
    %110 = vector.broadcast %cst_151 : f32 to vector<2x1x16xf32>
    %111 = arith.maximumf %109, %110 : vector<2x1x16xf32>
    %112 = vector.broadcast %102 : vector<2x1x16xf32> to vector<2x64x16xf32>
    %113 = arith.subf %98, %112 : vector<2x64x16xf32>
    %cst_152 = arith.constant 9.99999974E-6 : f32
    %114 = vector.broadcast %cst_152 : f32 to vector<2x1x16xf32>
    %115 = arith.addf %111, %114 : vector<2x1x16xf32>
    %116 = math.rsqrt %115 : vector<2x1x16xf32>
    %117 = vector.broadcast %116 : vector<2x1x16xf32> to vector<2x64x16xf32>
    %118 = arith.mulf %113, %117 : vector<2x64x16xf32>
    %c0_153 = arith.constant 0 : index
    %c0_154 = arith.constant 0 : index
    %119 = vector.load %arg8[%c0_153, %c0_154] : memref<1x16xf32, #tpu.memory_space<vmem>>, vector<1x16xf32>
    %120 = vector.shape_cast %119 : vector<1x16xf32> to vector<1x1x16xf32>
    %121 = vector.broadcast %120 : vector<1x1x16xf32> to vector<2x64x16xf32>
    %122 = arith.mulf %118, %121 : vector<2x64x16xf32>
    %c0_155 = arith.constant 0 : index
    %c0_156 = arith.constant 0 : index
    %123 = vector.load %arg9[%c0_155, %c0_156] : memref<1x16xf32, #tpu.memory_space<vmem>>, vector<1x16xf32>
    %124 = vector.shape_cast %123 : vector<1x16xf32> to vector<1x1x16xf32>
    %125 = vector.broadcast %124 : vector<1x1x16xf32> to vector<2x64x16xf32>
    %126 = arith.addf %122, %125 : vector<2x64x16xf32>
    %127 = vector.shape_cast %126 : vector<2x64x16xf32> to vector<128x16xf32>
    %128 = vector.shape_cast %127 : vector<128x16xf32> to vector<2x8x8x16xf32>
    %cst_157 = arith.constant 0.000000e+00 : f32
    %129 = vector.broadcast %cst_157 : f32 to vector<2x1x10x16xf32>
    %cst_158 = arith.constant 0.000000e+00 : f32
    %130 = vector.broadcast %cst_158 : f32 to vector<2x10x1x16xf32>
    %c0_159 = arith.constant 0 : index
    %c0_160 = arith.constant 0 : index
    %c0_161 = arith.constant 0 : index
    %c0_162 = arith.constant 0 : index
    %131 = vector.load %arg19[%c0_159, %c0_160, %c0_161, %c0_162] : memref<2x10x10x16xf32, #tpu.memory_space<vmem>>, vector<2x1x10x16xf32>
    tpu.vector_store %arg19[%c0_159, %c0_160, %c0_161, %c0_162], %129 {strides = array<i32>} : memref<2x10x10x16xf32, #tpu.memory_space<vmem>>, vector<2x1x10x16xf32>,
    %c0_163 = arith.constant 0 : index
    %c9 = arith.constant 9 : index
    %c0_164 = arith.constant 0 : index
    %c0_165 = arith.constant 0 : index
    %132 = vector.load %arg19[%c0_163, %c9, %c0_164, %c0_165] : memref<2x10x10x16xf32, #tpu.memory_space<vmem>>, vector<2x1x10x16xf32>
    tpu.vector_store %arg19[%c0_163, %c9, %c0_164, %c0_165], %129 {strides = array<i32>} : memref<2x10x10x16xf32, #tpu.memory_space<vmem>>, vector<2x1x10x16xf32>,
    %c0_166 = arith.constant 0 : index
    %c0_167 = arith.constant 0 : index
    %c0_168 = arith.constant 0 : index
    %c0_169 = arith.constant 0 : index
    %133 = vector.load %arg19[%c0_166, %c0_167, %c0_168, %c0_169] : memref<2x10x10x16xf32, #tpu.memory_space<vmem>>, vector<2x10x1x16xf32>
    tpu.vector_store %arg19[%c0_166, %c0_167, %c0_168, %c0_169], %130 {strides = array<i32>} : memref<2x10x10x16xf32, #tpu.memory_space<vmem>>, vector<2x10x1x16xf32>,
    %c0_170 = arith.constant 0 : index
    %c0_171 = arith.constant 0 : index
    %c9_172 = arith.constant 9 : index
    %c0_173 = arith.constant 0 : index
    %134 = vector.load %arg19[%c0_170, %c0_171, %c9_172, %c0_173] : memref<2x10x10x16xf32, #tpu.memory_space<vmem>>, vector<2x10x1x16xf32>
    tpu.vector_store %arg19[%c0_170, %c0_171, %c9_172, %c0_173], %130 {strides = array<i32>} : memref<2x10x10x16xf32, #tpu.memory_space<vmem>>, vector<2x10x1x16xf32>,
    %c0_174 = arith.constant 0 : index
    %c1_175 = arith.constant 1 : index
    %c1_176 = arith.constant 1 : index
    %c0_177 = arith.constant 0 : index
    %135 = vector.load %arg19[%c0_174, %c1_175, %c1_176, %c0_177] : memref<2x10x10x16xf32, #tpu.memory_space<vmem>>, vector<2x8x8x16xf32>
    tpu.vector_store %arg19[%c0_174, %c1_175, %c1_176, %c0_177], %128 {strides = array<i32>} : memref<2x10x10x16xf32, #tpu.memory_space<vmem>>, vector<2x8x8x16xf32>,
    %c0_178 = arith.constant 0 : index
    %c0_179 = arith.constant 0 : index
    %c0_180 = arith.constant 0 : index
    %c0_181 = arith.constant 0 : index
    %136 = vector.load %arg19[%c0_178, %c0_179, %c0_180, %c0_181] : memref<2x10x10x16xf32, #tpu.memory_space<vmem>>, vector<2x8x8x16xf32>
    %c0_182 = arith.constant 0 : index
    %c0_183 = arith.constant 0 : index
    %c1_184 = arith.constant 1 : index
    %c0_185 = arith.constant 0 : index
    %137 = vector.load %arg19[%c0_182, %c0_183, %c1_184, %c0_185] : memref<2x10x10x16xf32, #tpu.memory_space<vmem>>, vector<2x8x8x16xf32>
    %c0_186 = arith.constant 0 : index
    %c0_187 = arith.constant 0 : index
    %c2_188 = arith.constant 2 : index
    %c0_189 = arith.constant 0 : index
    %138 = vector.load %arg19[%c0_186, %c0_187, %c2_188, %c0_189] : memref<2x10x10x16xf32, #tpu.memory_space<vmem>>, vector<2x8x8x16xf32>
    %c0_190 = arith.constant 0 : index
    %c1_191 = arith.constant 1 : index
    %c0_192 = arith.constant 0 : index
    %c0_193 = arith.constant 0 : index
    %139 = vector.load %arg19[%c0_190, %c1_191, %c0_192, %c0_193] : memref<2x10x10x16xf32, #tpu.memory_space<vmem>>, vector<2x8x8x16xf32>
    %c0_194 = arith.constant 0 : index
    %c1_195 = arith.constant 1 : index
    %c1_196 = arith.constant 1 : index
    %c0_197 = arith.constant 0 : index
    %140 = vector.load %arg19[%c0_194, %c1_195, %c1_196, %c0_197] : memref<2x10x10x16xf32, #tpu.memory_space<vmem>>, vector<2x8x8x16xf32>
    %c0_198 = arith.constant 0 : index
    %c1_199 = arith.constant 1 : index
    %c2_200 = arith.constant 2 : index
    %c0_201 = arith.constant 0 : index
    %141 = vector.load %arg19[%c0_198, %c1_199, %c2_200, %c0_201] : memref<2x10x10x16xf32, #tpu.memory_space<vmem>>, vector<2x8x8x16xf32>
    %c0_202 = arith.constant 0 : index
    %c2_203 = arith.constant 2 : index
    %c0_204 = arith.constant 0 : index
    %c0_205 = arith.constant 0 : index
    %142 = vector.load %arg19[%c0_202, %c2_203, %c0_204, %c0_205] : memref<2x10x10x16xf32, #tpu.memory_space<vmem>>, vector<2x8x8x16xf32>
    %c0_206 = arith.constant 0 : index
    %c2_207 = arith.constant 2 : index
    %c1_208 = arith.constant 1 : index
    %c0_209 = arith.constant 0 : index
    %143 = vector.load %arg19[%c0_206, %c2_207, %c1_208, %c0_209] : memref<2x10x10x16xf32, #tpu.memory_space<vmem>>, vector<2x8x8x16xf32>
    %c0_210 = arith.constant 0 : index
    %c2_211 = arith.constant 2 : index
    %c2_212 = arith.constant 2 : index
    %c0_213 = arith.constant 0 : index
    %144 = vector.load %arg19[%c0_210, %c2_211, %c2_212, %c0_213] : memref<2x10x10x16xf32, #tpu.memory_space<vmem>>, vector<2x8x8x16xf32>
    %145 = tpu.concatenate %136, %137, %138, %139, %140, %141, %142, %143, %144 in 3 : vector<2x8x8x16xf32>, vector<2x8x8x16xf32>, vector<2x8x8x16xf32>, vector<2x8x8x16xf32>, vector<2x8x8x16xf32>, vector<2x8x8x16xf32>, vector<2x8x8x16xf32>, vector<2x8x8x16xf32>, vector<2x8x8x16xf32> -> vector<2x8x8x144xf32>
    %146 = vector.shape_cast %145 : vector<2x8x8x144xf32> to vector<128x144xf32>
    %147 = arith.truncf %146 : vector<128x144xf32> to vector<128x144xbf16>
    %c0_214 = arith.constant 0 : index
    %c0_215 = arith.constant 0 : index
    %148 = vector.load %arg10[%c0_214, %c0_215] : memref<144x16xbf16, #tpu.memory_space<vmem>>, vector<144x16xbf16>
    %cst_216 = arith.constant dense<0.000000e+00> : vector<128x16xf32>
    %149 = tpu.matmul %147, %148, %cst_216 {dimension_numbers = #tpu.dot_dimension_numbers<[1], [0], [0], [1], [0, 0, 1, 1], [], []>} : vector<128x144xbf16>, vector<144x16xbf16>, vector<128x16xf32> -> vector<128x16xf32>
    %c0_217 = arith.constant 0 : index
    %c0_218 = arith.constant 0 : index
    %150 = vector.load %arg11[%c0_217, %c0_218] : memref<1x16xf32, #tpu.memory_space<vmem>>, vector<1x16xf32>
    %151 = vector.broadcast %150 : vector<1x16xf32> to vector<128x16xf32>
    %152 = arith.addf %149, %151 : vector<128x16xf32>
    %cst_219 = arith.constant 0.000000e+00 : f32
    %153 = vector.broadcast %cst_219 : f32 to vector<128x16xf32>
    %154 = arith.cmpf oge, %152, %153 : vector<128x16xf32>
    %cst_220 = arith.constant 2.000000e-01 : f32
    %155 = vector.broadcast %cst_220 : f32 to vector<128x16xf32>
    %156 = arith.mulf %155, %152 : vector<128x16xf32>
    %157 = arith.select %154, %152, %156 : vector<128x16xi1>, vector<128x16xf32>
    %158 = vector.shape_cast %157 : vector<128x16xf32> to vector<8x2x8x16xf32>
    %159 = vector.extract_strided_slice %158 {offsets = [0, 0, 0, 0], sizes = [8, 1, 8, 16], strides = [1, 1, 1, 1]} : vector<8x2x8x16xf32> to vector<8x1x8x16xf32>
    %160 = vector.shape_cast %159 : vector<8x1x8x16xf32> to vector<8x8x16xf32>
    %161 = vector.extract_strided_slice %158 {offsets = [0, 1, 0, 0], sizes = [8, 1, 8, 16], strides = [1, 1, 1, 1]} : vector<8x2x8x16xf32> to vector<8x1x8x16xf32>
    %162 = vector.shape_cast %161 : vector<8x1x8x16xf32> to vector<8x8x16xf32>
    %163 = arith.addf %160, %162 : vector<8x8x16xf32>
    %c0_221 = arith.constant 0 : index
    %c0_222 = arith.constant 0 : index
    %c0_223 = arith.constant 0 : index
    %164 = vector.load %arg21[%c0_221, %c0_222, %c0_223] : memref<8x8x16xf32, #tpu.memory_space<vmem>>, vector<8x8x16xf32>
    tpu.vector_store %arg21[%c0_221, %c0_222, %c0_223], %163 {strides = array<i32>} : memref<8x8x16xf32, #tpu.memory_space<vmem>>, vector<8x8x16xf32>,
    %c0_224 = arith.constant 0 : index
    %c0_225 = arith.constant 0 : index
    %c0_226 = arith.constant 0 : index
    %165 = tpu.strided_load %arg21[%c0_224, %c0_225, %c0_226] {strides = array<i32: 1, 2, 1>} : memref<8x8x16xf32, #tpu.memory_space<vmem>>, vector<8x4x16xf32>
    %c0_227 = arith.constant 0 : index
    %c1_228 = arith.constant 1 : index
    %c0_229 = arith.constant 0 : index
    %166 = tpu.strided_load %arg21[%c0_227, %c1_228, %c0_229] {strides = array<i32: 1, 2, 1>} : memref<8x8x16xf32, #tpu.memory_space<vmem>>, vector<8x4x16xf32>
    %167 = arith.addf %165, %166 : vector<8x4x16xf32>
    %cst_230 = arith.constant 2.500000e-01 : f32
    %168 = vector.broadcast %cst_230 : f32 to vector<8x4x16xf32>
    %169 = arith.mulf %167, %168 : vector<8x4x16xf32>
    %cst_231 = arith.constant 0.000000e+00 : f32
    %170 = vector.broadcast %cst_231 : f32 to vector<8x4x16xf32>
    %171 = arith.cmpf oge, %169, %170 : vector<8x4x16xf32>
    %cst_232 = arith.constant 2.000000e-01 : f32
    %172 = vector.broadcast %cst_232 : f32 to vector<8x4x16xf32>
    %173 = arith.mulf %172, %169 : vector<8x4x16xf32>
    %174 = arith.select %171, %169, %173 : vector<8x4x16xi1>, vector<8x4x16xf32>
    %175 = vector.extract_strided_slice %174 {offsets = [0, 0, 0], sizes = [1, 4, 16], strides = [1, 1, 1]} : vector<8x4x16xf32> to vector<1x4x16xf32>
    %176 = vector.shape_cast %175 : vector<1x4x16xf32> to vector<4x16xf32>
    %177 = vector.extract_strided_slice %176 {offsets = [0, 0], sizes = [1, 16], strides = [1, 1]} : vector<4x16xf32> to vector<1x16xf32>
    %178 = vector.extract_strided_slice %176 {offsets = [1, 0], sizes = [1, 16], strides = [1, 1]} : vector<4x16xf32> to vector<1x16xf32>
    %179 = vector.extract_strided_slice %176 {offsets = [2, 0], sizes = [1, 16], strides = [1, 1]} : vector<4x16xf32> to vector<1x16xf32>
    %180 = vector.extract_strided_slice %176 {offsets = [3, 0], sizes = [1, 16], strides = [1, 1]} : vector<4x16xf32> to vector<1x16xf32>
    %181 = vector.extract_strided_slice %174 {offsets = [1, 0, 0], sizes = [1, 4, 16], strides = [1, 1, 1]} : vector<8x4x16xf32> to vector<1x4x16xf32>
    %182 = vector.shape_cast %181 : vector<1x4x16xf32> to vector<4x16xf32>
    %183 = vector.extract_strided_slice %182 {offsets = [0, 0], sizes = [1, 16], strides = [1, 1]} : vector<4x16xf32> to vector<1x16xf32>
    %184 = vector.extract_strided_slice %182 {offsets = [1, 0], sizes = [1, 16], strides = [1, 1]} : vector<4x16xf32> to vector<1x16xf32>
    %185 = vector.extract_strided_slice %182 {offsets = [2, 0], sizes = [1, 16], strides = [1, 1]} : vector<4x16xf32> to vector<1x16xf32>
    %186 = vector.extract_strided_slice %182 {offsets = [3, 0], sizes = [1, 16], strides = [1, 1]} : vector<4x16xf32> to vector<1x16xf32>
    %187 = vector.extract_strided_slice %174 {offsets = [2, 0, 0], sizes = [1, 4, 16], strides = [1, 1, 1]} : vector<8x4x16xf32> to vector<1x4x16xf32>
    %188 = vector.shape_cast %187 : vector<1x4x16xf32> to vector<4x16xf32>
    %189 = vector.extract_strided_slice %188 {offsets = [0, 0], sizes = [1, 16], strides = [1, 1]} : vector<4x16xf32> to vector<1x16xf32>
    %190 = vector.extract_strided_slice %188 {offsets = [1, 0], sizes = [1, 16], strides = [1, 1]} : vector<4x16xf32> to vector<1x16xf32>
    %191 = vector.extract_strided_slice %188 {offsets = [2, 0], sizes = [1, 16], strides = [1, 1]} : vector<4x16xf32> to vector<1x16xf32>
    %192 = vector.extract_strided_slice %188 {offsets = [3, 0], sizes = [1, 16], strides = [1, 1]} : vector<4x16xf32> to vector<1x16xf32>
    %193 = vector.extract_strided_slice %174 {offsets = [3, 0, 0], sizes = [1, 4, 16], strides = [1, 1, 1]} : vector<8x4x16xf32> to vector<1x4x16xf32>
    %194 = vector.shape_cast %193 : vector<1x4x16xf32> to vector<4x16xf32>
    %195 = vector.extract_strided_slice %194 {offsets = [0, 0], sizes = [1, 16], strides = [1, 1]} : vector<4x16xf32> to vector<1x16xf32>
    %196 = vector.extract_strided_slice %194 {offsets = [1, 0], sizes = [1, 16], strides = [1, 1]} : vector<4x16xf32> to vector<1x16xf32>
    %197 = vector.extract_strided_slice %194 {offsets = [2, 0], sizes = [1, 16], strides = [1, 1]} : vector<4x16xf32> to vector<1x16xf32>
    %198 = vector.extract_strided_slice %194 {offsets = [3, 0], sizes = [1, 16], strides = [1, 1]} : vector<4x16xf32> to vector<1x16xf32>
    %199 = tpu.concatenate %177, %178, %179, %180, %183, %184, %185, %186, %189, %190, %191, %192, %195, %196, %197, %198 in 1 : vector<1x16xf32>, vector<1x16xf32>, vector<1x16xf32>, vector<1x16xf32>, vector<1x16xf32>, vector<1x16xf32>, vector<1x16xf32>, vector<1x16xf32>, vector<1x16xf32>, vector<1x16xf32>, vector<1x16xf32>, vector<1x16xf32>, vector<1x16xf32>, vector<1x16xf32>, vector<1x16xf32>, vector<1x16xf32> -> vector<1x256xf32>
    %200 = vector.extract_strided_slice %174 {offsets = [4, 0, 0], sizes = [1, 4, 16], strides = [1, 1, 1]} : vector<8x4x16xf32> to vector<1x4x16xf32>
    %201 = vector.shape_cast %200 : vector<1x4x16xf32> to vector<4x16xf32>
    %202 = vector.extract_strided_slice %201 {offsets = [0, 0], sizes = [1, 16], strides = [1, 1]} : vector<4x16xf32> to vector<1x16xf32>
    %203 = vector.extract_strided_slice %201 {offsets = [1, 0], sizes = [1, 16], strides = [1, 1]} : vector<4x16xf32> to vector<1x16xf32>
    %204 = vector.extract_strided_slice %201 {offsets = [2, 0], sizes = [1, 16], strides = [1, 1]} : vector<4x16xf32> to vector<1x16xf32>
    %205 = vector.extract_strided_slice %201 {offsets = [3, 0], sizes = [1, 16], strides = [1, 1]} : vector<4x16xf32> to vector<1x16xf32>
    %206 = vector.extract_strided_slice %174 {offsets = [5, 0, 0], sizes = [1, 4, 16], strides = [1, 1, 1]} : vector<8x4x16xf32> to vector<1x4x16xf32>
    %207 = vector.shape_cast %206 : vector<1x4x16xf32> to vector<4x16xf32>
    %208 = vector.extract_strided_slice %207 {offsets = [0, 0], sizes = [1, 16], strides = [1, 1]} : vector<4x16xf32> to vector<1x16xf32>
    %209 = vector.extract_strided_slice %207 {offsets = [1, 0], sizes = [1, 16], strides = [1, 1]} : vector<4x16xf32> to vector<1x16xf32>
    %210 = vector.extract_strided_slice %207 {offsets = [2, 0], sizes = [1, 16], strides = [1, 1]} : vector<4x16xf32> to vector<1x16xf32>
    %211 = vector.extract_strided_slice %207 {offsets = [3, 0], sizes = [1, 16], strides = [1, 1]} : vector<4x16xf32> to vector<1x16xf32>
    %212 = vector.extract_strided_slice %174 {offsets = [6, 0, 0], sizes = [1, 4, 16], strides = [1, 1, 1]} : vector<8x4x16xf32> to vector<1x4x16xf32>
    %213 = vector.shape_cast %212 : vector<1x4x16xf32> to vector<4x16xf32>
    %214 = vector.extract_strided_slice %213 {offsets = [0, 0], sizes = [1, 16], strides = [1, 1]} : vector<4x16xf32> to vector<1x16xf32>
    %215 = vector.extract_strided_slice %213 {offsets = [1, 0], sizes = [1, 16], strides = [1, 1]} : vector<4x16xf32> to vector<1x16xf32>
    %216 = vector.extract_strided_slice %213 {offsets = [2, 0], sizes = [1, 16], strides = [1, 1]} : vector<4x16xf32> to vector<1x16xf32>
    %217 = vector.extract_strided_slice %213 {offsets = [3, 0], sizes = [1, 16], strides = [1, 1]} : vector<4x16xf32> to vector<1x16xf32>
    %218 = vector.extract_strided_slice %174 {offsets = [7, 0, 0], sizes = [1, 4, 16], strides = [1, 1, 1]} : vector<8x4x16xf32> to vector<1x4x16xf32>
    %219 = vector.shape_cast %218 : vector<1x4x16xf32> to vector<4x16xf32>
    %220 = vector.extract_strided_slice %219 {offsets = [0, 0], sizes = [1, 16], strides = [1, 1]} : vector<4x16xf32> to vector<1x16xf32>
    %221 = vector.extract_strided_slice %219 {offsets = [1, 0], sizes = [1, 16], strides = [1, 1]} : vector<4x16xf32> to vector<1x16xf32>
    %222 = vector.extract_strided_slice %219 {offsets = [2, 0], sizes = [1, 16], strides = [1, 1]} : vector<4x16xf32> to vector<1x16xf32>
    %223 = vector.extract_strided_slice %219 {offsets = [3, 0], sizes = [1, 16], strides = [1, 1]} : vector<4x16xf32> to vector<1x16xf32>
    %224 = tpu.concatenate %202, %203, %204, %205, %208, %209, %210, %211, %214, %215, %216, %217, %220, %221, %222, %223 in 1 : vector<1x16xf32>, vector<1x16xf32>, vector<1x16xf32>, vector<1x16xf32>, vector<1x16xf32>, vector<1x16xf32>, vector<1x16xf32>, vector<1x16xf32>, vector<1x16xf32>, vector<1x16xf32>, vector<1x16xf32>, vector<1x16xf32>, vector<1x16xf32>, vector<1x16xf32>, vector<1x16xf32>, vector<1x16xf32> -> vector<1x256xf32>
    %225 = tpu.concatenate %199, %224 in 0 : vector<1x256xf32>, vector<1x256xf32> -> vector<2x256xf32>
    %226 = arith.truncf %225 : vector<2x256xf32> to vector<2x256xbf16>
    %c0_233 = arith.constant 0 : index
    %c0_234 = arith.constant 0 : index
    %227 = vector.load %arg12[%c0_233, %c0_234] : memref<256x16xbf16, #tpu.memory_space<vmem>>, vector<256x16xbf16>
    %cst_235 = arith.constant dense<0.000000e+00> : vector<2x16xf32>
    %228 = tpu.matmul %226, %227, %cst_235 {dimension_numbers = #tpu.dot_dimension_numbers<[1], [0], [0], [1], [0, 0, 1, 1], [], []>} : vector<2x256xbf16>, vector<256x16xbf16>, vector<2x16xf32> -> vector<2x16xf32>
    %c0_236 = arith.constant 0 : index
    %c0_237 = arith.constant 0 : index
    %229 = vector.load %arg13[%c0_236, %c0_237] : memref<1x16xf32, #tpu.memory_space<vmem>>, vector<1x16xf32>
    %230 = vector.broadcast %229 : vector<1x16xf32> to vector<2x16xf32>
    %231 = arith.addf %228, %230 : vector<2x16xf32>
    %cst_238 = arith.constant 0.000000e+00 : f32
    %232 = vector.broadcast %cst_238 : f32 to vector<2x16xf32>
    %233 = arith.cmpf oge, %231, %232 : vector<2x16xf32>
    %cst_239 = arith.constant 2.000000e-01 : f32
    %234 = vector.broadcast %cst_239 : f32 to vector<2x16xf32>
    %235 = arith.mulf %234, %231 : vector<2x16xf32>
    %236 = arith.select %233, %231, %235 : vector<2x16xi1>, vector<2x16xf32>
    %237 = arith.truncf %236 : vector<2x16xf32> to vector<2x16xbf16>
    %c0_240 = arith.constant 0 : index
    %c0_241 = arith.constant 0 : index
    %238 = vector.load %arg14[%c0_240, %c0_241] : memref<16x1xbf16, #tpu.memory_space<vmem>>, vector<16x1xbf16>
    %cst_242 = arith.constant dense<0.000000e+00> : vector<2x1xf32>
    %239 = tpu.matmul %237, %238, %cst_242 {dimension_numbers = #tpu.dot_dimension_numbers<[1], [0], [0], [1], [0, 0, 1, 1], [], []>} : vector<2x16xbf16>, vector<16x1xbf16>, vector<2x1xf32> -> vector<2x1xf32>
    %c0_243 = arith.constant 0 : index
    %c0_244 = arith.constant 0 : index
    %240 = vector.load %arg15[%c0_243, %c0_244] : memref<1x1xf32, #tpu.memory_space<vmem>>, vector<1x1xf32>
    %241 = vector.broadcast %240 : vector<1x1xf32> to vector<2x1xf32>
    %242 = arith.addf %239, %241 : vector<2x1xf32>
    %c0_245 = arith.constant 0 : index
    %c0_246 = arith.constant 0 : index
    %c0_247 = arith.constant 0 : index
    %243 = vector.load %arg16[%c0_245, %c0_246, %c0_247] : memref<1x2x1xf32, #tpu.memory_space<vmem>>, vector<1x2x1xf32>
    %244 = vector.shape_cast %243 : vector<1x2x1xf32> to vector<2x1xf32>
    %245 = vector.shape_cast %242 : vector<2x1xf32> to vector<1x2x1xf32>
    tpu.vector_store %arg16[%c0_245, %c0_246, %c0_247], %245 {strides = array<i32>} : memref<1x2x1xf32, #tpu.memory_space<vmem>>, vector<1x2x1xf32>,
    return
  }
  func.func @transform_0(%arg0: i32) -> (i32, i32, i32, i32) {
    %c0_i32 = arith.constant 0 : i32
    %c0_i32_0 = arith.constant 0 : i32
    %c0_i32_1 = arith.constant 0 : i32
    %c0_i32_2 = arith.constant 0 : i32
    return %arg0, %c0_i32, %c0_i32_0, %c0_i32_1 : i32, i32, i32, i32
  }
  func.func @transform_1(%arg0: i32) -> (i32, i32) {
    %c0_i32 = arith.constant 0 : i32
    %c0_i32_0 = arith.constant 0 : i32
    %c0_i32_1 = arith.constant 0 : i32
    return %c0_i32, %c0_i32_0 : i32, i32
  }
  func.func @transform_2(%arg0: i32) -> (i32, i32) {
    %c0_i32 = arith.constant 0 : i32
    %c0_i32_0 = arith.constant 0 : i32
    %c0_i32_1 = arith.constant 0 : i32
    return %c0_i32, %c0_i32_0 : i32, i32
  }
  func.func @transform_3(%arg0: i32) -> (i32, i32) {
    %c0_i32 = arith.constant 0 : i32
    %c0_i32_0 = arith.constant 0 : i32
    %c0_i32_1 = arith.constant 0 : i32
    return %c0_i32, %c0_i32_0 : i32, i32
  }
  func.func @transform_4(%arg0: i32) -> (i32, i32) {
    %c0_i32 = arith.constant 0 : i32
    %c0_i32_0 = arith.constant 0 : i32
    %c0_i32_1 = arith.constant 0 : i32
    return %c0_i32, %c0_i32_0 : i32, i32
  }
  func.func @transform_5(%arg0: i32) -> (i32, i32) {
    %c0_i32 = arith.constant 0 : i32
    %c0_i32_0 = arith.constant 0 : i32
    %c0_i32_1 = arith.constant 0 : i32
    return %c0_i32, %c0_i32_0 : i32, i32
  }
  func.func @transform_6(%arg0: i32) -> (i32, i32) {
    %c0_i32 = arith.constant 0 : i32
    %c0_i32_0 = arith.constant 0 : i32
    %c0_i32_1 = arith.constant 0 : i32
    return %c0_i32, %c0_i32_0 : i32, i32
  }
  func.func @transform_7(%arg0: i32) -> (i32, i32) {
    %c0_i32 = arith.constant 0 : i32
    %c0_i32_0 = arith.constant 0 : i32
    %c0_i32_1 = arith.constant 0 : i32
    return %c0_i32, %c0_i32_0 : i32, i32
  }
  func.func @transform_8(%arg0: i32) -> (i32, i32) {
    %c0_i32 = arith.constant 0 : i32
    %c0_i32_0 = arith.constant 0 : i32
    %c0_i32_1 = arith.constant 0 : i32
    return %c0_i32, %c0_i32_0 : i32, i32
  }
  func.func @transform_9(%arg0: i32) -> (i32, i32) {
    %c0_i32 = arith.constant 0 : i32
    %c0_i32_0 = arith.constant 0 : i32
    %c0_i32_1 = arith.constant 0 : i32
    return %c0_i32, %c0_i32_0 : i32, i32
  }
  func.func @transform_10(%arg0: i32) -> (i32, i32) {
    %c0_i32 = arith.constant 0 : i32
    %c0_i32_0 = arith.constant 0 : i32
    %c0_i32_1 = arith.constant 0 : i32
    return %c0_i32, %c0_i32_0 : i32, i32
  }
  func.func @transform_11(%arg0: i32) -> (i32, i32) {
    %c0_i32 = arith.constant 0 : i32
    %c0_i32_0 = arith.constant 0 : i32
    %c0_i32_1 = arith.constant 0 : i32
    return %c0_i32, %c0_i32_0 : i32, i32
  }
  func.func @transform_12(%arg0: i32) -> (i32, i32) {
    %c0_i32 = arith.constant 0 : i32
    %c0_i32_0 = arith.constant 0 : i32
    %c0_i32_1 = arith.constant 0 : i32
    return %c0_i32, %c0_i32_0 : i32, i32
  }
  func.func @transform_13(%arg0: i32) -> (i32, i32) {
    %c0_i32 = arith.constant 0 : i32
    %c0_i32_0 = arith.constant 0 : i32
    %c0_i32_1 = arith.constant 0 : i32
    return %c0_i32, %c0_i32_0 : i32, i32
  }
  func.func @transform_14(%arg0: i32) -> (i32, i32) {
    %c0_i32 = arith.constant 0 : i32
    %c0_i32_0 = arith.constant 0 : i32
    %c0_i32_1 = arith.constant 0 : i32
    return %c0_i32, %c0_i32_0 : i32, i32
  }
  func.func @transform_15(%arg0: i32) -> (i32, i32, i32) {
    %c0_i32 = arith.constant 0 : i32
    %c0_i32_0 = arith.constant 0 : i32
    %c0_i32_1 = arith.constant 0 : i32
    return %arg0, %c0_i32, %c0_i32_0 : i32, i32, i32
  }
}

</mosaic_0001>

<llo_original>
// kernel: tpu_custom_call.1
$region0: #{tpu_custom_call.1}
  #allocation0 [shape = 'u32[]', space=smem, size = 0x4, offset = 0x4, fixed_abs, tag = 'smem constant byte address 0x4 - core index']
  #allocation1 [shape = 'u32[144,128]{1,0:T(1,128)}', space=vmem, size = 0x12000, scoped, tag = 'internal scratch']
  #allocation2 [shape = 'f32[2,18,18,3]{3,2,1,0:T(8,128)}', space=vmem, size = 0x6c000, scoped, tag = 'scratch operand']
  #allocation3 [shape = 'f32[2,18,18,8]{3,2,1,0:T(8,128)}', space=vmem, size = 0x6c000, scoped, tag = 'scratch operand']
  #allocation4 [shape = 'f32[2,10,10,16]{3,2,1,0:T(8,128)}', space=vmem, size = 0x28000, scoped, tag = 'scratch operand']
  #allocation5 [shape = 'f32[16,16,16]{2,1,0:T(8,128)}', space=vmem, size = 0x20000, scoped, tag = 'scratch operand']
  #allocation6 [shape = 'f32[8,8,16]{2,1,0:T(8,128)}', space=vmem, size = 0x8000, scoped, tag = 'scratch operand']
  #allocation7 [shape = 'f32[1,1]{1,0:T(1,128)S(1)}', space=vmem, size = 0x200, scoped, tag = 'scoped memory for tpu_custom_call.1']
  %s0 = inlined_call_operand.vmem [shape: f32[4,16,16,3], index: 0, kind: input, shape index: {}]
  %s1 = inlined_call_operand.vmem [shape: bf16[27,8], index: 1, kind: input, shape index: {}]
  %s2 = inlined_call_operand.vmem [shape: f32[1,8], index: 2, kind: input, shape index: {}]
  %s3 = inlined_call_operand.vmem [shape: f32[1,8], index: 3, kind: input, shape index: {}]
  %s4 = inlined_call_operand.vmem [shape: f32[1,8], index: 4, kind: input, shape index: {}]
  %s5 = inlined_call_operand.vmem [shape: bf16[72,16], index: 5, kind: input, shape index: {}]
  %s6 = inlined_call_operand.vmem [shape: f32[1,16], index: 6, kind: input, shape index: {}]
  %s7 = inlined_call_operand.vmem [shape: f32[1,16], index: 7, kind: input, shape index: {}]
  %s8 = inlined_call_operand.vmem [shape: f32[1,16], index: 8, kind: input, shape index: {}]
  %s9 = inlined_call_operand.vmem [shape: bf16[144,16], index: 9, kind: input, shape index: {}]
  %s10 = inlined_call_operand.vmem [shape: f32[1,16], index: 10, kind: input, shape index: {}]
  %s11 = inlined_call_operand.vmem [shape: bf16[256,16], index: 11, kind: input, shape index: {}]
  %s12 = inlined_call_operand.vmem [shape: f32[1,16], index: 12, kind: input, shape index: {}]
  %s13 = inlined_call_operand.vmem [shape: bf16[16,1], index: 13, kind: input, shape index: {}]
  %s14 = inlined_call_operand.<no memory space> [shape: f32[1,1], index: 14, kind: input, shape index: {}]
  %s15 = inlined_call_operand.vmem [shape: f32[2,2,1], index: 15, kind: output, shape index: {}]
  %s16 = sld [smem:[#allocation0]]
  $region93: #{tpu_custom_call.1} parent=0
    _
  %s18 = ssub.s32 1, %s16
  %s19 = scalar_select 0, %s18, %s16
  %v20 = vstv %s14
  %21 = vst [vmem:[#allocation7] sm:$0x1] %v20
  loop: start=0, step=1, limit=4
  $region2: #{tpu_custom_call.1} parent=0 // loop_pre_header
    _
  $region3: #{tpu_custom_call.1} parent=0 // loop_header
    %s23 = sphi 0, %s27
    %p24 = scmp.ge.s32.totalorder %s23, 4
    %s33 = sphi 0, %s35
    %s36 = sphi 0, %s33
    %s37 = sphi 0, %s36
    %s53 = sphi 0, %s37
    %s57 = sphi 0, %s57
    %s59 = sphi 0, %s57
    %s60 = sphi 0, %s59
    %s74 = sphi 0, %s60
    %s78 = sphi 0, %s78
    %s80 = sphi 0, %s78
    %s81 = sphi 0, %s80
    %s95 = sphi 0, %s81
    %s99 = sphi 0, %s99
    %s101 = sphi 0, %s99
    %s102 = sphi 0, %s101
    %s116 = sphi 0, %s102
    %s120 = sphi 0, %s120
    %s122 = sphi 0, %s120
    %s123 = sphi 0, %s122
    %s137 = sphi 0, %s123
    %s141 = sphi 0, %s141
    %s143 = sphi 0, %s141
    %s144 = sphi 0, %s143
    %s158 = sphi 0, %s144
    %s162 = sphi 0, %s162
    %s164 = sphi 0, %s162
    %s165 = sphi 0, %s164
    %s179 = sphi 0, %s165
    %s183 = sphi 0, %s183
    %s185 = sphi 0, %s183
    %s186 = sphi 0, %s185
    %s200 = sphi 0, %s186
    %s204 = sphi 0, %s204
    %s206 = sphi 0, %s204
    %s207 = sphi 0, %s206
    %s221 = sphi 0, %s207
    %s225 = sphi 0, %s225
    %s227 = sphi 0, %s225
    %s228 = sphi 0, %s227
    %s242 = sphi 0, %s228
    %s246 = sphi 0, %s246
    %s248 = sphi 0, %s246
    %s249 = sphi 0, %s248
    %s263 = sphi 0, %s249
    %s267 = sphi 0, %s267
    %s269 = sphi 0, %s267
    %s270 = sphi 0, %s269
    %s284 = sphi 0, %s270
    %s288 = sphi 0, %s288
    %s290 = sphi 0, %s288
    %s291 = sphi 0, %s290
    %s305 = sphi 0, %s291
    %s309 = sphi 0, %s309
    %s311 = sphi 0, %s309
    %s312 = sphi 0, %s311
    %s326 = sphi 0, %s312
    %s330 = sphi 0, %s330
    %s332 = sphi 0, %s330
    %s333 = sphi 0, %s332
    %s347 = sphi 0, %s333
    %s353 = sphi 0, %s355
    %s356 = sphi 0, %s353
    %s357 = sphi 0, %s356
    %s373 = sphi 0, %s357
  $region4: #{tpu_custom_call.1} parent=0 // loop_header_branch
    %26 = sbr.rel (%p24) target = $region8
  $region5: #{tpu_custom_call.1} parent=0 // loop_body
    %s28 = ssub.s32 %s23, 1
    %s29 = ssub.s32 %s23, 2
    %s30 = sadd.s32 %s23, 1
    %s31 = ssub.s32 %s23, %s30
    %p32 = scmp.eq.s32.totalorder %s31, 0
    %s34 = sadd.s32 %s33, 1
    %s35 = scalar_select %p32, %s33, %s34
    %p38 = pneg %p32
    %p39 = scmp.eq.s32.totalorder %s23, 1
    %p40 = por %p38, %p39
    %p41 = scmp.ne.s32.totalorder %s33, %s36
    %p42 = scmp.eq.s32.totalorder %s23, 0
    %p43 = por %p41, %p42
    %p44 = scmp.ne.s32.totalorder %s33, %s36
    %p45 = scmp.eq.s32.totalorder %s28, 1
    %p46 = por %p44, %p45
    %p47 = scmp.ne.s32.totalorder %s36, %s37
    %p48 = scmp.eq.s32.totalorder %s28, 0
    %p49 = por %p47, %p48
    %p50 = scmp.ne.s32.totalorder %s36, %s37
    %p51 = scmp.eq.s32.totalorder %s29, 1
    %p52 = por %p50, %p51
    %p54 = scmp.ne.s32.totalorder %s37, %s53
    %p55 = scmp.eq.s32.totalorder %s29, 0
    %p56 = por %p54, %p55
    %s58 = sadd.s32 %s57, 1
    %p61 = scmp.eq.s32.totalorder %s23, 1
    %p62 = scmp.ne.s32.totalorder %s57, %s59
    %p63 = scmp.eq.s32.totalorder %s23, 0
    %p64 = por %p62, %p63
    %p65 = scmp.ne.s32.totalorder %s57, %s59
    %p66 = scmp.eq.s32.totalorder %s28, 1
    %p67 = por %p65, %p66
    %p68 = scmp.ne.s32.totalorder %s59, %s60
    %p69 = scmp.eq.s32.totalorder %s28, 0
    %p70 = por %p68, %p69
    %p71 = scmp.ne.s32.totalorder %s59, %s60
    %p72 = scmp.eq.s32.totalorder %s29, 1
    %p73 = por %p71, %p72
    %p75 = scmp.ne.s32.totalorder %s60, %s74
    %p76 = scmp.eq.s32.totalorder %s29, 0
    %p77 = por %p75, %p76
    %s79 = sadd.s32 %s78, 1
    %p82 = scmp.eq.s32.totalorder %s23, 1
    %p83 = scmp.ne.s32.totalorder %s78, %s80
    %p84 = scmp.eq.s32.totalorder %s23, 0
    %p85 = por %p83, %p84
    %p86 = scmp.ne.s32.totalorder %s78, %s80
    %p87 = scmp.eq.s32.totalorder %s28, 1
    %p88 = por %p86, %p87
    %p89 = scmp.ne.s32.totalorder %s80, %s81
    %p90 = scmp.eq.s32.totalorder %s28, 0
    %p91 = por %p89, %p90
    %p92 = scmp.ne.s32.totalorder %s80, %s81
    %p93 = scmp.eq.s32.totalorder %s29, 1
    %p94 = por %p92, %p93
    %p96 = scmp.ne.s32.totalorder %s81, %s95
    %p97 = scmp.eq.s32.totalorder %s29, 0
    %p98 = por %p96, %p97
    %s100 = sadd.s32 %s99, 1
    %p103 = scmp.eq.s32.totalorder %s23, 1
    %p104 = scmp.ne.s32.totalorder %s99, %s101
    %p105 = scmp.eq.s32.totalorder %s23, 0
    %p106 = por %p104, %p105
    %p107 = scmp.ne.s32.totalorder %s99, %s101
    %p108 = scmp.eq.s32.totalorder %s28, 1
    %p109 = por %p107, %p108
    %p110 = scmp.ne.s32.totalorder %s101, %s102
    %p111 = scmp.eq.s32.totalorder %s28, 0
    %p112 = por %p110, %p111
    %p113 = scmp.ne.s32.totalorder %s101, %s102
    %p114 = scmp.eq.s32.totalorder %s29, 1
    %p115 = por %p113, %p114
    %p117 = scmp.ne.s32.totalorder %s102, %s116
    %p118 = scmp.eq.s32.totalorder %s29, 0
    %p119 = por %p117, %p118
    %s121 = sadd.s32 %s120, 1
    %p124 = scmp.eq.s32.totalorder %s23, 1
    %p125 = scmp.ne.s32.totalorder %s120, %s122
    %p126 = scmp.eq.s32.totalorder %s23, 0
    %p127 = por %p125, %p126
    %p128 = scmp.ne.s32.totalorder %s120, %s122
    %p129 = scmp.eq.s32.totalorder %s28, 1
    %p130 = por %p128, %p129
    %p131 = scmp.ne.s32.totalorder %s122, %s123
    %p132 = scmp.eq.s32.totalorder %s28, 0
    %p133 = por %p131, %p132
    %p134 = scmp.ne.s32.totalorder %s122, %s123
    %p135 = scmp.eq.s32.totalorder %s29, 1
    %p136 = por %p134, %p135
    %p138 = scmp.ne.s32.totalorder %s123, %s137
    %p139 = scmp.eq.s32.totalorder %s29, 0
    %p140 = por %p138, %p139
    %s142 = sadd.s32 %s141, 1
    %p145 = scmp.eq.s32.totalorder %s23, 1
    %p146 = scmp.ne.s32.totalorder %s141, %s143
    %p147 = scmp.eq.s32.totalorder %s23, 0
    %p148 = por %p146, %p147
    %p149 = scmp.ne.s32.totalorder %s141, %s143
    %p150 = scmp.eq.s32.totalorder %s28, 1
    %p151 = por %p149, %p150
    %p152 = scmp.ne.s32.totalorder %s143, %s144
    %p153 = scmp.eq.s32.totalorder %s28, 0
    %p154 = por %p152, %p153
    %p155 = scmp.ne.s32.totalorder %s143, %s144
    %p156 = scmp.eq.s32.totalorder %s29, 1
    %p157 = por %p155, %p156
    %p159 = scmp.ne.s32.totalorder %s144, %s158
    %p160 = scmp.eq.s32.totalorder %s29, 0
    %p161 = por %p159, %p160
    %s163 = sadd.s32 %s162, 1
    %p166 = scmp.eq.s32.totalorder %s23, 1
    %p167 = scmp.ne.s32.totalorder %s162, %s164
    %p168 = scmp.eq.s32.totalorder %s23, 0
    %p169 = por %p167, %p168
    %p170 = scmp.ne.s32.totalorder %s162, %s164
    %p171 = scmp.eq.s32.totalorder %s28, 1
    %p172 = por %p170, %p171
    %p173 = scmp.ne.s32.totalorder %s164, %s165
    %p174 = scmp.eq.s32.totalorder %s28, 0
    %p175 = por %p173, %p174
    %p176 = scmp.ne.s32.totalorder %s164, %s165
    %p177 = scmp.eq.s32.totalorder %s29, 1
    %p178 = por %p176, %p177
    %p180 = scmp.ne.s32.totalorder %s165, %s179
    %p181 = scmp.eq.s32.totalorder %s29, 0
    %p182 = por %p180, %p181
    %s184 = sadd.s32 %s183, 1
    %p187 = scmp.eq.s32.totalorder %s23, 1
    %p188 = scmp.ne.s32.totalorder %s183, %s185
    %p189 = scmp.eq.s32.totalorder %s23, 0
    %p190 = por %p188, %p189
    %p191 = scmp.ne.s32.totalorder %s183, %s185
    %p192 = scmp.eq.s32.totalorder %s28, 1
    %p193 = por %p191, %p192
    %p194 = scmp.ne.s32.totalorder %s185, %s186
    %p195 = scmp.eq.s32.totalorder %s28, 0
    %p196 = por %p194, %p195
    %p197 = scmp.ne.s32.totalorder %s185, %s186
    %p198 = scmp.eq.s32.totalorder %s29, 1
    %p199 = por %p197, %p198
    %p201 = scmp.ne.s32.totalorder %s186, %s200
    %p202 = scmp.eq.s32.totalorder %s29, 0
    %p203 = por %p201, %p202
    %s205 = sadd.s32 %s204, 1
    %p208 = scmp.eq.s32.totalorder %s23, 1
    %p209 = scmp.ne.s32.totalorder %s204, %s206
    %p210 = scmp.eq.s32.totalorder %s23, 0
    %p211 = por %p209, %p210
    %p212 = scmp.ne.s32.totalorder %s204, %s206
    %p213 = scmp.eq.s32.totalorder %s28, 1
    %p214 = por %p212, %p213
    %p215 = scmp.ne.s32.totalorder %s206, %s207
    %p216 = scmp.eq.s32.totalorder %s28, 0
    %p217 = por %p215, %p216
    %p218 = scmp.ne.s32.totalorder %s206, %s207
    %p219 = scmp.eq.s32.totalorder %s29, 1
    %p220 = por %p218, %p219
    %p222 = scmp.ne.s32.totalorder %s207, %s221
    %p223 = scmp.eq.s32.totalorder %s29, 0
    %p224 = por %p222, %p223
    %s226 = sadd.s32 %s225, 1
    %p229 = scmp.eq.s32.totalorder %s23, 1
    %p230 = scmp.ne.s32.totalorder %s225, %s227
    %p231 = scmp.eq.s32.totalorder %s23, 0
    %p232 = por %p230, %p231
    %p233 = scmp.ne.s32.totalorder %s225, %s227
    %p234 = scmp.eq.s32.totalorder %s28, 1
    %p235 = por %p233, %p234
    %p236 = scmp.ne.s32.totalorder %s227, %s228
    %p237 = scmp.eq.s32.totalorder %s28, 0
    %p238 = por %p236, %p237
    %p239 = scmp.ne.s32.totalorder %s227, %s228
    %p240 = scmp.eq.s32.totalorder %s29, 1
    %p241 = por %p239, %p240
    %p243 = scmp.ne.s32.totalorder %s228, %s242
    %p244 = scmp.eq.s32.totalorder %s29, 0
    %p245 = por %p243, %p244
    %s247 = sadd.s32 %s246, 1
    %p250 = scmp.eq.s32.totalorder %s23, 1
    %p251 = scmp.ne.s32.totalorder %s246, %s248
    %p252 = scmp.eq.s32.totalorder %s23, 0
    %p253 = por %p251, %p252
    %p254 = scmp.ne.s32.totalorder %s246, %s248
    %p255 = scmp.eq.s32.totalorder %s28, 1
    %p256 = por %p254, %p255
    %p257 = scmp.ne.s32.totalorder %s248, %s249
    %p258 = scmp.eq.s32.totalorder %s28, 0
    %p259 = por %p257, %p258
    %p260 = scmp.ne.s32.totalorder %s248, %s249
    %p261 = scmp.eq.s32.totalorder %s29, 1
    %p262 = por %p260, %p261
    %p264 = scmp.ne.s32.totalorder %s249, %s263
    %p265 = scmp.eq.s32.totalorder %s29, 0
    %p266 = por %p264, %p265
    %s268 = sadd.s32 %s267, 1
    %p271 = scmp.eq.s32.totalorder %s23, 1
    %p272 = scmp.ne.s32.totalorder %s267, %s269
    %p273 = scmp.eq.s32.totalorder %s23, 0
    %p274 = por %p272, %p273
    %p275 = scmp.ne.s32.totalorder %s267, %s269
    %p276 = scmp.eq.s32.totalorder %s28, 1
    %p277 = por %p275, %p276
    %p278 = scmp.ne.s32.totalorder %s269, %s270
    %p279 = scmp.eq.s32.totalorder %s28, 0
    %p280 = por %p278, %p279
    %p281 = scmp.ne.s32.totalorder %s269, %s270
    %p282 = scmp.eq.s32.totalorder %s29, 1
    %p283 = por %p281, %p282
    %p285 = scmp.ne.s32.totalorder %s270, %s284
    %p286 = scmp.eq.s32.totalorder %s29, 0
    %p287 = por %p285, %p286
    %s289 = sadd.s32 %s288, 1
    %p292 = scmp.eq.s32.totalorder %s23, 1
    %p293 = scmp.ne.s32.totalorder %s288, %s290
    %p294 = scmp.eq.s32.totalorder %s23, 0
    %p295 = por %p293, %p294
    %p296 = scmp.ne.s32.totalorder %s288, %s290
    %p297 = scmp.eq.s32.totalorder %s28, 1
    %p298 = por %p296, %p297
    %p299 = scmp.ne.s32.totalorder %s290, %s291
    %p300 = scmp.eq.s32.totalorder %s28, 0
    %p301 = por %p299, %p300
    %p302 = scmp.ne.s32.totalorder %s290, %s291
    %p303 = scmp.eq.s32.totalorder %s29, 1
    %p304 = por %p302, %p303
    %p306 = scmp.ne.s32.totalorder %s291, %s305
    %p307 = scmp.eq.s32.totalorder %s29, 0
    %p308 = por %p306, %p307
    %s310 = sadd.s32 %s309, 1
    %p313 = scmp.eq.s32.totalorder %s23, 1
    %p314 = scmp.ne.s32.totalorder %s309, %s311
    %p315 = scmp.eq.s32.totalorder %s23, 0
    %p316 = por %p314, %p315
    %p317 = scmp.ne.s32.totalorder %s309, %s311
    %p318 = scmp.eq.s32.totalorder %s28, 1
    %p319 = por %p317, %p318
    %p320 = scmp.ne.s32.totalorder %s311, %s312
    %p321 = scmp.eq.s32.totalorder %s28, 0
    %p322 = por %p320, %p321
    %p323 = scmp.ne.s32.totalorder %s311, %s312
    %p324 = scmp.eq.s32.totalorder %s29, 1
    %p325 = por %p323, %p324
    %p327 = scmp.ne.s32.totalorder %s312, %s326
    %p328 = scmp.eq.s32.totalorder %s29, 0
    %p329 = por %p327, %p328
    %s331 = sadd.s32 %s330, 1
    %p334 = scmp.eq.s32.totalorder %s23, 1
    %p335 = scmp.ne.s32.totalorder %s330, %s332
    %p336 = scmp.eq.s32.totalorder %s23, 0
    %p337 = por %p335, %p336
    %p338 = scmp.ne.s32.totalorder %s330, %s332
    %p339 = scmp.eq.s32.totalorder %s28, 1
    %p340 = por %p338, %p339
    %p341 = scmp.ne.s32.totalorder %s332, %s333
    %p342 = scmp.eq.s32.totalorder %s28, 0
    %p343 = por %p341, %p342
    %p344 = scmp.ne.s32.totalorder %s332, %s333
    %p345 = scmp.eq.s32.totalorder %s29, 1
    %p346 = por %p344, %p345
    %p348 = scmp.ne.s32.totalorder %s333, %s347
    %p349 = scmp.eq.s32.totalorder %s29, 0
    %p350 = por %p348, %p349
    %s351 = ssub.s32 %s23, %s30
    %p352 = scmp.eq.s32.totalorder %s351, 0
    %s354 = sadd.s32 %s353, 1
    %s355 = scalar_select %p352, %s353, %s354
    %p358 = pneg %p352
    %p359 = scmp.eq.s32.totalorder %s23, 1
    %p360 = por %p358, %p359
    %p361 = scmp.ne.s32.totalorder %s353, %s356
    %p362 = scmp.eq.s32.totalorder %s23, 0
    %p363 = por %p361, %p362
    %p364 = scmp.ne.s32.totalorder %s353, %s356
    %p365 = scmp.eq.s32.totalorder %s28, 1
    %p366 = por %p364, %p365
    %p367 = scmp.ne.s32.totalorder %s356, %s357
    %p368 = scmp.eq.s32.totalorder %s28, 0
    %p369 = por %p367, %p368
    %p370 = scmp.ne.s32.totalorder %s356, %s357
    %p371 = scmp.eq.s32.totalorder %s29, 1
    %p372 = por %p370, %p371
    %p374 = scmp.ne.s32.totalorder %s357, %s373
    %p375 = scmp.eq.s32.totalorder %s29, 0
    %p376 = por %p374, %p375
    %p377 = scmp.le.s32.totalorder 1, %s23
    %p378 = scmp.lt.s32.totalorder %s23, 3
    %p379 = pnand %p377, %p378
    %p380 = pneg %p379
    // Predicated region
    $region9: #{tpu_custom_call.1} parent=5 // pred_check
      _
    $region10: #{tpu_custom_call.1} parent=5 // pred_check_branch
      %382 = sbr.rel (%p379) target = $region12
    $region11: #{tpu_custom_call.1} parent=5 // pred_region
      %s383 = ssub.s32 %s23, 1
      // Predicated region
      $region13: #{tpu_custom_call.1} parent=11 // pred_check
        %p384 = pneg %p70
      $region14: #{tpu_custom_call.1} parent=11 // pred_check_branch
        %386 = sbr.rel (%p384) target = $region16
      $region15: #{tpu_custom_call.1} parent=11 // pred_region
        _
      $region16: #{tpu_custom_call.1} parent=11 // pred_fallthru
        _
      // Predicated region
      $region17: #{tpu_custom_call.1} parent=11 // pred_check
        %p387 = pneg %p91
      $region18: #{tpu_custom_call.1} parent=11 // pred_check_branch
        %389 = sbr.rel (%p387) target = $region20
      $region19: #{tpu_custom_call.1} parent=11 // pred_region
        _
      $region20: #{tpu_custom_call.1} parent=11 // pred_fallthru
        _
      // Predicated region
      $region21: #{tpu_custom_call.1} parent=11 // pred_check
        %p390 = pneg %p112
      $region22: #{tpu_custom_call.1} parent=11 // pred_check_branch
        %392 = sbr.rel (%p390) target = $region24
      $region23: #{tpu_custom_call.1} parent=11 // pred_region
        _
      $region24: #{tpu_custom_call.1} parent=11 // pred_fallthru
        _
      // Predicated region
      $region25: #{tpu_custom_call.1} parent=11 // pred_check
        %p393 = pneg %p133
      $region26: #{tpu_custom_call.1} parent=11 // pred_check_branch
        %395 = sbr.rel (%p393) target = $region28
      $region27: #{tpu_custom_call.1} parent=11 // pred_region
        _
      $region28: #{tpu_custom_call.1} parent=11 // pred_fallthru
        _
      // Predicated region
      $region29: #{tpu_custom_call.1} parent=11 // pred_check
        %p396 = pneg %p154
      $region30: #{tpu_custom_call.1} parent=11 // pred_check_branch
        %398 = sbr.rel (%p396) target = $region32
      $region31: #{tpu_custom_call.1} parent=11 // pred_region
        _
      $region32: #{tpu_custom_call.1} parent=11 // pred_fallthru
        _
      // Predicated region
      $region33: #{tpu_custom_call.1} parent=11 // pred_check
        %p399 = pneg %p175
      $region34: #{tpu_custom_call.1} parent=11 // pred_check_branch
        %401 = sbr.rel (%p399) target = $region36
      $region35: #{tpu_custom_call.1} parent=11 // pred_region
        _
      $region36: #{tpu_custom_call.1} parent=11 // pred_fallthru
        _
      // Predicated region
      $region37: #{tpu_custom_call.1} parent=11 // pred_check
        %p402 = pneg %p196
      $region38: #{tpu_custom_call.1} parent=11 // pred_check_branch
        %404 = sbr.rel (%p402) target = $region40
      $region39: #{tpu_custom_call.1} parent=11 // pred_region
        _
      $region40: #{tpu_custom_call.1} parent=11 // pred_fallthru
        _
      // Predicated region
      $region41: #{tpu_custom_call.1} parent=11 // pred_check
        %p405 = pneg %p217
      $region42: #{tpu_custom_call.1} parent=11 // pred_check_branch
        %407 = sbr.rel (%p405) target = $region44
      $region43: #{tpu_custom_call.1} parent=11 // pred_region
        _
      $region44: #{tpu_custom_call.1} parent=11 // pred_fallthru
        _
      // Predicated region
      $region45: #{tpu_custom_call.1} parent=11 // pred_check
        %p408 = pneg %p238
      $region46: #{tpu_custom_call.1} parent=11 // pred_check_branch
        %410 = sbr.rel (%p408) target = $region48
      $region47: #{tpu_custom_call.1} parent=11 // pred_region
        _
      $region48: #{tpu_custom_call.1} parent=11 // pred_fallthru
        _
      // Predicated region
      $region49: #{tpu_custom_call.1} parent=11 // pred_check
        %p411 = pneg %p259
      $region50: #{tpu_custom_call.1} parent=11 // pred_check_branch
        %413 = sbr.rel (%p411) target = $region52
      $region51: #{tpu_custom_call.1} parent=11 // pred_region
        _
      $region52: #{tpu_custom_call.1} parent=11 // pred_fallthru
        _
      // Predicated region
      $region53: #{tpu_custom_call.1} parent=11 // pred_check
        %p414 = pneg %p280
      $region54: #{tpu_custom_call.1} parent=11 // pred_check_branch
        %416 = sbr.rel (%p414) target = $region56
      $region55: #{tpu_custom_call.1} parent=11 // pred_region
        _
      $region56: #{tpu_custom_call.1} parent=11 // pred_fallthru
        _
      // Predicated region
      $region57: #{tpu_custom_call.1} parent=11 // pred_check
        %p417 = pneg %p301
      $region58: #{tpu_custom_call.1} parent=11 // pred_check_branch
        %419 = sbr.rel (%p417) target = $region60
      $region59: #{tpu_custom_call.1} parent=11 // pred_region
        _
      $region60: #{tpu_custom_call.1} parent=11 // pred_fallthru
        _
      // Predicated region
      $region61: #{tpu_custom_call.1} parent=11 // pred_check
        %p420 = pneg %p322
      $region62: #{tpu_custom_call.1} parent=11 // pred_check_branch
        %422 = sbr.rel (%p420) target = $region64
      $region63: #{tpu_custom_call.1} parent=11 // pred_region
        _
      $region64: #{tpu_custom_call.1} parent=11 // pred_fallthru
        _
      // Predicated region
      $region65: #{tpu_custom_call.1} parent=11 // pred_check
        %p423 = pneg %p343
      $region66: #{tpu_custom_call.1} parent=11 // pred_check_branch
        %425 = sbr.rel (%p423) target = $region68
      $region67: #{tpu_custom_call.1} parent=11 // pred_region
        _
      $region68: #{tpu_custom_call.1} parent=11 // pred_fallthru
        _
    $region12: #{tpu_custom_call.1} parent=5 // pred_fallthru
      _
    %p426 = scmp.lt.s32.totalorder %s23, 2
    // Predicated region
    $region69: #{tpu_custom_call.1} parent=5 // pred_check
      %p427 = pneg %p426
    $region70: #{tpu_custom_call.1} parent=5 // pred_check_branch
      %429 = sbr.rel (%p427) target = $region72
    $region71: #{tpu_custom_call.1} parent=5 // pred_region
      // Predicated region
      $region73: #{tpu_custom_call.1} parent=71 // pred_check
        %p430 = pneg %p43
      $region74: #{tpu_custom_call.1} parent=71 // pred_check_branch
        %432 = sbr.rel (%p430) target = $region76
      $region75: #{tpu_custom_call.1} parent=71 // pred_region
        %s433 = smul.u32 2, %s23
        %p434 = scmp.lt.s32.totalorder %s433, 3
        %s435 = scalar_select %p434, %s433, 3
        %s436 = smul.addr %s435, 32
        %s437 = smul.addr %s436, 8
        %s438 = scalar_lea.vmem %s0, %s437
        %s439 = smul.u32 2, %s23
      $region76: #{tpu_custom_call.1} parent=71 // pred_fallthru
        _
    $region72: #{tpu_custom_call.1} parent=5 // pred_fallthru
      _
    %p440 = scmp.le.s32.totalorder 1, %s23
    %p441 = scmp.lt.s32.totalorder %s23, 3
    %p442 = pnand %p440, %p441
    %p443 = pneg %p442
    // Predicated region
    $region77: #{tpu_custom_call.1} parent=5 // pred_check
      _
    $region78: #{tpu_custom_call.1} parent=5 // pred_check_branch
      %445 = sbr.rel (%p442) target = $region80
    $region79: #{tpu_custom_call.1} parent=5 // pred_region
      %s446 = ssub.s32 %s23, 1
      %s447 = smul.u32 2, %s28
      %p448 = scmp.lt.s32.totalorder %s447, 3
      %s449 = scalar_select %p448, %s447, 3
      %s450 = smul.addr %s449, 32
      %s451 = smul.addr %s450, 8
      %s452 = scalar_lea.vmem %s0, %s451
      %p453 = pneg %p49
      %p454 = pneg %p46
      %p455 = pneg %p70
      %p456 = pneg %p67
      %p457 = pneg %p91
      %p458 = pneg %p88
      %p459 = pneg %p112
      %p460 = pneg %p109
      %p461 = pneg %p133
      %p462 = pneg %p130
      %p463 = pneg %p154
      %p464 = pneg %p151
      %p465 = pneg %p175
      %p466 = pneg %p172
      %p467 = pneg %p196
      %p468 = pneg %p193
      %p469 = pneg %p217
      %p470 = pneg %p214
      %p471 = pneg %p238
      %p472 = pneg %p235
      %p473 = pneg %p259
      %p474 = pneg %p256
      %p475 = pneg %p280
      %p476 = pneg %p277
      %p477 = pneg %p301
      %p478 = pneg %p298
      %p479 = pneg %p322
      %p480 = pneg %p319
      %p481 = pneg %p343
      %p482 = pneg %p340
      %p483 = pneg %p369
      %p484 = pneg %p366
      %p485 = scmp.lt.s32.totalorder %s28, 1
      %s486 = scalar_select %p485, %s28, 1
      %s487 = smul.addr %s486, 2
      %s488 = scalar_lea.vmem %s15, %s487
      %s489 = smul.u32 2, %s28
      %p490 = scmp.lt.s32.totalorder %s489, 3
      %s491 = scalar_select %p490, %s489, 3
      %s492 = smul.addr %s491, 32
      %s493 = smul.addr %s492, 8
      %s494 = scalar_lea.vmem %s0, %s493
      %s495 = smul.u32 2, %s28
      %p496 = scmp.lt.s32.totalorder %s28, 1
      %s497 = scalar_select %p496, %s28, 1
      %s498 = smul.addr %s497, 2
      %s499 = scalar_lea.vmem %s15, %s498
      %v501 = vld [vmem:[%s494] sm:$0xff]
      %v502 = vld [vmem:[%s494 + $0x8] sm:$0xff]
      %v503 = vld [vmem:[%s494 + $0x10] sm:$0xff]
      %v504 = vld [vmem:[%s494 + $0x18] sm:$0xff]
      %v505 = vld [vmem:[%s494 + $0x20] sm:$0xff]
      %v506 = vld [vmem:[%s494 + $0x28] sm:$0xff]
      %v507 = vld [vmem:[%s494 + $0x30] sm:$0xff]
      %v508 = vld [vmem:[%s494 + $0x38] sm:$0xff]
      %v509 = vld [vmem:[%s494 + $0x40] sm:$0xff]
      %v510 = vld [vmem:[%s494 + $0x48] sm:$0xff]
      %v511 = vld [vmem:[%s494 + $0x50] sm:$0xff]
      %v512 = vld [vmem:[%s494 + $0x58] sm:$0xff]
      %v513 = vld [vmem:[%s494 + $0x60] sm:$0xff]
      %v514 = vld [vmem:[%s494 + $0x68] sm:$0xff]
      %v515 = vld [vmem:[%s494 + $0x70] sm:$0xff]
      %v516 = vld [vmem:[%s494 + $0x78] sm:$0xff]
      %v517 = vld [vmem:[%s494 + $0x80] sm:$0xff]
      %v518 = vld [vmem:[%s494 + $0x88] sm:$0xff]
      %v519 = vld [vmem:[%s494 + $0x90] sm:$0xff]
      %v520 = vld [vmem:[%s494 + $0x98] sm:$0xff]
      %v521 = vld [vmem:[%s494 + $0xa0] sm:$0xff]
      %v522 = vld [vmem:[%s494 + $0xa8] sm:$0xff]
      %v523 = vld [vmem:[%s494 + $0xb0] sm:$0xff]
      %v524 = vld [vmem:[%s494 + $0xb8] sm:$0xff]
      %v525 = vld [vmem:[%s494 + $0xc0] sm:$0xff]
      %v526 = vld [vmem:[%s494 + $0xc8] sm:$0xff]
      %v527 = vld [vmem:[%s494 + $0xd0] sm:$0xff]
      %v528 = vld [vmem:[%s494 + $0xd8] sm:$0xff]
      %v529 = vld [vmem:[%s494 + $0xe0] sm:$0xff]
      %v530 = vld [vmem:[%s494 + $0xe8] sm:$0xff]
      %v531 = vld [vmem:[%s494 + $0xf0] sm:$0xff]
      %v532 = vld [vmem:[%s494 + $0xf8] sm:$0xff]
      %v533 = vld [vmem:[%s494 + $0x100] sm:$0xff]
      %v534 = vld [vmem:[%s494 + $0x108] sm:$0xff]
      %v535 = vld [vmem:[%s494 + $0x110] sm:$0xff]
      %v536 = vld [vmem:[%s494 + $0x118] sm:$0xff]
      %v537 = vld [vmem:[%s494 + $0x120] sm:$0xff]
      %v538 = vld [vmem:[%s494 + $0x128] sm:$0xff]
      %v539 = vld [vmem:[%s494 + $0x130] sm:$0xff]
      %v540 = vld [vmem:[%s494 + $0x138] sm:$0xff]
      %v541 = vld [vmem:[%s494 + $0x140] sm:$0xff]
      %v542 = vld [vmem:[%s494 + $0x148] sm:$0xff]
      %v543 = vld [vmem:[%s494 + $0x150] sm:$0xff]
      %v544 = vld [vmem:[%s494 + $0x158] sm:$0xff]
      %v545 = vld [vmem:[%s494 + $0x160] sm:$0xff]
      %v546 = vld [vmem:[%s494 + $0x168] sm:$0xff]
      %v547 = vld [vmem:[%s494 + $0x170] sm:$0xff]
      %v548 = vld [vmem:[%s494 + $0x178] sm:$0xff]
      %v549 = vld [vmem:[%s494 + $0x180] sm:$0xff]
      %v550 = vld [vmem:[%s494 + $0x188] sm:$0xff]
      %v551 = vld [vmem:[%s494 + $0x190] sm:$0xff]
      %v552 = vld [vmem:[%s494 + $0x198] sm:$0xff]
      %v553 = vld [vmem:[%s494 + $0x1a0] sm:$0xff]
      %v554 = vld [vmem:[%s494 + $0x1a8] sm:$0xff]
      %v555 = vld [vmem:[%s494 + $0x1b0] sm:$0xff]
      %v556 = vld [vmem:[%s494 + $0x1b8] sm:$0xff]
      %v557 = vld [vmem:[%s494 + $0x1c0] sm:$0xff]
      %v558 = vld [vmem:[%s494 + $0x1c8] sm:$0xff]
      %v559 = vld [vmem:[%s494 + $0x1d0] sm:$0xff]
      %v560 = vld [vmem:[%s494 + $0x1d8] sm:$0xff]
      %v561 = vld [vmem:[%s494 + $0x1e0] sm:$0xff]
      %v562 = vld [vmem:[%s494 + $0x1e8] sm:$0xff]
      %v563 = vld [vmem:[%s494 + $0x1f0] sm:$0xff]
      %v564 = vld [vmem:[%s494 + $0x1f8] sm:$0xff]
      %vm565 = vcmask 23552
      %566 = vst.msk [vmem:[#allocation2] sm:$0xff] %vm565, 0.0
      %567 = vst.msk [vmem:[#allocation2 + $0x8] sm:$0xff] %vm565, 0.0
      %vm568 = vcmask 17408
      %569 = vst.msk [vmem:[#allocation2 + $0x10] sm:$0x3] %vm568, 0.0
      %570 = vst.msk [vmem:[#allocation2 + $0x1b0] sm:$0xff] %vm565, 0.0
      %571 = vst.msk [vmem:[#allocation2 + $0x1b8] sm:$0xff] %vm565, 0.0
      %572 = vst.msk [vmem:[#allocation2 + $0x1c0] sm:$0x3] %vm568, 0.0
      %s573 = scalar_lea.vmem [#allocation2], 408
      %574 = vst.msk [vmem:[%s573] sm:$0xff] %vm565, 0.0
      %575 = vst.msk [vmem:[%s573 + $0x8] sm:$0xff] %vm565, 0.0
      %576 = vst.msk [vmem:[%s573 + $0x10] sm:$0x3] %vm568, 0.0
      %577 = vst.msk [vmem:[%s573 + $0x1b0] sm:$0xff] %vm565, 0.0
      %578 = vst.msk [vmem:[%s573 + $0x1b8] sm:$0xff] %vm565, 0.0
      %579 = vst.msk [vmem:[%s573 + $0x1c0] sm:$0x3] %vm568, 0.0
      %vm580 = vcmask 16384
      %581 = vst.msk [vmem:[#allocation2] sm:$0x1] %vm580, 0.0
      %582 = vst.msk [vmem:[#allocation2 + $0x18] sm:$0x1] %vm580, 0.0
      %583 = vst.msk [vmem:[#allocation2 + $0x30] sm:$0x1] %vm580, 0.0
      %584 = vst.msk [vmem:[#allocation2 + $0x48] sm:$0x1] %vm580, 0.0
      %585 = vst.msk [vmem:[#allocation2 + $0x60] sm:$0x1] %vm580, 0.0
      %586 = vst.msk [vmem:[#allocation2 + $0x78] sm:$0x1] %vm580, 0.0
      %587 = vst.msk [vmem:[#allocation2 + $0x90] sm:$0x1] %vm580, 0.0
      %588 = vst.msk [vmem:[#allocation2 + $0xa8] sm:$0x1] %vm580, 0.0
      %589 = vst.msk [vmem:[#allocation2 + $0xc0] sm:$0x1] %vm580, 0.0
      %590 = vst.msk [vmem:[#allocation2 + $0xd8] sm:$0x1] %vm580, 0.0
      %591 = vst.msk [vmem:[#allocation2 + $0xf0] sm:$0x1] %vm580, 0.0
      %592 = vst.msk [vmem:[#allocation2 + $0x108] sm:$0x1] %vm580, 0.0
      %593 = vst.msk [vmem:[#allocation2 + $0x120] sm:$0x1] %vm580, 0.0
      %594 = vst.msk [vmem:[#allocation2 + $0x138] sm:$0x1] %vm580, 0.0
      %595 = vst.msk [vmem:[#allocation2 + $0x150] sm:$0x1] %vm580, 0.0
      %596 = vst.msk [vmem:[#allocation2 + $0x168] sm:$0x1] %vm580, 0.0
      %597 = vst.msk [vmem:[#allocation2 + $0x180] sm:$0x1] %vm580, 0.0
      %598 = vst.msk [vmem:[#allocation2 + $0x198] sm:$0x1] %vm580, 0.0
      %599 = vst.msk [vmem:[#allocation2 + $0x1b0] sm:$0x1] %vm580, 0.0
      %600 = vst.msk [vmem:[#allocation2 + $0x1c8] sm:$0x1] %vm580, 0.0
      %601 = vst.msk [vmem:[#allocation2 + $0x1e0] sm:$0x1] %vm580, 0.0
      %602 = vst.msk [vmem:[#allocation2 + $0x1f8] sm:$0x1] %vm580, 0.0
      %603 = vst.msk [vmem:[#allocation2 + $0x210] sm:$0x1] %vm580, 0.0
      %604 = vst.msk [vmem:[#allocation2 + $0x228] sm:$0x1] %vm580, 0.0
      %605 = vst.msk [vmem:[#allocation2 + $0x240] sm:$0x1] %vm580, 0.0
      %606 = vst.msk [vmem:[#allocation2 + $0x258] sm:$0x1] %vm580, 0.0
      %607 = vst.msk [vmem:[#allocation2 + $0x270] sm:$0x1] %vm580, 0.0
      %608 = vst.msk [vmem:[#allocation2 + $0x288] sm:$0x1] %vm580, 0.0
      %609 = vst.msk [vmem:[#allocation2 + $0x2a0] sm:$0x1] %vm580, 0.0
      %610 = vst.msk [vmem:[#allocation2 + $0x2b8] sm:$0x1] %vm580, 0.0
      %611 = vst.msk [vmem:[#allocation2 + $0x2d0] sm:$0x1] %vm580, 0.0
      %612 = vst.msk [vmem:[#allocation2 + $0x2e8] sm:$0x1] %vm580, 0.0
      %613 = vst.msk [vmem:[#allocation2 + $0x300] sm:$0x1] %vm580, 0.0
      %614 = vst.msk [vmem:[#allocation2 + $0x318] sm:$0x1] %vm580, 0.0
      %615 = vst.msk [vmem:[#allocation2 + $0x330] sm:$0x1] %vm580, 0.0
      %616 = vst.msk [vmem:[#allocation2 + $0x348] sm:$0x1] %vm580, 0.0
      %617 = vst.msk [vmem:[#allocation2 + $0x11] sm:$0x1] %vm580, 0.0
      %618 = vst.msk [vmem:[#allocation2 + $0x29] sm:$0x1] %vm580, 0.0
      %619 = vst.msk [vmem:[#allocation2 + $0x41] sm:$0x1] %vm580, 0.0
      %620 = vst.msk [vmem:[#allocation2 + $0x59] sm:$0x1] %vm580, 0.0
      %621 = vst.msk [vmem:[#allocation2 + $0x71] sm:$0x1] %vm580, 0.0
      %622 = vst.msk [vmem:[#allocation2 + $0x89] sm:$0x1] %vm580, 0.0
      %623 = vst.msk [vmem:[#allocation2 + $0xa1] sm:$0x1] %vm580, 0.0
      %624 = vst.msk [vmem:[#allocation2 + $0xb9] sm:$0x1] %vm580, 0.0
      %625 = vst.msk [vmem:[#allocation2 + $0xd1] sm:$0x1] %vm580, 0.0
      %626 = vst.msk [vmem:[#allocation2 + $0xe9] sm:$0x1] %vm580, 0.0
      %627 = vst.msk [vmem:[#allocation2 + $0x101] sm:$0x1] %vm580, 0.0
      %628 = vst.msk [vmem:[#allocation2 + $0x119] sm:$0x1] %vm580, 0.0
      %629 = vst.msk [vmem:[#allocation2 + $0x131] sm:$0x1] %vm580, 0.0
      %630 = vst.msk [vmem:[#allocation2 + $0x149] sm:$0x1] %vm580, 0.0
      %631 = vst.msk [vmem:[#allocation2 + $0x161] sm:$0x1] %vm580, 0.0
      %632 = vst.msk [vmem:[#allocation2 + $0x179] sm:$0x1] %vm580, 0.0
      %633 = vst.msk [vmem:[#allocation2 + $0x191] sm:$0x1] %vm580, 0.0
      %634 = vst.msk [vmem:[#allocation2 + $0x1a9] sm:$0x1] %vm580, 0.0
      %635 = vst.msk [vmem:[#allocation2 + $0x1c1] sm:$0x1] %vm580, 0.0
      %636 = vst.msk [vmem:[#allocation2 + $0x1d9] sm:$0x1] %vm580, 0.0
      %637 = vst.msk [vmem:[#allocation2 + $0x1f1] sm:$0x1] %vm580, 0.0
      %638 = vst.msk [vmem:[#allocation2 + $0x209] sm:$0x1] %vm580, 0.0
      %639 = vst.msk [vmem:[#allocation2 + $0x221] sm:$0x1] %vm580, 0.0
      %640 = vst.msk [vmem:[#allocation2 + $0x239] sm:$0x1] %vm580, 0.0
      %641 = vst.msk [vmem:[#allocation2 + $0x251] sm:$0x1] %vm580, 0.0
      %642 = vst.msk [vmem:[#allocation2 + $0x269] sm:$0x1] %vm580, 0.0
      %643 = vst.msk [vmem:[#allocation2 + $0x281] sm:$0x1] %vm580, 0.0
      %644 = vst.msk [vmem:[#allocation2 + $0x299] sm:$0x1] %vm580, 0.0
      %645 = vst.msk [vmem:[#allocation2 + $0x2b1] sm:$0x1] %vm580, 0.0
      %646 = vst.msk [vmem:[#allocation2 + $0x2c9] sm:$0x1] %vm580, 0.0
      %647 = vst.msk [vmem:[#allocation2 + $0x2e1] sm:$0x1] %vm580, 0.0
      %648 = vst.msk [vmem:[#allocation2 + $0x2f9] sm:$0x1] %vm580, 0.0
      %649 = vst.msk [vmem:[#allocation2 + $0x311] sm:$0x1] %vm580, 0.0
      %650 = vst.msk [vmem:[#allocation2 + $0x329] sm:$0x1] %vm580, 0.0
      %651 = vst.msk [vmem:[#allocation2 + $0x341] sm:$0x1] %vm580, 0.0
      %652 = vst.msk [vmem:[#allocation2 + $0x359] sm:$0x1] %vm580, 0.0
      %s653 = scalar_lea.vmem [#allocation2], 24
      %654 = vst.msk [vmem:[%s653 + $0x1] sm:$0xff] %vm565, %v501
      %655 = vst.msk [vmem:[%s653 + $0x9] sm:$0xff] %vm565, %v502
      %656 = vst.msk [vmem:[%s653 + $0x19] sm:$0xff] %vm565, %v503
      %657 = vst.msk [vmem:[%s653 + $0x21] sm:$0xff] %vm565, %v504
      %658 = vst.msk [vmem:[%s653 + $0x31] sm:$0xff] %vm565, %v505
      %659 = vst.msk [vmem:[%s653 + $0x39] sm:$0xff] %vm565, %v506
      %660 = vst.msk [vmem:[%s653 + $0x49] sm:$0xff] %vm565, %v507
      %661 = vst.msk [vmem:[%s653 + $0x51] sm:$0xff] %vm565, %v508
      %662 = vst.msk [vmem:[%s653 + $0x61] sm:$0xff] %vm565, %v509
      %663 = vst.msk [vmem:[%s653 + $0x69] sm:$0xff] %vm565, %v510
      %664 = vst.msk [vmem:[%s653 + $0x79] sm:$0xff] %vm565, %v511
      %665 = vst.msk [vmem:[%s653 + $0x81] sm:$0xff] %vm565, %v512
      %666 = vst.msk [vmem:[%s653 + $0x91] sm:$0xff] %vm565, %v513
      %667 = vst.msk [vmem:[%s653 + $0x99] sm:$0xff] %vm565, %v514
      %668 = vst.msk [vmem:[%s653 + $0xa9] sm:$0xff] %vm565, %v515
      %669 = vst.msk [vmem:[%s653 + $0xb1] sm:$0xff] %vm565, %v516
      %670 = vst.msk [vmem:[%s653 + $0xc1] sm:$0xff] %vm565, %v517
      %671 = vst.msk [vmem:[%s653 + $0xc9] sm:$0xff] %vm565, %v518
      %672 = vst.msk [vmem:[%s653 + $0xd9] sm:$0xff] %vm565, %v519
      %673 = vst.msk [vmem:[%s653 + $0xe1] sm:$0xff] %vm565, %v520
      %674 = vst.msk [vmem:[%s653 + $0xf1] sm:$0xff] %vm565, %v521
      %675 = vst.msk [vmem:[%s653 + $0xf9] sm:$0xff] %vm565, %v522
      %676 = vst.msk [vmem:[%s653 + $0x109] sm:$0xff] %vm565, %v523
      %677 = vst.msk [vmem:[%s653 + $0x111] sm:$0xff] %vm565, %v524
      %678 = vst.msk [vmem:[%s653 + $0x121] sm:$0xff] %vm565, %v525
      %679 = vst.msk [vmem:[%s653 + $0x129] sm:$0xff] %vm565, %v526
      %680 = vst.msk [vmem:[%s653 + $0x139] sm:$0xff] %vm565, %v527
      %681 = vst.msk [vmem:[%s653 + $0x141] sm:$0xff] %vm565, %v528
      %682 = vst.msk [vmem:[%s653 + $0x151] sm:$0xff] %vm565, %v529
      %683 = vst.msk [vmem:[%s653 + $0x159] sm:$0xff] %vm565, %v530
      %684 = vst.msk [vmem:[%s653 + $0x169] sm:$0xff] %vm565, %v531
      %685 = vst.msk [vmem:[%s653 + $0x171] sm:$0xff] %vm565, %v532
      %686 = vst.msk [vmem:[%s653 + $0x1b1] sm:$0xff] %vm565, %v533
      %687 = vst.msk [vmem:[%s653 + $0x1b9] sm:$0xff] %vm565, %v534
      %688 = vst.msk [vmem:[%s653 + $0x1c9] sm:$0xff] %vm565, %v535
      %689 = vst.msk [vmem:[%s653 + $0x1d1] sm:$0xff] %vm565, %v536
      %690 = vst.msk [vmem:[%s653 + $0x1e1] sm:$0xff] %vm565, %v537
      %691 = vst.msk [vmem:[%s653 + $0x1e9] sm:$0xff] %vm565, %v538
      %692 = vst.msk [vmem:[%s653 + $0x1f9] sm:$0xff] %vm565, %v539
      %693 = vst.msk [vmem:[%s653 + $0x201] sm:$0xff] %vm565, %v540
      %694 = vst.msk [vmem:[%s653 + $0x211] sm:$0xff] %vm565, %v541
      %695 = vst.msk [vmem:[%s653 + $0x219] sm:$0xff] %vm565, %v542
      %696 = vst.msk [vmem:[%s653 + $0x229] sm:$0xff] %vm565, %v543
      %697 = vst.msk [vmem:[%s653 + $0x231] sm:$0xff] %vm565, %v544
      %698 = vst.msk [vmem:[%s653 + $0x241] sm:$0xff] %vm565, %v545
      %699 = vst.msk [vmem:[%s653 + $0x249] sm:$0xff] %vm565, %v546
      %700 = vst.msk [vmem:[%s653 + $0x259] sm:$0xff] %vm565, %v547
      %701 = vst.msk [vmem:[%s653 + $0x261] sm:$0xff] %vm565, %v548
      %702 = vst.msk [vmem:[%s653 + $0x271] sm:$0xff] %vm565, %v549
      %703 = vst.msk [vmem:[%s653 + $0x279] sm:$0xff] %vm565, %v550
      %704 = vst.msk [vmem:[%s653 + $0x289] sm:$0xff] %vm565, %v551
      %705 = vst.msk [vmem:[%s653 + $0x291] sm:$0xff] %vm565, %v552
      %706 = vst.msk [vmem:[%s653 + $0x2a1] sm:$0xff] %vm565, %v553
      %707 = vst.msk [vmem:[%s653 + $0x2a9] sm:$0xff] %vm565, %v554
      %708 = vst.msk [vmem:[%s653 + $0x2b9] sm:$0xff] %vm565, %v555
      %709 = vst.msk [vmem:[%s653 + $0x2c1] sm:$0xff] %vm565, %v556
      %710 = vst.msk [vmem:[%s653 + $0x2d1] sm:$0xff] %vm565, %v557
      %711 = vst.msk [vmem:[%s653 + $0x2d9] sm:$0xff] %vm565, %v558
      %712 = vst.msk [vmem:[%s653 + $0x2e9] sm:$0xff] %vm565, %v559
      %713 = vst.msk [vmem:[%s653 + $0x2f1] sm:$0xff] %vm565, %v560
      %714 = vst.msk [vmem:[%s653 + $0x301] sm:$0xff] %vm565, %v561
      %715 = vst.msk [vmem:[%s653 + $0x309] sm:$0xff] %vm565, %v562
      %716 = vst.msk [vmem:[%s653 + $0x319] sm:$0xff] %vm565, %v563
      %717 = vst.msk [vmem:[%s653 + $0x321] sm:$0xff] %vm565, %v564
      %v718 = vld [vmem:[#allocation2] sm:$0xff]
      %v719 = vld [vmem:[#allocation2 + $0x8] sm:$0xff]
      %v720 = vld [vmem:[#allocation2 + $0x18] sm:$0xff]
      %v721 = vld [vmem:[#allocation2 + $0x20] sm:$0xff]
      %v722 = vld [vmem:[#allocation2 + $0x30] sm:$0xff]
      %v723 = vld [vmem:[#allocation2 + $0x38] sm:$0xff]
      %v724 = vld [vmem:[#allocation2 + $0x48] sm:$0xff]
      %v725 = vld [vmem:[#allocation2 + $0x50] sm:$0xff]
      %v726 = vld [vmem:[#allocation2 + $0x60] sm:$0xff]
      %v727 = vld [vmem:[#allocation2 + $0x68] sm:$0xff]
      %v728 = vld [vmem:[#allocation2 + $0x78] sm:$0xff]
      %v729 = vld [vmem:[#allocation2 + $0x80] sm:$0xff]
      %v730 = vld [vmem:[#allocation2 + $0x90] sm:$0xff]
      %v731 = vld [vmem:[#allocation2 + $0x98] sm:$0xff]
      %v732 = vld [vmem:[#allocation2 + $0xa8] sm:$0xff]
      %v733 = vld [vmem:[#allocation2 + $0xb0] sm:$0xff]
      %v734 = vld [vmem:[#allocation2 + $0xc0] sm:$0xff]
      %v735 = vld [vmem:[#allocation2 + $0xc8] sm:$0xff]
      %v736 = vld [vmem:[#allocation2 + $0xd8] sm:$0xff]
      %v737 = vld [vmem:[#allocation2 + $0xe0] sm:$0xff]
      %v738 = vld [vmem:[#allocation2 + $0xf0] sm:$0xff]
      %v739 = vld [vmem:[#allocation2 + $0xf8] sm:$0xff]
      %v740 = vld [vmem:[#allocation2 + $0x108] sm:$0xff]
      %v741 = vld [vmem:[#allocation2 + $0x110] sm:$0xff]
      %v742 = vld [vmem:[#allocation2 + $0x120] sm:$0xff]
      %v743 = vld [vmem:[#allocation2 + $0x128] sm:$0xff]
      %v744 = vld [vmem:[#allocation2 + $0x138] sm:$0xff]
      %v745 = vld [vmem:[#allocation2 + $0x140] sm:$0xff]
      %v746 = vld [vmem:[#allocation2 + $0x150] sm:$0xff]
      %v747 = vld [vmem:[#allocation2 + $0x158] sm:$0xff]
      %v748 = vld [vmem:[#allocation2 + $0x168] sm:$0xff]
      %v749 = vld [vmem:[#allocation2 + $0x170] sm:$0xff]
      %v750 = vld [vmem:[#allocation2 + $0x1b0] sm:$0xff]
      %v751 = vld [vmem:[#allocation2 + $0x1b8] sm:$0xff]
      %v752 = vld [vmem:[#allocation2 + $0x1c8] sm:$0xff]
      %v753 = vld [vmem:[#allocation2 + $0x1d0] sm:$0xff]
      %v754 = vld [vmem:[#allocation2 + $0x1e0] sm:$0xff]
      %v755 = vld [vmem:[#allocation2 + $0x1e8] sm:$0xff]
      %v756 = vld [vmem:[#allocation2 + $0x1f8] sm:$0xff]
      %v757 = vld [vmem:[#allocation2 + $0x200] sm:$0xff]
      %v758 = vld [vmem:[#allocation2 + $0x210] sm:$0xff]
      %v759 = vld [vmem:[#allocation2 + $0x218] sm:$0xff]
      %v760 = vld [vmem:[#allocation2 + $0x228] sm:$0xff]
      %v761 = vld [vmem:[#allocation2 + $0x230] sm:$0xff]
      %v762 = vld [vmem:[#allocation2 + $0x240] sm:$0xff]
      %v763 = vld [vmem:[#allocation2 + $0x248] sm:$0xff]
      %v764 = vld [vmem:[#allocation2 + $0x258] sm:$0xff]
      %v765 = vld [vmem:[#allocation2 + $0x260] sm:$0xff]
      %v766 = vld [vmem:[#allocation2 + $0x270] sm:$0xff]
      %v767 = vld [vmem:[#allocation2 + $0x278] sm:$0xff]
      %v768 = vld [vmem:[#allocation2 + $0x288] sm:$0xff]
      %v769 = vld [vmem:[#allocation2 + $0x290] sm:$0xff]
      %v770 = vld [vmem:[#allocation2 + $0x2a0] sm:$0xff]
      %v771 = vld [vmem:[#allocation2 + $0x2a8] sm:$0xff]
      %v772 = vld [vmem:[#allocation2 + $0x2b8] sm:$0xff]
      %v773 = vld [vmem:[#allocation2 + $0x2c0] sm:$0xff]
      %v774 = vld [vmem:[#allocation2 + $0x2d0] sm:$0xff]
      %v775 = vld [vmem:[#allocation2 + $0x2d8] sm:$0xff]
      %v776 = vld [vmem:[#allocation2 + $0x2e8] sm:$0xff]
      %v777 = vld [vmem:[#allocation2 + $0x2f0] sm:$0xff]
      %v778 = vld [vmem:[#allocation2 + $0x300] sm:$0xff]
      %v779 = vld [vmem:[#allocation2 + $0x308] sm:$0xff]
      %v780 = vld [vmem:[#allocation2 + $0x318] sm:$0xff]
      %v781 = vld [vmem:[#allocation2 + $0x320] sm:$0xff]
      %v782 = vld [vmem:[#allocation2 + $0x1] sm:$0xff]
      %v783 = vld [vmem:[#allocation2 + $0x9] sm:$0xff]
      %v784 = vld [vmem:[#allocation2 + $0x19] sm:$0xff]
      %v785 = vld [vmem:[#allocation2 + $0x21] sm:$0xff]
      %v786 = vld [vmem:[#allocation2 + $0x31] sm:$0xff]
      %v787 = vld [vmem:[#allocation2 + $0x39] sm:$0xff]
      %v788 = vld [vmem:[#allocation2 + $0x49] sm:$0xff]
      %v789 = vld [vmem:[#allocation2 + $0x51] sm:$0xff]
      %v790 = vld [vmem:[#allocation2 + $0x61] sm:$0xff]
      %v791 = vld [vmem:[#allocation2 + $0x69] sm:$0xff]
      %v792 = vld [vmem:[#allocation2 + $0x79] sm:$0xff]
      %v793 = vld [vmem:[#allocation2 + $0x81] sm:$0xff]
      %v794 = vld [vmem:[#allocation2 + $0x91] sm:$0xff]
      %v795 = vld [vmem:[#allocation2 + $0x99] sm:$0xff]
      %v796 = vld [vmem:[#allocation2 + $0xa9] sm:$0xff]
      %v797 = vld [vmem:[#allocation2 + $0xb1] sm:$0xff]
      %v798 = vld [vmem:[#allocation2 + $0xc1] sm:$0xff]
      %v799 = vld [vmem:[#allocation2 + $0xc9] sm:$0xff]
      %v800 = vld [vmem:[#allocation2 + $0xd9] sm:$0xff]
      %v801 = vld [vmem:[#allocation2 + $0xe1] sm:$0xff]
      %v802 = vld [vmem:[#allocation2 + $0xf1] sm:$0xff]
      %v803 = vld [vmem:[#allocation2 + $0xf9] sm:$0xff]
      %v804 = vld [vmem:[#allocation2 + $0x109] sm:$0xff]
      %v805 = vld [vmem:[#allocation2 + $0x111] sm:$0xff]
      %v806 = vld [vmem:[#allocation2 + $0x121] sm:$0xff]
      %v807 = vld [vmem:[#allocation2 + $0x129] sm:$0xff]
      %v808 = vld [vmem:[#allocation2 + $0x139] sm:$0xff]
      %v809 = vld [vmem:[#allocation2 + $0x141] sm:$0xff]
      %v810 = vld [vmem:[#allocation2 + $0x151] sm:$0xff]
      %v811 = vld [vmem:[#allocation2 + $0x159] sm:$0xff]
      %v812 = vld [vmem:[#allocation2 + $0x169] sm:$0xff]
      %v813 = vld [vmem:[#allocation2 + $0x171] sm:$0xff]
      %v814 = vld [vmem:[#allocation2 + $0x1b1] sm:$0xff]
      %v815 = vld [vmem:[#allocation2 + $0x1b9] sm:$0xff]
      %v816 = vld [vmem:[#allocation2 + $0x1c9] sm:$0xff]
      %v817 = vld [vmem:[#allocation2 + $0x1d1] sm:$0xff]
      %v818 = vld [vmem:[#allocation2 + $0x1e1] sm:$0xff]
      %v819 = vld [vmem:[#allocation2 + $0x1e9] sm:$0xff]
      %v820 = vld [vmem:[#allocation2 + $0x1f9] sm:$0xff]
      %v821 = vld [vmem:[#allocation2 + $0x201] sm:$0xff]
      %v822 = vld [vmem:[#allocation2 + $0x211] sm:$0xff]
      %v823 = vld [vmem:[#allocation2 + $0x219] sm:$0xff]
      %v824 = vld [vmem:[#allocation2 + $0x229] sm:$0xff]
      %v825 = vld [vmem:[#allocation2 + $0x231] sm:$0xff]
      %v826 = vld [vmem:[#allocation2 + $0x241] sm:$0xff]
      %v827 = vld [vmem:[#allocation2 + $0x249] sm:$0xff]
      %v828 = vld [vmem:[#allocation2 + $0x259] sm:$0xff]
      %v829 = vld [vmem:[#allocation2 + $0x261] sm:$0xff]
      %v830 = vld [vmem:[#allocation2 + $0x271] sm:$0xff]
      %v831 = vld [vmem:[#allocation2 + $0x279] sm:$0xff]
      %v832 = vld [vmem:[#allocation2 + $0x289] sm:$0xff]
      %v833 = vld [vmem:[#allocation2 + $0x291] sm:$0xff]
      %v834 = vld [vmem:[#allocation2 + $0x2a1] sm:$0xff]
      %v835 = vld [vmem:[#allocation2 + $0x2a9] sm:$0xff]
      %v836 = vld [vmem:[#allocation2 + $0x2b9] sm:$0xff]
      %v837 = vld [vmem:[#allocation2 + $0x2c1] sm:$0xff]
      %v838 = vld [vmem:[#allocation2 + $0x2d1] sm:$0xff]
      %v839 = vld [vmem:[#allocation2 + $0x2d9] sm:$0xff]
      %v840 = vld [vmem:[#allocation2 + $0x2e9] sm:$0xff]
      %v841 = vld [vmem:[#allocation2 + $0x2f1] sm:$0xff]
      %v842 = vld [vmem:[#allocation2 + $0x301] sm:$0xff]
      %v843 = vld [vmem:[#allocation2 + $0x309] sm:$0xff]
      %v844 = vld [vmem:[#allocation2 + $0x319] sm:$0xff]
      %v845 = vld [vmem:[#allocation2 + $0x321] sm:$0xff]
      %v846 = vld [vmem:[#allocation2 + $0x2] sm:$0xff]
      %v847 = vld [vmem:[#allocation2 + $0xa] sm:$0xff]
      %v848 = vld [vmem:[#allocation2 + $0x1a] sm:$0xff]
      %v849 = vld [vmem:[#allocation2 + $0x22] sm:$0xff]
      %v850 = vld [vmem:[#allocation2 + $0x32] sm:$0xff]
      %v851 = vld [vmem:[#allocation2 + $0x3a] sm:$0xff]
      %v852 = vld [vmem:[#allocation2 + $0x4a] sm:$0xff]
      %v853 = vld [vmem:[#allocation2 + $0x52] sm:$0xff]
      %v854 = vld [vmem:[#allocation2 + $0x62] sm:$0xff]
      %v855 = vld [vmem:[#allocation2 + $0x6a] sm:$0xff]
      %v856 = vld [vmem:[#allocation2 + $0x7a] sm:$0xff]
      %v857 = vld [vmem:[#allocation2 + $0x82] sm:$0xff]
      %v858 = vld [vmem:[#allocation2 + $0x92] sm:$0xff]
      %v859 = vld [vmem:[#allocation2 + $0x9a] sm:$0xff]
      %v860 = vld [vmem:[#allocation2 + $0xaa] sm:$0xff]
      %v861 = vld [vmem:[#allocation2 + $0xb2] sm:$0xff]
      %v862 = vld [vmem:[#allocation2 + $0xc2] sm:$0xff]
      %v863 = vld [vmem:[#allocation2 + $0xca] sm:$0xff]
      %v864 = vld [vmem:[#allocation2 + $0xda] sm:$0xff]
      %v865 = vld [vmem:[#allocation2 + $0xe2] sm:$0xff]
      %v866 = vld [vmem:[#allocation2 + $0xf2] sm:$0xff]
      %v867 = vld [vmem:[#allocation2 + $0xfa] sm:$0xff]
      %v868 = vld [vmem:[#allocation2 + $0x10a] sm:$0xff]
      %v869 = vld [vmem:[#allocation2 + $0x112] sm:$0xff]
      %v870 = vld [vmem:[#allocation2 + $0x122] sm:$0xff]
      %v871 = vld [vmem:[#allocation2 + $0x12a] sm:$0xff]
      %v872 = vld [vmem:[#allocation2 + $0x13a] sm:$0xff]
      %v873 = vld [vmem:[#allocation2 + $0x142] sm:$0xff]
      %v874 = vld [vmem:[#allocation2 + $0x152] sm:$0xff]
      %v875 = vld [vmem:[#allocation2 + $0x15a] sm:$0xff]
      %v876 = vld [vmem:[#allocation2 + $0x16a] sm:$0xff]
      %v877 = vld [vmem:[#allocation2 + $0x172] sm:$0xff]
      %v878 = vld [vmem:[#allocation2 + $0x1b2] sm:$0xff]
      %v879 = vld [vmem:[#allocation2 + $0x1ba] sm:$0xff]
      %v880 = vld [vmem:[#allocation2 + $0x1ca] sm:$0xff]
      %v881 = vld [vmem:[#allocation2 + $0x1d2] sm:$0xff]
      %v882 = vld [vmem:[#allocation2 + $0x1e2] sm:$0xff]
      %v883 = vld [vmem:[#allocation2 + $0x1ea] sm:$0xff]
      %v884 = vld [vmem:[#allocation2 + $0x1fa] sm:$0xff]
      %v885 = vld [vmem:[#allocation2 + $0x202] sm:$0xff]
      %v886 = vld [vmem:[#allocation2 + $0x212] sm:$0xff]
      %v887 = vld [vmem:[#allocation2 + $0x21a] sm:$0xff]
      %v888 = vld [vmem:[#allocation2 + $0x22a] sm:$0xff]
      %v889 = vld [vmem:[#allocation2 + $0x232] sm:$0xff]
      %v890 = vld [vmem:[#allocation2 + $0x242] sm:$0xff]
      %v891 = vld [vmem:[#allocation2 + $0x24a] sm:$0xff]
      %v892 = vld [vmem:[#allocation2 + $0x25a] sm:$0xff]
      %v893 = vld [vmem:[#allocation2 + $0x262] sm:$0xff]
      %v894 = vld [vmem:[#allocation2 + $0x272] sm:$0xff]
      %v895 = vld [vmem:[#allocation2 + $0x27a] sm:$0xff]
      %v896 = vld [vmem:[#allocation2 + $0x28a] sm:$0xff]
      %v897 = vld [vmem:[#allocation2 + $0x292] sm:$0xff]
      %v898 = vld [vmem:[#allocation2 + $0x2a2] sm:$0xff]
      %v899 = vld [vmem:[#allocation2 + $0x2aa] sm:$0xff]
      %v900 = vld [vmem:[#allocation2 + $0x2ba] sm:$0xff]
      %v901 = vld [vmem:[#allocation2 + $0x2c2] sm:$0xff]
      %v902 = vld [vmem:[#allocation2 + $0x2d2] sm:$0xff]
      %v903 = vld [vmem:[#allocation2 + $0x2da] sm:$0xff]
      %v904 = vld [vmem:[#allocation2 + $0x2ea] sm:$0xff]
      %v905 = vld [vmem:[#allocation2 + $0x2f2] sm:$0xff]
      %v906 = vld [vmem:[#allocation2 + $0x302] sm:$0xff]
      %v907 = vld [vmem:[#allocation2 + $0x30a] sm:$0xff]
      %v908 = vld [vmem:[#allocation2 + $0x31a] sm:$0xff]
      %v909 = vld [vmem:[#allocation2 + $0x322] sm:$0xff]
      %v910 = vld [vmem:[%s653] sm:$0xff]
      %v911 = vld [vmem:[%s653 + $0x8] sm:$0xff]
      %v912 = vld [vmem:[%s653 + $0x18] sm:$0xff]
      %v913 = vld [vmem:[%s653 + $0x20] sm:$0xff]
      %v914 = vld [vmem:[%s653 + $0x30] sm:$0xff]
      %v915 = vld [vmem:[%s653 + $0x38] sm:$0xff]
      %v916 = vld [vmem:[%s653 + $0x48] sm:$0xff]
      %v917 = vld [vmem:[%s653 + $0x50] sm:$0xff]
      %v918 = vld [vmem:[%s653 + $0x60] sm:$0xff]
      %v919 = vld [vmem:[%s653 + $0x68] sm:$0xff]
      %v920 = vld [vmem:[%s653 + $0x78] sm:$0xff]
      %v921 = vld [vmem:[%s653 + $0x80] sm:$0xff]
      %v922 = vld [vmem:[%s653 + $0x90] sm:$0xff]
      %v923 = vld [vmem:[%s653 + $0x98] sm:$0xff]
      %v924 = vld [vmem:[%s653 + $0xa8] sm:$0xff]
      %v925 = vld [vmem:[%s653 + $0xb0] sm:$0xff]
      %v926 = vld [vmem:[%s653 + $0xc0] sm:$0xff]
      %v927 = vld [vmem:[%s653 + $0xc8] sm:$0xff]
      %v928 = vld [vmem:[%s653 + $0xd8] sm:$0xff]
      %v929 = vld [vmem:[%s653 + $0xe0] sm:$0xff]
      %v930 = vld [vmem:[%s653 + $0xf0] sm:$0xff]
      %v931 = vld [vmem:[%s653 + $0xf8] sm:$0xff]
      %v932 = vld [vmem:[%s653 + $0x108] sm:$0xff]
      %v933 = vld [vmem:[%s653 + $0x110] sm:$0xff]
      %v934 = vld [vmem:[%s653 + $0x120] sm:$0xff]
      %v935 = vld [vmem:[%s653 + $0x128] sm:$0xff]
      %v936 = vld [vmem:[%s653 + $0x138] sm:$0xff]
      %v937 = vld [vmem:[%s653 + $0x140] sm:$0xff]
      %v938 = vld [vmem:[%s653 + $0x150] sm:$0xff]
      %v939 = vld [vmem:[%s653 + $0x158] sm:$0xff]
      %v940 = vld [vmem:[%s653 + $0x168] sm:$0xff]
      %v941 = vld [vmem:[%s653 + $0x170] sm:$0xff]
      %v942 = vld [vmem:[%s653 + $0x1b0] sm:$0xff]
      %v943 = vld [vmem:[%s653 + $0x1b8] sm:$0xff]
      %v944 = vld [vmem:[%s653 + $0x1c8] sm:$0xff]
      %v945 = vld [vmem:[%s653 + $0x1d0] sm:$0xff]
      %v946 = vld [vmem:[%s653 + $0x1e0] sm:$0xff]
      %v947 = vld [vmem:[%s653 + $0x1e8] sm:$0xff]
      %v948 = vld [vmem:[%s653 + $0x1f8] sm:$0xff]
      %v949 = vld [vmem:[%s653 + $0x200] sm:$0xff]
      %v950 = vld [vmem:[%s653 + $0x210] sm:$0xff]
      %v951 = vld [vmem:[%s653 + $0x218] sm:$0xff]
      %v952 = vld [vmem:[%s653 + $0x228] sm:$0xff]
      %v953 = vld [vmem:[%s653 + $0x230] sm:$0xff]
      %v954 = vld [vmem:[%s653 + $0x240] sm:$0xff]
      %v955 = vld [vmem:[%s653 + $0x248] sm:$0xff]
      %v956 = vld [vmem:[%s653 + $0x258] sm:$0xff]
      %v957 = vld [vmem:[%s653 + $0x260] sm:$0xff]
      %v958 = vld [vmem:[%s653 + $0x270] sm:$0xff]
      %v959 = vld [vmem:[%s653 + $0x278] sm:$0xff]
      %v960 = vld [vmem:[%s653 + $0x288] sm:$0xff]
      %v961 = vld [vmem:[%s653 + $0x290] sm:$0xff]
      %v962 = vld [vmem:[%s653 + $0x2a0] sm:$0xff]
      %v963 = vld [vmem:[%s653 + $0x2a8] sm:$0xff]
      %v964 = vld [vmem:[%s653 + $0x2b8] sm:$0xff]
      %v965 = vld [vmem:[%s653 + $0x2c0] sm:$0xff]
      %v966 = vld [vmem:[%s653 + $0x2d0] sm:$0xff]
      %v967 = vld [vmem:[%s653 + $0x2d8] sm:$0xff]
      %v968 = vld [vmem:[%s653 + $0x2e8] sm:$0xff]
      %v969 = vld [vmem:[%s653 + $0x2f0] sm:$0xff]
      %v970 = vld [vmem:[%s653 + $0x300] sm:$0xff]
      %v971 = vld [vmem:[%s653 + $0x308] sm:$0xff]
      %v972 = vld [vmem:[%s653 + $0x318] sm:$0xff]
      %v973 = vld [vmem:[%s653 + $0x320] sm:$0xff]
      %v974 = vld [vmem:[%s653 + $0x1] sm:$0xff]
      %v975 = vld [vmem:[%s653 + $0x9] sm:$0xff]
      %v976 = vld [vmem:[%s653 + $0x19] sm:$0xff]
      %v977 = vld [vmem:[%s653 + $0x21] sm:$0xff]
      %v978 = vld [vmem:[%s653 + $0x31] sm:$0xff]
      %v979 = vld [vmem:[%s653 + $0x39] sm:$0xff]
      %v980 = vld [vmem:[%s653 + $0x49] sm:$0xff]
      %v981 = vld [vmem:[%s653 + $0x51] sm:$0xff]
      %v982 = vld [vmem:[%s653 + $0x61] sm:$0xff]
      %v983 = vld [vmem:[%s653 + $0x69] sm:$0xff]
      %v984 = vld [vmem:[%s653 + $0x79] sm:$0xff]
      %v985 = vld [vmem:[%s653 + $0x81] sm:$0xff]
      %v986 = vld [vmem:[%s653 + $0x91] sm:$0xff]
      %v987 = vld [vmem:[%s653 + $0x99] sm:$0xff]
      %v988 = vld [vmem:[%s653 + $0xa9] sm:$0xff]
      %v989 = vld [vmem:[%s653 + $0xb1] sm:$0xff]
      %v990 = vld [vmem:[%s653 + $0xc1] sm:$0xff]
      %v991 = vld [vmem:[%s653 + $0xc9] sm:$0xff]
      %v992 = vld [vmem:[%s653 + $0xd9] sm:$0xff]
      %v993 = vld [vmem:[%s653 + $0xe1] sm:$0xff]
      %v994 = vld [vmem:[%s653 + $0xf1] sm:$0xff]
      %v995 = vld [vmem:[%s653 + $0xf9] sm:$0xff]
      %v996 = vld [vmem:[%s653 + $0x109] sm:$0xff]
      %v997 = vld [vmem:[%s653 + $0x111] sm:$0xff]
      %v998 = vld [vmem:[%s653 + $0x121] sm:$0xff]
      %v999 = vld [vmem:[%s653 + $0x129] sm:$0xff]
      %v1000 = vld [vmem:[%s653 + $0x139] sm:$0xff]
      %v1001 = vld [vmem:[%s653 + $0x141] sm:$0xff]
      %v1002 = vld [vmem:[%s653 + $0x151] sm:$0xff]
      %v1003 = vld [vmem:[%s653 + $0x159] sm:$0xff]
      %v1004 = vld [vmem:[%s653 + $0x169] sm:$0xff]
      %v1005 = vld [vmem:[%s653 + $0x171] sm:$0xff]
      %v1006 = vld [vmem:[%s653 + $0x1b1] sm:$0xff]
      %v1007 = vld [vmem:[%s653 + $0x1b9] sm:$0xff]
      %v1008 = vld [vmem:[%s653 + $0x1c9] sm:$0xff]
      %v1009 = vld [vmem:[%s653 + $0x1d1] sm:$0xff]
      %v1010 = vld [vmem:[%s653 + $0x1e1] sm:$0xff]
      %v1011 = vld [vmem:[%s653 + $0x1e9] sm:$0xff]
      %v1012 = vld [vmem:[%s653 + $0x1f9] sm:$0xff]
      %v1013 = vld [vmem:[%s653 + $0x201] sm:$0xff]
      %v1014 = vld [vmem:[%s653 + $0x211] sm:$0xff]
      %v1015 = vld [vmem:[%s653 + $0x219] sm:$0xff]
      %v1016 = vld [vmem:[%s653 + $0x229] sm:$0xff]
      %v1017 = vld [vmem:[%s653 + $0x231] sm:$0xff]
      %v1018 = vld [vmem:[%s653 + $0x241] sm:$0xff]
      %v1019 = vld [vmem:[%s653 + $0x249] sm:$0xff]
      %v1020 = vld [vmem:[%s653 + $0x259] sm:$0xff]
      %v1021 = vld [vmem:[%s653 + $0x261] sm:$0xff]
      %v1022 = vld [vmem:[%s653 + $0x271] sm:$0xff]
      %v1023 = vld [vmem:[%s653 + $0x279] sm:$0xff]
      %v1024 = vld [vmem:[%s653 + $0x289] sm:$0xff]
      %v1025 = vld [vmem:[%s653 + $0x291] sm:$0xff]
      %v1026 = vld [vmem:[%s653 + $0x2a1] sm:$0xff]
      %v1027 = vld [vmem:[%s653 + $0x2a9] sm:$0xff]
      %v1028 = vld [vmem:[%s653 + $0x2b9] sm:$0xff]
      %v1029 = vld [vmem:[%s653 + $0x2c1] sm:$0xff]
      %v1030 = vld [vmem:[%s653 + $0x2d1] sm:$0xff]
      %v1031 = vld [vmem:[%s653 + $0x2d9] sm:$0xff]
      %v1032 = vld [vmem:[%s653 + $0x2e9] sm:$0xff]
      %v1033 = vld [vmem:[%s653 + $0x2f1] sm:$0xff]
      %v1034 = vld [vmem:[%s653 + $0x301] sm:$0xff]
      %v1035 = vld [vmem:[%s653 + $0x309] sm:$0xff]
      %v1036 = vld [vmem:[%s653 + $0x319] sm:$0xff]
      %v1037 = vld [vmem:[%s653 + $0x321] sm:$0xff]
      %v1038 = vld [vmem:[%s653 + $0x2] sm:$0xff]
      %v1039 = vld [vmem:[%s653 + $0xa] sm:$0xff]
      %v1040 = vld [vmem:[%s653 + $0x1a] sm:$0xff]
      %v1041 = vld [vmem:[%s653 + $0x22] sm:$0xff]
      %v1042 = vld [vmem:[%s653 + $0x32] sm:$0xff]
      %v1043 = vld [vmem:[%s653 + $0x3a] sm:$0xff]
      %v1044 = vld [vmem:[%s653 + $0x4a] sm:$0xff]
      %v1045 = vld [vmem:[%s653 + $0x52] sm:$0xff]
      %v1046 = vld [vmem:[%s653 + $0x62] sm:$0xff]
      %v1047 = vld [vmem:[%s653 + $0x6a] sm:$0xff]
      %v1048 = vld [vmem:[%s653 + $0x7a] sm:$0xff]
      %v1049 = vld [vmem:[%s653 + $0x82] sm:$0xff]
      %v1050 = vld [vmem:[%s653 + $0x92] sm:$0xff]
      %v1051 = vld [vmem:[%s653 + $0x9a] sm:$0xff]
      %v1052 = vld [vmem:[%s653 + $0xaa] sm:$0xff]
      %v1053 = vld [vmem:[%s653 + $0xb2] sm:$0xff]
      %v1054 = vld [vmem:[%s653 + $0xc2] sm:$0xff]
      %v1055 = vld [vmem:[%s653 + $0xca] sm:$0xff]
      %v1056 = vld [vmem:[%s653 + $0xda] sm:$0xff]
      %v1057 = vld [vmem:[%s653 + $0xe2] sm:$0xff]
      %v1058 = vld [vmem:[%s653 + $0xf2] sm:$0xff]
      %v1059 = vld [vmem:[%s653 + $0xfa] sm:$0xff]
      %v1060 = vld [vmem:[%s653 + $0x10a] sm:$0xff]
      %v1061 = vld [vmem:[%s653 + $0x112] sm:$0xff]
      %v1062 = vld [vmem:[%s653 + $0x122] sm:$0xff]
      %v1063 = vld [vmem:[%s653 + $0x12a] sm:$0xff]
      %v1064 = vld [vmem:[%s653 + $0x13a] sm:$0xff]
      %v1065 = vld [vmem:[%s653 + $0x142] sm:$0xff]
      %v1066 = vld [vmem:[%s653 + $0x152] sm:$0xff]
      %v1067 = vld [vmem:[%s653 + $0x15a] sm:$0xff]
      %v1068 = vld [vmem:[%s653 + $0x16a] sm:$0xff]
      %v1069 = vld [vmem:[%s653 + $0x172] sm:$0xff]
      %v1070 = vld [vmem:[%s653 + $0x1b2] sm:$0xff]
      %v1071 = vld [vmem:[%s653 + $0x1ba] sm:$0xff]
      %v1072 = vld [vmem:[%s653 + $0x1ca] sm:$0xff]
      %v1073 = vld [vmem:[%s653 + $0x1d2] sm:$0xff]
      %v1074 = vld [vmem:[%s653 + $0x1e2] sm:$0xff]
      %v1075 = vld [vmem:[%s653 + $0x1ea] sm:$0xff]
      %v1076 = vld [vmem:[%s653 + $0x1fa] sm:$0xff]
      %v1077 = vld [vmem:[%s653 + $0x202] sm:$0xff]
      %v1078 = vld [vmem:[%s653 + $0x212] sm:$0xff]
      %v1079 = vld [vmem:[%s653 + $0x21a] sm:$0xff]
      %v1080 = vld [vmem:[%s653 + $0x22a] sm:$0xff]
      %v1081 = vld [vmem:[%s653 + $0x232] sm:$0xff]
      %v1082 = vld [vmem:[%s653 + $0x242] sm:$0xff]
      %v1083 = vld [vmem:[%s653 + $0x24a] sm:$0xff]
      %v1084 = vld [vmem:[%s653 + $0x25a] sm:$0xff]
      %v1085 = vld [vmem:[%s653 + $0x262] sm:$0xff]
      %v1086 = vld [vmem:[%s653 + $0x272] sm:$0xff]
      %v1087 = vld [vmem:[%s653 + $0x27a] sm:$0xff]
      %v1088 = vld [vmem:[%s653 + $0x28a] sm:$0xff]
      %v1089 = vld [vmem:[%s653 + $0x292] sm:$0xff]
      %v1090 = vld [vmem:[%s653 + $0x2a2] sm:$0xff]
      %v1091 = vld [vmem:[%s653 + $0x2aa] sm:$0xff]
      %v1092 = vld [vmem:[%s653 + $0x2ba] sm:$0xff]
      %v1093 = vld [vmem:[%s653 + $0x2c2] sm:$0xff]
      %v1094 = vld [vmem:[%s653 + $0x2d2] sm:$0xff]
      %v1095 = vld [vmem:[%s653 + $0x2da] sm:$0xff]
      %v1096 = vld [vmem:[%s653 + $0x2ea] sm:$0xff]
      %v1097 = vld [vmem:[%s653 + $0x2f2] sm:$0xff]
      %v1098 = vld [vmem:[%s653 + $0x302] sm:$0xff]
      %v1099 = vld [vmem:[%s653 + $0x30a] sm:$0xff]
      %v1100 = vld [vmem:[%s653 + $0x31a] sm:$0xff]
      %v1101 = vld [vmem:[%s653 + $0x322] sm:$0xff]
      %s1102 = scalar_lea.vmem [#allocation2], 48
      %v1103 = vld [vmem:[%s1102] sm:$0xff]
      %v1104 = vld [vmem:[%s1102 + $0x8] sm:$0xff]
      %v1105 = vld [vmem:[%s1102 + $0x18] sm:$0xff]
      %v1106 = vld [vmem:[%s1102 + $0x20] sm:$0xff]
      %v1107 = vld [vmem:[%s1102 + $0x30] sm:$0xff]
      %v1108 = vld [vmem:[%s1102 + $0x38] sm:$0xff]
      %v1109 = vld [vmem:[%s1102 + $0x48] sm:$0xff]
      %v1110 = vld [vmem:[%s1102 + $0x50] sm:$0xff]
      %v1111 = vld [vmem:[%s1102 + $0x60] sm:$0xff]
      %v1112 = vld [vmem:[%s1102 + $0x68] sm:$0xff]
      %v1113 = vld [vmem:[%s1102 + $0x78] sm:$0xff]
      %v1114 = vld [vmem:[%s1102 + $0x80] sm:$0xff]
      %v1115 = vld [vmem:[%s1102 + $0x90] sm:$0xff]
      %v1116 = vld [vmem:[%s1102 + $0x98] sm:$0xff]
      %v1117 = vld [vmem:[%s1102 + $0xa8] sm:$0xff]
      %v1118 = vld [vmem:[%s1102 + $0xb0] sm:$0xff]
      %v1119 = vld [vmem:[%s1102 + $0xc0] sm:$0xff]
      %v1120 = vld [vmem:[%s1102 + $0xc8] sm:$0xff]
      %v1121 = vld [vmem:[%s1102 + $0xd8] sm:$0xff]
      %v1122 = vld [vmem:[%s1102 + $0xe0] sm:$0xff]
      %v1123 = vld [vmem:[%s1102 + $0xf0] sm:$0xff]
      %v1124 = vld [vmem:[%s1102 + $0xf8] sm:$0xff]
      %v1125 = vld [vmem:[%s1102 + $0x108] sm:$0xff]
      %v1126 = vld [vmem:[%s1102 + $0x110] sm:$0xff]
      %v1127 = vld [vmem:[%s1102 + $0x120] sm:$0xff]
      %v1128 = vld [vmem:[%s1102 + $0x128] sm:$0xff]
      %v1129 = vld [vmem:[%s1102 + $0x138] sm:$0xff]
      %v1130 = vld [vmem:[%s1102 + $0x140] sm:$0xff]
      %v1131 = vld [vmem:[%s1102 + $0x150] sm:$0xff]
      %v1132 = vld [vmem:[%s1102 + $0x158] sm:$0xff]
      %v1133 = vld [vmem:[%s1102 + $0x168] sm:$0xff]
      %v1134 = vld [vmem:[%s1102 + $0x170] sm:$0xff]
      %v1135 = vld [vmem:[%s1102 + $0x1b0] sm:$0xff]
      %v1136 = vld [vmem:[%s1102 + $0x1b8] sm:$0xff]
      %v1137 = vld [vmem:[%s1102 + $0x1c8] sm:$0xff]
      %v1138 = vld [vmem:[%s1102 + $0x1d0] sm:$0xff]
      %v1139 = vld [vmem:[%s1102 + $0x1e0] sm:$0xff]
      %v1140 = vld [vmem:[%s1102 + $0x1e8] sm:$0xff]
      %v1141 = vld [vmem:[%s1102 + $0x1f8] sm:$0xff]
      %v1142 = vld [vmem:[%s1102 + $0x200] sm:$0xff]
      %v1143 = vld [vmem:[%s1102 + $0x210] sm:$0xff]
      %v1144 = vld [vmem:[%s1102 + $0x218] sm:$0xff]
      %v1145 = vld [vmem:[%s1102 + $0x228] sm:$0xff]
      %v1146 = vld [vmem:[%s1102 + $0x230] sm:$0xff]
      %v1147 = vld [vmem:[%s1102 + $0x240] sm:$0xff]
      %v1148 = vld [vmem:[%s1102 + $0x248] sm:$0xff]
      %v1149 = vld [vmem:[%s1102 + $0x258] sm:$0xff]
      %v1150 = vld [vmem:[%s1102 + $0x260] sm:$0xff]
      %v1151 = vld [vmem:[%s1102 + $0x270] sm:$0xff]
      %v1152 = vld [vmem:[%s1102 + $0x278] sm:$0xff]
      %v1153 = vld [vmem:[%s1102 + $0x288] sm:$0xff]
      %v1154 = vld [vmem:[%s1102 + $0x290] sm:$0xff]
      %v1155 = vld [vmem:[%s1102 + $0x2a0] sm:$0xff]
      %v1156 = vld [vmem:[%s1102 + $0x2a8] sm:$0xff]
      %v1157 = vld [vmem:[%s1102 + $0x2b8] sm:$0xff]
      %v1158 = vld [vmem:[%s1102 + $0x2c0] sm:$0xff]
      %v1159 = vld [vmem:[%s1102 + $0x2d0] sm:$0xff]
      %v1160 = vld [vmem:[%s1102 + $0x2d8] sm:$0xff]
      %v1161 = vld [vmem:[%s1102 + $0x2e8] sm:$0xff]
      %v1162 = vld [vmem:[%s1102 + $0x2f0] sm:$0xff]
      %v1163 = vld [vmem:[%s1102 + $0x300] sm:$0xff]
      %v1164 = vld [vmem:[%s1102 + $0x308] sm:$0xff]
      %v1165 = vld [vmem:[%s1102 + $0x318] sm:$0xff]
      %v1166 = vld [vmem:[%s1102 + $0x320] sm:$0xff]
      %v1167 = vld [vmem:[%s1102 + $0x1] sm:$0xff]
      %v1168 = vld [vmem:[%s1102 + $0x9] sm:$0xff]
      %v1169 = vld [vmem:[%s1102 + $0x19] sm:$0xff]
      %v1170 = vld [vmem:[%s1102 + $0x21] sm:$0xff]
      %v1171 = vld [vmem:[%s1102 + $0x31] sm:$0xff]
      %v1172 = vld [vmem:[%s1102 + $0x39] sm:$0xff]
      %v1173 = vld [vmem:[%s1102 + $0x49] sm:$0xff]
      %v1174 = vld [vmem:[%s1102 + $0x51] sm:$0xff]
      %v1175 = vld [vmem:[%s1102 + $0x61] sm:$0xff]
      %v1176 = vld [vmem:[%s1102 + $0x69] sm:$0xff]
      %v1177 = vld [vmem:[%s1102 + $0x79] sm:$0xff]
      %v1178 = vld [vmem:[%s1102 + $0x81] sm:$0xff]
      %v1179 = vld [vmem:[%s1102 + $0x91] sm:$0xff]
      %v1180 = vld [vmem:[%s1102 + $0x99] sm:$0xff]
      %v1181 = vld [vmem:[%s1102 + $0xa9] sm:$0xff]
      %v1182 = vld [vmem:[%s1102 + $0xb1] sm:$0xff]
      %v1183 = vld [vmem:[%s1102 + $0xc1] sm:$0xff]
      %v1184 = vld [vmem:[%s1102 + $0xc9] sm:$0xff]
      %v1185 = vld [vmem:[%s1102 + $0xd9] sm:$0xff]
      %v1186 = vld [vmem:[%s1102 + $0xe1] sm:$0xff]
      %v1187 = vld [vmem:[%s1102 + $0xf1] sm:$0xff]
      %v1188 = vld [vmem:[%s1102 + $0xf9] sm:$0xff]
      %v1189 = vld [vmem:[%s1102 + $0x109] sm:$0xff]
      %v1190 = vld [vmem:[%s1102 + $0x111] sm:$0xff]
      %v1191 = vld [vmem:[%s1102 + $0x121] sm:$0xff]
      %v1192 = vld [vmem:[%s1102 + $0x129] sm:$0xff]
      %v1193 = vld [vmem:[%s1102 + $0x139] sm:$0xff]
      %v1194 = vld [vmem:[%s1102 + $0x141] sm:$0xff]
      %v1195 = vld [vmem:[%s1102 + $0x151] sm:$0xff]
      %v1196 = vld [vmem:[%s1102 + $0x159] sm:$0xff]
      %v1197 = vld [vmem:[%s1102 + $0x169] sm:$0xff]
      %v1198 = vld [vmem:[%s1102 + $0x171] sm:$0xff]
      %v1199 = vld [vmem:[%s1102 + $0x1b1] sm:$0xff]
      %v1200 = vld [vmem:[%s1102 + $0x1b9] sm:$0xff]
      %v1201 = vld [vmem:[%s1102 + $0x1c9] sm:$0xff]
      %v1202 = vld [vmem:[%s1102 + $0x1d1] sm:$0xff]
      %v1203 = vld [vmem:[%s1102 + $0x1e1] sm:$0xff]
      %v1204 = vld [vmem:[%s1102 + $0x1e9] sm:$0xff]
      %v1205 = vld [vmem:[%s1102 + $0x1f9] sm:$0xff]
      %v1206 = vld [vmem:[%s1102 + $0x201] sm:$0xff]
      %v1207 = vld [vmem:[%s1102 + $0x211] sm:$0xff]
      %v1208 = vld [vmem:[%s1102 + $0x219] sm:$0xff]
      %v1209 = vld [vmem:[%s1102 + $0x229] sm:$0xff]
      %v1210 = vld [vmem:[%s1102 + $0x231] sm:$0xff]
      %v1211 = vld [vmem:[%s1102 + $0x241] sm:$0xff]
      %v1212 = vld [vmem:[%s1102 + $0x249] sm:$0xff]
      %v1213 = vld [vmem:[%s1102 + $0x259] sm:$0xff]
      %v1214 = vld [vmem:[%s1102 + $0x261] sm:$0xff]
      %v1215 = vld [vmem:[%s1102 + $0x271] sm:$0xff]
      %v1216 = vld [vmem:[%s1102 + $0x279] sm:$0xff]
      %v1217 = vld [vmem:[%s1102 + $0x289] sm:$0xff]
      %v1218 = vld [vmem:[%s1102 + $0x291] sm:$0xff]
      %v1219 = vld [vmem:[%s1102 + $0x2a1] sm:$0xff]
      %v1220 = vld [vmem:[%s1102 + $0x2a9] sm:$0xff]
      %v1221 = vld [vmem:[%s1102 + $0x2b9] sm:$0xff]
      %v1222 = vld [vmem:[%s1102 + $0x2c1] sm:$0xff]
      %v1223 = vld [vmem:[%s1102 + $0x2d1] sm:$0xff]
      %v1224 = vld [vmem:[%s1102 + $0x2d9] sm:$0xff]
      %v1225 = vld [vmem:[%s1102 + $0x2e9] sm:$0xff]
      %v1226 = vld [vmem:[%s1102 + $0x2f1] sm:$0xff]
      %v1227 = vld [vmem:[%s1102 + $0x301] sm:$0xff]
      %v1228 = vld [vmem:[%s1102 + $0x309] sm:$0xff]
      %v1229 = vld [vmem:[%s1102 + $0x319] sm:$0xff]
      %v1230 = vld [vmem:[%s1102 + $0x321] sm:$0xff]
      %v1231 = vld [vmem:[%s1102 + $0x2] sm:$0xff]
      %v1232 = vld [vmem:[%s1102 + $0xa] sm:$0xff]
      %v1233 = vld [vmem:[%s1102 + $0x1a] sm:$0xff]
      %v1234 = vld [vmem:[%s1102 + $0x22] sm:$0xff]
      %v1235 = vld [vmem:[%s1102 + $0x32] sm:$0xff]
      %v1236 = vld [vmem:[%s1102 + $0x3a] sm:$0xff]
      %v1237 = vld [vmem:[%s1102 + $0x4a] sm:$0xff]
      %v1238 = vld [vmem:[%s1102 + $0x52] sm:$0xff]
      %v1239 = vld [vmem:[%s1102 + $0x62] sm:$0xff]
      %v1240 = vld [vmem:[%s1102 + $0x6a] sm:$0xff]
      %v1241 = vld [vmem:[%s1102 + $0x7a] sm:$0xff]
      %v1242 = vld [vmem:[%s1102 + $0x82] sm:$0xff]
      %v1243 = vld [vmem:[%s1102 + $0x92] sm:$0xff]
      %v1244 = vld [vmem:[%s1102 + $0x9a] sm:$0xff]
      %v1245 = vld [vmem:[%s1102 + $0xaa] sm:$0xff]
      %v1246 = vld [vmem:[%s1102 + $0xb2] sm:$0xff]
      %v1247 = vld [vmem:[%s1102 + $0xc2] sm:$0xff]
      %v1248 = vld [vmem:[%s1102 + $0xca] sm:$0xff]
      %v1249 = vld [vmem:[%s1102 + $0xda] sm:$0xff]
      %v1250 = vld [vmem:[%s1102 + $0xe2] sm:$0xff]
      %v1251 = vld [vmem:[%s1102 + $0xf2] sm:$0xff]
      %v1252 = vld [vmem:[%s1102 + $0xfa] sm:$0xff]
      %v1253 = vld [vmem:[%s1102 + $0x10a] sm:$0xff]
      %v1254 = vld [vmem:[%s1102 + $0x112] sm:$0xff]
      %v1255 = vld [vmem:[%s1102 + $0x122] sm:$0xff]
      %v1256 = vld [vmem:[%s1102 + $0x12a] sm:$0xff]
      %v1257 = vld [vmem:[%s1102 + $0x13a] sm:$0xff]
      %v1258 = vld [vmem:[%s1102 + $0x142] sm:$0xff]
      %v1259 = vld [vmem:[%s1102 + $0x152] sm:$0xff]
      %v1260 = vld [vmem:[%s1102 + $0x15a] sm:$0xff]
      %v1261 = vld [vmem:[%s1102 + $0x16a] sm:$0xff]
      %v1262 = vld [vmem:[%s1102 + $0x172] sm:$0xff]
      %v1263 = vld [vmem:[%s1102 + $0x1b2] sm:$0xff]
      %v1264 = vld [vmem:[%s1102 + $0x1ba] sm:$0xff]
      %v1265 = vld [vmem:[%s1102 + $0x1ca] sm:$0xff]
      %v1266 = vld [vmem:[%s1102 + $0x1d2] sm:$0xff]
      %v1267 = vld [vmem:[%s1102 + $0x1e2] sm:$0xff]
      %v1268 = vld [vmem:[%s1102 + $0x1ea] sm:$0xff]
      %v1269 = vld [vmem:[%s1102 + $0x1fa] sm:$0xff]
      %v1270 = vld [vmem:[%s1102 + $0x202] sm:$0xff]
      %v1271 = vld [vmem:[%s1102 + $0x212] sm:$0xff]
      %v1272 = vld [vmem:[%s1102 + $0x21a] sm:$0xff]
      %v1273 = vld [vmem:[%s1102 + $0x22a] sm:$0xff]
      %v1274 = vld [vmem:[%s1102 + $0x232] sm:$0xff]
      %v1275 = vld [vmem:[%s1102 + $0x242] sm:$0xff]
      %v1276 = vld [vmem:[%s1102 + $0x24a] sm:$0xff]
      %v1277 = vld [vmem:[%s1102 + $0x25a] sm:$0xff]
      %v1278 = vld [vmem:[%s1102 + $0x262] sm:$0xff]
      %v1279 = vld [vmem:[%s1102 + $0x272] sm:$0xff]
      %v1280 = vld [vmem:[%s1102 + $0x27a] sm:$0xff]
      %v1281 = vld [vmem:[%s1102 + $0x28a] sm:$0xff]
      %v1282 = vld [vmem:[%s1102 + $0x292] sm:$0xff]
      %v1283 = vld [vmem:[%s1102 + $0x2a2] sm:$0xff]
      %v1284 = vld [vmem:[%s1102 + $0x2aa] sm:$0xff]
      %v1285 = vld [vmem:[%s1102 + $0x2ba] sm:$0xff]
      %v1286 = vld [vmem:[%s1102 + $0x2c2] sm:$0xff]
      %v1287 = vld [vmem:[%s1102 + $0x2d2] sm:$0xff]
      %v1288 = vld [vmem:[%s1102 + $0x2da] sm:$0xff]
      %v1289 = vld [vmem:[%s1102 + $0x2ea] sm:$0xff]
      %v1290 = vld [vmem:[%s1102 + $0x2f2] sm:$0xff]
      %v1291 = vld [vmem:[%s1102 + $0x302] sm:$0xff]
      %v1292 = vld [vmem:[%s1102 + $0x30a] sm:$0xff]
      %v1293 = vld [vmem:[%s1102 + $0x31a] sm:$0xff]
      %v1294 = vld [vmem:[%s1102 + $0x322] sm:$0xff]
      %1359 = vrot.lane.b32.xlu0 %v782, 3
      %v1360 = vpop.permute.xlu0 %1359
      %1361 = vrot.lane.b32.xlu0 %v783, 3
      %v1362 = vpop.permute.xlu0 %1361
      %1363 = vrot.lane.b32.xlu0 %v784, 3
      %v1364 = vpop.permute.xlu0 %1363
      %1365 = vrot.lane.b32.xlu0 %v785, 3
      %v1366 = vpop.permute.xlu0 %1365
      %1367 = vrot.lane.b32.xlu0 %v786, 3
      %v1368 = vpop.permute.xlu0 %1367
      %1369 = vrot.lane.b32.xlu0 %v787, 3
      %v1370 = vpop.permute.xlu0 %1369
      %1371 = vrot.lane.b32.xlu0 %v788, 3
      %v1372 = vpop.permute.xlu0 %1371
      %1373 = vrot.lane.b32.xlu0 %v789, 3
      %v1374 = vpop.permute.xlu0 %1373
      %1375 = vrot.lane.b32.xlu0 %v790, 3
      %v1376 = vpop.permute.xlu0 %1375
      %1377 = vrot.lane.b32.xlu0 %v791, 3
      %v1378 = vpop.permute.xlu0 %1377
      %1379 = vrot.lane.b32.xlu0 %v792, 3
      %v1380 = vpop.permute.xlu0 %1379
      %1381 = vrot.lane.b32.xlu0 %v793, 3
      %v1382 = vpop.permute.xlu0 %1381
      %1383 = vrot.lane.b32.xlu0 %v794, 3
      %v1384 = vpop.permute.xlu0 %1383
      %1385 = vrot.lane.b32.xlu0 %v795, 3
      %v1386 = vpop.permute.xlu0 %1385
      %1387 = vrot.lane.b32.xlu0 %v796, 3
      %v1388 = vpop.permute.xlu0 %1387
      %1389 = vrot.lane.b32.xlu0 %v797, 3
      %v1390 = vpop.permute.xlu0 %1389
      %1391 = vrot.lane.b32.xlu0 %v798, 3
      %v1392 = vpop.permute.xlu0 %1391
      %1393 = vrot.lane.b32.xlu0 %v799, 3
      %v1394 = vpop.permute.xlu0 %1393
      %1395 = vrot.lane.b32.xlu0 %v800, 3
      %v1396 = vpop.permute.xlu0 %1395
      %1397 = vrot.lane.b32.xlu0 %v801, 3
      %v1398 = vpop.permute.xlu0 %1397
      %1399 = vrot.lane.b32.xlu0 %v802, 3
      %v1400 = vpop.permute.xlu0 %1399
      %1401 = vrot.lane.b32.xlu0 %v803, 3
      %v1402 = vpop.permute.xlu0 %1401
      %1403 = vrot.lane.b32.xlu0 %v804, 3
      %v1404 = vpop.permute.xlu0 %1403
      %1405 = vrot.lane.b32.xlu0 %v805, 3
      %v1406 = vpop.permute.xlu0 %1405
      %1407 = vrot.lane.b32.xlu0 %v806, 3
      %v1408 = vpop.permute.xlu0 %1407
      %1409 = vrot.lane.b32.xlu0 %v807, 3
      %v1410 = vpop.permute.xlu0 %1409
      %1411 = vrot.lane.b32.xlu0 %v808, 3
      %v1412 = vpop.permute.xlu0 %1411
      %1413 = vrot.lane.b32.xlu0 %v809, 3
      %v1414 = vpop.permute.xlu0 %1413
      %1415 = vrot.lane.b32.xlu0 %v810, 3
      %v1416 = vpop.permute.xlu0 %1415
      %1417 = vrot.lane.b32.xlu0 %v811, 3
      %v1418 = vpop.permute.xlu0 %1417
      %1419 = vrot.lane.b32.xlu0 %v812, 3
      %v1420 = vpop.permute.xlu0 %1419
      %1421 = vrot.lane.b32.xlu0 %v813, 3
      %v1422 = vpop.permute.xlu0 %1421
      %1423 = vrot.lane.b32.xlu0 %v814, 3
      %v1424 = vpop.permute.xlu0 %1423
      %1425 = vrot.lane.b32.xlu0 %v815, 3
      %v1426 = vpop.permute.xlu0 %1425
      %1427 = vrot.lane.b32.xlu0 %v816, 3
      %v1428 = vpop.permute.xlu0 %1427
      %1429 = vrot.lane.b32.xlu0 %v817, 3
      %v1430 = vpop.permute.xlu0 %1429
      %1431 = vrot.lane.b32.xlu0 %v818, 3
      %v1432 = vpop.permute.xlu0 %1431
      %1433 = vrot.lane.b32.xlu0 %v819, 3
      %v1434 = vpop.permute.xlu0 %1433
      %1435 = vrot.lane.b32.xlu0 %v820, 3
      %v1436 = vpop.permute.xlu0 %1435
      %1437 = vrot.lane.b32.xlu0 %v821, 3
      %v1438 = vpop.permute.xlu0 %1437
      %1439 = vrot.lane.b32.xlu0 %v822, 3
      %v1440 = vpop.permute.xlu0 %1439
      %1441 = vrot.lane.b32.xlu0 %v823, 3
      %v1442 = vpop.permute.xlu0 %1441
      %1443 = vrot.lane.b32.xlu0 %v824, 3
      %v1444 = vpop.permute.xlu0 %1443
      %1445 = vrot.lane.b32.xlu0 %v825, 3
      %v1446 = vpop.permute.xlu0 %1445
      %1447 = vrot.lane.b32.xlu0 %v826, 3
      %v1448 = vpop.permute.xlu0 %1447
      %1449 = vrot.lane.b32.xlu0 %v827, 3
      %v1450 = vpop.permute.xlu0 %1449
      %1451 = vrot.lane.b32.xlu0 %v828, 3
      %v1452 = vpop.permute.xlu0 %1451
      %1453 = vrot.lane.b32.xlu0 %v829, 3
      %v1454 = vpop.permute.xlu0 %1453
      %1455 = vrot.lane.b32.xlu0 %v830, 3
      %v1456 = vpop.permute.xlu0 %1455
      %1457 = vrot.lane.b32.xlu0 %v831, 3
      %v1458 = vpop.permute.xlu0 %1457
      %1459 = vrot.lane.b32.xlu0 %v832, 3
      %v1460 = vpop.permute.xlu0 %1459
      %1461 = vrot.lane.b32.xlu0 %v833, 3
      %v1462 = vpop.permute.xlu0 %1461
      %1463 = vrot.lane.b32.xlu0 %v834, 3
      %v1464 = vpop.permute.xlu0 %1463
      %1465 = vrot.lane.b32.xlu0 %v835, 3
      %v1466 = vpop.permute.xlu0 %1465
      %1467 = vrot.lane.b32.xlu0 %v836, 3
      %v1468 = vpop.permute.xlu0 %1467
      %1469 = vrot.lane.b32.xlu0 %v837, 3
      %v1470 = vpop.permute.xlu0 %1469
      %1471 = vrot.lane.b32.xlu0 %v838, 3
      %v1472 = vpop.permute.xlu0 %1471
      %1473 = vrot.lane.b32.xlu0 %v839, 3
      %v1474 = vpop.permute.xlu0 %1473
      %1475 = vrot.lane.b32.xlu0 %v840, 3
      %v1476 = vpop.permute.xlu0 %1475
      %1477 = vrot.lane.b32.xlu0 %v841, 3
      %v1478 = vpop.permute.xlu0 %1477
      %1479 = vrot.lane.b32.xlu0 %v842, 3
      %v1480 = vpop.permute.xlu0 %1479
      %1481 = vrot.lane.b32.xlu0 %v843, 3
      %v1482 = vpop.permute.xlu0 %1481
      %1483 = vrot.lane.b32.xlu0 %v844, 3
      %v1484 = vpop.permute.xlu0 %1483
      %1485 = vrot.lane.b32.xlu0 %v845, 3
      %v1486 = vpop.permute.xlu0 %1485
      %1615 = vrot.lane.b32.xlu0 %v846, 6
      %v1616 = vpop.permute.xlu0 %1615
      %1617 = vrot.lane.b32.xlu0 %v847, 6
      %v1618 = vpop.permute.xlu0 %1617
      %1619 = vrot.lane.b32.xlu0 %v848, 6
      %v1620 = vpop.permute.xlu0 %1619
      %1621 = vrot.lane.b32.xlu0 %v849, 6
      %v1622 = vpop.permute.xlu0 %1621
      %1623 = vrot.lane.b32.xlu0 %v850, 6
      %v1624 = vpop.permute.xlu0 %1623
      %1625 = vrot.lane.b32.xlu0 %v851, 6
      %v1626 = vpop.permute.xlu0 %1625
      %1627 = vrot.lane.b32.xlu0 %v852, 6
      %v1628 = vpop.permute.xlu0 %1627
      %1629 = vrot.lane.b32.xlu0 %v853, 6
      %v1630 = vpop.permute.xlu0 %1629
      %1631 = vrot.lane.b32.xlu0 %v854, 6
      %v1632 = vpop.permute.xlu0 %1631
      %1633 = vrot.lane.b32.xlu0 %v855, 6
      %v1634 = vpop.permute.xlu0 %1633
      %1635 = vrot.lane.b32.xlu0 %v856, 6
      %v1636 = vpop.permute.xlu0 %1635
      %1637 = vrot.lane.b32.xlu0 %v857, 6
      %v1638 = vpop.permute.xlu0 %1637
      %1639 = vrot.lane.b32.xlu0 %v858, 6
      %v1640 = vpop.permute.xlu0 %1639
      %1641 = vrot.lane.b32.xlu0 %v859, 6
      %v1642 = vpop.permute.xlu0 %1641
      %1643 = vrot.lane.b32.xlu0 %v860, 6
      %v1644 = vpop.permute.xlu0 %1643
      %1645 = vrot.lane.b32.xlu0 %v861, 6
      %v1646 = vpop.permute.xlu0 %1645
      %1647 = vrot.lane.b32.xlu0 %v862, 6
      %v1648 = vpop.permute.xlu0 %1647
      %1649 = vrot.lane.b32.xlu0 %v863, 6
      %v1650 = vpop.permute.xlu0 %1649
      %1651 = vrot.lane.b32.xlu0 %v864, 6
      %v1652 = vpop.permute.xlu0 %1651
      %1653 = vrot.lane.b32.xlu0 %v865, 6
      %v1654 = vpop.permute.xlu0 %1653
      %1655 = vrot.lane.b32.xlu0 %v866, 6
      %v1656 = vpop.permute.xlu0 %1655
      %1657 = vrot.lane.b32.xlu0 %v867, 6
      %v1658 = vpop.permute.xlu0 %1657
      %1659 = vrot.lane.b32.xlu0 %v868, 6
      %v1660 = vpop.permute.xlu0 %1659
      %1661 = vrot.lane.b32.xlu0 %v869, 6
      %v1662 = vpop.permute.xlu0 %1661
      %1663 = vrot.lane.b32.xlu0 %v870, 6
      %v1664 = vpop.permute.xlu0 %1663
      %1665 = vrot.lane.b32.xlu0 %v871, 6
      %v1666 = vpop.permute.xlu0 %1665
      %1667 = vrot.lane.b32.xlu0 %v872, 6
      %v1668 = vpop.permute.xlu0 %1667
      %1669 = vrot.lane.b32.xlu0 %v873, 6
      %v1670 = vpop.permute.xlu0 %1669
      %1671 = vrot.lane.b32.xlu0 %v874, 6
      %v1672 = vpop.permute.xlu0 %1671
      %1673 = vrot.lane.b32.xlu0 %v875, 6
      %v1674 = vpop.permute.xlu0 %1673
      %1675 = vrot.lane.b32.xlu0 %v876, 6
      %v1676 = vpop.permute.xlu0 %1675
      %1677 = vrot.lane.b32.xlu0 %v877, 6
      %v1678 = vpop.permute.xlu0 %1677
      %1679 = vrot.lane.b32.xlu0 %v878, 6
      %v1680 = vpop.permute.xlu0 %1679
      %1681 = vrot.lane.b32.xlu0 %v879, 6
      %v1682 = vpop.permute.xlu0 %1681
      %1683 = vrot.lane.b32.xlu0 %v880, 6
      %v1684 = vpop.permute.xlu0 %1683
      %1685 = vrot.lane.b32.xlu0 %v881, 6
      %v1686 = vpop.permute.xlu0 %1685
      %1687 = vrot.lane.b32.xlu0 %v882, 6
      %v1688 = vpop.permute.xlu0 %1687
      %1689 = vrot.lane.b32.xlu0 %v883, 6
      %v1690 = vpop.permute.xlu0 %1689
      %1691 = vrot.lane.b32.xlu0 %v884, 6
      %v1692 = vpop.permute.xlu0 %1691
      %1693 = vrot.lane.b32.xlu0 %v885, 6
      %v1694 = vpop.permute.xlu0 %1693
      %1695 = vrot.lane.b32.xlu0 %v886, 6
      %v1696 = vpop.permute.xlu0 %1695
      %1697 = vrot.lane.b32.xlu0 %v887, 6
      %v1698 = vpop.permute.xlu0 %1697
      %1699 = vrot.lane.b32.xlu0 %v888, 6
      %v1700 = vpop.permute.xlu0 %1699
      %1701 = vrot.lane.b32.xlu0 %v889, 6
      %v1702 = vpop.permute.xlu0 %1701
      %1703 = vrot.lane.b32.xlu0 %v890, 6
      %v1704 = vpop.permute.xlu0 %1703
      %1705 = vrot.lane.b32.xlu0 %v891, 6
      %v1706 = vpop.permute.xlu0 %1705
      %1707 = vrot.lane.b32.xlu0 %v892, 6
      %v1708 = vpop.permute.xlu0 %1707
      %1709 = vrot.lane.b32.xlu0 %v893, 6
      %v1710 = vpop.permute.xlu0 %1709
      %1711 = vrot.lane.b32.xlu0 %v894, 6
      %v1712 = vpop.permute.xlu0 %1711
      %1713 = vrot.lane.b32.xlu0 %v895, 6
      %v1714 = vpop.permute.xlu0 %1713
      %1715 = vrot.lane.b32.xlu0 %v896, 6
      %v1716 = vpop.permute.xlu0 %1715
      %1717 = vrot.lane.b32.xlu0 %v897, 6
      %v1718 = vpop.permute.xlu0 %1717
      %1719 = vrot.lane.b32.xlu0 %v898, 6
      %v1720 = vpop.permute.xlu0 %1719
      %1721 = vrot.lane.b32.xlu0 %v899, 6
      %v1722 = vpop.permute.xlu0 %1721
      %1723 = vrot.lane.b32.xlu0 %v900, 6
      %v1724 = vpop.permute.xlu0 %1723
      %1725 = vrot.lane.b32.xlu0 %v901, 6
      %v1726 = vpop.permute.xlu0 %1725
      %1727 = vrot.lane.b32.xlu0 %v902, 6
      %v1728 = vpop.permute.xlu0 %1727
      %1729 = vrot.lane.b32.xlu0 %v903, 6
      %v1730 = vpop.permute.xlu0 %1729
      %1731 = vrot.lane.b32.xlu0 %v904, 6
      %v1732 = vpop.permute.xlu0 %1731
      %1733 = vrot.lane.b32.xlu0 %v905, 6
      %v1734 = vpop.permute.xlu0 %1733
      %1735 = vrot.lane.b32.xlu0 %v906, 6
      %v1736 = vpop.permute.xlu0 %1735
      %1737 = vrot.lane.b32.xlu0 %v907, 6
      %v1738 = vpop.permute.xlu0 %1737
      %1739 = vrot.lane.b32.xlu0 %v908, 6
      %v1740 = vpop.permute.xlu0 %1739
      %1741 = vrot.lane.b32.xlu0 %v909, 6
      %v1742 = vpop.permute.xlu0 %1741
      %1871 = vrot.lane.b32.xlu0 %v910, 9
      %v1872 = vpop.permute.xlu0 %1871
      %1873 = vrot.lane.b32.xlu0 %v911, 9
      %v1874 = vpop.permute.xlu0 %1873
      %1875 = vrot.lane.b32.xlu0 %v912, 9
      %v1876 = vpop.permute.xlu0 %1875
      %1877 = vrot.lane.b32.xlu0 %v913, 9
      %v1878 = vpop.permute.xlu0 %1877
      %1879 = vrot.lane.b32.xlu0 %v914, 9
      %v1880 = vpop.permute.xlu0 %1879
      %1881 = vrot.lane.b32.xlu0 %v915, 9
      %v1882 = vpop.permute.xlu0 %1881
      %1883 = vrot.lane.b32.xlu0 %v916, 9
      %v1884 = vpop.permute.xlu0 %1883
      %1885 = vrot.lane.b32.xlu0 %v917, 9
      %v1886 = vpop.permute.xlu0 %1885
      %1887 = vrot.lane.b32.xlu0 %v918, 9
      %v1888 = vpop.permute.xlu0 %1887
      %1889 = vrot.lane.b32.xlu0 %v919, 9
      %v1890 = vpop.permute.xlu0 %1889
      %1891 = vrot.lane.b32.xlu0 %v920, 9
      %v1892 = vpop.permute.xlu0 %1891
      %1893 = vrot.lane.b32.xlu0 %v921, 9
      %v1894 = vpop.permute.xlu0 %1893
      %1895 = vrot.lane.b32.xlu0 %v922, 9
      %v1896 = vpop.permute.xlu0 %1895
      %1897 = vrot.lane.b32.xlu0 %v923, 9
      %v1898 = vpop.permute.xlu0 %1897
      %1899 = vrot.lane.b32.xlu0 %v924, 9
      %v1900 = vpop.permute.xlu0 %1899
      %1901 = vrot.lane.b32.xlu0 %v925, 9
      %v1902 = vpop.permute.xlu0 %1901
      %1903 = vrot.lane.b32.xlu0 %v926, 9
      %v1904 = vpop.permute.xlu0 %1903
      %1905 = vrot.lane.b32.xlu0 %v927, 9
      %v1906 = vpop.permute.xlu0 %1905
      %1907 = vrot.lane.b32.xlu0 %v928, 9
      %v1908 = vpop.permute.xlu0 %1907
      %1909 = vrot.lane.b32.xlu0 %v929, 9
      %v1910 = vpop.permute.xlu0 %1909
      %1911 = vrot.lane.b32.xlu0 %v930, 9
      %v1912 = vpop.permute.xlu0 %1911
      %1913 = vrot.lane.b32.xlu0 %v931, 9
      %v1914 = vpop.permute.xlu0 %1913
      %1915 = vrot.lane.b32.xlu0 %v932, 9
      %v1916 = vpop.permute.xlu0 %1915
      %1917 = vrot.lane.b32.xlu0 %v933, 9
      %v1918 = vpop.permute.xlu0 %1917
      %1919 = vrot.lane.b32.xlu0 %v934, 9
      %v1920 = vpop.permute.xlu0 %1919
      %1921 = vrot.lane.b32.xlu0 %v935, 9
      %v1922 = vpop.permute.xlu0 %1921
      %1923 = vrot.lane.b32.xlu0 %v936, 9
      %v1924 = vpop.permute.xlu0 %1923
      %1925 = vrot.lane.b32.xlu0 %v937, 9
      %v1926 = vpop.permute.xlu0 %1925
      %1927 = vrot.lane.b32.xlu0 %v938, 9
      %v1928 = vpop.permute.xlu0 %1927
      %1929 = vrot.lane.b32.xlu0 %v939, 9
      %v1930 = vpop.permute.xlu0 %1929
      %1931 = vrot.lane.b32.xlu0 %v940, 9
      %v1932 = vpop.permute.xlu0 %1931
      %1933 = vrot.lane.b32.xlu0 %v941, 9
      %v1934 = vpop.permute.xlu0 %1933
      %1935 = vrot.lane.b32.xlu0 %v942, 9
      %v1936 = vpop.permute.xlu0 %1935
      %1937 = vrot.lane.b32.xlu0 %v943, 9
      %v1938 = vpop.permute.xlu0 %1937
      %1939 = vrot.lane.b32.xlu0 %v944, 9
      %v1940 = vpop.permute.xlu0 %1939
      %1941 = vrot.lane.b32.xlu0 %v945, 9
      %v1942 = vpop.permute.xlu0 %1941
      %1943 = vrot.lane.b32.xlu0 %v946, 9
      %v1944 = vpop.permute.xlu0 %1943
      %1945 = vrot.lane.b32.xlu0 %v947, 9
      %v1946 = vpop.permute.xlu0 %1945
      %1947 = vrot.lane.b32.xlu0 %v948, 9
      %v1948 = vpop.permute.xlu0 %1947
      %1949 = vrot.lane.b32.xlu0 %v949, 9
      %v1950 = vpop.permute.xlu0 %1949
      %1951 = vrot.lane.b32.xlu0 %v950, 9
      %v1952 = vpop.permute.xlu0 %1951
      %1953 = vrot.lane.b32.xlu0 %v951, 9
      %v1954 = vpop.permute.xlu0 %1953
      %1955 = vrot.lane.b32.xlu0 %v952, 9
      %v1956 = vpop.permute.xlu0 %1955
      %1957 = vrot.lane.b32.xlu0 %v953, 9
      %v1958 = vpop.permute.xlu0 %1957
      %1959 = vrot.lane.b32.xlu0 %v954, 9
      %v1960 = vpop.permute.xlu0 %1959
      %1961 = vrot.lane.b32.xlu0 %v955, 9
      %v1962 = vpop.permute.xlu0 %1961
      %1963 = vrot.lane.b32.xlu0 %v956, 9
      %v1964 = vpop.permute.xlu0 %1963
      %1965 = vrot.lane.b32.xlu0 %v957, 9
      %v1966 = vpop.permute.xlu0 %1965
      %1967 = vrot.lane.b32.xlu0 %v958, 9
      %v1968 = vpop.permute.xlu0 %1967
      %1969 = vrot.lane.b32.xlu0 %v959, 9
      %v1970 = vpop.permute.xlu0 %1969
      %1971 = vrot.lane.b32.xlu0 %v960, 9
      %v1972 = vpop.permute.xlu0 %1971
      %1973 = vrot.lane.b32.xlu0 %v961, 9
      %v1974 = vpop.permute.xlu0 %1973
      %1975 = vrot.lane.b32.xlu0 %v962, 9
      %v1976 = vpop.permute.xlu0 %1975
      %1977 = vrot.lane.b32.xlu0 %v963, 9
      %v1978 = vpop.permute.xlu0 %1977
      %1979 = vrot.lane.b32.xlu0 %v964, 9
      %v1980 = vpop.permute.xlu0 %1979
      %1981 = vrot.lane.b32.xlu0 %v965, 9
      %v1982 = vpop.permute.xlu0 %1981
      %1983 = vrot.lane.b32.xlu0 %v966, 9
      %v1984 = vpop.permute.xlu0 %1983
      %1985 = vrot.lane.b32.xlu0 %v967, 9
      %v1986 = vpop.permute.xlu0 %1985
      %1987 = vrot.lane.b32.xlu0 %v968, 9
      %v1988 = vpop.permute.xlu0 %1987
      %1989 = vrot.lane.b32.xlu0 %v969, 9
      %v1990 = vpop.permute.xlu0 %1989
      %1991 = vrot.lane.b32.xlu0 %v970, 9
      %v1992 = vpop.permute.xlu0 %1991
      %1993 = vrot.lane.b32.xlu0 %v971, 9
      %v1994 = vpop.permute.xlu0 %1993
      %1995 = vrot.lane.b32.xlu0 %v972, 9
      %v1996 = vpop.permute.xlu0 %1995
      %1997 = vrot.lane.b32.xlu0 %v973, 9
      %v1998 = vpop.permute.xlu0 %1997
      %2127 = vrot.lane.b32.xlu0 %v974, 12
      %v2128 = vpop.permute.xlu0 %2127
      %2129 = vrot.lane.b32.xlu0 %v975, 12
      %v2130 = vpop.permute.xlu0 %2129
      %2131 = vrot.lane.b32.xlu0 %v976, 12
      %v2132 = vpop.permute.xlu0 %2131
      %2133 = vrot.lane.b32.xlu0 %v977, 12
      %v2134 = vpop.permute.xlu0 %2133
      %2135 = vrot.lane.b32.xlu0 %v978, 12
      %v2136 = vpop.permute.xlu0 %2135
      %2137 = vrot.lane.b32.xlu0 %v979, 12
      %v2138 = vpop.permute.xlu0 %2137
      %2139 = vrot.lane.b32.xlu0 %v980, 12
      %v2140 = vpop.permute.xlu0 %2139
      %2141 = vrot.lane.b32.xlu0 %v981, 12
      %v2142 = vpop.permute.xlu0 %2141
      %2143 = vrot.lane.b32.xlu0 %v982, 12
      %v2144 = vpop.permute.xlu0 %2143
      %2145 = vrot.lane.b32.xlu0 %v983, 12
      %v2146 = vpop.permute.xlu0 %2145
      %2147 = vrot.lane.b32.xlu0 %v984, 12
      %v2148 = vpop.permute.xlu0 %2147
      %2149 = vrot.lane.b32.xlu0 %v985, 12
      %v2150 = vpop.permute.xlu0 %2149
      %2151 = vrot.lane.b32.xlu0 %v986, 12
      %v2152 = vpop.permute.xlu0 %2151
      %2153 = vrot.lane.b32.xlu0 %v987, 12
      %v2154 = vpop.permute.xlu0 %2153
      %2155 = vrot.lane.b32.xlu0 %v988, 12
      %v2156 = vpop.permute.xlu0 %2155
      %2157 = vrot.lane.b32.xlu0 %v989, 12
      %v2158 = vpop.permute.xlu0 %2157
      %2159 = vrot.lane.b32.xlu0 %v990, 12
      %v2160 = vpop.permute.xlu0 %2159
      %2161 = vrot.lane.b32.xlu0 %v991, 12
      %v2162 = vpop.permute.xlu0 %2161
      %2163 = vrot.lane.b32.xlu0 %v992, 12
      %v2164 = vpop.permute.xlu0 %2163
      %2165 = vrot.lane.b32.xlu0 %v993, 12
      %v2166 = vpop.permute.xlu0 %2165
      %2167 = vrot.lane.b32.xlu0 %v994, 12
      %v2168 = vpop.permute.xlu0 %2167
      %2169 = vrot.lane.b32.xlu0 %v995, 12
      %v2170 = vpop.permute.xlu0 %2169
      %2171 = vrot.lane.b32.xlu0 %v996, 12
      %v2172 = vpop.permute.xlu0 %2171
      %2173 = vrot.lane.b32.xlu0 %v997, 12
      %v2174 = vpop.permute.xlu0 %2173
      %2175 = vrot.lane.b32.xlu0 %v998, 12
      %v2176 = vpop.permute.xlu0 %2175
      %2177 = vrot.lane.b32.xlu0 %v999, 12
      %v2178 = vpop.permute.xlu0 %2177
      %2179 = vrot.lane.b32.xlu0 %v1000, 12
      %v2180 = vpop.permute.xlu0 %2179
      %2181 = vrot.lane.b32.xlu0 %v1001, 12
      %v2182 = vpop.permute.xlu0 %2181
      %2183 = vrot.lane.b32.xlu0 %v1002, 12
      %v2184 = vpop.permute.xlu0 %2183
      %2185 = vrot.lane.b32.xlu0 %v1003, 12
      %v2186 = vpop.permute.xlu0 %2185
      %2187 = vrot.lane.b32.xlu0 %v1004, 12
      %v2188 = vpop.permute.xlu0 %2187
      %2189 = vrot.lane.b32.xlu0 %v1005, 12
      %v2190 = vpop.permute.xlu0 %2189
      %2191 = vrot.lane.b32.xlu0 %v1006, 12
      %v2192 = vpop.permute.xlu0 %2191
      %2193 = vrot.lane.b32.xlu0 %v1007, 12
      %v2194 = vpop.permute.xlu0 %2193
      %2195 = vrot.lane.b32.xlu0 %v1008, 12
      %v2196 = vpop.permute.xlu0 %2195
      %2197 = vrot.lane.b32.xlu0 %v1009, 12
      %v2198 = vpop.permute.xlu0 %2197
      %2199 = vrot.lane.b32.xlu0 %v1010, 12
      %v2200 = vpop.permute.xlu0 %2199
      %2201 = vrot.lane.b32.xlu0 %v1011, 12
      %v2202 = vpop.permute.xlu0 %2201
      %2203 = vrot.lane.b32.xlu0 %v1012, 12
      %v2204 = vpop.permute.xlu0 %2203
      %2205 = vrot.lane.b32.xlu0 %v1013, 12
      %v2206 = vpop.permute.xlu0 %2205
      %2207 = vrot.lane.b32.xlu0 %v1014, 12
      %v2208 = vpop.permute.xlu0 %2207
      %2209 = vrot.lane.b32.xlu0 %v1015, 12
      %v2210 = vpop.permute.xlu0 %2209
      %2211 = vrot.lane.b32.xlu0 %v1016, 12
      %v2212 = vpop.permute.xlu0 %2211
      %2213 = vrot.lane.b32.xlu0 %v1017, 12
      %v2214 = vpop.permute.xlu0 %2213
      %2215 = vrot.lane.b32.xlu0 %v1018, 12
      %v2216 = vpop.permute.xlu0 %2215
      %2217 = vrot.lane.b32.xlu0 %v1019, 12
      %v2218 = vpop.permute.xlu0 %2217
      %2219 = vrot.lane.b32.xlu0 %v1020, 12
      %v2220 = vpop.permute.xlu0 %2219
      %2221 = vrot.lane.b32.xlu0 %v1021, 12
      %v2222 = vpop.permute.xlu0 %2221
      %2223 = vrot.lane.b32.xlu0 %v1022, 12
      %v2224 = vpop.permute.xlu0 %2223
      %2225 = vrot.lane.b32.xlu0 %v1023, 12
      %v2226 = vpop.permute.xlu0 %2225
      %2227 = vrot.lane.b32.xlu0 %v1024, 12
      %v2228 = vpop.permute.xlu0 %2227
      %2229 = vrot.lane.b32.xlu0 %v1025, 12
      %v2230 = vpop.permute.xlu0 %2229
      %2231 = vrot.lane.b32.xlu0 %v1026, 12
      %v2232 = vpop.permute.xlu0 %2231
      %2233 = vrot.lane.b32.xlu0 %v1027, 12
      %v2234 = vpop.permute.xlu0 %2233
      %2235 = vrot.lane.b32.xlu0 %v1028, 12
      %v2236 = vpop.permute.xlu0 %2235
      %2237 = vrot.lane.b32.xlu0 %v1029, 12
      %v2238 = vpop.permute.xlu0 %2237
      %2239 = vrot.lane.b32.xlu0 %v1030, 12
      %v2240 = vpop.permute.xlu0 %2239
      %2241 = vrot.lane.b32.xlu0 %v1031, 12
      %v2242 = vpop.permute.xlu0 %2241
      %2243 = vrot.lane.b32.xlu0 %v1032, 12
      %v2244 = vpop.permute.xlu0 %2243
      %2245 = vrot.lane.b32.xlu0 %v1033, 12
      %v2246 = vpop.permute.xlu0 %2245
      %2247 = vrot.lane.b32.xlu0 %v1034, 12
      %v2248 = vpop.permute.xlu0 %2247
      %2249 = vrot.lane.b32.xlu0 %v1035, 12
      %v2250 = vpop.permute.xlu0 %2249
      %2251 = vrot.lane.b32.xlu0 %v1036, 12
      %v2252 = vpop.permute.xlu0 %2251
      %2253 = vrot.lane.b32.xlu0 %v1037, 12
      %v2254 = vpop.permute.xlu0 %2253
      %2383 = vrot.lane.b32.xlu0 %v1038, 15
      %v2384 = vpop.permute.xlu0 %2383
      %2385 = vrot.lane.b32.xlu0 %v1039, 15
      %v2386 = vpop.permute.xlu0 %2385
      %2387 = vrot.lane.b32.xlu0 %v1040, 15
      %v2388 = vpop.permute.xlu0 %2387
      %2389 = vrot.lane.b32.xlu0 %v1041, 15
      %v2390 = vpop.permute.xlu0 %2389
      %2391 = vrot.lane.b32.xlu0 %v1042, 15
      %v2392 = vpop.permute.xlu0 %2391
      %2393 = vrot.lane.b32.xlu0 %v1043, 15
      %v2394 = vpop.permute.xlu0 %2393
      %2395 = vrot.lane.b32.xlu0 %v1044, 15
      %v2396 = vpop.permute.xlu0 %2395
      %2397 = vrot.lane.b32.xlu0 %v1045, 15
      %v2398 = vpop.permute.xlu0 %2397
      %2399 = vrot.lane.b32.xlu0 %v1046, 15
      %v2400 = vpop.permute.xlu0 %2399
      %2401 = vrot.lane.b32.xlu0 %v1047, 15
      %v2402 = vpop.permute.xlu0 %2401
      %2403 = vrot.lane.b32.xlu0 %v1048, 15
      %v2404 = vpop.permute.xlu0 %2403
      %2405 = vrot.lane.b32.xlu0 %v1049, 15
      %v2406 = vpop.permute.xlu0 %2405
      %2407 = vrot.lane.b32.xlu0 %v1050, 15
      %v2408 = vpop.permute.xlu0 %2407
      %2409 = vrot.lane.b32.xlu0 %v1051, 15
      %v2410 = vpop.permute.xlu0 %2409
      %2411 = vrot.lane.b32.xlu0 %v1052, 15
      %v2412 = vpop.permute.xlu0 %2411
      %2413 = vrot.lane.b32.xlu0 %v1053, 15
      %v2414 = vpop.permute.xlu0 %2413
      %2415 = vrot.lane.b32.xlu0 %v1054, 15
      %v2416 = vpop.permute.xlu0 %2415
      %2417 = vrot.lane.b32.xlu0 %v1055, 15
      %v2418 = vpop.permute.xlu0 %2417
      %2419 = vrot.lane.b32.xlu0 %v1056, 15
      %v2420 = vpop.permute.xlu0 %2419
      %2421 = vrot.lane.b32.xlu0 %v1057, 15
      %v2422 = vpop.permute.xlu0 %2421
      %2423 = vrot.lane.b32.xlu0 %v1058, 15
      %v2424 = vpop.permute.xlu0 %2423
      %2425 = vrot.lane.b32.xlu0 %v1059, 15
      %v2426 = vpop.permute.xlu0 %2425
      %2427 = vrot.lane.b32.xlu0 %v1060, 15
      %v2428 = vpop.permute.xlu0 %2427
      %2429 = vrot.lane.b32.xlu0 %v1061, 15
      %v2430 = vpop.permute.xlu0 %2429
      %2431 = vrot.lane.b32.xlu0 %v1062, 15
      %v2432 = vpop.permute.xlu0 %2431
      %2433 = vrot.lane.b32.xlu0 %v1063, 15
      %v2434 = vpop.permute.xlu0 %2433
      %2435 = vrot.lane.b32.xlu0 %v1064, 15
      %v2436 = vpop.permute.xlu0 %2435
      %2437 = vrot.lane.b32.xlu0 %v1065, 15
      %v2438 = vpop.permute.xlu0 %2437
      %2439 = vrot.lane.b32.xlu0 %v1066, 15
      %v2440 = vpop.permute.xlu0 %2439
      %2441 = vrot.lane.b32.xlu0 %v1067, 15
      %v2442 = vpop.permute.xlu0 %2441
      %2443 = vrot.lane.b32.xlu0 %v1068, 15
      %v2444 = vpop.permute.xlu0 %2443
      %2445 = vrot.lane.b32.xlu0 %v1069, 15
      %v2446 = vpop.permute.xlu0 %2445
      %2447 = vrot.lane.b32.xlu0 %v1070, 15
      %v2448 = vpop.permute.xlu0 %2447
      %2449 = vrot.lane.b32.xlu0 %v1071, 15
      %v2450 = vpop.permute.xlu0 %2449
      %2451 = vrot.lane.b32.xlu0 %v1072, 15
      %v2452 = vpop.permute.xlu0 %2451
      %2453 = vrot.lane.b32.xlu0 %v1073, 15
      %v2454 = vpop.permute.xlu0 %2453
      %2455 = vrot.lane.b32.xlu0 %v1074, 15
      %v2456 = vpop.permute.xlu0 %2455
      %2457 = vrot.lane.b32.xlu0 %v1075, 15
      %v2458 = vpop.permute.xlu0 %2457
      %2459 = vrot.lane.b32.xlu0 %v1076, 15
      %v2460 = vpop.permute.xlu0 %2459
      %2461 = vrot.lane.b32.xlu0 %v1077, 15
      %v2462 = vpop.permute.xlu0 %2461
      %2463 = vrot.lane.b32.xlu0 %v1078, 15
      %v2464 = vpop.permute.xlu0 %2463
      %2465 = vrot.lane.b32.xlu0 %v1079, 15
      %v2466 = vpop.permute.xlu0 %2465
      %2467 = vrot.lane.b32.xlu0 %v1080, 15
      %v2468 = vpop.permute.xlu0 %2467
      %2469 = vrot.lane.b32.xlu0 %v1081, 15
      %v2470 = vpop.permute.xlu0 %2469
      %2471 = vrot.lane.b32.xlu0 %v1082, 15
      %v2472 = vpop.permute.xlu0 %2471
      %2473 = vrot.lane.b32.xlu0 %v1083, 15
      %v2474 = vpop.permute.xlu0 %2473
      %2475 = vrot.lane.b32.xlu0 %v1084, 15
      %v2476 = vpop.permute.xlu0 %2475
      %2477 = vrot.lane.b32.xlu0 %v1085, 15
      %v2478 = vpop.permute.xlu0 %2477
      %2479 = vrot.lane.b32.xlu0 %v1086, 15
      %v2480 = vpop.permute.xlu0 %2479
      %2481 = vrot.lane.b32.xlu0 %v1087, 15
      %v2482 = vpop.permute.xlu0 %2481
      %2483 = vrot.lane.b32.xlu0 %v1088, 15
      %v2484 = vpop.permute.xlu0 %2483
      %2485 = vrot.lane.b32.xlu0 %v1089, 15
      %v2486 = vpop.permute.xlu0 %2485
      %2487 = vrot.lane.b32.xlu0 %v1090, 15
      %v2488 = vpop.permute.xlu0 %2487
      %2489 = vrot.lane.b32.xlu0 %v1091, 15
      %v2490 = vpop.permute.xlu0 %2489
      %2491 = vrot.lane.b32.xlu0 %v1092, 15
      %v2492 = vpop.permute.xlu0 %2491
      %2493 = vrot.lane.b32.xlu0 %v1093, 15
      %v2494 = vpop.permute.xlu0 %2493
      %2495 = vrot.lane.b32.xlu0 %v1094, 15
      %v2496 = vpop.permute.xlu0 %2495
      %2497 = vrot.lane.b32.xlu0 %v1095, 15
      %v2498 = vpop.permute.xlu0 %2497
      %2499 = vrot.lane.b32.xlu0 %v1096, 15
      %v2500 = vpop.permute.xlu0 %2499
      %2501 = vrot.lane.b32.xlu0 %v1097, 15
      %v2502 = vpop.permute.xlu0 %2501
      %2503 = vrot.lane.b32.xlu0 %v1098, 15
      %v2504 = vpop.permute.xlu0 %2503
      %2505 = vrot.lane.b32.xlu0 %v1099, 15
      %v2506 = vpop.permute.xlu0 %2505
      %2507 = vrot.lane.b32.xlu0 %v1100, 15
      %v2508 = vpop.permute.xlu0 %2507
      %2509 = vrot.lane.b32.xlu0 %v1101, 15
      %v2510 = vpop.permute.xlu0 %2509
      %2639 = vrot.lane.b32.xlu0 %v1103, 18
      %v2640 = vpop.permute.xlu0 %2639
      %2641 = vrot.lane.b32.xlu0 %v1104, 18
      %v2642 = vpop.permute.xlu0 %2641
      %2643 = vrot.lane.b32.xlu0 %v1105, 18
      %v2644 = vpop.permute.xlu0 %2643
      %2645 = vrot.lane.b32.xlu0 %v1106, 18
      %v2646 = vpop.permute.xlu0 %2645
      %2647 = vrot.lane.b32.xlu0 %v1107, 18
      %v2648 = vpop.permute.xlu0 %2647
      %2649 = vrot.lane.b32.xlu0 %v1108, 18
      %v2650 = vpop.permute.xlu0 %2649
      %2651 = vrot.lane.b32.xlu0 %v1109, 18
      %v2652 = vpop.permute.xlu0 %2651
      %2653 = vrot.lane.b32.xlu0 %v1110, 18
      %v2654 = vpop.permute.xlu0 %2653
      %2655 = vrot.lane.b32.xlu0 %v1111, 18
      %v2656 = vpop.permute.xlu0 %2655
      %2657 = vrot.lane.b32.xlu0 %v1112, 18
      %v2658 = vpop.permute.xlu0 %2657
      %2659 = vrot.lane.b32.xlu0 %v1113, 18
      %v2660 = vpop.permute.xlu0 %2659
      %2661 = vrot.lane.b32.xlu0 %v1114, 18
      %v2662 = vpop.permute.xlu0 %2661
      %2663 = vrot.lane.b32.xlu0 %v1115, 18
      %v2664 = vpop.permute.xlu0 %2663
      %2665 = vrot.lane.b32.xlu0 %v1116, 18
      %v2666 = vpop.permute.xlu0 %2665
      %2667 = vrot.lane.b32.xlu0 %v1117, 18
      %v2668 = vpop.permute.xlu0 %2667
      %2669 = vrot.lane.b32.xlu0 %v1118, 18
      %v2670 = vpop.permute.xlu0 %2669
      %2671 = vrot.lane.b32.xlu0 %v1119, 18
      %v2672 = vpop.permute.xlu0 %2671
      %2673 = vrot.lane.b32.xlu0 %v1120, 18
      %v2674 = vpop.permute.xlu0 %2673
      %2675 = vrot.lane.b32.xlu0 %v1121, 18
      %v2676 = vpop.permute.xlu0 %2675
      %2677 = vrot.lane.b32.xlu0 %v1122, 18
      %v2678 = vpop.permute.xlu0 %2677
      %2679 = vrot.lane.b32.xlu0 %v1123, 18
      %v2680 = vpop.permute.xlu0 %2679
      %2681 = vrot.lane.b32.xlu0 %v1124, 18
      %v2682 = vpop.permute.xlu0 %2681
      %2683 = vrot.lane.b32.xlu0 %v1125, 18
      %v2684 = vpop.permute.xlu0 %2683
      %2685 = vrot.lane.b32.xlu0 %v1126, 18
      %v2686 = vpop.permute.xlu0 %2685
      %2687 = vrot.lane.b32.xlu0 %v1127, 18
      %v2688 = vpop.permute.xlu0 %2687
      %2689 = vrot.lane.b32.xlu0 %v1128, 18
      %v2690 = vpop.permute.xlu0 %2689
      %2691 = vrot.lane.b32.xlu0 %v1129, 18
      %v2692 = vpop.permute.xlu0 %2691
      %2693 = vrot.lane.b32.xlu0 %v1130, 18
      %v2694 = vpop.permute.xlu0 %2693
      %2695 = vrot.lane.b32.xlu0 %v1131, 18
      %v2696 = vpop.permute.xlu0 %2695
      %2697 = vrot.lane.b32.xlu0 %v1132, 18
      %v2698 = vpop.permute.xlu0 %2697
      %2699 = vrot.lane.b32.xlu0 %v1133, 18
      %v2700 = vpop.permute.xlu0 %2699
      %2701 = vrot.lane.b32.xlu0 %v1134, 18
      %v2702 = vpop.permute.xlu0 %2701
      %2703 = vrot.lane.b32.xlu0 %v1135, 18
      %v2704 = vpop.permute.xlu0 %2703
      %2705 = vrot.lane.b32.xlu0 %v1136, 18
      %v2706 = vpop.permute.xlu0 %2705
      %2707 = vrot.lane.b32.xlu0 %v1137, 18
      %v2708 = vpop.permute.xlu0 %2707
      %2709 = vrot.lane.b32.xlu0 %v1138, 18
      %v2710 = vpop.permute.xlu0 %2709
      %2711 = vrot.lane.b32.xlu0 %v1139, 18
      %v2712 = vpop.permute.xlu0 %2711
      %2713 = vrot.lane.b32.xlu0 %v1140, 18
      %v2714 = vpop.permute.xlu0 %2713
      %2715 = vrot.lane.b32.xlu0 %v1141, 18
      %v2716 = vpop.permute.xlu0 %2715
      %2717 = vrot.lane.b32.xlu0 %v1142, 18
      %v2718 = vpop.permute.xlu0 %2717
      %2719 = vrot.lane.b32.xlu0 %v1143, 18
      %v2720 = vpop.permute.xlu0 %2719
      %2721 = vrot.lane.b32.xlu0 %v1144, 18
      %v2722 = vpop.permute.xlu0 %2721
      %2723 = vrot.lane.b32.xlu0 %v1145, 18
      %v2724 = vpop.permute.xlu0 %2723
      %2725 = vrot.lane.b32.xlu0 %v1146, 18
      %v2726 = vpop.permute.xlu0 %2725
      %2727 = vrot.lane.b32.xlu0 %v1147, 18
      %v2728 = vpop.permute.xlu0 %2727
      %2729 = vrot.lane.b32.xlu0 %v1148, 18
      %v2730 = vpop.permute.xlu0 %2729
      %2731 = vrot.lane.b32.xlu0 %v1149, 18
      %v2732 = vpop.permute.xlu0 %2731
      %2733 = vrot.lane.b32.xlu0 %v1150, 18
      %v2734 = vpop.permute.xlu0 %2733
      %2735 = vrot.lane.b32.xlu0 %v1151, 18
      %v2736 = vpop.permute.xlu0 %2735
      %2737 = vrot.lane.b32.xlu0 %v1152, 18
      %v2738 = vpop.permute.xlu0 %2737
      %2739 = vrot.lane.b32.xlu0 %v1153, 18
      %v2740 = vpop.permute.xlu0 %2739
      %2741 = vrot.lane.b32.xlu0 %v1154, 18
      %v2742 = vpop.permute.xlu0 %2741
      %2743 = vrot.lane.b32.xlu0 %v1155, 18
      %v2744 = vpop.permute.xlu0 %2743
      %2745 = vrot.lane.b32.xlu0 %v1156, 18
      %v2746 = vpop.permute.xlu0 %2745
      %2747 = vrot.lane.b32.xlu0 %v1157, 18
      %v2748 = vpop.permute.xlu0 %2747
      %2749 = vrot.lane.b32.xlu0 %v1158, 18
      %v2750 = vpop.permute.xlu0 %2749
      %2751 = vrot.lane.b32.xlu0 %v1159, 18
      %v2752 = vpop.permute.xlu0 %2751
      %2753 = vrot.lane.b32.xlu0 %v1160, 18
      %v2754 = vpop.permute.xlu0 %2753
      %2755 = vrot.lane.b32.xlu0 %v1161, 18
      %v2756 = vpop.permute.xlu0 %2755
      %2757 = vrot.lane.b32.xlu0 %v1162, 18
      %v2758 = vpop.permute.xlu0 %2757
      %2759 = vrot.lane.b32.xlu0 %v1163, 18
      %v2760 = vpop.permute.xlu0 %2759
      %2761 = vrot.lane.b32.xlu0 %v1164, 18
      %v2762 = vpop.permute.xlu0 %2761
      %2763 = vrot.lane.b32.xlu0 %v1165, 18
      %v2764 = vpop.permute.xlu0 %2763
      %2765 = vrot.lane.b32.xlu0 %v1166, 18
      %v2766 = vpop.permute.xlu0 %2765
      %2895 = vrot.lane.b32.xlu0 %v1167, 21
      %v2896 = vpop.permute.xlu0 %2895
      %2897 = vrot.lane.b32.xlu0 %v1168, 21
      %v2898 = vpop.permute.xlu0 %2897
      %2899 = vrot.lane.b32.xlu0 %v1169, 21
      %v2900 = vpop.permute.xlu0 %2899
      %2901 = vrot.lane.b32.xlu0 %v1170, 21
      %v2902 = vpop.permute.xlu0 %2901
      %2903 = vrot.lane.b32.xlu0 %v1171, 21
      %v2904 = vpop.permute.xlu0 %2903
      %2905 = vrot.lane.b32.xlu0 %v1172, 21
      %v2906 = vpop.permute.xlu0 %2905
      %2907 = vrot.lane.b32.xlu0 %v1173, 21
      %v2908 = vpop.permute.xlu0 %2907
      %2909 = vrot.lane.b32.xlu0 %v1174, 21
      %v2910 = vpop.permute.xlu0 %2909
      %2911 = vrot.lane.b32.xlu0 %v1175, 21
      %v2912 = vpop.permute.xlu0 %2911
      %2913 = vrot.lane.b32.xlu0 %v1176, 21
      %v2914 = vpop.permute.xlu0 %2913
      %2915 = vrot.lane.b32.xlu0 %v1177, 21
      %v2916 = vpop.permute.xlu0 %2915
      %2917 = vrot.lane.b32.xlu0 %v1178, 21
      %v2918 = vpop.permute.xlu0 %2917
      %2919 = vrot.lane.b32.xlu0 %v1179, 21
      %v2920 = vpop.permute.xlu0 %2919
      %2921 = vrot.lane.b32.xlu0 %v1180, 21
      %v2922 = vpop.permute.xlu0 %2921
      %2923 = vrot.lane.b32.xlu0 %v1181, 21
      %v2924 = vpop.permute.xlu0 %2923
      %2925 = vrot.lane.b32.xlu0 %v1182, 21
      %v2926 = vpop.permute.xlu0 %2925
      %2927 = vrot.lane.b32.xlu0 %v1183, 21
      %v2928 = vpop.permute.xlu0 %2927
      %2929 = vrot.lane.b32.xlu0 %v1184, 21
      %v2930 = vpop.permute.xlu0 %2929
      %2931 = vrot.lane.b32.xlu0 %v1185, 21
      %v2932 = vpop.permute.xlu0 %2931
      %2933 = vrot.lane.b32.xlu0 %v1186, 21
      %v2934 = vpop.permute.xlu0 %2933
      %2935 = vrot.lane.b32.xlu0 %v1187, 21
      %v2936 = vpop.permute.xlu0 %2935
      %2937 = vrot.lane.b32.xlu0 %v1188, 21
      %v2938 = vpop.permute.xlu0 %2937
      %2939 = vrot.lane.b32.xlu0 %v1189, 21
      %v2940 = vpop.permute.xlu0 %2939
      %2941 = vrot.lane.b32.xlu0 %v1190, 21
      %v2942 = vpop.permute.xlu0 %2941
      %2943 = vrot.lane.b32.xlu0 %v1191, 21
      %v2944 = vpop.permute.xlu0 %2943
      %2945 = vrot.lane.b32.xlu0 %v1192, 21
      %v2946 = vpop.permute.xlu0 %2945
      %2947 = vrot.lane.b32.xlu0 %v1193, 21
      %v2948 = vpop.permute.xlu0 %2947
      %2949 = vrot.lane.b32.xlu0 %v1194, 21
      %v2950 = vpop.permute.xlu0 %2949
      %2951 = vrot.lane.b32.xlu0 %v1195, 21
      %v2952 = vpop.permute.xlu0 %2951
      %2953 = vrot.lane.b32.xlu0 %v1196, 21
      %v2954 = vpop.permute.xlu0 %2953
      %2955 = vrot.lane.b32.xlu0 %v1197, 21
      %v2956 = vpop.permute.xlu0 %2955
      %2957 = vrot.lane.b32.xlu0 %v1198, 21
      %v2958 = vpop.permute.xlu0 %2957
      %2959 = vrot.lane.b32.xlu0 %v1199, 21
      %v2960 = vpop.permute.xlu0 %2959
      %2961 = vrot.lane.b32.xlu0 %v1200, 21
      %v2962 = vpop.permute.xlu0 %2961
      %2963 = vrot.lane.b32.xlu0 %v1201, 21
      %v2964 = vpop.permute.xlu0 %2963
      %2965 = vrot.lane.b32.xlu0 %v1202, 21
      %v2966 = vpop.permute.xlu0 %2965
      %2967 = vrot.lane.b32.xlu0 %v1203, 21
      %v2968 = vpop.permute.xlu0 %2967
      %2969 = vrot.lane.b32.xlu0 %v1204, 21
      %v2970 = vpop.permute.xlu0 %2969
      %2971 = vrot.lane.b32.xlu0 %v1205, 21
      %v2972 = vpop.permute.xlu0 %2971
      %2973 = vrot.lane.b32.xlu0 %v1206, 21
      %v2974 = vpop.permute.xlu0 %2973
      %2975 = vrot.lane.b32.xlu0 %v1207, 21
      %v2976 = vpop.permute.xlu0 %2975
      %2977 = vrot.lane.b32.xlu0 %v1208, 21
      %v2978 = vpop.permute.xlu0 %2977
      %2979 = vrot.lane.b32.xlu0 %v1209, 21
      %v2980 = vpop.permute.xlu0 %2979
      %2981 = vrot.lane.b32.xlu0 %v1210, 21
      %v2982 = vpop.permute.xlu0 %2981
      %2983 = vrot.lane.b32.xlu0 %v1211, 21
      %v2984 = vpop.permute.xlu0 %2983
      %2985 = vrot.lane.b32.xlu0 %v1212, 21
      %v2986 = vpop.permute.xlu0 %2985
      %2987 = vrot.lane.b32.xlu0 %v1213, 21
      %v2988 = vpop.permute.xlu0 %2987
      %2989 = vrot.lane.b32.xlu0 %v1214, 21
      %v2990 = vpop.permute.xlu0 %2989
      %2991 = vrot.lane.b32.xlu0 %v1215, 21
      %v2992 = vpop.permute.xlu0 %2991
      %2993 = vrot.lane.b32.xlu0 %v1216, 21
      %v2994 = vpop.permute.xlu0 %2993
      %2995 = vrot.lane.b32.xlu0 %v1217, 21
      %v2996 = vpop.permute.xlu0 %2995
      %2997 = vrot.lane.b32.xlu0 %v1218, 21
      %v2998 = vpop.permute.xlu0 %2997
      %2999 = vrot.lane.b32.xlu0 %v1219, 21
      %v3000 = vpop.permute.xlu0 %2999
      %3001 = vrot.lane.b32.xlu0 %v1220, 21
      %v3002 = vpop.permute.xlu0 %3001
      %3003 = vrot.lane.b32.xlu0 %v1221, 21
      %v3004 = vpop.permute.xlu0 %3003
      %3005 = vrot.lane.b32.xlu0 %v1222, 21
      %v3006 = vpop.permute.xlu0 %3005
      %3007 = vrot.lane.b32.xlu0 %v1223, 21
      %v3008 = vpop.permute.xlu0 %3007
      %3009 = vrot.lane.b32.xlu0 %v1224, 21
      %v3010 = vpop.permute.xlu0 %3009
      %3011 = vrot.lane.b32.xlu0 %v1225, 21
      %v3012 = vpop.permute.xlu0 %3011
      %3013 = vrot.lane.b32.xlu0 %v1226, 21
      %v3014 = vpop.permute.xlu0 %3013
      %3015 = vrot.lane.b32.xlu0 %v1227, 21
      %v3016 = vpop.permute.xlu0 %3015
      %3017 = vrot.lane.b32.xlu0 %v1228, 21
      %v3018 = vpop.permute.xlu0 %3017
      %3019 = vrot.lane.b32.xlu0 %v1229, 21
      %v3020 = vpop.permute.xlu0 %3019
      %3021 = vrot.lane.b32.xlu0 %v1230, 21
      %v3022 = vpop.permute.xlu0 %3021
      %3151 = vrot.lane.b32.xlu0 %v1231, 24
      %v3152 = vpop.permute.xlu0 %3151
      %3153 = vrot.lane.b32.xlu0 %v1232, 24
      %v3154 = vpop.permute.xlu0 %3153
      %3155 = vrot.lane.b32.xlu0 %v1233, 24
      %v3156 = vpop.permute.xlu0 %3155
      %3157 = vrot.lane.b32.xlu0 %v1234, 24
      %v3158 = vpop.permute.xlu0 %3157
      %3159 = vrot.lane.b32.xlu0 %v1235, 24
      %v3160 = vpop.permute.xlu0 %3159
      %3161 = vrot.lane.b32.xlu0 %v1236, 24
      %v3162 = vpop.permute.xlu0 %3161
      %3163 = vrot.lane.b32.xlu0 %v1237, 24
      %v3164 = vpop.permute.xlu0 %3163
      %3165 = vrot.lane.b32.xlu0 %v1238, 24
      %v3166 = vpop.permute.xlu0 %3165
      %3167 = vrot.lane.b32.xlu0 %v1239, 24
      %v3168 = vpop.permute.xlu0 %3167
      %3169 = vrot.lane.b32.xlu0 %v1240, 24
      %v3170 = vpop.permute.xlu0 %3169
      %3171 = vrot.lane.b32.xlu0 %v1241, 24
      %v3172 = vpop.permute.xlu0 %3171
      %3173 = vrot.lane.b32.xlu0 %v1242, 24
      %v3174 = vpop.permute.xlu0 %3173
      %3175 = vrot.lane.b32.xlu0 %v1243, 24
      %v3176 = vpop.permute.xlu0 %3175
      %3177 = vrot.lane.b32.xlu0 %v1244, 24
      %v3178 = vpop.permute.xlu0 %3177
      %3179 = vrot.lane.b32.xlu0 %v1245, 24
      %v3180 = vpop.permute.xlu0 %3179
      %3181 = vrot.lane.b32.xlu0 %v1246, 24
      %v3182 = vpop.permute.xlu0 %3181
      %3183 = vrot.lane.b32.xlu0 %v1247, 24
      %v3184 = vpop.permute.xlu0 %3183
      %3185 = vrot.lane.b32.xlu0 %v1248, 24
      %v3186 = vpop.permute.xlu0 %3185
      %3187 = vrot.lane.b32.xlu0 %v1249, 24
      %v3188 = vpop.permute.xlu0 %3187
      %3189 = vrot.lane.b32.xlu0 %v1250, 24
      %v3190 = vpop.permute.xlu0 %3189
      %3191 = vrot.lane.b32.xlu0 %v1251, 24
      %v3192 = vpop.permute.xlu0 %3191
      %3193 = vrot.lane.b32.xlu0 %v1252, 24
      %v3194 = vpop.permute.xlu0 %3193
      %3195 = vrot.lane.b32.xlu0 %v1253, 24
      %v3196 = vpop.permute.xlu0 %3195
      %3197 = vrot.lane.b32.xlu0 %v1254, 24
      %v3198 = vpop.permute.xlu0 %3197
      %3199 = vrot.lane.b32.xlu0 %v1255, 24
      %v3200 = vpop.permute.xlu0 %3199
      %3201 = vrot.lane.b32.xlu0 %v1256, 24
      %v3202 = vpop.permute.xlu0 %3201
      %3203 = vrot.lane.b32.xlu0 %v1257, 24
      %v3204 = vpop.permute.xlu0 %3203
      %3205 = vrot.lane.b32.xlu0 %v1258, 24
      %v3206 = vpop.permute.xlu0 %3205
      %3207 = vrot.lane.b32.xlu0 %v1259, 24
      %v3208 = vpop.permute.xlu0 %3207
      %3209 = vrot.lane.b32.xlu0 %v1260, 24
      %v3210 = vpop.permute.xlu0 %3209
      %3211 = vrot.lane.b32.xlu0 %v1261, 24
      %v3212 = vpop.permute.xlu0 %3211
      %3213 = vrot.lane.b32.xlu0 %v1262, 24
      %v3214 = vpop.permute.xlu0 %3213
      %3215 = vrot.lane.b32.xlu0 %v1263, 24
      %v3216 = vpop.permute.xlu0 %3215
      %3217 = vrot.lane.b32.xlu0 %v1264, 24
      %v3218 = vpop.permute.xlu0 %3217
      %3219 = vrot.lane.b32.xlu0 %v1265, 24
      %v3220 = vpop.permute.xlu0 %3219
      %3221 = vrot.lane.b32.xlu0 %v1266, 24
      %v3222 = vpop.permute.xlu0 %3221
      %3223 = vrot.lane.b32.xlu0 %v1267, 24
      %v3224 = vpop.permute.xlu0 %3223
      %3225 = vrot.lane.b32.xlu0 %v1268, 24
      %v3226 = vpop.permute.xlu0 %3225
      %3227 = vrot.lane.b32.xlu0 %v1269, 24
      %v3228 = vpop.permute.xlu0 %3227
      %3229 = vrot.lane.b32.xlu0 %v1270, 24
      %v3230 = vpop.permute.xlu0 %3229
      %3231 = vrot.lane.b32.xlu0 %v1271, 24
      %v3232 = vpop.permute.xlu0 %3231
      %3233 = vrot.lane.b32.xlu0 %v1272, 24
      %v3234 = vpop.permute.xlu0 %3233
      %3235 = vrot.lane.b32.xlu0 %v1273, 24
      %v3236 = vpop.permute.xlu0 %3235
      %3237 = vrot.lane.b32.xlu0 %v1274, 24
      %v3238 = vpop.permute.xlu0 %3237
      %3239 = vrot.lane.b32.xlu0 %v1275, 24
      %v3240 = vpop.permute.xlu0 %3239
      %3241 = vrot.lane.b32.xlu0 %v1276, 24
      %v3242 = vpop.permute.xlu0 %3241
      %3243 = vrot.lane.b32.xlu0 %v1277, 24
      %v3244 = vpop.permute.xlu0 %3243
      %3245 = vrot.lane.b32.xlu0 %v1278, 24
      %v3246 = vpop.permute.xlu0 %3245
      %3247 = vrot.lane.b32.xlu0 %v1279, 24
      %v3248 = vpop.permute.xlu0 %3247
      %3249 = vrot.lane.b32.xlu0 %v1280, 24
      %v3250 = vpop.permute.xlu0 %3249
      %3251 = vrot.lane.b32.xlu0 %v1281, 24
      %v3252 = vpop.permute.xlu0 %3251
      %3253 = vrot.lane.b32.xlu0 %v1282, 24
      %v3254 = vpop.permute.xlu0 %3253
      %3255 = vrot.lane.b32.xlu0 %v1283, 24
      %v3256 = vpop.permute.xlu0 %3255
      %3257 = vrot.lane.b32.xlu0 %v1284, 24
      %v3258 = vpop.permute.xlu0 %3257
      %3259 = vrot.lane.b32.xlu0 %v1285, 24
      %v3260 = vpop.permute.xlu0 %3259
      %3261 = vrot.lane.b32.xlu0 %v1286, 24
      %v3262 = vpop.permute.xlu0 %3261
      %3263 = vrot.lane.b32.xlu0 %v1287, 24
      %v3264 = vpop.permute.xlu0 %3263
      %3265 = vrot.lane.b32.xlu0 %v1288, 24
      %v3266 = vpop.permute.xlu0 %3265
      %3267 = vrot.lane.b32.xlu0 %v1289, 24
      %v3268 = vpop.permute.xlu0 %3267
      %3269 = vrot.lane.b32.xlu0 %v1290, 24
      %v3270 = vpop.permute.xlu0 %3269
      %3271 = vrot.lane.b32.xlu0 %v1291, 24
      %v3272 = vpop.permute.xlu0 %3271
      %3273 = vrot.lane.b32.xlu0 %v1292, 24
      %v3274 = vpop.permute.xlu0 %3273
      %3275 = vrot.lane.b32.xlu0 %v1293, 24
      %v3276 = vpop.permute.xlu0 %3275
      %3277 = vrot.lane.b32.xlu0 %v1294, 24
      %v3278 = vpop.permute.xlu0 %3277
      %v3343 = vsel %vm565, %v718, %v1360
      %v3344 = vsel %vm565, %v719, %v1362
      %v3345 = vsel %vm565, %v720, %v1364
      %v3346 = vsel %vm565, %v721, %v1366
      %v3347 = vsel %vm565, %v722, %v1368
      %v3348 = vsel %vm565, %v723, %v1370
      %v3349 = vsel %vm565, %v724, %v1372
      %v3350 = vsel %vm565, %v725, %v1374
      %v3351 = vsel %vm565, %v726, %v1376
      %v3352 = vsel %vm565, %v727, %v1378
      %v3353 = vsel %vm565, %v728, %v1380
      %v3354 = vsel %vm565, %v729, %v1382
      %v3355 = vsel %vm565, %v730, %v1384
      %v3356 = vsel %vm565, %v731, %v1386
      %v3357 = vsel %vm565, %v732, %v1388
      %v3358 = vsel %vm565, %v733, %v1390
      %v3359 = vsel %vm565, %v734, %v1392
      %v3360 = vsel %vm565, %v735, %v1394
      %v3361 = vsel %vm565, %v736, %v1396
      %v3362 = vsel %vm565, %v737, %v1398
      %v3363 = vsel %vm565, %v738, %v1400
      %v3364 = vsel %vm565, %v739, %v1402
      %v3365 = vsel %vm565, %v740, %v1404
      %v3366 = vsel %vm565, %v741, %v1406
      %v3367 = vsel %vm565, %v742, %v1408
      %v3368 = vsel %vm565, %v743, %v1410
      %v3369 = vsel %vm565, %v744, %v1412
      %v3370 = vsel %vm565, %v745, %v1414
      %v3371 = vsel %vm565, %v746, %v1416
      %v3372 = vsel %vm565, %v747, %v1418
      %v3373 = vsel %vm565, %v748, %v1420
      %v3374 = vsel %vm565, %v749, %v1422
      %v3375 = vsel %vm565, %v750, %v1424
      %v3376 = vsel %vm565, %v751, %v1426
      %v3377 = vsel %vm565, %v752, %v1428
      %v3378 = vsel %vm565, %v753, %v1430
      %v3379 = vsel %vm565, %v754, %v1432
      %v3380 = vsel %vm565, %v755, %v1434
      %v3381 = vsel %vm565, %v756, %v1436
      %v3382 = vsel %vm565, %v757, %v1438
      %v3383 = vsel %vm565, %v758, %v1440
      %v3384 = vsel %vm565, %v759, %v1442
      %v3385 = vsel %vm565, %v760, %v1444
      %v3386 = vsel %vm565, %v761, %v1446
      %v3387 = vsel %vm565, %v762, %v1448
      %v3388 = vsel %vm565, %v763, %v1450
      %v3389 = vsel %vm565, %v764, %v1452
      %v3390 = vsel %vm565, %v765, %v1454
      %v3391 = vsel %vm565, %v766, %v1456
      %v3392 = vsel %vm565, %v767, %v1458
      %v3393 = vsel %vm565, %v768, %v1460
      %v3394 = vsel %vm565, %v769, %v1462
      %v3395 = vsel %vm565, %v770, %v1464
      %v3396 = vsel %vm565, %v771, %v1466
      %v3397 = vsel %vm565, %v772, %v1468
      %v3398 = vsel %vm565, %v773, %v1470
      %v3399 = vsel %vm565, %v774, %v1472
      %v3400 = vsel %vm565, %v775, %v1474
      %v3401 = vsel %vm565, %v776, %v1476
      %v3402 = vsel %vm565, %v777, %v1478
      %v3403 = vsel %vm565, %v778, %v1480
      %v3404 = vsel %vm565, %v779, %v1482
      %v3405 = vsel %vm565, %v780, %v1484
      %v3406 = vsel %vm565, %v781, %v1486
      %vm3407 = vcmask 48128
      %v3408 = vsel %vm3407, %v3343, %v1616
      %v3409 = vsel %vm3407, %v3344, %v1618
      %v3410 = vsel %vm3407, %v3345, %v1620
      %v3411 = vsel %vm3407, %v3346, %v1622
      %v3412 = vsel %vm3407, %v3347, %v1624
      %v3413 = vsel %vm3407, %v3348, %v1626
      %v3414 = vsel %vm3407, %v3349, %v1628
      %v3415 = vsel %vm3407, %v3350, %v1630
      %v3416 = vsel %vm3407, %v3351, %v1632
      %v3417 = vsel %vm3407, %v3352, %v1634
      %v3418 = vsel %vm3407, %v3353, %v1636
      %v3419 = vsel %vm3407, %v3354, %v1638
      %v3420 = vsel %vm3407, %v3355, %v1640
      %v3421 = vsel %vm3407, %v3356, %v1642
      %v3422 = vsel %vm3407, %v3357, %v1644
      %v3423 = vsel %vm3407, %v3358, %v1646
      %v3424 = vsel %vm3407, %v3359, %v1648
      %v3425 = vsel %vm3407, %v3360, %v1650
      %v3426 = vsel %vm3407, %v3361, %v1652
      %v3427 = vsel %vm3407, %v3362, %v1654
      %v3428 = vsel %vm3407, %v3363, %v1656
      %v3429 = vsel %vm3407, %v3364, %v1658
      %v3430 = vsel %vm3407, %v3365, %v1660
      %v3431 = vsel %vm3407, %v3366, %v1662
      %v3432 = vsel %vm3407, %v3367, %v1664
      %v3433 = vsel %vm3407, %v3368, %v1666
      %v3434 = vsel %vm3407, %v3369, %v1668
      %v3435 = vsel %vm3407, %v3370, %v1670
      %v3436 = vsel %vm3407, %v3371, %v1672
      %v3437 = vsel %vm3407, %v3372, %v1674
      %v3438 = vsel %vm3407, %v3373, %v1676
      %v3439 = vsel %vm3407, %v3374, %v1678
      %v3440 = vsel %vm3407, %v3375, %v1680
      %v3441 = vsel %vm3407, %v3376, %v1682
      %v3442 = vsel %vm3407, %v3377, %v1684
      %v3443 = vsel %vm3407, %v3378, %v1686
      %v3444 = vsel %vm3407, %v3379, %v1688
      %v3445 = vsel %vm3407, %v3380, %v1690
      %v3446 = vsel %vm3407, %v3381, %v1692
      %v3447 = vsel %vm3407, %v3382, %v1694
      %v3448 = vsel %vm3407, %v3383, %v1696
      %v3449 = vsel %vm3407, %v3384, %v1698
      %v3450 = vsel %vm3407, %v3385, %v1700
      %v3451 = vsel %vm3407, %v3386, %v1702
      %v3452 = vsel %vm3407, %v3387, %v1704
      %v3453 = vsel %vm3407, %v3388, %v1706
      %v3454 = vsel %vm3407, %v3389, %v1708
      %v3455 = vsel %vm3407, %v3390, %v1710
      %v3456 = vsel %vm3407, %v3391, %v1712
      %v3457 = vsel %vm3407, %v3392, %v1714
      %v3458 = vsel %vm3407, %v3393, %v1716
      %v3459 = vsel %vm3407, %v3394, %v1718
      %v3460 = vsel %vm3407, %v3395, %v1720
      %v3461 = vsel %vm3407, %v3396, %v1722
      %v3462 = vsel %vm3407, %v3397, %v1724
      %v3463 = vsel %vm3407, %v3398, %v1726
      %v3464 = vsel %vm3407, %v3399, %v1728
      %v3465 = vsel %vm3407, %v3400, %v1730
      %v3466 = vsel %vm3407, %v3401, %v1732
      %v3467 = vsel %vm3407, %v3402, %v1734
      %v3468 = vsel %vm3407, %v3403, %v1736
      %v3469 = vsel %vm3407, %v3404, %v1738
      %v3470 = vsel %vm3407, %v3405, %v1740
      %v3471 = vsel %vm3407, %v3406, %v1742
      %vm3472 = vcmask 72704
      %v3473 = vsel %vm3472, %v3408, %v1872
      %v3474 = vsel %vm3472, %v3409, %v1874
      %v3475 = vsel %vm3472, %v3410, %v1876
      %v3476 = vsel %vm3472, %v3411, %v1878
      %v3477 = vsel %vm3472, %v3412, %v1880
      %v3478 = vsel %vm3472, %v3413, %v1882
      %v3479 = vsel %vm3472, %v3414, %v1884
      %v3480 = vsel %vm3472, %v3415, %v1886
      %v3481 = vsel %vm3472, %v3416, %v1888
      %v3482 = vsel %vm3472, %v3417, %v1890
      %v3483 = vsel %vm3472, %v3418, %v1892
      %v3484 = vsel %vm3472, %v3419, %v1894
      %v3485 = vsel %vm3472, %v3420, %v1896
      %v3486 = vsel %vm3472, %v3421, %v1898
      %v3487 = vsel %vm3472, %v3422, %v1900
      %v3488 = vsel %vm3472, %v3423, %v1902
      %v3489 = vsel %vm3472, %v3424, %v1904
      %v3490 = vsel %vm3472, %v3425, %v1906
      %v3491 = vsel %vm3472, %v3426, %v1908
      %v3492 = vsel %vm3472, %v3427, %v1910
      %v3493 = vsel %vm3472, %v3428, %v1912
      %v3494 = vsel %vm3472, %v3429, %v1914
      %v3495 = vsel %vm3472, %v3430, %v1916
      %v3496 = vsel %vm3472, %v3431, %v1918
      %v3497 = vsel %vm3472, %v3432, %v1920
      %v3498 = vsel %vm3472, %v3433, %v1922
      %v3499 = vsel %vm3472, %v3434, %v1924
      %v3500 = vsel %vm3472, %v3435, %v1926
      %v3501 = vsel %vm3472, %v3436, %v1928
      %v3502 = vsel %vm3472, %v3437, %v1930
      %v3503 = vsel %vm3472, %v3438, %v1932
      %v3504 = vsel %vm3472, %v3439, %v1934
      %v3505 = vsel %vm3472, %v3440, %v1936
      %v3506 = vsel %vm3472, %v3441, %v1938
      %v3507 = vsel %vm3472, %v3442, %v1940
      %v3508 = vsel %vm3472, %v3443, %v1942
      %v3509 = vsel %vm3472, %v3444, %v1944
      %v3510 = vsel %vm3472, %v3445, %v1946
      %v3511 = vsel %vm3472, %v3446, %v1948
      %v3512 = vsel %vm3472, %v3447, %v1950
      %v3513 = vsel %vm3472, %v3448, %v1952
      %v3514 = vsel %vm3472, %v3449, %v1954
      %v3515 = vsel %vm3472, %v3450, %v1956
      %v3516 = vsel %vm3472, %v3451, %v1958
      %v3517 = vsel %vm3472, %v3452, %v1960
      %v3518 = vsel %vm3472, %v3453, %v1962
      %v3519 = vsel %vm3472, %v3454, %v1964
      %v3520 = vsel %vm3472, %v3455, %v1966
      %v3521 = vsel %vm3472, %v3456, %v1968
      %v3522 = vsel %vm3472, %v3457, %v1970
      %v3523 = vsel %vm3472, %v3458, %v1972
      %v3524 = vsel %vm3472, %v3459, %v1974
      %v3525 = vsel %vm3472, %v3460, %v1976
      %v3526 = vsel %vm3472, %v3461, %v1978
      %v3527 = vsel %vm3472, %v3462, %v1980
      %v3528 = vsel %vm3472, %v3463, %v1982
      %v3529 = vsel %vm3472, %v3464, %v1984
      %v3530 = vsel %vm3472, %v3465, %v1986
      %v3531 = vsel %vm3472, %v3466, %v1988
      %v3532 = vsel %vm3472, %v3467, %v1990
      %v3533 = vsel %vm3472, %v3468, %v1992
      %v3534 = vsel %vm3472, %v3469, %v1994
      %v3535 = vsel %vm3472, %v3470, %v1996
      %v3536 = vsel %vm3472, %v3471, %v1998
      %vm3537 = vcmask 97280
      %v3538 = vsel %vm3537, %v3473, %v2128
      %v3539 = vsel %vm3537, %v3474, %v2130
      %v3540 = vsel %vm3537, %v3475, %v2132
      %v3541 = vsel %vm3537, %v3476, %v2134
      %v3542 = vsel %vm3537, %v3477, %v2136
      %v3543 = vsel %vm3537, %v3478, %v2138
      %v3544 = vsel %vm3537, %v3479, %v2140
      %v3545 = vsel %vm3537, %v3480, %v2142
      %v3546 = vsel %vm3537, %v3481, %v2144
      %v3547 = vsel %vm3537, %v3482, %v2146
      %v3548 = vsel %vm3537, %v3483, %v2148
      %v3549 = vsel %vm3537, %v3484, %v2150
      %v3550 = vsel %vm3537, %v3485, %v2152
      %v3551 = vsel %vm3537, %v3486, %v2154
      %v3552 = vsel %vm3537, %v3487, %v2156
      %v3553 = vsel %vm3537, %v3488, %v2158
      %v3554 = vsel %vm3537, %v3489, %v2160
      %v3555 = vsel %vm3537, %v3490, %v2162
      %v3556 = vsel %vm3537, %v3491, %v2164
      %v3557 = vsel %vm3537, %v3492, %v2166
      %v3558 = vsel %vm3537, %v3493, %v2168
      %v3559 = vsel %vm3537, %v3494, %v2170
      %v3560 = vsel %vm3537, %v3495, %v2172
      %v3561 = vsel %vm3537, %v3496, %v2174
      %v3562 = vsel %vm3537, %v3497, %v2176
      %v3563 = vsel %vm3537, %v3498, %v2178
      %v3564 = vsel %vm3537, %v3499, %v2180
      %v3565 = vsel %vm3537, %v3500, %v2182
      %v3566 = vsel %vm3537, %v3501, %v2184
      %v3567 = vsel %vm3537, %v3502, %v2186
      %v3568 = vsel %vm3537, %v3503, %v2188
      %v3569 = vsel %vm3537, %v3504, %v2190
      %v3570 = vsel %vm3537, %v3505, %v2192
      %v3571 = vsel %vm3537, %v3506, %v2194
      %v3572 = vsel %vm3537, %v3507, %v2196
      %v3573 = vsel %vm3537, %v3508, %v2198
      %v3574 = vsel %vm3537, %v3509, %v2200
      %v3575 = vsel %vm3537, %v3510, %v2202
      %v3576 = vsel %vm3537, %v3511, %v2204
      %v3577 = vsel %vm3537, %v3512, %v2206
      %v3578 = vsel %vm3537, %v3513, %v2208
      %v3579 = vsel %vm3537, %v3514, %v2210
      %v3580 = vsel %vm3537, %v3515, %v2212
      %v3581 = vsel %vm3537, %v3516, %v2214
      %v3582 = vsel %vm3537, %v3517, %v2216
      %v3583 = vsel %vm3537, %v3518, %v2218
      %v3584 = vsel %vm3537, %v3519, %v2220
      %v3585 = vsel %vm3537, %v3520, %v2222
      %v3586 = vsel %vm3537, %v3521, %v2224
      %v3587 = vsel %vm3537, %v3522, %v2226
      %v3588 = vsel %vm3537, %v3523, %v2228
      %v3589 = vsel %vm3537, %v3524, %v2230
      %v3590 = vsel %vm3537, %v3525, %v2232
      %v3591 = vsel %vm3537, %v3526, %v2234
      %v3592 = vsel %vm3537, %v3527, %v2236
      %v3593 = vsel %vm3537, %v3528, %v2238
      %v3594 = vsel %vm3537, %v3529, %v2240
      %v3595 = vsel %vm3537, %v3530, %v2242
      %v3596 = vsel %vm3537, %v3531, %v2244
      %v3597 = vsel %vm3537, %v3532, %v2246
      %v3598 = vsel %vm3537, %v3533, %v2248
      %v3599 = vsel %vm3537, %v3534, %v2250
      %v3600 = vsel %vm3537, %v3535, %v2252
      %v3601 = vsel %vm3537, %v3536, %v2254
      %vm3602 = vcmask 121856
      %v3603 = vsel %vm3602, %v3538, %v2384
      %v3604 = vsel %vm3602, %v3539, %v2386
      %v3605 = vsel %vm3602, %v3540, %v2388
      %v3606 = vsel %vm3602, %v3541, %v2390
      %v3607 = vsel %vm3602, %v3542, %v2392
      %v3608 = vsel %vm3602, %v3543, %v2394
      %v3609 = vsel %vm3602, %v3544, %v2396
      %v3610 = vsel %vm3602, %v3545, %v2398
      %v3611 = vsel %vm3602, %v3546, %v2400
      %v3612 = vsel %vm3602, %v3547, %v2402
      %v3613 = vsel %vm3602, %v3548, %v2404
      %v3614 = vsel %vm3602, %v3549, %v2406
      %v3615 = vsel %vm3602, %v3550, %v2408
      %v3616 = vsel %vm3602, %v3551, %v2410
      %v3617 = vsel %vm3602, %v3552, %v2412
      %v3618 = vsel %vm3602, %v3553, %v2414
      %v3619 = vsel %vm3602, %v3554, %v2416
      %v3620 = vsel %vm3602, %v3555, %v2418
      %v3621 = vsel %vm3602, %v3556, %v2420
      %v3622 = vsel %vm3602, %v3557, %v2422
      %v3623 = vsel %vm3602, %v3558, %v2424
      %v3624 = vsel %vm3602, %v3559, %v2426
      %v3625 = vsel %vm3602, %v3560, %v2428
      %v3626 = vsel %vm3602, %v3561, %v2430
      %v3627 = vsel %vm3602, %v3562, %v2432
      %v3628 = vsel %vm3602, %v3563, %v2434
      %v3629 = vsel %vm3602, %v3564, %v2436
      %v3630 = vsel %vm3602, %v3565, %v2438
      %v3631 = vsel %vm3602, %v3566, %v2440
      %v3632 = vsel %vm3602, %v3567, %v2442
      %v3633 = vsel %vm3602, %v3568, %v2444
      %v3634 = vsel %vm3602, %v3569, %v2446
      %v3635 = vsel %vm3602, %v3570, %v2448
      %v3636 = vsel %vm3602, %v3571, %v2450
      %v3637 = vsel %vm3602, %v3572, %v2452
      %v3638 = vsel %vm3602, %v3573, %v2454
      %v3639 = vsel %vm3602, %v3574, %v2456
      %v3640 = vsel %vm3602, %v3575, %v2458
      %v3641 = vsel %vm3602, %v3576, %v2460
      %v3642 = vsel %vm3602, %v3577, %v2462
      %v3643 = vsel %vm3602, %v3578, %v2464
      %v3644 = vsel %vm3602, %v3579, %v2466
      %v3645 = vsel %vm3602, %v3580, %v2468
      %v3646 = vsel %vm3602, %v3581, %v2470
      %v3647 = vsel %vm3602, %v3582, %v2472
      %v3648 = vsel %vm3602, %v3583, %v2474
      %v3649 = vsel %vm3602, %v3584, %v2476
      %v3650 = vsel %vm3602, %v3585, %v2478
      %v3651 = vsel %vm3602, %v3586, %v2480
      %v3652 = vsel %vm3602, %v3587, %v2482
      %v3653 = vsel %vm3602, %v3588, %v2484
      %v3654 = vsel %vm3602, %v3589, %v2486
      %v3655 = vsel %vm3602, %v3590, %v2488
      %v3656 = vsel %vm3602, %v3591, %v2490
      %v3657 = vsel %vm3602, %v3592, %v2492
      %v3658 = vsel %vm3602, %v3593, %v2494
      %v3659 = vsel %vm3602, %v3594, %v2496
      %v3660 = vsel %vm3602, %v3595, %v2498
      %v3661 = vsel %vm3602, %v3596, %v2500
      %v3662 = vsel %vm3602, %v3597, %v2502
      %v3663 = vsel %vm3602, %v3598, %v2504
      %v3664 = vsel %vm3602, %v3599, %v2506
      %v3665 = vsel %vm3602, %v3600, %v2508
      %v3666 = vsel %vm3602, %v3601, %v2510
      %vm3667 = vcmask 146432
      %v3668 = vsel %vm3667, %v3603, %v2640
      %v3669 = vsel %vm3667, %v3604, %v2642
      %v3670 = vsel %vm3667, %v3605, %v2644
      %v3671 = vsel %vm3667, %v3606, %v2646
      %v3672 = vsel %vm3667, %v3607, %v2648
      %v3673 = vsel %vm3667, %v3608, %v2650
      %v3674 = vsel %vm3667, %v3609, %v2652
      %v3675 = vsel %vm3667, %v3610, %v2654
      %v3676 = vsel %vm3667, %v3611, %v2656
      %v3677 = vsel %vm3667, %v3612, %v2658
      %v3678 = vsel %vm3667, %v3613, %v2660
      %v3679 = vsel %vm3667, %v3614, %v2662
      %v3680 = vsel %vm3667, %v3615, %v2664
      %v3681 = vsel %vm3667, %v3616, %v2666
      %v3682 = vsel %vm3667, %v3617, %v2668
      %v3683 = vsel %vm3667, %v3618, %v2670
      %v3684 = vsel %vm3667, %v3619, %v2672
      %v3685 = vsel %vm3667, %v3620, %v2674
      %v3686 = vsel %vm3667, %v3621, %v2676
      %v3687 = vsel %vm3667, %v3622, %v2678
      %v3688 = vsel %vm3667, %v3623, %v2680
      %v3689 = vsel %vm3667, %v3624, %v2682
      %v3690 = vsel %vm3667, %v3625, %v2684
      %v3691 = vsel %vm3667, %v3626, %v2686
      %v3692 = vsel %vm3667, %v3627, %v2688
      %v3693 = vsel %vm3667, %v3628, %v2690
      %v3694 = vsel %vm3667, %v3629, %v2692
      %v3695 = vsel %vm3667, %v3630, %v2694
      %v3696 = vsel %vm3667, %v3631, %v2696
      %v3697 = vsel %vm3667, %v3632, %v2698
      %v3698 = vsel %vm3667, %v3633, %v2700
      %v3699 = vsel %vm3667, %v3634, %v2702
      %v3700 = vsel %vm3667, %v3635, %v2704
      %v3701 = vsel %vm3667, %v3636, %v2706
      %v3702 = vsel %vm3667, %v3637, %v2708
      %v3703 = vsel %vm3667, %v3638, %v2710
      %v3704 = vsel %vm3667, %v3639, %v2712
      %v3705 = vsel %vm3667, %v3640, %v2714
      %v3706 = vsel %vm3667, %v3641, %v2716
      %v3707 = vsel %vm3667, %v3642, %v2718
      %v3708 = vsel %vm3667, %v3643, %v2720
      %v3709 = vsel %vm3667, %v3644, %v2722
      %v3710 = vsel %vm3667, %v3645, %v2724
      %v3711 = vsel %vm3667, %v3646, %v2726
      %v3712 = vsel %vm3667, %v3647, %v2728
      %v3713 = vsel %vm3667, %v3648, %v2730
      %v3714 = vsel %vm3667, %v3649, %v2732
      %v3715 = vsel %vm3667, %v3650, %v2734
      %v3716 = vsel %vm3667, %v3651, %v2736
      %v3717 = vsel %vm3667, %v3652, %v2738
      %v3718 = vsel %vm3667, %v3653, %v2740
      %v3719 = vsel %vm3667, %v3654, %v2742
      %v3720 = vsel %vm3667, %v3655, %v2744
      %v3721 = vsel %vm3667, %v3656, %v2746
      %v3722 = vsel %vm3667, %v3657, %v2748
      %v3723 = vsel %vm3667, %v3658, %v2750
      %v3724 = vsel %vm3667, %v3659, %v2752
      %v3725 = vsel %vm3667, %v3660, %v2754
      %v3726 = vsel %vm3667, %v3661, %v2756
      %v3727 = vsel %vm3667, %v3662, %v2758
      %v3728 = vsel %vm3667, %v3663, %v2760
      %v3729 = vsel %vm3667, %v3664, %v2762
      %v3730 = vsel %vm3667, %v3665, %v2764
      %v3731 = vsel %vm3667, %v3666, %v2766
      %vm3732 = vcmask 171008
      %v3733 = vsel %vm3732, %v3668, %v2896
      %v3734 = vsel %vm3732, %v3669, %v2898
      %v3735 = vsel %vm3732, %v3670, %v2900
      %v3736 = vsel %vm3732, %v3671, %v2902
      %v3737 = vsel %vm3732, %v3672, %v2904
      %v3738 = vsel %vm3732, %v3673, %v2906
      %v3739 = vsel %vm3732, %v3674, %v2908
      %v3740 = vsel %vm3732, %v3675, %v2910
      %v3741 = vsel %vm3732, %v3676, %v2912
      %v3742 = vsel %vm3732, %v3677, %v2914
      %v3743 = vsel %vm3732, %v3678, %v2916
      %v3744 = vsel %vm3732, %v3679, %v2918
      %v3745 = vsel %vm3732, %v3680, %v2920
      %v3746 = vsel %vm3732, %v3681, %v2922
      %v3747 = vsel %vm3732, %v3682, %v2924
      %v3748 = vsel %vm3732, %v3683, %v2926
      %v3749 = vsel %vm3732, %v3684, %v2928
      %v3750 = vsel %vm3732, %v3685, %v2930
      %v3751 = vsel %vm3732, %v3686, %v2932
      %v3752 = vsel %vm3732, %v3687, %v2934
      %v3753 = vsel %vm3732, %v3688, %v2936
      %v3754 = vsel %vm3732, %v3689, %v2938
      %v3755 = vsel %vm3732, %v3690, %v2940
      %v3756 = vsel %vm3732, %v3691, %v2942
      %v3757 = vsel %vm3732, %v3692, %v2944
      %v3758 = vsel %vm3732, %v3693, %v2946
      %v3759 = vsel %vm3732, %v3694, %v2948
      %v3760 = vsel %vm3732, %v3695, %v2950
      %v3761 = vsel %vm3732, %v3696, %v2952
      %v3762 = vsel %vm3732, %v3697, %v2954
      %v3763 = vsel %vm3732, %v3698, %v2956
      %v3764 = vsel %vm3732, %v3699, %v2958
      %v3765 = vsel %vm3732, %v3700, %v2960
      %v3766 = vsel %vm3732, %v3701, %v2962
      %v3767 = vsel %vm3732, %v3702, %v2964
      %v3768 = vsel %vm3732, %v3703, %v2966
      %v3769 = vsel %vm3732, %v3704, %v2968
      %v3770 = vsel %vm3732, %v3705, %v2970
      %v3771 = vsel %vm3732, %v3706, %v2972
      %v3772 = vsel %vm3732, %v3707, %v2974
      %v3773 = vsel %vm3732, %v3708, %v2976
      %v3774 = vsel %vm3732, %v3709, %v2978
      %v3775 = vsel %vm3732, %v3710, %v2980
      %v3776 = vsel %vm3732, %v3711, %v2982
      %v3777 = vsel %vm3732, %v3712, %v2984
      %v3778 = vsel %vm3732, %v3713, %v2986
      %v3779 = vsel %vm3732, %v3714, %v2988
      %v3780 = vsel %vm3732, %v3715, %v2990
      %v3781 = vsel %vm3732, %v3716, %v2992
      %v3782 = vsel %vm3732, %v3717, %v2994
      %v3783 = vsel %vm3732, %v3718, %v2996
      %v3784 = vsel %vm3732, %v3719, %v2998
      %v3785 = vsel %vm3732, %v3720, %v3000
      %v3786 = vsel %vm3732, %v3721, %v3002
      %v3787 = vsel %vm3732, %v3722, %v3004
      %v3788 = vsel %vm3732, %v3723, %v3006
      %v3789 = vsel %vm3732, %v3724, %v3008
      %v3790 = vsel %vm3732, %v3725, %v3010
      %v3791 = vsel %vm3732, %v3726, %v3012
      %v3792 = vsel %vm3732, %v3727, %v3014
      %v3793 = vsel %vm3732, %v3728, %v3016
      %v3794 = vsel %vm3732, %v3729, %v3018
      %v3795 = vsel %vm3732, %v3730, %v3020
      %v3796 = vsel %vm3732, %v3731, %v3022
      %vm3797 = vcmask 195584
      %v3798 = vsel %vm3797, %v3733, %v3152
      %v3799 = vsel %vm3797, %v3734, %v3154
      %v3800 = vsel %vm3797, %v3735, %v3156
      %v3801 = vsel %vm3797, %v3736, %v3158
      %v3802 = vsel %vm3797, %v3737, %v3160
      %v3803 = vsel %vm3797, %v3738, %v3162
      %v3804 = vsel %vm3797, %v3739, %v3164
      %v3805 = vsel %vm3797, %v3740, %v3166
      %v3806 = vsel %vm3797, %v3741, %v3168
      %v3807 = vsel %vm3797, %v3742, %v3170
      %v3808 = vsel %vm3797, %v3743, %v3172
      %v3809 = vsel %vm3797, %v3744, %v3174
      %v3810 = vsel %vm3797, %v3745, %v3176
      %v3811 = vsel %vm3797, %v3746, %v3178
      %v3812 = vsel %vm3797, %v3747, %v3180
      %v3813 = vsel %vm3797, %v3748, %v3182
      %v3814 = vsel %vm3797, %v3749, %v3184
      %v3815 = vsel %vm3797, %v3750, %v3186
      %v3816 = vsel %vm3797, %v3751, %v3188
      %v3817 = vsel %vm3797, %v3752, %v3190
      %v3818 = vsel %vm3797, %v3753, %v3192
      %v3819 = vsel %vm3797, %v3754, %v3194
      %v3820 = vsel %vm3797, %v3755, %v3196
      %v3821 = vsel %vm3797, %v3756, %v3198
      %v3822 = vsel %vm3797, %v3757, %v3200
      %v3823 = vsel %vm3797, %v3758, %v3202
      %v3824 = vsel %vm3797, %v3759, %v3204
      %v3825 = vsel %vm3797, %v3760, %v3206
      %v3826 = vsel %vm3797, %v3761, %v3208
      %v3827 = vsel %vm3797, %v3762, %v3210
      %v3828 = vsel %vm3797, %v3763, %v3212
      %v3829 = vsel %vm3797, %v3764, %v3214
      %v3830 = vsel %vm3797, %v3765, %v3216
      %v3831 = vsel %vm3797, %v3766, %v3218
      %v3832 = vsel %vm3797, %v3767, %v3220
      %v3833 = vsel %vm3797, %v3768, %v3222
      %v3834 = vsel %vm3797, %v3769, %v3224
      %v3835 = vsel %vm3797, %v3770, %v3226
      %v3836 = vsel %vm3797, %v3771, %v3228
      %v3837 = vsel %vm3797, %v3772, %v3230
      %v3838 = vsel %vm3797, %v3773, %v3232
      %v3839 = vsel %vm3797, %v3774, %v3234
      %v3840 = vsel %vm3797, %v3775, %v3236
      %v3841 = vsel %vm3797, %v3776, %v3238
      %v3842 = vsel %vm3797, %v3777, %v3240
      %v3843 = vsel %vm3797, %v3778, %v3242
      %v3844 = vsel %vm3797, %v3779, %v3244
      %v3845 = vsel %vm3797, %v3780, %v3246
      %v3846 = vsel %vm3797, %v3781, %v3248
      %v3847 = vsel %vm3797, %v3782, %v3250
      %v3848 = vsel %vm3797, %v3783, %v3252
      %v3849 = vsel %vm3797, %v3784, %v3254
      %v3850 = vsel %vm3797, %v3785, %v3256
      %v3851 = vsel %vm3797, %v3786, %v3258
      %v3852 = vsel %vm3797, %v3787, %v3260
      %v3853 = vsel %vm3797, %v3788, %v3262
      %v3854 = vsel %vm3797, %v3789, %v3264
      %v3855 = vsel %vm3797, %v3790, %v3266
      %v3856 = vsel %vm3797, %v3791, %v3268
      %v3857 = vsel %vm3797, %v3792, %v3270
      %v3858 = vsel %vm3797, %v3793, %v3272
      %v3859 = vsel %vm3797, %v3794, %v3274
      %v3860 = vsel %vm3797, %v3795, %v3276
      %v3861 = vsel %vm3797, %v3796, %v3278
      %v3862 = vpack.c.bf16 %v3799, %v3798
      %v3863 = vpack.c.bf16 %v3801, %v3800
      %v3864 = vpack.c.bf16 %v3803, %v3802
      %v3865 = vpack.c.bf16 %v3805, %v3804
      %v3866 = vpack.c.bf16 %v3807, %v3806
      %v3867 = vpack.c.bf16 %v3809, %v3808
      %v3868 = vpack.c.bf16 %v3811, %v3810
      %v3869 = vpack.c.bf16 %v3813, %v3812
      %v3870 = vpack.c.bf16 %v3815, %v3814
      %v3871 = vpack.c.bf16 %v3817, %v3816
      %v3872 = vpack.c.bf16 %v3819, %v3818
      %v3873 = vpack.c.bf16 %v3821, %v3820
      %v3874 = vpack.c.bf16 %v3823, %v3822
      %v3875 = vpack.c.bf16 %v3825, %v3824
      %v3876 = vpack.c.bf16 %v3827, %v3826
      %v3877 = vpack.c.bf16 %v3829, %v3828
      %v3878 = vpack.c.bf16 %v3831, %v3830
      %v3879 = vpack.c.bf16 %v3833, %v3832
      %v3880 = vpack.c.bf16 %v3835, %v3834
      %v3881 = vpack.c.bf16 %v3837, %v3836
      %v3882 = vpack.c.bf16 %v3839, %v3838
      %v3883 = vpack.c.bf16 %v3841, %v3840
      %v3884 = vpack.c.bf16 %v3843, %v3842
      %v3885 = vpack.c.bf16 %v3845, %v3844
      %v3886 = vpack.c.bf16 %v3847, %v3846
      %v3887 = vpack.c.bf16 %v3849, %v3848
      %v3888 = vpack.c.bf16 %v3851, %v3850
      %v3889 = vpack.c.bf16 %v3853, %v3852
      %v3890 = vpack.c.bf16 %v3855, %v3854
      %v3891 = vpack.c.bf16 %v3857, %v3856
      %v3892 = vpack.c.bf16 %v3859, %v3858
      %v3893 = vpack.c.bf16 %v3861, %v3860
      %v3894 = vld [vmem:[%s1] sm:$0xf]
      %v3895 = vld [vmem:[%s1 + $0x4] sm:$0xf]
      %v3896 = vld [vmem:[%s1 + $0x8] sm:$0xf]
      %v3897 = vld [vmem:[%s1 + $0xc] sm:$0x3]
      %v3898 = vld [vmem:[%s2] sm:$0x1]
      %v3900 = vlaneseq
      %v3901 = vshrl.u32 %v3900, 7
      %v3902 = vsub.s32 0, %v3901
      %v3903 = vrot.slane %v3898, %v3902
      %v3909 = vunpack.c.l.b16 %v3894
      %v3910 = vunpack.c.l.b16 %v3895
      %v3911 = vunpack.c.l.b16 %v3896
      %v3912 = vunpack.c.l.b16 %v3897
      %v3913 = vpack.c.b16 %v3910, %v3909
      %v3914 = vpack.c.b16 %v3912, %v3911
      %vm3916 = vcmask 220160
      %v3918 = vsel %vm3916, %v3862, 0
      %v3921 = vsel %vm3916, %v3863, 0
      %v3924 = vsel %vm3916, %v3864, 0
      %v3927 = vsel %vm3916, %v3865, 0
      %v3930 = vsel %vm3916, %v3866, 0
      %v3933 = vsel %vm3916, %v3867, 0
      %v3936 = vsel %vm3916, %v3868, 0
      %v3939 = vsel %vm3916, %v3869, 0
      %v3942 = vsel %vm3916, %v3870, 0
      %v3945 = vsel %vm3916, %v3871, 0
      %v3948 = vsel %vm3916, %v3872, 0
      %v3951 = vsel %vm3916, %v3873, 0
      %v3954 = vsel %vm3916, %v3874, 0
      %v3957 = vsel %vm3916, %v3875, 0
      %v3960 = vsel %vm3916, %v3876, 0
      %v3963 = vsel %vm3916, %v3877, 0
      %v3966 = vsel %vm3916, %v3878, 0
      %v3969 = vsel %vm3916, %v3879, 0
      %v3972 = vsel %vm3916, %v3880, 0
      %v3975 = vsel %vm3916, %v3881, 0
      %v3978 = vsel %vm3916, %v3882, 0
      %v3981 = vsel %vm3916, %v3883, 0
      %v3984 = vsel %vm3916, %v3884, 0
      %v3987 = vsel %vm3916, %v3885, 0
      %v3990 = vsel %vm3916, %v3886, 0
      %v3993 = vsel %vm3916, %v3887, 0
      %v3996 = vsel %vm3916, %v3888, 0
      %v3999 = vsel %vm3916, %v3889, 0
      %v4002 = vsel %vm3916, %v3890, 0
      %v4005 = vsel %vm3916, %v3891, 0
      %v4008 = vsel %vm3916, %v3892, 0
      %v4011 = vsel %vm3916, %v3893, 0
      %vm4013 = vcmask 1044480
      %vm4014 = vcmask 1045504
      %v4015 = vsel %vm4013, 4294967295, 65535
      %v4016 = vsel %vm4014, %v4015, 0
      %v4018 = vand.u32 %v3914, %v4016
      %4020 = vmatprep.subr.bf16.mxu0 0
      %4021 = vmatpush1.bf16.msra.mxu0 %v3913
      %4022 = vmatprep.subr.bf16.mxu0 0
      %4023 = vmatpush1.bf16.msra.mxu0 %v4018
      %4024 = vmatprep.subr.bf16.mxu0 0
      %4025 = vmatpush1.bf16.msra.mxu0 0
      %4026 = vmatprep.subr.bf16.mxu0 0
      %4027 = vmatpush1.bf16.msra.mxu0 0
      %4028 = vmatprep.subr.bf16.mxu0 0
      %4029 = vmatpush1.bf16.msra.mxu0 0
      %4030 = vmatprep.subr.bf16.mxu0 0
      %4031 = vmatpush1.bf16.msra.mxu0 0
      %4032 = vmatprep.subr.bf16.mxu0 0
      %4033 = vmatpush1.bf16.msra.mxu0 0
      %4034 = vmatprep.subr.bf16.mxu0 0
      %4035 = vmatpush1.bf16.msra.mxu0 0
      %4036 = vmatprep.subr.bf16.mxu0 0
      %4037 = vmatpush1.bf16.msra.mxu0 0
      %4038 = vmatprep.subr.bf16.mxu0 0
      %4039 = vmatpush1.bf16.msra.mxu0 0
      %4040 = vmatprep.subr.bf16.mxu0 0
      %4041 = vmatpush1.bf16.msra.mxu0 0
      %4042 = vmatprep.subr.bf16.mxu0 0
      %4043 = vmatpush1.bf16.msra.mxu0 0
      %4044 = vmatprep.subr.bf16.mxu0 0
      %4045 = vmatpush1.bf16.msra.mxu0 0
      %4046 = vmatprep.subr.bf16.mxu0 0
      %4047 = vmatpush1.bf16.msra.mxu0 0
      %4048 = vmatprep.subr.bf16.mxu0 0
      %4049 = vmatpush1.bf16.msra.mxu0 0
      %4050 = vmatprep.subr.bf16.mxu0 0
      %4051 = vmatpush1.bf16.msra.mxu0 0
      %4052 = vmatprep.mubr.bf16.mxu0 0
      %4053 = vmatmul.mubr.bf16.gmra.mrb[0].mxu0 %v3918
      %v4054 = vpop.f32.mrb[0].mxu0
      %v4055 = vadd.f32 %v3903, %v4054
      %v4056 = vpop.f32.mrb[0].mxu0
      %v4057 = vpop.f32.mrb[0].mxu0
      %v4058 = vadd.f32 %v3903, %v4057
      %v4059 = vpop.f32.mrb[0].mxu0
      %4060 = vmatprep.mubr.bf16.mxu0 0
      %4061 = vmatmul.mubr.bf16.gmra.mrb[0].mxu0 %v3921
      %v4062 = vpop.f32.mrb[0].mxu0
      %v4063 = vadd.f32 %v3903, %v4062
      %v4064 = vpop.f32.mrb[0].mxu0
      %v4065 = vpop.f32.mrb[0].mxu0
      %v4066 = vadd.f32 %v3903, %v4065
      %v4067 = vpop.f32.mrb[0].mxu0
      %4068 = vmatprep.mubr.bf16.mxu0 0
      %4069 = vmatmul.mubr.bf16.gmra.mrb[0].mxu0 %v3924
      %v4070 = vpop.f32.mrb[0].mxu0
      %v4071 = vadd.f32 %v3903, %v4070
      %v4072 = vpop.f32.mrb[0].mxu0
      %v4073 = vpop.f32.mrb[0].mxu0
      %v4074 = vadd.f32 %v3903, %v4073
      %v4075 = vpop.f32.mrb[0].mxu0
      %4076 = vmatprep.mubr.bf16.mxu0 0
      %4077 = vmatmul.mubr.bf16.gmra.mrb[0].mxu0 %v3927
      %v4078 = vpop.f32.mrb[0].mxu0
      %v4079 = vadd.f32 %v3903, %v4078
      %v4080 = vpop.f32.mrb[0].mxu0
      %v4081 = vpop.f32.mrb[0].mxu0
      %v4082 = vadd.f32 %v3903, %v4081
      %v4083 = vpop.f32.mrb[0].mxu0
      %4084 = vmatprep.mubr.bf16.mxu0 0
      %4085 = vmatmul.mubr.bf16.gmra.mrb[0].mxu0 %v3930
      %v4086 = vpop.f32.mrb[0].mxu0
      %v4087 = vadd.f32 %v3903, %v4086
      %v4088 = vpop.f32.mrb[0].mxu0
      %v4089 = vpop.f32.mrb[0].mxu0
      %v4090 = vadd.f32 %v3903, %v4089
      %v4091 = vpop.f32.mrb[0].mxu0
      %4092 = vmatprep.mubr.bf16.mxu0 0
      %4093 = vmatmul.mubr.bf16.gmra.mrb[0].mxu0 %v3933
      %v4094 = vpop.f32.mrb[0].mxu0
      %v4095 = vadd.f32 %v3903, %v4094
      %v4096 = vpop.f32.mrb[0].mxu0
      %v4097 = vpop.f32.mrb[0].mxu0
      %v4098 = vadd.f32 %v3903, %v4097
      %v4099 = vpop.f32.mrb[0].mxu0
      %4100 = vmatprep.mubr.bf16.mxu0 0
      %4101 = vmatmul.mubr.bf16.gmra.mrb[0].mxu0 %v3936
      %v4102 = vpop.f32.mrb[0].mxu0
      %v4103 = vadd.f32 %v3903, %v4102
      %v4104 = vpop.f32.mrb[0].mxu0
      %v4105 = vpop.f32.mrb[0].mxu0
      %v4106 = vadd.f32 %v3903, %v4105
      %v4107 = vpop.f32.mrb[0].mxu0
      %4108 = vmatprep.mubr.bf16.mxu0 0
      %4109 = vmatmul.mubr.bf16.gmra.mrb[0].mxu0 %v3939
      %v4110 = vpop.f32.mrb[0].mxu0
      %v4111 = vadd.f32 %v3903, %v4110
      %v4112 = vpop.f32.mrb[0].mxu0
      %v4113 = vpop.f32.mrb[0].mxu0
      %v4114 = vadd.f32 %v3903, %v4113
      %v4115 = vpop.f32.mrb[0].mxu0
      %4116 = vmatprep.mubr.bf16.mxu0 0
      %4117 = vmatmul.mubr.bf16.gmra.mrb[0].mxu0 %v3942
      %v4118 = vpop.f32.mrb[0].mxu0
      %v4119 = vadd.f32 %v3903, %v4118
      %v4120 = vpop.f32.mrb[0].mxu0
      %v4121 = vpop.f32.mrb[0].mxu0
      %v4122 = vadd.f32 %v3903, %v4121
      %v4123 = vpop.f32.mrb[0].mxu0
      %4124 = vmatprep.mubr.bf16.mxu0 0
      %4125 = vmatmul.mubr.bf16.gmra.mrb[0].mxu0 %v3945
      %v4126 = vpop.f32.mrb[0].mxu0
      %v4127 = vadd.f32 %v3903, %v4126
      %v4128 = vpop.f32.mrb[0].mxu0
      %v4129 = vpop.f32.mrb[0].mxu0
      %v4130 = vadd.f32 %v3903, %v4129
      %v4131 = vpop.f32.mrb[0].mxu0
      %4132 = vmatprep.mubr.bf16.mxu0 0
      %4133 = vmatmul.mubr.bf16.gmra.mrb[0].mxu0 %v3948
      %v4134 = vpop.f32.mrb[0].mxu0
      %v4135 = vadd.f32 %v3903, %v4134
      %v4136 = vpop.f32.mrb[0].mxu0
      %v4137 = vpop.f32.mrb[0].mxu0
      %v4138 = vadd.f32 %v3903, %v4137
      %v4139 = vpop.f32.mrb[0].mxu0
      %4140 = vmatprep.mubr.bf16.mxu0 0
      %4141 = vmatmul.mubr.bf16.gmra.mrb[0].mxu0 %v3951
      %v4142 = vpop.f32.mrb[0].mxu0
      %v4143 = vadd.f32 %v3903, %v4142
      %v4144 = vpop.f32.mrb[0].mxu0
      %v4145 = vpop.f32.mrb[0].mxu0
      %v4146 = vadd.f32 %v3903, %v4145
      %v4147 = vpop.f32.mrb[0].mxu0
      %4148 = vmatprep.mubr.bf16.mxu0 0
      %4149 = vmatmul.mubr.bf16.gmra.mrb[0].mxu0 %v3954
      %v4150 = vpop.f32.mrb[0].mxu0
      %v4151 = vadd.f32 %v3903, %v4150
      %v4152 = vpop.f32.mrb[0].mxu0
      %v4153 = vpop.f32.mrb[0].mxu0
      %v4154 = vadd.f32 %v3903, %v4153
      %v4155 = vpop.f32.mrb[0].mxu0
      %4156 = vmatprep.mubr.bf16.mxu0 0
      %4157 = vmatmul.mubr.bf16.gmra.mrb[0].mxu0 %v3957
      %v4158 = vpop.f32.mrb[0].mxu0
      %v4159 = vadd.f32 %v3903, %v4158
      %v4160 = vpop.f32.mrb[0].mxu0
      %v4161 = vpop.f32.mrb[0].mxu0
      %v4162 = vadd.f32 %v3903, %v4161
      %v4163 = vpop.f32.mrb[0].mxu0
      %4164 = vmatprep.mubr.bf16.mxu0 0
      %4165 = vmatmul.mubr.bf16.gmra.mrb[0].mxu0 %v3960
      %v4166 = vpop.f32.mrb[0].mxu0
      %v4167 = vadd.f32 %v3903, %v4166
      %v4168 = vpop.f32.mrb[0].mxu0
      %v4169 = vpop.f32.mrb[0].mxu0
      %v4170 = vadd.f32 %v3903, %v4169
      %v4171 = vpop.f32.mrb[0].mxu0
      %4172 = vmatprep.mubr.bf16.mxu0 0
      %4173 = vmatmul.mubr.bf16.gmra.mrb[0].mxu0 %v3963
      %v4174 = vpop.f32.mrb[0].mxu0
      %v4175 = vadd.f32 %v3903, %v4174
      %v4176 = vpop.f32.mrb[0].mxu0
      %v4177 = vpop.f32.mrb[0].mxu0
      %v4178 = vadd.f32 %v3903, %v4177
      %v4179 = vpop.f32.mrb[0].mxu0
      %4180 = vmatprep.mubr.bf16.mxu0 0
      %4181 = vmatmul.mubr.bf16.gmra.mrb[0].mxu0 %v3966
      %v4182 = vpop.f32.mrb[0].mxu0
      %v4183 = vadd.f32 %v3903, %v4182
      %v4184 = vpop.f32.mrb[0].mxu0
      %v4185 = vpop.f32.mrb[0].mxu0
      %v4186 = vadd.f32 %v3903, %v4185
      %v4187 = vpop.f32.mrb[0].mxu0
      %4188 = vmatprep.mubr.bf16.mxu0 0
      %4189 = vmatmul.mubr.bf16.gmra.mrb[0].mxu0 %v3969
      %v4190 = vpop.f32.mrb[0].mxu0
      %v4191 = vadd.f32 %v3903, %v4190
      %v4192 = vpop.f32.mrb[0].mxu0
      %v4193 = vpop.f32.mrb[0].mxu0
      %v4194 = vadd.f32 %v3903, %v4193
      %v4195 = vpop.f32.mrb[0].mxu0
      %4196 = vmatprep.mubr.bf16.mxu0 0
      %4197 = vmatmul.mubr.bf16.gmra.mrb[0].mxu0 %v3972
      %v4198 = vpop.f32.mrb[0].mxu0
      %v4199 = vadd.f32 %v3903, %v4198
      %v4200 = vpop.f32.mrb[0].mxu0
      %v4201 = vpop.f32.mrb[0].mxu0
      %v4202 = vadd.f32 %v3903, %v4201
      %v4203 = vpop.f32.mrb[0].mxu0
      %4204 = vmatprep.mubr.bf16.mxu0 0
      %4205 = vmatmul.mubr.bf16.gmra.mrb[0].mxu0 %v3975
      %v4206 = vpop.f32.mrb[0].mxu0
      %v4207 = vadd.f32 %v3903, %v4206
      %v4208 = vpop.f32.mrb[0].mxu0
      %v4209 = vpop.f32.mrb[0].mxu0
      %v4210 = vadd.f32 %v3903, %v4209
      %v4211 = vpop.f32.mrb[0].mxu0
      %4212 = vmatprep.mubr.bf16.mxu0 0
      %4213 = vmatmul.mubr.bf16.gmra.mrb[0].mxu0 %v3978
      %v4214 = vpop.f32.mrb[0].mxu0
      %v4215 = vadd.f32 %v3903, %v4214
      %v4216 = vpop.f32.mrb[0].mxu0
      %v4217 = vpop.f32.mrb[0].mxu0
      %v4218 = vadd.f32 %v3903, %v4217
      %v4219 = vpop.f32.mrb[0].mxu0
      %4220 = vmatprep.mubr.bf16.mxu0 0
      %4221 = vmatmul.mubr.bf16.gmra.mrb[0].mxu0 %v3981
      %v4222 = vpop.f32.mrb[0].mxu0
      %v4223 = vadd.f32 %v3903, %v4222
      %v4224 = vpop.f32.mrb[0].mxu0
      %v4225 = vpop.f32.mrb[0].mxu0
      %v4226 = vadd.f32 %v3903, %v4225
      %v4227 = vpop.f32.mrb[0].mxu0
      %4228 = vmatprep.mubr.bf16.mxu0 0
      %4229 = vmatmul.mubr.bf16.gmra.mrb[0].mxu0 %v3984
      %v4230 = vpop.f32.mrb[0].mxu0
      %v4231 = vadd.f32 %v3903, %v4230
      %v4232 = vpop.f32.mrb[0].mxu0
      %v4233 = vpop.f32.mrb[0].mxu0
      %v4234 = vadd.f32 %v3903, %v4233
      %v4235 = vpop.f32.mrb[0].mxu0
      %4236 = vmatprep.mubr.bf16.mxu0 0
      %4237 = vmatmul.mubr.bf16.gmra.mrb[0].mxu0 %v3987
      %v4238 = vpop.f32.mrb[0].mxu0
      %v4239 = vadd.f32 %v3903, %v4238
      %v4240 = vpop.f32.mrb[0].mxu0
      %v4241 = vpop.f32.mrb[0].mxu0
      %v4242 = vadd.f32 %v3903, %v4241
      %v4243 = vpop.f32.mrb[0].mxu0
      %4244 = vmatprep.mubr.bf16.mxu0 0
      %4245 = vmatmul.mubr.bf16.gmra.mrb[0].mxu0 %v3990
      %v4246 = vpop.f32.mrb[0].mxu0
      %v4247 = vadd.f32 %v3903, %v4246
      %v4248 = vpop.f32.mrb[0].mxu0
      %v4249 = vpop.f32.mrb[0].mxu0
      %v4250 = vadd.f32 %v3903, %v4249
      %v4251 = vpop.f32.mrb[0].mxu0
      %4252 = vmatprep.mubr.bf16.mxu0 0
      %4253 = vmatmul.mubr.bf16.gmra.mrb[0].mxu0 %v3993
      %v4254 = vpop.f32.mrb[0].mxu0
      %v4255 = vadd.f32 %v3903, %v4254
      %v4256 = vpop.f32.mrb[0].mxu0
      %v4257 = vpop.f32.mrb[0].mxu0
      %v4258 = vadd.f32 %v3903, %v4257
      %v4259 = vpop.f32.mrb[0].mxu0
      %4260 = vmatprep.mubr.bf16.mxu0 0
      %4261 = vmatmul.mubr.bf16.gmra.mrb[0].mxu0 %v3996
      %v4262 = vpop.f32.mrb[0].mxu0
      %v4263 = vadd.f32 %v3903, %v4262
      %v4264 = vpop.f32.mrb[0].mxu0
      %v4265 = vpop.f32.mrb[0].mxu0
      %v4266 = vadd.f32 %v3903, %v4265
      %v4267 = vpop.f32.mrb[0].mxu0
      %4268 = vmatprep.mubr.bf16.mxu0 0
      %4269 = vmatmul.mubr.bf16.gmra.mrb[0].mxu0 %v3999
      %v4270 = vpop.f32.mrb[0].mxu0
      %v4271 = vadd.f32 %v3903, %v4270
      %v4272 = vpop.f32.mrb[0].mxu0
      %v4273 = vpop.f32.mrb[0].mxu0
      %v4274 = vadd.f32 %v3903, %v4273
      %v4275 = vpop.f32.mrb[0].mxu0
      %4276 = vmatprep.mubr.bf16.mxu0 0
      %4277 = vmatmul.mubr.bf16.gmra.mrb[0].mxu0 %v4002
      %v4278 = vpop.f32.mrb[0].mxu0
      %v4279 = vadd.f32 %v3903, %v4278
      %v4280 = vpop.f32.mrb[0].mxu0
      %v4281 = vpop.f32.mrb[0].mxu0
      %v4282 = vadd.f32 %v3903, %v4281
      %v4283 = vpop.f32.mrb[0].mxu0
      %4284 = vmatprep.mubr.bf16.mxu0 0
      %4285 = vmatmul.mubr.bf16.gmra.mrb[0].mxu0 %v4005
      %v4286 = vpop.f32.mrb[0].mxu0
      %v4287 = vadd.f32 %v3903, %v4286
      %v4288 = vpop.f32.mrb[0].mxu0
      %v4289 = vpop.f32.mrb[0].mxu0
      %v4290 = vadd.f32 %v3903, %v4289
      %v4291 = vpop.f32.mrb[0].mxu0
      %4292 = vmatprep.mubr.bf16.mxu0 0
      %4293 = vmatmul.mubr.bf16.gmra.mrb[0].mxu0 %v4008
      %v4294 = vpop.f32.mrb[0].mxu0
      %v4295 = vadd.f32 %v3903, %v4294
      %v4296 = vpop.f32.mrb[0].mxu0
      %v4297 = vpop.f32.mrb[0].mxu0
      %v4298 = vadd.f32 %v3903, %v4297
      %v4299 = vpop.f32.mrb[0].mxu0
      %4300 = vmatprep.mubr.bf16.mxu0 0
      %4301 = vmatmul.mubr.bf16.gmra.mrb[0].mxu0 %v4011
      %v4302 = vpop.f32.mrb[0].mxu0
      %v4303 = vadd.f32 %v3903, %v4302
      %v4304 = vpop.f32.mrb[0].mxu0
      %v4305 = vpop.f32.mrb[0].mxu0
      %v4306 = vadd.f32 %v3903, %v4305
      %v4307 = vpop.f32.mrb[0].mxu0
      %4308 = vdwg.mxu0
      %vm4309 = vcmask 64512
      %v4310 = vsel %vm4309, %v4055, 0.0
      %v4311 = vsel %vm4309, %v4058, 0.0
      %v4312 = vadd.f32 %v4310, %v4311
      %v4313 = vsel %vm4309, %v4063, 0.0
      %v4314 = vadd.f32 %v4312, %v4313
      %v4315 = vsel %vm4309, %v4066, 0.0
      %v4316 = vadd.f32 %v4314, %v4315
      %v4317 = vsel %vm4309, %v4071, 0.0
      %v4318 = vadd.f32 %v4316, %v4317
      %v4319 = vsel %vm4309, %v4074, 0.0
      %v4320 = vadd.f32 %v4318, %v4319
      %v4321 = vsel %vm4309, %v4079, 0.0
      %v4322 = vadd.f32 %v4320, %v4321
      %v4323 = vsel %vm4309, %v4082, 0.0
      %v4324 = vadd.f32 %v4322, %v4323
      %v4325 = vsel %vm4309, %v4087, 0.0
      %v4326 = vadd.f32 %v4324, %v4325
      %v4327 = vsel %vm4309, %v4090, 0.0
      %v4328 = vadd.f32 %v4326, %v4327
      %v4329 = vsel %vm4309, %v4095, 0.0
      %v4330 = vadd.f32 %v4328, %v4329
      %v4331 = vsel %vm4309, %v4098, 0.0
      %v4332 = vadd.f32 %v4330, %v4331
      %v4333 = vsel %vm4309, %v4103, 0.0
      %v4334 = vadd.f32 %v4332, %v4333
      %v4335 = vsel %vm4309, %v4106, 0.0
      %v4336 = vadd.f32 %v4334, %v4335
      %v4337 = vsel %vm4309, %v4111, 0.0
      %v4338 = vadd.f32 %v4336, %v4337
      %v4339 = vsel %vm4309, %v4114, 0.0
      %v4340 = vadd.f32 %v4338, %v4339
      %v4341 = vsel %vm4309, %v4119, 0.0
      %v4342 = vadd.f32 %v4340, %v4341
      %v4343 = vsel %vm4309, %v4122, 0.0
      %v4344 = vadd.f32 %v4342, %v4343
      %v4345 = vsel %vm4309, %v4127, 0.0
      %v4346 = vadd.f32 %v4344, %v4345
      %v4347 = vsel %vm4309, %v4130, 0.0
      %v4348 = vadd.f32 %v4346, %v4347
      %v4349 = vsel %vm4309, %v4135, 0.0
      %v4350 = vadd.f32 %v4348, %v4349
      %v4351 = vsel %vm4309, %v4138, 0.0
      %v4352 = vadd.f32 %v4350, %v4351
      %v4353 = vsel %vm4309, %v4143, 0.0
      %v4354 = vadd.f32 %v4352, %v4353
      %v4355 = vsel %vm4309, %v4146, 0.0
      %v4356 = vadd.f32 %v4354, %v4355
      %v4357 = vsel %vm4309, %v4151, 0.0
      %v4358 = vadd.f32 %v4356, %v4357
      %v4359 = vsel %vm4309, %v4154, 0.0
      %v4360 = vadd.f32 %v4358, %v4359
      %v4361 = vsel %vm4309, %v4159, 0.0
      %v4362 = vadd.f32 %v4360, %v4361
      %v4363 = vsel %vm4309, %v4162, 0.0
      %v4364 = vadd.f32 %v4362, %v4363
      %v4365 = vsel %vm4309, %v4167, 0.0
      %v4366 = vadd.f32 %v4364, %v4365
      %v4367 = vsel %vm4309, %v4170, 0.0
      %v4368 = vadd.f32 %v4366, %v4367
      %v4369 = vsel %vm4309, %v4175, 0.0
      %v4370 = vadd.f32 %v4368, %v4369
      %v4371 = vsel %vm4309, %v4178, 0.0
      %v4372 = vadd.f32 %v4370, %v4371
      %v4373 = vrot.slane %v4372, 4
      %v4374 = vadd.f32 %v4372, %v4373
      %v4375 = vrot.slane %v4374, 2
      %v4376 = vadd.f32 %v4374, %v4375
      %v4377 = vrot.slane %v4376, 1
      %v4378 = vadd.f32 %v4376, %v4377
      %v4379 = vsel %vm4309, %v4183, 0.0
      %v4380 = vsel %vm4309, %v4186, 0.0
      %v4381 = vadd.f32 %v4379, %v4380
      %v4382 = vsel %vm4309, %v4191, 0.0
      %v4383 = vadd.f32 %v4381, %v4382
      %v4384 = vsel %vm4309, %v4194, 0.0
      %v4385 = vadd.f32 %v4383, %v4384
      %v4386 = vsel %vm4309, %v4199, 0.0
      %v4387 = vadd.f32 %v4385, %v4386
      %v4388 = vsel %vm4309, %v4202, 0.0
      %v4389 = vadd.f32 %v4387, %v4388
      %v4390 = vsel %vm4309, %v4207, 0.0
      %v4391 = vadd.f32 %v4389, %v4390
      %v4392 = vsel %vm4309, %v4210, 0.0
      %v4393 = vadd.f32 %v4391, %v4392
      %v4394 = vsel %vm4309, %v4215, 0.0
      %v4395 = vadd.f32 %v4393, %v4394
      %v4396 = vsel %vm4309, %v4218, 0.0
      %v4397 = vadd.f32 %v4395, %v4396
      %v4398 = vsel %vm4309, %v4223, 0.0
      %v4399 = vadd.f32 %v4397, %v4398
      %v4400 = vsel %vm4309, %v4226, 0.0
      %v4401 = vadd.f32 %v4399, %v4400
      %v4402 = vsel %vm4309, %v4231, 0.0
      %v4403 = vadd.f32 %v4401, %v4402
      %v4404 = vsel %vm4309, %v4234, 0.0
      %v4405 = vadd.f32 %v4403, %v4404
      %v4406 = vsel %vm4309, %v4239, 0.0
      %v4407 = vadd.f32 %v4405, %v4406
      %v4408 = vsel %vm4309, %v4242, 0.0
      %v4409 = vadd.f32 %v4407, %v4408
      %v4410 = vsel %vm4309, %v4247, 0.0
      %v4411 = vadd.f32 %v4409, %v4410
      %v4412 = vsel %vm4309, %v4250, 0.0
      %v4413 = vadd.f32 %v4411, %v4412
      %v4414 = vsel %vm4309, %v4255, 0.0
      %v4415 = vadd.f32 %v4413, %v4414
      %v4416 = vsel %vm4309, %v4258, 0.0
      %v4417 = vadd.f32 %v4415, %v4416
      %v4418 = vsel %vm4309, %v4263, 0.0
      %v4419 = vadd.f32 %v4417, %v4418
      %v4420 = vsel %vm4309, %v4266, 0.0
      %v4421 = vadd.f32 %v4419, %v4420
      %v4422 = vsel %vm4309, %v4271, 0.0
      %v4423 = vadd.f32 %v4421, %v4422
      %v4424 = vsel %vm4309, %v4274, 0.0
      %v4425 = vadd.f32 %v4423, %v4424
      %v4426 = vsel %vm4309, %v4279, 0.0
      %v4427 = vadd.f32 %v4425, %v4426
      %v4428 = vsel %vm4309, %v4282, 0.0
      %v4429 = vadd.f32 %v4427, %v4428
      %v4430 = vsel %vm4309, %v4287, 0.0
      %v4431 = vadd.f32 %v4429, %v4430
      %v4432 = vsel %vm4309, %v4290, 0.0
      %v4433 = vadd.f32 %v4431, %v4432
      %v4434 = vsel %vm4309, %v4295, 0.0
      %v4435 = vadd.f32 %v4433, %v4434
      %v4436 = vsel %vm4309, %v4298, 0.0
      %v4437 = vadd.f32 %v4435, %v4436
      %v4438 = vsel %vm4309, %v4303, 0.0
      %v4439 = vadd.f32 %v4437, %v4438
      %v4440 = vsel %vm4309, %v4306, 0.0
      %v4441 = vadd.f32 %v4439, %v4440
      %v4442 = vrot.slane %v4441, 4
      %v4443 = vadd.f32 %v4441, %v4442
      %v4444 = vrot.slane %v4443, 2
      %v4445 = vadd.f32 %v4443, %v4444
      %v4446 = vrot.slane %v4445, 1
      %v4447 = vadd.f32 %v4445, %v4446
      %v4448 = vmul.f32 %v4378, 0.00390625
      %v4449 = vmul.f32 %v4447, 0.00390625
      %v4450 = vmul.f32 %v4055, %v4055
      %v4451 = vmul.f32 %v4058, %v4058
      %v4452 = vmul.f32 %v4063, %v4063
      %v4453 = vmul.f32 %v4066, %v4066
      %v4454 = vmul.f32 %v4071, %v4071
      %v4455 = vmul.f32 %v4074, %v4074
      %v4456 = vmul.f32 %v4079, %v4079
      %v4457 = vmul.f32 %v4082, %v4082
      %v4458 = vmul.f32 %v4087, %v4087
      %v4459 = vmul.f32 %v4090, %v4090
      %v4460 = vmul.f32 %v4095, %v4095
      %v4461 = vmul.f32 %v4098, %v4098
      %v4462 = vmul.f32 %v4103, %v4103
      %v4463 = vmul.f32 %v4106, %v4106
      %v4464 = vmul.f32 %v4111, %v4111
      %v4465 = vmul.f32 %v4114, %v4114
      %v4466 = vmul.f32 %v4119, %v4119
      %v4467 = vmul.f32 %v4122, %v4122
      %v4468 = vmul.f32 %v4127, %v4127
      %v4469 = vmul.f32 %v4130, %v4130
      %v4470 = vmul.f32 %v4135, %v4135
      %v4471 = vmul.f32 %v4138, %v4138
      %v4472 = vmul.f32 %v4143, %v4143
      %v4473 = vmul.f32 %v4146, %v4146
      %v4474 = vmul.f32 %v4151, %v4151
      %v4475 = vmul.f32 %v4154, %v4154
      %v4476 = vmul.f32 %v4159, %v4159
      %v4477 = vmul.f32 %v4162, %v4162
      %v4478 = vmul.f32 %v4167, %v4167
      %v4479 = vmul.f32 %v4170, %v4170
      %v4480 = vmul.f32 %v4175, %v4175
      %v4481 = vmul.f32 %v4178, %v4178
      %v4482 = vmul.f32 %v4183, %v4183
      %v4483 = vmul.f32 %v4186, %v4186
      %v4484 = vmul.f32 %v4191, %v4191
      %v4485 = vmul.f32 %v4194, %v4194
      %v4486 = vmul.f32 %v4199, %v4199
      %v4487 = vmul.f32 %v4202, %v4202
      %v4488 = vmul.f32 %v4207, %v4207
      %v4489 = vmul.f32 %v4210, %v4210
      %v4490 = vmul.f32 %v4215, %v4215
      %v4491 = vmul.f32 %v4218, %v4218
      %v4492 = vmul.f32 %v4223, %v4223
      %v4493 = vmul.f32 %v4226, %v4226
      %v4494 = vmul.f32 %v4231, %v4231
      %v4495 = vmul.f32 %v4234, %v4234
      %v4496 = vmul.f32 %v4239, %v4239
      %v4497 = vmul.f32 %v4242, %v4242
      %v4498 = vmul.f32 %v4247, %v4247
      %v4499 = vmul.f32 %v4250, %v4250
      %v4500 = vmul.f32 %v4255, %v4255
      %v4501 = vmul.f32 %v4258, %v4258
      %v4502 = vmul.f32 %v4263, %v4263
      %v4503 = vmul.f32 %v4266, %v4266
      %v4504 = vmul.f32 %v4271, %v4271
      %v4505 = vmul.f32 %v4274, %v4274
      %v4506 = vmul.f32 %v4279, %v4279
      %v4507 = vmul.f32 %v4282, %v4282
      %v4508 = vmul.f32 %v4287, %v4287
      %v4509 = vmul.f32 %v4290, %v4290
      %v4510 = vmul.f32 %v4295, %v4295
      %v4511 = vmul.f32 %v4298, %v4298
      %v4512 = vmul.f32 %v4303, %v4303
      %v4513 = vmul.f32 %v4306, %v4306
      %v4514 = vsel %vm4309, %v4450, 0.0
      %v4515 = vsel %vm4309, %v4451, 0.0
      %v4516 = vadd.f32 %v4514, %v4515
      %v4517 = vsel %vm4309, %v4452, 0.0
      %v4518 = vadd.f32 %v4516, %v4517
      %v4519 = vsel %vm4309, %v4453, 0.0
      %v4520 = vadd.f32 %v4518, %v4519
      %v4521 = vsel %vm4309, %v4454, 0.0
      %v4522 = vadd.f32 %v4520, %v4521
      %v4523 = vsel %vm4309, %v4455, 0.0
      %v4524 = vadd.f32 %v4522, %v4523
      %v4525 = vsel %vm4309, %v4456, 0.0
      %v4526 = vadd.f32 %v4524, %v4525
      %v4527 = vsel %vm4309, %v4457, 0.0
      %v4528 = vadd.f32 %v4526, %v4527
      %v4529 = vsel %vm4309, %v4458, 0.0
      %v4530 = vadd.f32 %v4528, %v4529
      %v4531 = vsel %vm4309, %v4459, 0.0
      %v4532 = vadd.f32 %v4530, %v4531
      %v4533 = vsel %vm4309, %v4460, 0.0
      %v4534 = vadd.f32 %v4532, %v4533
      %v4535 = vsel %vm4309, %v4461, 0.0
      %v4536 = vadd.f32 %v4534, %v4535
      %v4537 = vsel %vm4309, %v4462, 0.0
      %v4538 = vadd.f32 %v4536, %v4537
      %v4539 = vsel %vm4309, %v4463, 0.0
      %v4540 = vadd.f32 %v4538, %v4539
      %v4541 = vsel %vm4309, %v4464, 0.0
      %v4542 = vadd.f32 %v4540, %v4541
      %v4543 = vsel %vm4309, %v4465, 0.0
      %v4544 = vadd.f32 %v4542, %v4543
      %v4545 = vsel %vm4309, %v4466, 0.0
      %v4546 = vadd.f32 %v4544, %v4545
      %v4547 = vsel %vm4309, %v4467, 0.0
      %v4548 = vadd.f32 %v4546, %v4547
      %v4549 = vsel %vm4309, %v4468, 0.0
      %v4550 = vadd.f32 %v4548, %v4549
      %v4551 = vsel %vm4309, %v4469, 0.0
      %v4552 = vadd.f32 %v4550, %v4551
      %v4553 = vsel %vm4309, %v4470, 0.0
      %v4554 = vadd.f32 %v4552, %v4553
      %v4555 = vsel %vm4309, %v4471, 0.0
      %v4556 = vadd.f32 %v4554, %v4555
      %v4557 = vsel %vm4309, %v4472, 0.0
      %v4558 = vadd.f32 %v4556, %v4557
      %v4559 = vsel %vm4309, %v4473, 0.0
      %v4560 = vadd.f32 %v4558, %v4559
      %v4561 = vsel %vm4309, %v4474, 0.0
      %v4562 = vadd.f32 %v4560, %v4561
      %v4563 = vsel %vm4309, %v4475, 0.0
      %v4564 = vadd.f32 %v4562, %v4563
      %v4565 = vsel %vm4309, %v4476, 0.0
      %v4566 = vadd.f32 %v4564, %v4565
      %v4567 = vsel %vm4309, %v4477, 0.0
      %v4568 = vadd.f32 %v4566, %v4567
      %v4569 = vsel %vm4309, %v4478, 0.0
      %v4570 = vadd.f32 %v4568, %v4569
      %v4571 = vsel %vm4309, %v4479, 0.0
      %v4572 = vadd.f32 %v4570, %v4571
      %v4573 = vsel %vm4309, %v4480, 0.0
      %v4574 = vadd.f32 %v4572, %v4573
      %v4575 = vsel %vm4309, %v4481, 0.0
      %v4576 = vadd.f32 %v4574, %v4575
      %v4577 = vrot.slane %v4576, 4
      %v4578 = vadd.f32 %v4576, %v4577
      %v4579 = vrot.slane %v4578, 2
      %v4580 = vadd.f32 %v4578, %v4579
      %v4581 = vrot.slane %v4580, 1
      %v4582 = vadd.f32 %v4580, %v4581
      %v4583 = vsel %vm4309, %v4482, 0.0
      %v4584 = vsel %vm4309, %v4483, 0.0
      %v4585 = vadd.f32 %v4583, %v4584
      %v4586 = vsel %vm4309, %v4484, 0.0
      %v4587 = vadd.f32 %v4585, %v4586
      %v4588 = vsel %vm4309, %v4485, 0.0
      %v4589 = vadd.f32 %v4587, %v4588
      %v4590 = vsel %vm4309, %v4486, 0.0
      %v4591 = vadd.f32 %v4589, %v4590
      %v4592 = vsel %vm4309, %v4487, 0.0
      %v4593 = vadd.f32 %v4591, %v4592
      %v4594 = vsel %vm4309, %v4488, 0.0
      %v4595 = vadd.f32 %v4593, %v4594
      %v4596 = vsel %vm4309, %v4489, 0.0
      %v4597 = vadd.f32 %v4595, %v4596
      %v4598 = vsel %vm4309, %v4490, 0.0
      %v4599 = vadd.f32 %v4597, %v4598
      %v4600 = vsel %vm4309, %v4491, 0.0
      %v4601 = vadd.f32 %v4599, %v4600
      %v4602 = vsel %vm4309, %v4492, 0.0
      %v4603 = vadd.f32 %v4601, %v4602
      %v4604 = vsel %vm4309, %v4493, 0.0
      %v4605 = vadd.f32 %v4603, %v4604
      %v4606 = vsel %vm4309, %v4494, 0.0
      %v4607 = vadd.f32 %v4605, %v4606
      %v4608 = vsel %vm4309, %v4495, 0.0
      %v4609 = vadd.f32 %v4607, %v4608
      %v4610 = vsel %vm4309, %v4496, 0.0
      %v4611 = vadd.f32 %v4609, %v4610
      %v4612 = vsel %vm4309, %v4497, 0.0
      %v4613 = vadd.f32 %v4611, %v4612
      %v4614 = vsel %vm4309, %v4498, 0.0
      %v4615 = vadd.f32 %v4613, %v4614
      %v4616 = vsel %vm4309, %v4499, 0.0
      %v4617 = vadd.f32 %v4615, %v4616
      %v4618 = vsel %vm4309, %v4500, 0.0
      %v4619 = vadd.f32 %v4617, %v4618
      %v4620 = vsel %vm4309, %v4501, 0.0
      %v4621 = vadd.f32 %v4619, %v4620
      %v4622 = vsel %vm4309, %v4502, 0.0
      %v4623 = vadd.f32 %v4621, %v4622
      %v4624 = vsel %vm4309, %v4503, 0.0
      %v4625 = vadd.f32 %v4623, %v4624
      %v4626 = vsel %vm4309, %v4504, 0.0
      %v4627 = vadd.f32 %v4625, %v4626
      %v4628 = vsel %vm4309, %v4505, 0.0
      %v4629 = vadd.f32 %v4627, %v4628
      %v4630 = vsel %vm4309, %v4506, 0.0
      %v4631 = vadd.f32 %v4629, %v4630
      %v4632 = vsel %vm4309, %v4507, 0.0
      %v4633 = vadd.f32 %v4631, %v4632
      %v4634 = vsel %vm4309, %v4508, 0.0
      %v4635 = vadd.f32 %v4633, %v4634
      %v4636 = vsel %vm4309, %v4509, 0.0
      %v4637 = vadd.f32 %v4635, %v4636
      %v4638 = vsel %vm4309, %v4510, 0.0
      %v4639 = vadd.f32 %v4637, %v4638
      %v4640 = vsel %vm4309, %v4511, 0.0
      %v4641 = vadd.f32 %v4639, %v4640
      %v4642 = vsel %vm4309, %v4512, 0.0
      %v4643 = vadd.f32 %v4641, %v4642
      %v4644 = vsel %vm4309, %v4513, 0.0
      %v4645 = vadd.f32 %v4643, %v4644
      %v4646 = vrot.slane %v4645, 4
      %v4647 = vadd.f32 %v4645, %v4646
      %v4648 = vrot.slane %v4647, 2
      %v4649 = vadd.f32 %v4647, %v4648
      %v4650 = vrot.slane %v4649, 1
      %v4651 = vadd.f32 %v4649, %v4650
      %v4652 = vmul.f32 %v4582, 0.00390625
      %v4653 = vmul.f32 %v4651, 0.00390625
      %v4654 = vmul.f32 %v4448, %v4448
      %v4655 = vmul.f32 %v4449, %v4449
      %v4656 = vsub.f32 %v4652, %v4654
      %v4657 = vsub.f32 %v4653, %v4655
      %v4658 = vmax.f32 %v4656, 0.0
      %v4659 = vmax.f32 %v4657, 0.0
      %v4660 = vsub.f32 %v4055, %v4448
      %v4661 = vsub.f32 %v4058, %v4448
      %v4662 = vsub.f32 %v4063, %v4448
      %v4663 = vsub.f32 %v4066, %v4448
      %v4664 = vsub.f32 %v4071, %v4448
      %v4665 = vsub.f32 %v4074, %v4448
      %v4666 = vsub.f32 %v4079, %v4448
      %v4667 = vsub.f32 %v4082, %v4448
      %v4668 = vsub.f32 %v4087, %v4448
      %v4669 = vsub.f32 %v4090, %v4448
      %v4670 = vsub.f32 %v4095, %v4448
      %v4671 = vsub.f32 %v4098, %v4448
      %v4672 = vsub.f32 %v4103, %v4448
      %v4673 = vsub.f32 %v4106, %v4448
      %v4674 = vsub.f32 %v4111, %v4448
      %v4675 = vsub.f32 %v4114, %v4448
      %v4676 = vsub.f32 %v4119, %v4448
      %v4677 = vsub.f32 %v4122, %v4448
      %v4678 = vsub.f32 %v4127, %v4448
      %v4679 = vsub.f32 %v4130, %v4448
      %v4680 = vsub.f32 %v4135, %v4448
      %v4681 = vsub.f32 %v4138, %v4448
      %v4682 = vsub.f32 %v4143, %v4448
      %v4683 = vsub.f32 %v4146, %v4448
      %v4684 = vsub.f32 %v4151, %v4448
      %v4685 = vsub.f32 %v4154, %v4448
      %v4686 = vsub.f32 %v4159, %v4448
      %v4687 = vsub.f32 %v4162, %v4448
      %v4688 = vsub.f32 %v4167, %v4448
      %v4689 = vsub.f32 %v4170, %v4448
      %v4690 = vsub.f32 %v4175, %v4448
      %v4691 = vsub.f32 %v4178, %v4448
      %v4692 = vsub.f32 %v4183, %v4449
      %v4693 = vsub.f32 %v4186, %v4449
      %v4694 = vsub.f32 %v4191, %v4449
      %v4695 = vsub.f32 %v4194, %v4449
      %v4696 = vsub.f32 %v4199, %v4449
      %v4697 = vsub.f32 %v4202, %v4449
      %v4698 = vsub.f32 %v4207, %v4449
      %v4699 = vsub.f32 %v4210, %v4449
      %v4700 = vsub.f32 %v4215, %v4449
      %v4701 = vsub.f32 %v4218, %v4449
      %v4702 = vsub.f32 %v4223, %v4449
      %v4703 = vsub.f32 %v4226, %v4449
      %v4704 = vsub.f32 %v4231, %v4449
      %v4705 = vsub.f32 %v4234, %v4449
      %v4706 = vsub.f32 %v4239, %v4449
      %v4707 = vsub.f32 %v4242, %v4449
      %v4708 = vsub.f32 %v4247, %v4449
      %v4709 = vsub.f32 %v4250, %v4449
      %v4710 = vsub.f32 %v4255, %v4449
      %v4711 = vsub.f32 %v4258, %v4449
      %v4712 = vsub.f32 %v4263, %v4449
      %v4713 = vsub.f32 %v4266, %v4449
      %v4714 = vsub.f32 %v4271, %v4449
      %v4715 = vsub.f32 %v4274, %v4449
      %v4716 = vsub.f32 %v4279, %v4449
      %v4717 = vsub.f32 %v4282, %v4449
      %v4718 = vsub.f32 %v4287, %v4449
      %v4719 = vsub.f32 %v4290, %v4449
      %v4720 = vsub.f32 %v4295, %v4449
      %v4721 = vsub.f32 %v4298, %v4449
      %v4722 = vsub.f32 %v4303, %v4449
      %v4723 = vsub.f32 %v4306, %v4449
      %v4724 = vadd.f32 %v4658, 1e-05
      %v4725 = vadd.f32 %v4659, 1e-05
      %v4726 = vrsqrt.pop %v4724
      %v4727 = vrsqrt.pop %v4725
      %v4728 = vmul.f32 %v4660, %v4726
      %v4729 = vmul.f32 %v4661, %v4726
      %v4730 = vmul.f32 %v4662, %v4726
      %v4731 = vmul.f32 %v4663, %v4726
      %v4732 = vmul.f32 %v4664, %v4726
      %v4733 = vmul.f32 %v4665, %v4726
      %v4734 = vmul.f32 %v4666, %v4726
      %v4735 = vmul.f32 %v4667, %v4726
      %v4736 = vmul.f32 %v4668, %v4726
      %v4737 = vmul.f32 %v4669, %v4726
      %v4738 = vmul.f32 %v4670, %v4726
      %v4739 = vmul.f32 %v4671, %v4726
      %v4740 = vmul.f32 %v4672, %v4726
      %v4741 = vmul.f32 %v4673, %v4726
      %v4742 = vmul.f32 %v4674, %v4726
      %v4743 = vmul.f32 %v4675, %v4726
      %v4744 = vmul.f32 %v4676, %v4726
      %v4745 = vmul.f32 %v4677, %v4726
      %v4746 = vmul.f32 %v4678, %v4726
      %v4747 = vmul.f32 %v4679, %v4726
      %v4748 = vmul.f32 %v4680, %v4726
      %v4749 = vmul.f32 %v4681, %v4726
      %v4750 = vmul.f32 %v4682, %v4726
      %v4751 = vmul.f32 %v4683, %v4726
      %v4752 = vmul.f32 %v4684, %v4726
      %v4753 = vmul.f32 %v4685, %v4726
      %v4754 = vmul.f32 %v4686, %v4726
      %v4755 = vmul.f32 %v4687, %v4726
      %v4756 = vmul.f32 %v4688, %v4726
      %v4757 = vmul.f32 %v4689, %v4726
      %v4758 = vmul.f32 %v4690, %v4726
      %v4759 = vmul.f32 %v4691, %v4726
      %v4760 = vmul.f32 %v4692, %v4727
      %v4761 = vmul.f32 %v4693, %v4727
      %v4762 = vmul.f32 %v4694, %v4727
      %v4763 = vmul.f32 %v4695, %v4727
      %v4764 = vmul.f32 %v4696, %v4727
      %v4765 = vmul.f32 %v4697, %v4727
      %v4766 = vmul.f32 %v4698, %v4727
      %v4767 = vmul.f32 %v4699, %v4727
      %v4768 = vmul.f32 %v4700, %v4727
      %v4769 = vmul.f32 %v4701, %v4727
      %v4770 = vmul.f32 %v4702, %v4727
      %v4771 = vmul.f32 %v4703, %v4727
      %v4772 = vmul.f32 %v4704, %v4727
      %v4773 = vmul.f32 %v4705, %v4727
      %v4774 = vmul.f32 %v4706, %v4727
      %v4775 = vmul.f32 %v4707, %v4727
      %v4776 = vmul.f32 %v4708, %v4727
      %v4777 = vmul.f32 %v4709, %v4727
      %v4778 = vmul.f32 %v4710, %v4727
      %v4779 = vmul.f32 %v4711, %v4727
      %v4780 = vmul.f32 %v4712, %v4727
      %v4781 = vmul.f32 %v4713, %v4727
      %v4782 = vmul.f32 %v4714, %v4727
      %v4783 = vmul.f32 %v4715, %v4727
      %v4784 = vmul.f32 %v4716, %v4727
      %v4785 = vmul.f32 %v4717, %v4727
      %v4786 = vmul.f32 %v4718, %v4727
      %v4787 = vmul.f32 %v4719, %v4727
      %v4788 = vmul.f32 %v4720, %v4727
      %v4789 = vmul.f32 %v4721, %v4727
      %v4790 = vmul.f32 %v4722, %v4727
      %v4791 = vmul.f32 %v4723, %v4727
      %v4792 = vld [vmem:[%s3] sm:$0x1]
      %v4794 = vlaneseq
      %v4795 = vshrl.u32 %v4794, 7
      %v4796 = vsub.s32 0, %v4795
      %v4797 = vrot.slane %v4792, %v4796
      %v4799 = vmul.f32 %v4728, %v4797
      %v4800 = vmul.f32 %v4729, %v4797
      %v4801 = vmul.f32 %v4730, %v4797
      %v4802 = vmul.f32 %v4731, %v4797
      %v4803 = vmul.f32 %v4732, %v4797
      %v4804 = vmul.f32 %v4733, %v4797
      %v4805 = vmul.f32 %v4734, %v4797
      %v4806 = vmul.f32 %v4735, %v4797
      %v4807 = vmul.f32 %v4736, %v4797
      %v4808 = vmul.f32 %v4737, %v4797
      %v4809 = vmul.f32 %v4738, %v4797
      %v4810 = vmul.f32 %v4739, %v4797
      %v4811 = vmul.f32 %v4740, %v4797
      %v4812 = vmul.f32 %v4741, %v4797
      %v4813 = vmul.f32 %v4742, %v4797
      %v4814 = vmul.f32 %v4743, %v4797
      %v4815 = vmul.f32 %v4744, %v4797
      %v4816 = vmul.f32 %v4745, %v4797
      %v4817 = vmul.f32 %v4746, %v4797
      %v4818 = vmul.f32 %v4747, %v4797
      %v4819 = vmul.f32 %v4748, %v4797
      %v4820 = vmul.f32 %v4749, %v4797
      %v4821 = vmul.f32 %v4750, %v4797
      %v4822 = vmul.f32 %v4751, %v4797
      %v4823 = vmul.f32 %v4752, %v4797
      %v4824 = vmul.f32 %v4753, %v4797
      %v4825 = vmul.f32 %v4754, %v4797
      %v4826 = vmul.f32 %v4755, %v4797
      %v4827 = vmul.f32 %v4756, %v4797
      %v4828 = vmul.f32 %v4757, %v4797
      %v4829 = vmul.f32 %v4758, %v4797
      %v4830 = vmul.f32 %v4759, %v4797
      %v4831 = vmul.f32 %v4760, %v4797
      %v4832 = vmul.f32 %v4761, %v4797
      %v4833 = vmul.f32 %v4762, %v4797
      %v4834 = vmul.f32 %v4763, %v4797
      %v4835 = vmul.f32 %v4764, %v4797
      %v4836 = vmul.f32 %v4765, %v4797
      %v4837 = vmul.f32 %v4766, %v4797
      %v4838 = vmul.f32 %v4767, %v4797
      %v4839 = vmul.f32 %v4768, %v4797
      %v4840 = vmul.f32 %v4769, %v4797
      %v4841 = vmul.f32 %v4770, %v4797
      %v4842 = vmul.f32 %v4771, %v4797
      %v4843 = vmul.f32 %v4772, %v4797
      %v4844 = vmul.f32 %v4773, %v4797
      %v4845 = vmul.f32 %v4774, %v4797
      %v4846 = vmul.f32 %v4775, %v4797
      %v4847 = vmul.f32 %v4776, %v4797
      %v4848 = vmul.f32 %v4777, %v4797
      %v4849 = vmul.f32 %v4778, %v4797
      %v4850 = vmul.f32 %v4779, %v4797
      %v4851 = vmul.f32 %v4780, %v4797
      %v4852 = vmul.f32 %v4781, %v4797
      %v4853 = vmul.f32 %v4782, %v4797
      %v4854 = vmul.f32 %v4783, %v4797
      %v4855 = vmul.f32 %v4784, %v4797
      %v4856 = vmul.f32 %v4785, %v4797
      %v4857 = vmul.f32 %v4786, %v4797
      %v4858 = vmul.f32 %v4787, %v4797
      %v4859 = vmul.f32 %v4788, %v4797
      %v4860 = vmul.f32 %v4789, %v4797
      %v4861 = vmul.f32 %v4790, %v4797
      %v4862 = vmul.f32 %v4791, %v4797
      %v4863 = vld [vmem:[%s4] sm:$0x1]
      %v4865 = vlaneseq
      %v4866 = vshrl.u32 %v4865, 7
      %v4867 = vsub.s32 0, %v4866
      %v4868 = vrot.slane %v4863, %v4867
      %v4870 = vadd.f32 %v4799, %v4868
      %v4871 = vadd.f32 %v4800, %v4868
      %v4872 = vadd.f32 %v4801, %v4868
      %v4873 = vadd.f32 %v4802, %v4868
      %v4874 = vadd.f32 %v4803, %v4868
      %v4875 = vadd.f32 %v4804, %v4868
      %v4876 = vadd.f32 %v4805, %v4868
      %v4877 = vadd.f32 %v4806, %v4868
      %v4878 = vadd.f32 %v4807, %v4868
      %v4879 = vadd.f32 %v4808, %v4868
      %v4880 = vadd.f32 %v4809, %v4868
      %v4881 = vadd.f32 %v4810, %v4868
      %v4882 = vadd.f32 %v4811, %v4868
      %v4883 = vadd.f32 %v4812, %v4868
      %v4884 = vadd.f32 %v4813, %v4868
      %v4885 = vadd.f32 %v4814, %v4868
      %v4886 = vadd.f32 %v4815, %v4868
      %v4887 = vadd.f32 %v4816, %v4868
      %v4888 = vadd.f32 %v4817, %v4868
      %v4889 = vadd.f32 %v4818, %v4868
      %v4890 = vadd.f32 %v4819, %v4868
      %v4891 = vadd.f32 %v4820, %v4868
      %v4892 = vadd.f32 %v4821, %v4868
      %v4893 = vadd.f32 %v4822, %v4868
      %v4894 = vadd.f32 %v4823, %v4868
      %v4895 = vadd.f32 %v4824, %v4868
      %v4896 = vadd.f32 %v4825, %v4868
      %v4897 = vadd.f32 %v4826, %v4868
      %v4898 = vadd.f32 %v4827, %v4868
      %v4899 = vadd.f32 %v4828, %v4868
      %v4900 = vadd.f32 %v4829, %v4868
      %v4901 = vadd.f32 %v4830, %v4868
      %v4902 = vadd.f32 %v4831, %v4868
      %v4903 = vadd.f32 %v4832, %v4868
      %v4904 = vadd.f32 %v4833, %v4868
      %v4905 = vadd.f32 %v4834, %v4868
      %v4906 = vadd.f32 %v4835, %v4868
      %v4907 = vadd.f32 %v4836, %v4868
      %v4908 = vadd.f32 %v4837, %v4868
      %v4909 = vadd.f32 %v4838, %v4868
      %v4910 = vadd.f32 %v4839, %v4868
      %v4911 = vadd.f32 %v4840, %v4868
      %v4912 = vadd.f32 %v4841, %v4868
      %v4913 = vadd.f32 %v4842, %v4868
      %v4914 = vadd.f32 %v4843, %v4868
      %v4915 = vadd.f32 %v4844, %v4868
      %v4916 = vadd.f32 %v4845, %v4868
      %v4917 = vadd.f32 %v4846, %v4868
      %v4918 = vadd.f32 %v4847, %v4868
      %v4919 = vadd.f32 %v4848, %v4868
      %v4920 = vadd.f32 %v4849, %v4868
      %v4921 = vadd.f32 %v4850, %v4868
      %v4922 = vadd.f32 %v4851, %v4868
      %v4923 = vadd.f32 %v4852, %v4868
      %v4924 = vadd.f32 %v4853, %v4868
      %v4925 = vadd.f32 %v4854, %v4868
      %v4926 = vadd.f32 %v4855, %v4868
      %v4927 = vadd.f32 %v4856, %v4868
      %v4928 = vadd.f32 %v4857, %v4868
      %v4929 = vadd.f32 %v4858, %v4868
      %v4930 = vadd.f32 %v4859, %v4868
      %v4931 = vadd.f32 %v4860, %v4868
      %v4932 = vadd.f32 %v4861, %v4868
      %v4933 = vadd.f32 %v4862, %v4868
      %4934 = vst.msk [vmem:[#allocation3] sm:$0xff] %vm4309, 0.0
      %4935 = vst.msk [vmem:[#allocation3 + $0x8] sm:$0xff] %vm4309, 0.0
      %vm4936 = vcmask 58368
      %4937 = vst.msk [vmem:[#allocation3 + $0x10] sm:$0x3] %vm4936, 0.0
      %4938 = vst.msk [vmem:[#allocation3 + $0x1b0] sm:$0xff] %vm4309, 0.0
      %4939 = vst.msk [vmem:[#allocation3 + $0x1b8] sm:$0xff] %vm4309, 0.0
      %4940 = vst.msk [vmem:[#allocation3 + $0x1c0] sm:$0x3] %vm4936, 0.0
      %s4941 = scalar_lea.vmem [#allocation3], 408
      %4942 = vst.msk [vmem:[%s4941] sm:$0xff] %vm4309, 0.0
      %4943 = vst.msk [vmem:[%s4941 + $0x8] sm:$0xff] %vm4309, 0.0
      %4944 = vst.msk [vmem:[%s4941 + $0x10] sm:$0x3] %vm4936, 0.0
      %4945 = vst.msk [vmem:[%s4941 + $0x1b0] sm:$0xff] %vm4309, 0.0
      %4946 = vst.msk [vmem:[%s4941 + $0x1b8] sm:$0xff] %vm4309, 0.0
      %4947 = vst.msk [vmem:[%s4941 + $0x1c0] sm:$0x3] %vm4936, 0.0
      %vm4948 = vcmask 57344
      %4949 = vst.msk [vmem:[#allocation3] sm:$0x1] %vm4948, 0.0
      %4950 = vst.msk [vmem:[#allocation3 + $0x18] sm:$0x1] %vm4948, 0.0
      %4951 = vst.msk [vmem:[#allocation3 + $0x30] sm:$0x1] %vm4948, 0.0
      %4952 = vst.msk [vmem:[#allocation3 + $0x48] sm:$0x1] %vm4948, 0.0
      %4953 = vst.msk [vmem:[#allocation3 + $0x60] sm:$0x1] %vm4948, 0.0
      %4954 = vst.msk [vmem:[#allocation3 + $0x78] sm:$0x1] %vm4948, 0.0
      %4955 = vst.msk [vmem:[#allocation3 + $0x90] sm:$0x1] %vm4948, 0.0
      %4956 = vst.msk [vmem:[#allocation3 + $0xa8] sm:$0x1] %vm4948, 0.0
      %4957 = vst.msk [vmem:[#allocation3 + $0xc0] sm:$0x1] %vm4948, 0.0
      %4958 = vst.msk [vmem:[#allocation3 + $0xd8] sm:$0x1] %vm4948, 0.0
      %4959 = vst.msk [vmem:[#allocation3 + $0xf0] sm:$0x1] %vm4948, 0.0
      %4960 = vst.msk [vmem:[#allocation3 + $0x108] sm:$0x1] %vm4948, 0.0
      %4961 = vst.msk [vmem:[#allocation3 + $0x120] sm:$0x1] %vm4948, 0.0
      %4962 = vst.msk [vmem:[#allocation3 + $0x138] sm:$0x1] %vm4948, 0.0
      %4963 = vst.msk [vmem:[#allocation3 + $0x150] sm:$0x1] %vm4948, 0.0
      %4964 = vst.msk [vmem:[#allocation3 + $0x168] sm:$0x1] %vm4948, 0.0
      %4965 = vst.msk [vmem:[#allocation3 + $0x180] sm:$0x1] %vm4948, 0.0
      %4966 = vst.msk [vmem:[#allocation3 + $0x198] sm:$0x1] %vm4948, 0.0
      %4967 = vst.msk [vmem:[#allocation3 + $0x1b0] sm:$0x1] %vm4948, 0.0
      %4968 = vst.msk [vmem:[#allocation3 + $0x1c8] sm:$0x1] %vm4948, 0.0
      %4969 = vst.msk [vmem:[#allocation3 + $0x1e0] sm:$0x1] %vm4948, 0.0
      %4970 = vst.msk [vmem:[#allocation3 + $0x1f8] sm:$0x1] %vm4948, 0.0
      %4971 = vst.msk [vmem:[#allocation3 + $0x210] sm:$0x1] %vm4948, 0.0
      %4972 = vst.msk [vmem:[#allocation3 + $0x228] sm:$0x1] %vm4948, 0.0
      %4973 = vst.msk [vmem:[#allocation3 + $0x240] sm:$0x1] %vm4948, 0.0
      %4974 = vst.msk [vmem:[#allocation3 + $0x258] sm:$0x1] %vm4948, 0.0
      %4975 = vst.msk [vmem:[#allocation3 + $0x270] sm:$0x1] %vm4948, 0.0
      %4976 = vst.msk [vmem:[#allocation3 + $0x288] sm:$0x1] %vm4948, 0.0
      %4977 = vst.msk [vmem:[#allocation3 + $0x2a0] sm:$0x1] %vm4948, 0.0
      %4978 = vst.msk [vmem:[#allocation3 + $0x2b8] sm:$0x1] %vm4948, 0.0
      %4979 = vst.msk [vmem:[#allocation3 + $0x2d0] sm:$0x1] %vm4948, 0.0
      %4980 = vst.msk [vmem:[#allocation3 + $0x2e8] sm:$0x1] %vm4948, 0.0
      %4981 = vst.msk [vmem:[#allocation3 + $0x300] sm:$0x1] %vm4948, 0.0
      %4982 = vst.msk [vmem:[#allocation3 + $0x318] sm:$0x1] %vm4948, 0.0
      %4983 = vst.msk [vmem:[#allocation3 + $0x330] sm:$0x1] %vm4948, 0.0
      %4984 = vst.msk [vmem:[#allocation3 + $0x348] sm:$0x1] %vm4948, 0.0
      %4985 = vst.msk [vmem:[#allocation3 + $0x11] sm:$0x1] %vm4948, 0.0
      %4986 = vst.msk [vmem:[#allocation3 + $0x29] sm:$0x1] %vm4948, 0.0
      %4987 = vst.msk [vmem:[#allocation3 + $0x41] sm:$0x1] %vm4948, 0.0
      %4988 = vst.msk [vmem:[#allocation3 + $0x59] sm:$0x1] %vm4948, 0.0
      %4989 = vst.msk [vmem:[#allocation3 + $0x71] sm:$0x1] %vm4948, 0.0
      %4990 = vst.msk [vmem:[#allocation3 + $0x89] sm:$0x1] %vm4948, 0.0
      %4991 = vst.msk [vmem:[#allocation3 + $0xa1] sm:$0x1] %vm4948, 0.0
      %4992 = vst.msk [vmem:[#allocation3 + $0xb9] sm:$0x1] %vm4948, 0.0
      %4993 = vst.msk [vmem:[#allocation3 + $0xd1] sm:$0x1] %vm4948, 0.0
      %4994 = vst.msk [vmem:[#allocation3 + $0xe9] sm:$0x1] %vm4948, 0.0
      %4995 = vst.msk [vmem:[#allocation3 + $0x101] sm:$0x1] %vm4948, 0.0
      %4996 = vst.msk [vmem:[#allocation3 + $0x119] sm:$0x1] %vm4948, 0.0
      %4997 = vst.msk [vmem:[#allocation3 + $0x131] sm:$0x1] %vm4948, 0.0
      %4998 = vst.msk [vmem:[#allocation3 + $0x149] sm:$0x1] %vm4948, 0.0
      %4999 = vst.msk [vmem:[#allocation3 + $0x161] sm:$0x1] %vm4948, 0.0
      %5000 = vst.msk [vmem:[#allocation3 + $0x179] sm:$0x1] %vm4948, 0.0
      %5001 = vst.msk [vmem:[#allocation3 + $0x191] sm:$0x1] %vm4948, 0.0
      %5002 = vst.msk [vmem:[#allocation3 + $0x1a9] sm:$0x1] %vm4948, 0.0
      %5003 = vst.msk [vmem:[#allocation3 + $0x1c1] sm:$0x1] %vm4948, 0.0
      %5004 = vst.msk [vmem:[#allocation3 + $0x1d9] sm:$0x1] %vm4948, 0.0
      %5005 = vst.msk [vmem:[#allocation3 + $0x1f1] sm:$0x1] %vm4948, 0.0
      %5006 = vst.msk [vmem:[#allocation3 + $0x209] sm:$0x1] %vm4948, 0.0
      %5007 = vst.msk [vmem:[#allocation3 + $0x221] sm:$0x1] %vm4948, 0.0
      %5008 = vst.msk [vmem:[#allocation3 + $0x239] sm:$0x1] %vm4948, 0.0
      %5009 = vst.msk [vmem:[#allocation3 + $0x251] sm:$0x1] %vm4948, 0.0
      %5010 = vst.msk [vmem:[#allocation3 + $0x269] sm:$0x1] %vm4948, 0.0
      %5011 = vst.msk [vmem:[#allocation3 + $0x281] sm:$0x1] %vm4948, 0.0
      %5012 = vst.msk [vmem:[#allocation3 + $0x299] sm:$0x1] %vm4948, 0.0
      %5013 = vst.msk [vmem:[#allocation3 + $0x2b1] sm:$0x1] %vm4948, 0.0
      %5014 = vst.msk [vmem:[#allocation3 + $0x2c9] sm:$0x1] %vm4948, 0.0
      %5015 = vst.msk [vmem:[#allocation3 + $0x2e1] sm:$0x1] %vm4948, 0.0
      %5016 = vst.msk [vmem:[#allocation3 + $0x2f9] sm:$0x1] %vm4948, 0.0
      %5017 = vst.msk [vmem:[#allocation3 + $0x311] sm:$0x1] %vm4948, 0.0
      %5018 = vst.msk [vmem:[#allocation3 + $0x329] sm:$0x1] %vm4948, 0.0
      %5019 = vst.msk [vmem:[#allocation3 + $0x341] sm:$0x1] %vm4948, 0.0
      %5020 = vst.msk [vmem:[#allocation3 + $0x359] sm:$0x1] %vm4948, 0.0
      %s5021 = scalar_lea.vmem [#allocation3], 24
      %5022 = vst.msk [vmem:[%s5021 + $0x1] sm:$0xff] %vm4309, %v4870
      %5023 = vst.msk [vmem:[%s5021 + $0x9] sm:$0xff] %vm4309, %v4871
      %5024 = vst.msk [vmem:[%s5021 + $0x19] sm:$0xff] %vm4309, %v4872
      %5025 = vst.msk [vmem:[%s5021 + $0x21] sm:$0xff] %vm4309, %v4873
      %5026 = vst.msk [vmem:[%s5021 + $0x31] sm:$0xff] %vm4309, %v4874
      %5027 = vst.msk [vmem:[%s5021 + $0x39] sm:$0xff] %vm4309, %v4875
      %5028 = vst.msk [vmem:[%s5021 + $0x49] sm:$0xff] %vm4309, %v4876
      %5029 = vst.msk [vmem:[%s5021 + $0x51] sm:$0xff] %vm4309, %v4877
      %5030 = vst.msk [vmem:[%s5021 + $0x61] sm:$0xff] %vm4309, %v4878
      %5031 = vst.msk [vmem:[%s5021 + $0x69] sm:$0xff] %vm4309, %v4879
      %5032 = vst.msk [vmem:[%s5021 + $0x79] sm:$0xff] %vm4309, %v4880
      %5033 = vst.msk [vmem:[%s5021 + $0x81] sm:$0xff] %vm4309, %v4881
      %5034 = vst.msk [vmem:[%s5021 + $0x91] sm:$0xff] %vm4309, %v4882
      %5035 = vst.msk [vmem:[%s5021 + $0x99] sm:$0xff] %vm4309, %v4883
      %5036 = vst.msk [vmem:[%s5021 + $0xa9] sm:$0xff] %vm4309, %v4884
      %5037 = vst.msk [vmem:[%s5021 + $0xb1] sm:$0xff] %vm4309, %v4885
      %5038 = vst.msk [vmem:[%s5021 + $0xc1] sm:$0xff] %vm4309, %v4886
      %5039 = vst.msk [vmem:[%s5021 + $0xc9] sm:$0xff] %vm4309, %v4887
      %5040 = vst.msk [vmem:[%s5021 + $0xd9] sm:$0xff] %vm4309, %v4888
      %5041 = vst.msk [vmem:[%s5021 + $0xe1] sm:$0xff] %vm4309, %v4889
      %5042 = vst.msk [vmem:[%s5021 + $0xf1] sm:$0xff] %vm4309, %v4890
      %5043 = vst.msk [vmem:[%s5021 + $0xf9] sm:$0xff] %vm4309, %v4891
      %5044 = vst.msk [vmem:[%s5021 + $0x109] sm:$0xff] %vm4309, %v4892
      %5045 = vst.msk [vmem:[%s5021 + $0x111] sm:$0xff] %vm4309, %v4893
      %5046 = vst.msk [vmem:[%s5021 + $0x121] sm:$0xff] %vm4309, %v4894
      %5047 = vst.msk [vmem:[%s5021 + $0x129] sm:$0xff] %vm4309, %v4895
      %5048 = vst.msk [vmem:[%s5021 + $0x139] sm:$0xff] %vm4309, %v4896
      %5049 = vst.msk [vmem:[%s5021 + $0x141] sm:$0xff] %vm4309, %v4897
      %5050 = vst.msk [vmem:[%s5021 + $0x151] sm:$0xff] %vm4309, %v4898
      %5051 = vst.msk [vmem:[%s5021 + $0x159] sm:$0xff] %vm4309, %v4899
      %5052 = vst.msk [vmem:[%s5021 + $0x169] sm:$0xff] %vm4309, %v4900
      %5053 = vst.msk [vmem:[%s5021 + $0x171] sm:$0xff] %vm4309, %v4901
      %5054 = vst.msk [vmem:[%s5021 + $0x1b1] sm:$0xff] %vm4309, %v4902
      %5055 = vst.msk [vmem:[%s5021 + $0x1b9] sm:$0xff] %vm4309, %v4903
      %5056 = vst.msk [vmem:[%s5021 + $0x1c9] sm:$0xff] %vm4309, %v4904
      %5057 = vst.msk [vmem:[%s5021 + $0x1d1] sm:$0xff] %vm4309, %v4905
      %5058 = vst.msk [vmem:[%s5021 + $0x1e1] sm:$0xff] %vm4309, %v4906
      %5059 = vst.msk [vmem:[%s5021 + $0x1e9] sm:$0xff] %vm4309, %v4907
      %5060 = vst.msk [vmem:[%s5021 + $0x1f9] sm:$0xff] %vm4309, %v4908
      %5061 = vst.msk [vmem:[%s5021 + $0x201] sm:$0xff] %vm4309, %v4909
      %5062 = vst.msk [vmem:[%s5021 + $0x211] sm:$0xff] %vm4309, %v4910
      %5063 = vst.msk [vmem:[%s5021 + $0x219] sm:$0xff] %vm4309, %v4911
      %5064 = vst.msk [vmem:[%s5021 + $0x229] sm:$0xff] %vm4309, %v4912
      %5065 = vst.msk [vmem:[%s5021 + $0x231] sm:$0xff] %vm4309, %v4913
      %5066 = vst.msk [vmem:[%s5021 + $0x241] sm:$0xff] %vm4309, %v4914
      %5067 = vst.msk [vmem:[%s5021 + $0x249] sm:$0xff] %vm4309, %v4915
      %5068 = vst.msk [vmem:[%s5021 + $0x259] sm:$0xff] %vm4309, %v4916
      %5069 = vst.msk [vmem:[%s5021 + $0x261] sm:$0xff] %vm4309, %v4917
      %5070 = vst.msk [vmem:[%s5021 + $0x271] sm:$0xff] %vm4309, %v4918
      %5071 = vst.msk [vmem:[%s5021 + $0x279] sm:$0xff] %vm4309, %v4919
      %5072 = vst.msk [vmem:[%s5021 + $0x289] sm:$0xff] %vm4309, %v4920
      %5073 = vst.msk [vmem:[%s5021 + $0x291] sm:$0xff] %vm4309, %v4921
      %5074 = vst.msk [vmem:[%s5021 + $0x2a1] sm:$0xff] %vm4309, %v4922
      %5075 = vst.msk [vmem:[%s5021 + $0x2a9] sm:$0xff] %vm4309, %v4923
      %5076 = vst.msk [vmem:[%s5021 + $0x2b9] sm:$0xff] %vm4309, %v4924
      %5077 = vst.msk [vmem:[%s5021 + $0x2c1] sm:$0xff] %vm4309, %v4925
      %5078 = vst.msk [vmem:[%s5021 + $0x2d1] sm:$0xff] %vm4309, %v4926
      %5079 = vst.msk [vmem:[%s5021 + $0x2d9] sm:$0xff] %vm4309, %v4927
      %5080 = vst.msk [vmem:[%s5021 + $0x2e9] sm:$0xff] %vm4309, %v4928
      %5081 = vst.msk [vmem:[%s5021 + $0x2f1] sm:$0xff] %vm4309, %v4929
      %5082 = vst.msk [vmem:[%s5021 + $0x301] sm:$0xff] %vm4309, %v4930
      %5083 = vst.msk [vmem:[%s5021 + $0x309] sm:$0xff] %vm4309, %v4931
      %5084 = vst.msk [vmem:[%s5021 + $0x319] sm:$0xff] %vm4309, %v4932
      %5085 = vst.msk [vmem:[%s5021 + $0x321] sm:$0xff] %vm4309, %v4933
      %v5086 = vld [vmem:[#allocation3] sm:$0xff]
      %v5087 = vld [vmem:[#allocation3 + $0x8] sm:$0xff]
      %v5088 = vld [vmem:[#allocation3 + $0x18] sm:$0xff]
      %v5089 = vld [vmem:[#allocation3 + $0x20] sm:$0xff]
      %v5090 = vld [vmem:[#allocation3 + $0x30] sm:$0xff]
      %v5091 = vld [vmem:[#allocation3 + $0x38] sm:$0xff]
      %v5092 = vld [vmem:[#allocation3 + $0x48] sm:$0xff]
      %v5093 = vld [vmem:[#allocation3 + $0x50] sm:$0xff]
      %v5094 = vld [vmem:[#allocation3 + $0x60] sm:$0xff]
      %v5095 = vld [vmem:[#allocation3 + $0x68] sm:$0xff]
      %v5096 = vld [vmem:[#allocation3 + $0x78] sm:$0xff]
      %v5097 = vld [vmem:[#allocation3 + $0x80] sm:$0xff]
      %v5098 = vld [vmem:[#allocation3 + $0x90] sm:$0xff]
      %v5099 = vld [vmem:[#allocation3 + $0x98] sm:$0xff]
      %v5100 = vld [vmem:[#allocation3 + $0xa8] sm:$0xff]
      %v5101 = vld [vmem:[#allocation3 + $0xb0] sm:$0xff]
      %v5102 = vld [vmem:[#allocation3 + $0xc0] sm:$0xff]
      %v5103 = vld [vmem:[#allocation3 + $0xc8] sm:$0xff]
      %v5104 = vld [vmem:[#allocation3 + $0xd8] sm:$0xff]
      %v5105 = vld [vmem:[#allocation3 + $0xe0] sm:$0xff]
      %v5106 = vld [vmem:[#allocation3 + $0xf0] sm:$0xff]
      %v5107 = vld [vmem:[#allocation3 + $0xf8] sm:$0xff]
      %v5108 = vld [vmem:[#allocation3 + $0x108] sm:$0xff]
      %v5109 = vld [vmem:[#allocation3 + $0x110] sm:$0xff]
      %v5110 = vld [vmem:[#allocation3 + $0x120] sm:$0xff]
      %v5111 = vld [vmem:[#allocation3 + $0x128] sm:$0xff]
      %v5112 = vld [vmem:[#allocation3 + $0x138] sm:$0xff]
      %v5113 = vld [vmem:[#allocation3 + $0x140] sm:$0xff]
      %v5114 = vld [vmem:[#allocation3 + $0x150] sm:$0xff]
      %v5115 = vld [vmem:[#allocation3 + $0x158] sm:$0xff]
      %v5116 = vld [vmem:[#allocation3 + $0x168] sm:$0xff]
      %v5117 = vld [vmem:[#allocation3 + $0x170] sm:$0xff]
      %v5118 = vld [vmem:[#allocation3 + $0x1b0] sm:$0xff]
      %v5119 = vld [vmem:[#allocation3 + $0x1b8] sm:$0xff]
      %v5120 = vld [vmem:[#allocation3 + $0x1c8] sm:$0xff]
      %v5121 = vld [vmem:[#allocation3 + $0x1d0] sm:$0xff]
      %v5122 = vld [vmem:[#allocation3 + $0x1e0] sm:$0xff]
      %v5123 = vld [vmem:[#allocation3 + $0x1e8] sm:$0xff]
      %v5124 = vld [vmem:[#allocation3 + $0x1f8] sm:$0xff]
      %v5125 = vld [vmem:[#allocation3 + $0x200] sm:$0xff]
      %v5126 = vld [vmem:[#allocation3 + $0x210] sm:$0xff]
      %v5127 = vld [vmem:[#allocation3 + $0x218] sm:$0xff]
      %v5128 = vld [vmem:[#allocation3 + $0x228] sm:$0xff]
      %v5129 = vld [vmem:[#allocation3 + $0x230] sm:$0xff]
      %v5130 = vld [vmem:[#allocation3 + $0x240] sm:$0xff]
      %v5131 = vld [vmem:[#allocation3 + $0x248] sm:$0xff]
      %v5132 = vld [vmem:[#allocation3 + $0x258] sm:$0xff]
      %v5133 = vld [vmem:[#allocation3 + $0x260] sm:$0xff]
      %v5134 = vld [vmem:[#allocation3 + $0x270] sm:$0xff]
      %v5135 = vld [vmem:[#allocation3 + $0x278] sm:$0xff]
      %v5136 = vld [vmem:[#allocation3 + $0x288] sm:$0xff]
      %v5137 = vld [vmem:[#allocation3 + $0x290] sm:$0xff]
      %v5138 = vld [vmem:[#allocation3 + $0x2a0] sm:$0xff]
      %v5139 = vld [vmem:[#allocation3 + $0x2a8] sm:$0xff]
      %v5140 = vld [vmem:[#allocation3 + $0x2b8] sm:$0xff]
      %v5141 = vld [vmem:[#allocation3 + $0x2c0] sm:$0xff]
      %v5142 = vld [vmem:[#allocation3 + $0x2d0] sm:$0xff]
      %v5143 = vld [vmem:[#allocation3 + $0x2d8] sm:$0xff]
      %v5144 = vld [vmem:[#allocation3 + $0x2e8] sm:$0xff]
      %v5145 = vld [vmem:[#allocation3 + $0x2f0] sm:$0xff]
      %v5146 = vld [vmem:[#allocation3 + $0x300] sm:$0xff]
      %v5147 = vld [vmem:[#allocation3 + $0x308] sm:$0xff]
      %v5148 = vld [vmem:[#allocation3 + $0x318] sm:$0xff]
      %v5149 = vld [vmem:[#allocation3 + $0x320] sm:$0xff]
      %v5150 = vld [vmem:[#allocation3 + $0x1] sm:$0xff]
      %v5151 = vld [vmem:[#allocation3 + $0x9] sm:$0xff]
      %v5152 = vld [vmem:[#allocation3 + $0x19] sm:$0xff]
      %v5153 = vld [vmem:[#allocation3 + $0x21] sm:$0xff]
      %v5154 = vld [vmem:[#allocation3 + $0x31] sm:$0xff]
      %v5155 = vld [vmem:[#allocation3 + $0x39] sm:$0xff]
      %v5156 = vld [vmem:[#allocation3 + $0x49] sm:$0xff]
      %v5157 = vld [vmem:[#allocation3 + $0x51] sm:$0xff]
      %v5158 = vld [vmem:[#allocation3 + $0x61] sm:$0xff]
      %v5159 = vld [vmem:[#allocation3 + $0x69] sm:$0xff]
      %v5160 = vld [vmem:[#allocation3 + $0x79] sm:$0xff]
      %v5161 = vld [vmem:[#allocation3 + $0x81] sm:$0xff]
      %v5162 = vld [vmem:[#allocation3 + $0x91] sm:$0xff]
      %v5163 = vld [vmem:[#allocation3 + $0x99] sm:$0xff]
      %v5164 = vld [vmem:[#allocation3 + $0xa9] sm:$0xff]
      %v5165 = vld [vmem:[#allocation3 + $0xb1] sm:$0xff]
      %v5166 = vld [vmem:[#allocation3 + $0xc1] sm:$0xff]
      %v5167 = vld [vmem:[#allocation3 + $0xc9] sm:$0xff]
      %v5168 = vld [vmem:[#allocation3 + $0xd9] sm:$0xff]
      %v5169 = vld [vmem:[#allocation3 + $0xe1] sm:$0xff]
      %v5170 = vld [vmem:[#allocation3 + $0xf1] sm:$0xff]
      %v5171 = vld [vmem:[#allocation3 + $0xf9] sm:$0xff]
      %v5172 = vld [vmem:[#allocation3 + $0x109] sm:$0xff]
      %v5173 = vld [vmem:[#allocation3 + $0x111] sm:$0xff]
      %v5174 = vld [vmem:[#allocation3 + $0x121] sm:$0xff]
      %v5175 = vld [vmem:[#allocation3 + $0x129] sm:$0xff]
      %v5176 = vld [vmem:[#allocation3 + $0x139] sm:$0xff]
      %v5177 = vld [vmem:[#allocation3 + $0x141] sm:$0xff]
      %v5178 = vld [vmem:[#allocation3 + $0x151] sm:$0xff]
      %v5179 = vld [vmem:[#allocation3 + $0x159] sm:$0xff]
      %v5180 = vld [vmem:[#allocation3 + $0x169] sm:$0xff]
      %v5181 = vld [vmem:[#allocation3 + $0x171] sm:$0xff]
      %v5182 = vld [vmem:[#allocation3 + $0x1b1] sm:$0xff]
      %v5183 = vld [vmem:[#allocation3 + $0x1b9] sm:$0xff]
      %v5184 = vld [vmem:[#allocation3 + $0x1c9] sm:$0xff]
      %v5185 = vld [vmem:[#allocation3 + $0x1d1] sm:$0xff]
      %v5186 = vld [vmem:[#allocation3 + $0x1e1] sm:$0xff]
      %v5187 = vld [vmem:[#allocation3 + $0x1e9] sm:$0xff]
      %v5188 = vld [vmem:[#allocation3 + $0x1f9] sm:$0xff]
      %v5189 = vld [vmem:[#allocation3 + $0x201] sm:$0xff]
      %v5190 = vld [vmem:[#allocation3 + $0x211] sm:$0xff]
      %v5191 = vld [vmem:[#allocation3 + $0x219] sm:$0xff]
      %v5192 = vld [vmem:[#allocation3 + $0x229] sm:$0xff]
      %v5193 = vld [vmem:[#allocation3 + $0x231] sm:$0xff]
      %v5194 = vld [vmem:[#allocation3 + $0x241] sm:$0xff]
      %v5195 = vld [vmem:[#allocation3 + $0x249] sm:$0xff]
      %v5196 = vld [vmem:[#allocation3 + $0x259] sm:$0xff]
      %v5197 = vld [vmem:[#allocation3 + $0x261] sm:$0xff]
      %v5198 = vld [vmem:[#allocation3 + $0x271] sm:$0xff]
      %v5199 = vld [vmem:[#allocation3 + $0x279] sm:$0xff]
      %v5200 = vld [vmem:[#allocation3 + $0x289] sm:$0xff]
      %v5201 = vld [vmem:[#allocation3 + $0x291] sm:$0xff]
      %v5202 = vld [vmem:[#allocation3 + $0x2a1] sm:$0xff]
      %v5203 = vld [vmem:[#allocation3 + $0x2a9] sm:$0xff]
      %v5204 = vld [vmem:[#allocation3 + $0x2b9] sm:$0xff]
      %v5205 = vld [vmem:[#allocation3 + $0x2c1] sm:$0xff]
      %v5206 = vld [vmem:[#allocation3 + $0x2d1] sm:$0xff]
      %v5207 = vld [vmem:[#allocation3 + $0x2d9] sm:$0xff]
      %v5208 = vld [vmem:[#allocation3 + $0x2e9] sm:$0xff]
      %v5209 = vld [vmem:[#allocation3 + $0x2f1] sm:$0xff]
      %v5210 = vld [vmem:[#allocation3 + $0x301] sm:$0xff]
      %v5211 = vld [vmem:[#allocation3 + $0x309] sm:$0xff]
      %v5212 = vld [vmem:[#allocation3 + $0x319] sm:$0xff]
      %v5213 = vld [vmem:[#allocation3 + $0x321] sm:$0xff]
      %v5214 = vld [vmem:[#allocation3 + $0x2] sm:$0xff]
      %v5215 = vld [vmem:[#allocation3 + $0xa] sm:$0xff]
      %v5216 = vld [vmem:[#allocation3 + $0x1a] sm:$0xff]
      %v5217 = vld [vmem:[#allocation3 + $0x22] sm:$0xff]
      %v5218 = vld [vmem:[#allocation3 + $0x32] sm:$0xff]
      %v5219 = vld [vmem:[#allocation3 + $0x3a] sm:$0xff]
      %v5220 = vld [vmem:[#allocation3 + $0x4a] sm:$0xff]
      %v5221 = vld [vmem:[#allocation3 + $0x52] sm:$0xff]
      %v5222 = vld [vmem:[#allocation3 + $0x62] sm:$0xff]
      %v5223 = vld [vmem:[#allocation3 + $0x6a] sm:$0xff]
      %v5224 = vld [vmem:[#allocation3 + $0x7a] sm:$0xff]
      %v5225 = vld [vmem:[#allocation3 + $0x82] sm:$0xff]
      %v5226 = vld [vmem:[#allocation3 + $0x92] sm:$0xff]
      %v5227 = vld [vmem:[#allocation3 + $0x9a] sm:$0xff]
      %v5228 = vld [vmem:[#allocation3 + $0xaa] sm:$0xff]
      %v5229 = vld [vmem:[#allocation3 + $0xb2] sm:$0xff]
      %v5230 = vld [vmem:[#allocation3 + $0xc2] sm:$0xff]
      %v5231 = vld [vmem:[#allocation3 + $0xca] sm:$0xff]
      %v5232 = vld [vmem:[#allocation3 + $0xda] sm:$0xff]
      %v5233 = vld [vmem:[#allocation3 + $0xe2] sm:$0xff]
      %v5234 = vld [vmem:[#allocation3 + $0xf2] sm:$0xff]
      %v5235 = vld [vmem:[#allocation3 + $0xfa] sm:$0xff]
      %v5236 = vld [vmem:[#allocation3 + $0x10a] sm:$0xff]
      %v5237 = vld [vmem:[#allocation3 + $0x112] sm:$0xff]
      %v5238 = vld [vmem:[#allocation3 + $0x122] sm:$0xff]
      %v5239 = vld [vmem:[#allocation3 + $0x12a] sm:$0xff]
      %v5240 = vld [vmem:[#allocation3 + $0x13a] sm:$0xff]
      %v5241 = vld [vmem:[#allocation3 + $0x142] sm:$0xff]
      %v5242 = vld [vmem:[#allocation3 + $0x152] sm:$0xff]
      %v5243 = vld [vmem:[#allocation3 + $0x15a] sm:$0xff]
      %v5244 = vld [vmem:[#allocation3 + $0x16a] sm:$0xff]
      %v5245 = vld [vmem:[#allocation3 + $0x172] sm:$0xff]
      %v5246 = vld [vmem:[#allocation3 + $0x1b2] sm:$0xff]
      %v5247 = vld [vmem:[#allocation3 + $0x1ba] sm:$0xff]
      %v5248 = vld [vmem:[#allocation3 + $0x1ca] sm:$0xff]
      %v5249 = vld [vmem:[#allocation3 + $0x1d2] sm:$0xff]
      %v5250 = vld [vmem:[#allocation3 + $0x1e2] sm:$0xff]
      %v5251 = vld [vmem:[#allocation3 + $0x1ea] sm:$0xff]
      %v5252 = vld [vmem:[#allocation3 + $0x1fa] sm:$0xff]
      %v5253 = vld [vmem:[#allocation3 + $0x202] sm:$0xff]
      %v5254 = vld [vmem:[#allocation3 + $0x212] sm:$0xff]
      %v5255 = vld [vmem:[#allocation3 + $0x21a] sm:$0xff]
      %v5256 = vld [vmem:[#allocation3 + $0x22a] sm:$0xff]
      %v5257 = vld [vmem:[#allocation3 + $0x232] sm:$0xff]
      %v5258 = vld [vmem:[#allocation3 + $0x242] sm:$0xff]
      %v5259 = vld [vmem:[#allocation3 + $0x24a] sm:$0xff]
      %v5260 = vld [vmem:[#allocation3 + $0x25a] sm:$0xff]
      %v5261 = vld [vmem:[#allocation3 + $0x262] sm:$0xff]
      %v5262 = vld [vmem:[#allocation3 + $0x272] sm:$0xff]
      %v5263 = vld [vmem:[#allocation3 + $0x27a] sm:$0xff]
      %v5264 = vld [vmem:[#allocation3 + $0x28a] sm:$0xff]
      %v5265 = vld [vmem:[#allocation3 + $0x292] sm:$0xff]
      %v5266 = vld [vmem:[#allocation3 + $0x2a2] sm:$0xff]
      %v5267 = vld [vmem:[#allocation3 + $0x2aa] sm:$0xff]
      %v5268 = vld [vmem:[#allocation3 + $0x2ba] sm:$0xff]
      %v5269 = vld [vmem:[#allocation3 + $0x2c2] sm:$0xff]
      %v5270 = vld [vmem:[#allocation3 + $0x2d2] sm:$0xff]
      %v5271 = vld [vmem:[#allocation3 + $0x2da] sm:$0xff]
      %v5272 = vld [vmem:[#allocation3 + $0x2ea] sm:$0xff]
      %v5273 = vld [vmem:[#allocation3 + $0x2f2] sm:$0xff]
      %v5274 = vld [vmem:[#allocation3 + $0x302] sm:$0xff]
      %v5275 = vld [vmem:[#allocation3 + $0x30a] sm:$0xff]
      %v5276 = vld [vmem:[#allocation3 + $0x31a] sm:$0xff]
      %v5277 = vld [vmem:[#allocation3 + $0x322] sm:$0xff]
      %v5278 = vld [vmem:[%s5021] sm:$0xff]
      %v5279 = vld [vmem:[%s5021 + $0x8] sm:$0xff]
      %v5280 = vld [vmem:[%s5021 + $0x18] sm:$0xff]
      %v5281 = vld [vmem:[%s5021 + $0x20] sm:$0xff]
      %v5282 = vld [vmem:[%s5021 + $0x30] sm:$0xff]
      %v5283 = vld [vmem:[%s5021 + $0x38] sm:$0xff]
      %v5284 = vld [vmem:[%s5021 + $0x48] sm:$0xff]
      %v5285 = vld [vmem:[%s5021 + $0x50] sm:$0xff]
      %v5286 = vld [vmem:[%s5021 + $0x60] sm:$0xff]
      %v5287 = vld [vmem:[%s5021 + $0x68] sm:$0xff]
      %v5288 = vld [vmem:[%s5021 + $0x78] sm:$0xff]
      %v5289 = vld [vmem:[%s5021 + $0x80] sm:$0xff]
      %v5290 = vld [vmem:[%s5021 + $0x90] sm:$0xff]
      %v5291 = vld [vmem:[%s5021 + $0x98] sm:$0xff]
      %v5292 = vld [vmem:[%s5021 + $0xa8] sm:$0xff]
      %v5293 = vld [vmem:[%s5021 + $0xb0] sm:$0xff]
      %v5294 = vld [vmem:[%s5021 + $0xc0] sm:$0xff]
      %v5295 = vld [vmem:[%s5021 + $0xc8] sm:$0xff]
      %v5296 = vld [vmem:[%s5021 + $0xd8] sm:$0xff]
      %v5297 = vld [vmem:[%s5021 + $0xe0] sm:$0xff]
      %v5298 = vld [vmem:[%s5021 + $0xf0] sm:$0xff]
      %v5299 = vld [vmem:[%s5021 + $0xf8] sm:$0xff]
      %v5300 = vld [vmem:[%s5021 + $0x108] sm:$0xff]
      %v5301 = vld [vmem:[%s5021 + $0x110] sm:$0xff]
      %v5302 = vld [vmem:[%s5021 + $0x120] sm:$0xff]
      %v5303 = vld [vmem:[%s5021 + $0x128] sm:$0xff]
      %v5304 = vld [vmem:[%s5021 + $0x138] sm:$0xff]
      %v5305 = vld [vmem:[%s5021 + $0x140] sm:$0xff]
      %v5306 = vld [vmem:[%s5021 + $0x150] sm:$0xff]
      %v5307 = vld [vmem:[%s5021 + $0x158] sm:$0xff]
      %v5308 = vld [vmem:[%s5021 + $0x168] sm:$0xff]
      %v5309 = vld [vmem:[%s5021 + $0x170] sm:$0xff]
      %v5310 = vld [vmem:[%s5021 + $0x1b0] sm:$0xff]
      %v5311 = vld [vmem:[%s5021 + $0x1b8] sm:$0xff]
      %v5312 = vld [vmem:[%s5021 + $0x1c8] sm:$0xff]
      %v5313 = vld [vmem:[%s5021 + $0x1d0] sm:$0xff]
      %v5314 = vld [vmem:[%s5021 + $0x1e0] sm:$0xff]
      %v5315 = vld [vmem:[%s5021 + $0x1e8] sm:$0xff]
      %v5316 = vld [vmem:[%s5021 + $0x1f8] sm:$0xff]
      %v5317 = vld [vmem:[%s5021 + $0x200] sm:$0xff]
      %v5318 = vld [vmem:[%s5021 + $0x210] sm:$0xff]
      %v5319 = vld [vmem:[%s5021 + $0x218] sm:$0xff]
      %v5320 = vld [vmem:[%s5021 + $0x228] sm:$0xff]
      %v5321 = vld [vmem:[%s5021 + $0x230] sm:$0xff]
      %v5322 = vld [vmem:[%s5021 + $0x240] sm:$0xff]
      %v5323 = vld [vmem:[%s5021 + $0x248] sm:$0xff]
      %v5324 = vld [vmem:[%s5021 + $0x258] sm:$0xff]
      %v5325 = vld [vmem:[%s5021 + $0x260] sm:$0xff]
      %v5326 = vld [vmem:[%s5021 + $0x270] sm:$0xff]
      %v5327 = vld [vmem:[%s5021 + $0x278] sm:$0xff]
      %v5328 = vld [vmem:[%s5021 + $0x288] sm:$0xff]
      %v5329 = vld [vmem:[%s5021 + $0x290] sm:$0xff]
      %v5330 = vld [vmem:[%s5021 + $0x2a0] sm:$0xff]
      %v5331 = vld [vmem:[%s5021 + $0x2a8] sm:$0xff]
      %v5332 = vld [vmem:[%s5021 + $0x2b8] sm:$0xff]
      %v5333 = vld [vmem:[%s5021 + $0x2c0] sm:$0xff]
      %v5334 = vld [vmem:[%s5021 + $0x2d0] sm:$0xff]
      %v5335 = vld [vmem:[%s5021 + $0x2d8] sm:$0xff]
      %v5336 = vld [vmem:[%s5021 + $0x2e8] sm:$0xff]
      %v5337 = vld [vmem:[%s5021 + $0x2f0] sm:$0xff]
      %v5338 = vld [vmem:[%s5021 + $0x300] sm:$0xff]
      %v5339 = vld [vmem:[%s5021 + $0x308] sm:$0xff]
      %v5340 = vld [vmem:[%s5021 + $0x318] sm:$0xff]
      %v5341 = vld [vmem:[%s5021 + $0x320] sm:$0xff]
      %v5342 = vld [vmem:[%s5021 + $0x1] sm:$0xff]
      %v5343 = vld [vmem:[%s5021 + $0x9] sm:$0xff]
      %v5344 = vld [vmem:[%s5021 + $0x19] sm:$0xff]
      %v5345 = vld [vmem:[%s5021 + $0x21] sm:$0xff]
      %v5346 = vld [vmem:[%s5021 + $0x31] sm:$0xff]
      %v5347 = vld [vmem:[%s5021 + $0x39] sm:$0xff]
      %v5348 = vld [vmem:[%s5021 + $0x49] sm:$0xff]
      %v5349 = vld [vmem:[%s5021 + $0x51] sm:$0xff]
      %v5350 = vld [vmem:[%s5021 + $0x61] sm:$0xff]
      %v5351 = vld [vmem:[%s5021 + $0x69] sm:$0xff]
      %v5352 = vld [vmem:[%s5021 + $0x79] sm:$0xff]
      %v5353 = vld [vmem:[%s5021 + $0x81] sm:$0xff]
      %v5354 = vld [vmem:[%s5021 + $0x91] sm:$0xff]
      %v5355 = vld [vmem:[%s5021 + $0x99] sm:$0xff]
      %v5356 = vld [vmem:[%s5021 + $0xa9] sm:$0xff]
      %v5357 = vld [vmem:[%s5021 + $0xb1] sm:$0xff]
      %v5358 = vld [vmem:[%s5021 + $0xc1] sm:$0xff]
      %v5359 = vld [vmem:[%s5021 + $0xc9] sm:$0xff]
      %v5360 = vld [vmem:[%s5021 + $0xd9] sm:$0xff]
      %v5361 = vld [vmem:[%s5021 + $0xe1] sm:$0xff]
      %v5362 = vld [vmem:[%s5021 + $0xf1] sm:$0xff]
      %v5363 = vld [vmem:[%s5021 + $0xf9] sm:$0xff]
      %v5364 = vld [vmem:[%s5021 + $0x109] sm:$0xff]
      %v5365 = vld [vmem:[%s5021 + $0x111] sm:$0xff]
      %v5366 = vld [vmem:[%s5021 + $0x121] sm:$0xff]
      %v5367 = vld [vmem:[%s5021 + $0x129] sm:$0xff]
      %v5368 = vld [vmem:[%s5021 + $0x139] sm:$0xff]
      %v5369 = vld [vmem:[%s5021 + $0x141] sm:$0xff]
      %v5370 = vld [vmem:[%s5021 + $0x151] sm:$0xff]
      %v5371 = vld [vmem:[%s5021 + $0x159] sm:$0xff]
      %v5372 = vld [vmem:[%s5021 + $0x169] sm:$0xff]
      %v5373 = vld [vmem:[%s5021 + $0x171] sm:$0xff]
      %v5374 = vld [vmem:[%s5021 + $0x1b1] sm:$0xff]
      %v5375 = vld [vmem:[%s5021 + $0x1b9] sm:$0xff]
      %v5376 = vld [vmem:[%s5021 + $0x1c9] sm:$0xff]
      %v5377 = vld [vmem:[%s5021 + $0x1d1] sm:$0xff]
      %v5378 = vld [vmem:[%s5021 + $0x1e1] sm:$0xff]
      %v5379 = vld [vmem:[%s5021 + $0x1e9] sm:$0xff]
      %v5380 = vld [vmem:[%s5021 + $0x1f9] sm:$0xff]
      %v5381 = vld [vmem:[%s5021 + $0x201] sm:$0xff]
      %v5382 = vld [vmem:[%s5021 + $0x211] sm:$0xff]
      %v5383 = vld [vmem:[%s5021 + $0x219] sm:$0xff]
      %v5384 = vld [vmem:[%s5021 + $0x229] sm:$0xff]
      %v5385 = vld [vmem:[%s5021 + $0x231] sm:$0xff]
      %v5386 = vld [vmem:[%s5021 + $0x241] sm:$0xff]
      %v5387 = vld [vmem:[%s5021 + $0x249] sm:$0xff]
      %v5388 = vld [vmem:[%s5021 + $0x259] sm:$0xff]
      %v5389 = vld [vmem:[%s5021 + $0x261] sm:$0xff]
      %v5390 = vld [vmem:[%s5021 + $0x271] sm:$0xff]
      %v5391 = vld [vmem:[%s5021 + $0x279] sm:$0xff]
      %v5392 = vld [vmem:[%s5021 + $0x289] sm:$0xff]
      %v5393 = vld [vmem:[%s5021 + $0x291] sm:$0xff]
      %v5394 = vld [vmem:[%s5021 + $0x2a1] sm:$0xff]
      %v5395 = vld [vmem:[%s5021 + $0x2a9] sm:$0xff]
      %v5396 = vld [vmem:[%s5021 + $0x2b9] sm:$0xff]
      %v5397 = vld [vmem:[%s5021 + $0x2c1] sm:$0xff]
      %v5398 = vld [vmem:[%s5021 + $0x2d1] sm:$0xff]
      %v5399 = vld [vmem:[%s5021 + $0x2d9] sm:$0xff]
      %v5400 = vld [vmem:[%s5021 + $0x2e9] sm:$0xff]
      %v5401 = vld [vmem:[%s5021 + $0x2f1] sm:$0xff]
      %v5402 = vld [vmem:[%s5021 + $0x301] sm:$0xff]
      %v5403 = vld [vmem:[%s5021 + $0x309] sm:$0xff]
      %v5404 = vld [vmem:[%s5021 + $0x319] sm:$0xff]
      %v5405 = vld [vmem:[%s5021 + $0x321] sm:$0xff]
      %v5406 = vld [vmem:[%s5021 + $0x2] sm:$0xff]
      %v5407 = vld [vmem:[%s5021 + $0xa] sm:$0xff]
      %v5408 = vld [vmem:[%s5021 + $0x1a] sm:$0xff]
      %v5409 = vld [vmem:[%s5021 + $0x22] sm:$0xff]
      %v5410 = vld [vmem:[%s5021 + $0x32] sm:$0xff]
      %v5411 = vld [vmem:[%s5021 + $0x3a] sm:$0xff]
      %v5412 = vld [vmem:[%s5021 + $0x4a] sm:$0xff]
      %v5413 = vld [vmem:[%s5021 + $0x52] sm:$0xff]
      %v5414 = vld [vmem:[%s5021 + $0x62] sm:$0xff]
      %v5415 = vld [vmem:[%s5021 + $0x6a] sm:$0xff]
      %v5416 = vld [vmem:[%s5021 + $0x7a] sm:$0xff]
      %v5417 = vld [vmem:[%s5021 + $0x82] sm:$0xff]
      %v5418 = vld [vmem:[%s5021 + $0x92] sm:$0xff]
      %v5419 = vld [vmem:[%s5021 + $0x9a] sm:$0xff]
      %v5420 = vld [vmem:[%s5021 + $0xaa] sm:$0xff]
      %v5421 = vld [vmem:[%s5021 + $0xb2] sm:$0xff]
      %v5422 = vld [vmem:[%s5021 + $0xc2] sm:$0xff]
      %v5423 = vld [vmem:[%s5021 + $0xca] sm:$0xff]
      %v5424 = vld [vmem:[%s5021 + $0xda] sm:$0xff]
      %v5425 = vld [vmem:[%s5021 + $0xe2] sm:$0xff]
      %v5426 = vld [vmem:[%s5021 + $0xf2] sm:$0xff]
      %v5427 = vld [vmem:[%s5021 + $0xfa] sm:$0xff]
      %v5428 = vld [vmem:[%s5021 + $0x10a] sm:$0xff]
      %v5429 = vld [vmem:[%s5021 + $0x112] sm:$0xff]
      %v5430 = vld [vmem:[%s5021 + $0x122] sm:$0xff]
      %v5431 = vld [vmem:[%s5021 + $0x12a] sm:$0xff]
      %v5432 = vld [vmem:[%s5021 + $0x13a] sm:$0xff]
      %v5433 = vld [vmem:[%s5021 + $0x142] sm:$0xff]
      %v5434 = vld [vmem:[%s5021 + $0x152] sm:$0xff]
      %v5435 = vld [vmem:[%s5021 + $0x15a] sm:$0xff]
      %v5436 = vld [vmem:[%s5021 + $0x16a] sm:$0xff]
      %v5437 = vld [vmem:[%s5021 + $0x172] sm:$0xff]
      %v5438 = vld [vmem:[%s5021 + $0x1b2] sm:$0xff]
      %v5439 = vld [vmem:[%s5021 + $0x1ba] sm:$0xff]
      %v5440 = vld [vmem:[%s5021 + $0x1ca] sm:$0xff]
      %v5441 = vld [vmem:[%s5021 + $0x1d2] sm:$0xff]
      %v5442 = vld [vmem:[%s5021 + $0x1e2] sm:$0xff]
      %v5443 = vld [vmem:[%s5021 + $0x1ea] sm:$0xff]
      %v5444 = vld [vmem:[%s5021 + $0x1fa] sm:$0xff]
      %v5445 = vld [vmem:[%s5021 + $0x202] sm:$0xff]
      %v5446 = vld [vmem:[%s5021 + $0x212] sm:$0xff]
      %v5447 = vld [vmem:[%s5021 + $0x21a] sm:$0xff]
      %v5448 = vld [vmem:[%s5021 + $0x22a] sm:$0xff]
      %v5449 = vld [vmem:[%s5021 + $0x232] sm:$0xff]
      %v5450 = vld [vmem:[%s5021 + $0x242] sm:$0xff]
      %v5451 = vld [vmem:[%s5021 + $0x24a] sm:$0xff]
      %v5452 = vld [vmem:[%s5021 + $0x25a] sm:$0xff]
      %v5453 = vld [vmem:[%s5021 + $0x262] sm:$0xff]
      %v5454 = vld [vmem:[%s5021 + $0x272] sm:$0xff]
      %v5455 = vld [vmem:[%s5021 + $0x27a] sm:$0xff]
      %v5456 = vld [vmem:[%s5021 + $0x28a] sm:$0xff]
      %v5457 = vld [vmem:[%s5021 + $0x292] sm:$0xff]
      %v5458 = vld [vmem:[%s5021 + $0x2a2] sm:$0xff]
      %v5459 = vld [vmem:[%s5021 + $0x2aa] sm:$0xff]
      %v5460 = vld [vmem:[%s5021 + $0x2ba] sm:$0xff]
      %v5461 = vld [vmem:[%s5021 + $0x2c2] sm:$0xff]
      %v5462 = vld [vmem:[%s5021 + $0x2d2] sm:$0xff]
      %v5463 = vld [vmem:[%s5021 + $0x2da] sm:$0xff]
      %v5464 = vld [vmem:[%s5021 + $0x2ea] sm:$0xff]
      %v5465 = vld [vmem:[%s5021 + $0x2f2] sm:$0xff]
      %v5466 = vld [vmem:[%s5021 + $0x302] sm:$0xff]
      %v5467 = vld [vmem:[%s5021 + $0x30a] sm:$0xff]
      %v5468 = vld [vmem:[%s5021 + $0x31a] sm:$0xff]
      %v5469 = vld [vmem:[%s5021 + $0x322] sm:$0xff]
      %s5470 = scalar_lea.vmem [#allocation3], 48
      %v5471 = vld [vmem:[%s5470] sm:$0xff]
      %v5472 = vld [vmem:[%s5470 + $0x8] sm:$0xff]
      %v5473 = vld [vmem:[%s5470 + $0x18] sm:$0xff]
      %v5474 = vld [vmem:[%s5470 + $0x20] sm:$0xff]
      %v5475 = vld [vmem:[%s5470 + $0x30] sm:$0xff]
      %v5476 = vld [vmem:[%s5470 + $0x38] sm:$0xff]
      %v5477 = vld [vmem:[%s5470 + $0x48] sm:$0xff]
      %v5478 = vld [vmem:[%s5470 + $0x50] sm:$0xff]
      %v5479 = vld [vmem:[%s5470 + $0x60] sm:$0xff]
      %v5480 = vld [vmem:[%s5470 + $0x68] sm:$0xff]
      %v5481 = vld [vmem:[%s5470 + $0x78] sm:$0xff]
      %v5482 = vld [vmem:[%s5470 + $0x80] sm:$0xff]
      %v5483 = vld [vmem:[%s5470 + $0x90] sm:$0xff]
      %v5484 = vld [vmem:[%s5470 + $0x98] sm:$0xff]
      %v5485 = vld [vmem:[%s5470 + $0xa8] sm:$0xff]
      %v5486 = vld [vmem:[%s5470 + $0xb0] sm:$0xff]
      %v5487 = vld [vmem:[%s5470 + $0xc0] sm:$0xff]
      %v5488 = vld [vmem:[%s5470 + $0xc8] sm:$0xff]
      %v5489 = vld [vmem:[%s5470 + $0xd8] sm:$0xff]
      %v5490 = vld [vmem:[%s5470 + $0xe0] sm:$0xff]
      %v5491 = vld [vmem:[%s5470 + $0xf0] sm:$0xff]
      %v5492 = vld [vmem:[%s5470 + $0xf8] sm:$0xff]
      %v5493 = vld [vmem:[%s5470 + $0x108] sm:$0xff]
      %v5494 = vld [vmem:[%s5470 + $0x110] sm:$0xff]
      %v5495 = vld [vmem:[%s5470 + $0x120] sm:$0xff]
      %v5496 = vld [vmem:[%s5470 + $0x128] sm:$0xff]
      %v5497 = vld [vmem:[%s5470 + $0x138] sm:$0xff]
      %v5498 = vld [vmem:[%s5470 + $0x140] sm:$0xff]
      %v5499 = vld [vmem:[%s5470 + $0x150] sm:$0xff]
      %v5500 = vld [vmem:[%s5470 + $0x158] sm:$0xff]
      %v5501 = vld [vmem:[%s5470 + $0x168] sm:$0xff]
      %v5502 = vld [vmem:[%s5470 + $0x170] sm:$0xff]
      %v5503 = vld [vmem:[%s5470 + $0x1b0] sm:$0xff]
      %v5504 = vld [vmem:[%s5470 + $0x1b8] sm:$0xff]
      %v5505 = vld [vmem:[%s5470 + $0x1c8] sm:$0xff]
      %v5506 = vld [vmem:[%s5470 + $0x1d0] sm:$0xff]
      %v5507 = vld [vmem:[%s5470 + $0x1e0] sm:$0xff]
      %v5508 = vld [vmem:[%s5470 + $0x1e8] sm:$0xff]
      %v5509 = vld [vmem:[%s5470 + $0x1f8] sm:$0xff]
      %v5510 = vld [vmem:[%s5470 + $0x200] sm:$0xff]
      %v5511 = vld [vmem:[%s5470 + $0x210] sm:$0xff]
      %v5512 = vld [vmem:[%s5470 + $0x218] sm:$0xff]
      %v5513 = vld [vmem:[%s5470 + $0x228] sm:$0xff]
      %v5514 = vld [vmem:[%s5470 + $0x230] sm:$0xff]
      %v5515 = vld [vmem:[%s5470 + $0x240] sm:$0xff]
      %v5516 = vld [vmem:[%s5470 + $0x248] sm:$0xff]
      %v5517 = vld [vmem:[%s5470 + $0x258] sm:$0xff]
      %v5518 = vld [vmem:[%s5470 + $0x260] sm:$0xff]
      %v5519 = vld [vmem:[%s5470 + $0x270] sm:$0xff]
      %v5520 = vld [vmem:[%s5470 + $0x278] sm:$0xff]
      %v5521 = vld [vmem:[%s5470 + $0x288] sm:$0xff]
      %v5522 = vld [vmem:[%s5470 + $0x290] sm:$0xff]
      %v5523 = vld [vmem:[%s5470 + $0x2a0] sm:$0xff]
      %v5524 = vld [vmem:[%s5470 + $0x2a8] sm:$0xff]
      %v5525 = vld [vmem:[%s5470 + $0x2b8] sm:$0xff]
      %v5526 = vld [vmem:[%s5470 + $0x2c0] sm:$0xff]
      %v5527 = vld [vmem:[%s5470 + $0x2d0] sm:$0xff]
      %v5528 = vld [vmem:[%s5470 + $0x2d8] sm:$0xff]
      %v5529 = vld [vmem:[%s5470 + $0x2e8] sm:$0xff]
      %v5530 = vld [vmem:[%s5470 + $0x2f0] sm:$0xff]
      %v5531 = vld [vmem:[%s5470 + $0x300] sm:$0xff]
      %v5532 = vld [vmem:[%s5470 + $0x308] sm:$0xff]
      %v5533 = vld [vmem:[%s5470 + $0x318] sm:$0xff]
      %v5534 = vld [vmem:[%s5470 + $0x320] sm:$0xff]
      %v5535 = vld [vmem:[%s5470 + $0x1] sm:$0xff]
      %v5536 = vld [vmem:[%s5470 + $0x9] sm:$0xff]
      %v5537 = vld [vmem:[%s5470 + $0x19] sm:$0xff]
      %v5538 = vld [vmem:[%s5470 + $0x21] sm:$0xff]
      %v5539 = vld [vmem:[%s5470 + $0x31] sm:$0xff]
      %v5540 = vld [vmem:[%s5470 + $0x39] sm:$0xff]
      %v5541 = vld [vmem:[%s5470 + $0x49] sm:$0xff]
      %v5542 = vld [vmem:[%s5470 + $0x51] sm:$0xff]
      %v5543 = vld [vmem:[%s5470 + $0x61] sm:$0xff]
      %v5544 = vld [vmem:[%s5470 + $0x69] sm:$0xff]
      %v5545 = vld [vmem:[%s5470 + $0x79] sm:$0xff]
      %v5546 = vld [vmem:[%s5470 + $0x81] sm:$0xff]
      %v5547 = vld [vmem:[%s5470 + $0x91] sm:$0xff]
      %v5548 = vld [vmem:[%s5470 + $0x99] sm:$0xff]
      %v5549 = vld [vmem:[%s5470 + $0xa9] sm:$0xff]
      %v5550 = vld [vmem:[%s5470 + $0xb1] sm:$0xff]
      %v5551 = vld [vmem:[%s5470 + $0xc1] sm:$0xff]
      %v5552 = vld [vmem:[%s5470 + $0xc9] sm:$0xff]
      %v5553 = vld [vmem:[%s5470 + $0xd9] sm:$0xff]
      %v5554 = vld [vmem:[%s5470 + $0xe1] sm:$0xff]
      %v5555 = vld [vmem:[%s5470 + $0xf1] sm:$0xff]
      %v5556 = vld [vmem:[%s5470 + $0xf9] sm:$0xff]
      %v5557 = vld [vmem:[%s5470 + $0x109] sm:$0xff]
      %v5558 = vld [vmem:[%s5470 + $0x111] sm:$0xff]
      %v5559 = vld [vmem:[%s5470 + $0x121] sm:$0xff]
      %v5560 = vld [vmem:[%s5470 + $0x129] sm:$0xff]
      %v5561 = vld [vmem:[%s5470 + $0x139] sm:$0xff]
      %v5562 = vld [vmem:[%s5470 + $0x141] sm:$0xff]
      %v5563 = vld [vmem:[%s5470 + $0x151] sm:$0xff]
      %v5564 = vld [vmem:[%s5470 + $0x159] sm:$0xff]
      %v5565 = vld [vmem:[%s5470 + $0x169] sm:$0xff]
      %v5566 = vld [vmem:[%s5470 + $0x171] sm:$0xff]
      %v5567 = vld [vmem:[%s5470 + $0x1b1] sm:$0xff]
      %v5568 = vld [vmem:[%s5470 + $0x1b9] sm:$0xff]
      %v5569 = vld [vmem:[%s5470 + $0x1c9] sm:$0xff]
      %v5570 = vld [vmem:[%s5470 + $0x1d1] sm:$0xff]
      %v5571 = vld [vmem:[%s5470 + $0x1e1] sm:$0xff]
      %v5572 = vld [vmem:[%s5470 + $0x1e9] sm:$0xff]
      %v5573 = vld [vmem:[%s5470 + $0x1f9] sm:$0xff]
      %v5574 = vld [vmem:[%s5470 + $0x201] sm:$0xff]
      %v5575 = vld [vmem:[%s5470 + $0x211] sm:$0xff]
      %v5576 = vld [vmem:[%s5470 + $0x219] sm:$0xff]
      %v5577 = vld [vmem:[%s5470 + $0x229] sm:$0xff]
      %v5578 = vld [vmem:[%s5470 + $0x231] sm:$0xff]
      %v5579 = vld [vmem:[%s5470 + $0x241] sm:$0xff]
      %v5580 = vld [vmem:[%s5470 + $0x249] sm:$0xff]
      %v5581 = vld [vmem:[%s5470 + $0x259] sm:$0xff]
      %v5582 = vld [vmem:[%s5470 + $0x261] sm:$0xff]
      %v5583 = vld [vmem:[%s5470 + $0x271] sm:$0xff]
      %v5584 = vld [vmem:[%s5470 + $0x279] sm:$0xff]
      %v5585 = vld [vmem:[%s5470 + $0x289] sm:$0xff]
      %v5586 = vld [vmem:[%s5470 + $0x291] sm:$0xff]
      %v5587 = vld [vmem:[%s5470 + $0x2a1] sm:$0xff]
      %v5588 = vld [vmem:[%s5470 + $0x2a9] sm:$0xff]
      %v5589 = vld [vmem:[%s5470 + $0x2b9] sm:$0xff]
      %v5590 = vld [vmem:[%s5470 + $0x2c1] sm:$0xff]
      %v5591 = vld [vmem:[%s5470 + $0x2d1] sm:$0xff]
      %v5592 = vld [vmem:[%s5470 + $0x2d9] sm:$0xff]
      %v5593 = vld [vmem:[%s5470 + $0x2e9] sm:$0xff]
      %v5594 = vld [vmem:[%s5470 + $0x2f1] sm:$0xff]
      %v5595 = vld [vmem:[%s5470 + $0x301] sm:$0xff]
      %v5596 = vld [vmem:[%s5470 + $0x309] sm:$0xff]
      %v5597 = vld [vmem:[%s5470 + $0x319] sm:$0xff]
      %v5598 = vld [vmem:[%s5470 + $0x321] sm:$0xff]
      %v5599 = vld [vmem:[%s5470 + $0x2] sm:$0xff]
      %v5600 = vld [vmem:[%s5470 + $0xa] sm:$0xff]
      %v5601 = vld [vmem:[%s5470 + $0x1a] sm:$0xff]
      %v5602 = vld [vmem:[%s5470 + $0x22] sm:$0xff]
      %v5603 = vld [vmem:[%s5470 + $0x32] sm:$0xff]
      %v5604 = vld [vmem:[%s5470 + $0x3a] sm:$0xff]
      %v5605 = vld [vmem:[%s5470 + $0x4a] sm:$0xff]
      %v5606 = vld [vmem:[%s5470 + $0x52] sm:$0xff]
      %v5607 = vld [vmem:[%s5470 + $0x62] sm:$0xff]
      %v5608 = vld [vmem:[%s5470 + $0x6a] sm:$0xff]
      %v5609 = vld [vmem:[%s5470 + $0x7a] sm:$0xff]
      %v5610 = vld [vmem:[%s5470 + $0x82] sm:$0xff]
      %v5611 = vld [vmem:[%s5470 + $0x92] sm:$0xff]
      %v5612 = vld [vmem:[%s5470 + $0x9a] sm:$0xff]
      %v5613 = vld [vmem:[%s5470 + $0xaa] sm:$0xff]
      %v5614 = vld [vmem:[%s5470 + $0xb2] sm:$0xff]
      %v5615 = vld [vmem:[%s5470 + $0xc2] sm:$0xff]
      %v5616 = vld [vmem:[%s5470 + $0xca] sm:$0xff]
      %v5617 = vld [vmem:[%s5470 + $0xda] sm:$0xff]
      %v5618 = vld [vmem:[%s5470 + $0xe2] sm:$0xff]
      %v5619 = vld [vmem:[%s5470 + $0xf2] sm:$0xff]
      %v5620 = vld [vmem:[%s5470 + $0xfa] sm:$0xff]
      %v5621 = vld [vmem:[%s5470 + $0x10a] sm:$0xff]
      %v5622 = vld [vmem:[%s5470 + $0x112] sm:$0xff]
      %v5623 = vld [vmem:[%s5470 + $0x122] sm:$0xff]
      %v5624 = vld [vmem:[%s5470 + $0x12a] sm:$0xff]
      %v5625 = vld [vmem:[%s5470 + $0x13a] sm:$0xff]
      %v5626 = vld [vmem:[%s5470 + $0x142] sm:$0xff]
      %v5627 = vld [vmem:[%s5470 + $0x152] sm:$0xff]
      %v5628 = vld [vmem:[%s5470 + $0x15a] sm:$0xff]
      %v5629 = vld [vmem:[%s5470 + $0x16a] sm:$0xff]
      %v5630 = vld [vmem:[%s5470 + $0x172] sm:$0xff]
      %v5631 = vld [vmem:[%s5470 + $0x1b2] sm:$0xff]
      %v5632 = vld [vmem:[%s5470 + $0x1ba] sm:$0xff]
      %v5633 = vld [vmem:[%s5470 + $0x1ca] sm:$0xff]
      %v5634 = vld [vmem:[%s5470 + $0x1d2] sm:$0xff]
      %v5635 = vld [vmem:[%s5470 + $0x1e2] sm:$0xff]
      %v5636 = vld [vmem:[%s5470 + $0x1ea] sm:$0xff]
      %v5637 = vld [vmem:[%s5470 + $0x1fa] sm:$0xff]
      %v5638 = vld [vmem:[%s5470 + $0x202] sm:$0xff]
      %v5639 = vld [vmem:[%s5470 + $0x212] sm:$0xff]
      %v5640 = vld [vmem:[%s5470 + $0x21a] sm:$0xff]
      %v5641 = vld [vmem:[%s5470 + $0x22a] sm:$0xff]
      %v5642 = vld [vmem:[%s5470 + $0x232] sm:$0xff]
      %v5643 = vld [vmem:[%s5470 + $0x242] sm:$0xff]
      %v5644 = vld [vmem:[%s5470 + $0x24a] sm:$0xff]
      %v5645 = vld [vmem:[%s5470 + $0x25a] sm:$0xff]
      %v5646 = vld [vmem:[%s5470 + $0x262] sm:$0xff]
      %v5647 = vld [vmem:[%s5470 + $0x272] sm:$0xff]
      %v5648 = vld [vmem:[%s5470 + $0x27a] sm:$0xff]
      %v5649 = vld [vmem:[%s5470 + $0x28a] sm:$0xff]
      %v5650 = vld [vmem:[%s5470 + $0x292] sm:$0xff]
      %v5651 = vld [vmem:[%s5470 + $0x2a2] sm:$0xff]
      %v5652 = vld [vmem:[%s5470 + $0x2aa] sm:$0xff]
      %v5653 = vld [vmem:[%s5470 + $0x2ba] sm:$0xff]
      %v5654 = vld [vmem:[%s5470 + $0x2c2] sm:$0xff]
      %v5655 = vld [vmem:[%s5470 + $0x2d2] sm:$0xff]
      %v5656 = vld [vmem:[%s5470 + $0x2da] sm:$0xff]
      %v5657 = vld [vmem:[%s5470 + $0x2ea] sm:$0xff]
      %v5658 = vld [vmem:[%s5470 + $0x2f2] sm:$0xff]
      %v5659 = vld [vmem:[%s5470 + $0x302] sm:$0xff]
      %v5660 = vld [vmem:[%s5470 + $0x30a] sm:$0xff]
      %v5661 = vld [vmem:[%s5470 + $0x31a] sm:$0xff]
      %v5662 = vld [vmem:[%s5470 + $0x322] sm:$0xff]
      %5727 = vrot.lane.b32.xlu0 %v5150, 8
      %v5728 = vpop.permute.xlu0 %5727
      %5729 = vrot.lane.b32.xlu0 %v5151, 8
      %v5730 = vpop.permute.xlu0 %5729
      %5731 = vrot.lane.b32.xlu0 %v5152, 8
      %v5732 = vpop.permute.xlu0 %5731
      %5733 = vrot.lane.b32.xlu0 %v5153, 8
      %v5734 = vpop.permute.xlu0 %5733
      %5735 = vrot.lane.b32.xlu0 %v5154, 8
      %v5736 = vpop.permute.xlu0 %5735
      %5737 = vrot.lane.b32.xlu0 %v5155, 8
      %v5738 = vpop.permute.xlu0 %5737
      %5739 = vrot.lane.b32.xlu0 %v5156, 8
      %v5740 = vpop.permute.xlu0 %5739
      %5741 = vrot.lane.b32.xlu0 %v5157, 8
      %v5742 = vpop.permute.xlu0 %5741
      %5743 = vrot.lane.b32.xlu0 %v5158, 8
      %v5744 = vpop.permute.xlu0 %5743
      %5745 = vrot.lane.b32.xlu0 %v5159, 8
      %v5746 = vpop.permute.xlu0 %5745
      %5747 = vrot.lane.b32.xlu0 %v5160, 8
      %v5748 = vpop.permute.xlu0 %5747
      %5749 = vrot.lane.b32.xlu0 %v5161, 8
      %v5750 = vpop.permute.xlu0 %5749
      %5751 = vrot.lane.b32.xlu0 %v5162, 8
      %v5752 = vpop.permute.xlu0 %5751
      %5753 = vrot.lane.b32.xlu0 %v5163, 8
      %v5754 = vpop.permute.xlu0 %5753
      %5755 = vrot.lane.b32.xlu0 %v5164, 8
      %v5756 = vpop.permute.xlu0 %5755
      %5757 = vrot.lane.b32.xlu0 %v5165, 8
      %v5758 = vpop.permute.xlu0 %5757
      %5759 = vrot.lane.b32.xlu0 %v5166, 8
      %v5760 = vpop.permute.xlu0 %5759
      %5761 = vrot.lane.b32.xlu0 %v5167, 8
      %v5762 = vpop.permute.xlu0 %5761
      %5763 = vrot.lane.b32.xlu0 %v5168, 8
      %v5764 = vpop.permute.xlu0 %5763
      %5765 = vrot.lane.b32.xlu0 %v5169, 8
      %v5766 = vpop.permute.xlu0 %5765
      %5767 = vrot.lane.b32.xlu0 %v5170, 8
      %v5768 = vpop.permute.xlu0 %5767
      %5769 = vrot.lane.b32.xlu0 %v5171, 8
      %v5770 = vpop.permute.xlu0 %5769
      %5771 = vrot.lane.b32.xlu0 %v5172, 8
      %v5772 = vpop.permute.xlu0 %5771
      %5773 = vrot.lane.b32.xlu0 %v5173, 8
      %v5774 = vpop.permute.xlu0 %5773
      %5775 = vrot.lane.b32.xlu0 %v5174, 8
      %v5776 = vpop.permute.xlu0 %5775
      %5777 = vrot.lane.b32.xlu0 %v5175, 8
      %v5778 = vpop.permute.xlu0 %5777
      %5779 = vrot.lane.b32.xlu0 %v5176, 8
      %v5780 = vpop.permute.xlu0 %5779
      %5781 = vrot.lane.b32.xlu0 %v5177, 8
      %v5782 = vpop.permute.xlu0 %5781
      %5783 = vrot.lane.b32.xlu0 %v5178, 8
      %v5784 = vpop.permute.xlu0 %5783
      %5785 = vrot.lane.b32.xlu0 %v5179, 8
      %v5786 = vpop.permute.xlu0 %5785
      %5787 = vrot.lane.b32.xlu0 %v5180, 8
      %v5788 = vpop.permute.xlu0 %5787
      %5789 = vrot.lane.b32.xlu0 %v5181, 8
      %v5790 = vpop.permute.xlu0 %5789
      %5791 = vrot.lane.b32.xlu0 %v5182, 8
      %v5792 = vpop.permute.xlu0 %5791
      %5793 = vrot.lane.b32.xlu0 %v5183, 8
      %v5794 = vpop.permute.xlu0 %5793
      %5795 = vrot.lane.b32.xlu0 %v5184, 8
      %v5796 = vpop.permute.xlu0 %5795
      %5797 = vrot.lane.b32.xlu0 %v5185, 8
      %v5798 = vpop.permute.xlu0 %5797
      %5799 = vrot.lane.b32.xlu0 %v5186, 8
      %v5800 = vpop.permute.xlu0 %5799
      %5801 = vrot.lane.b32.xlu0 %v5187, 8
      %v5802 = vpop.permute.xlu0 %5801
      %5803 = vrot.lane.b32.xlu0 %v5188, 8
      %v5804 = vpop.permute.xlu0 %5803
      %5805 = vrot.lane.b32.xlu0 %v5189, 8
      %v5806 = vpop.permute.xlu0 %5805
      %5807 = vrot.lane.b32.xlu0 %v5190, 8
      %v5808 = vpop.permute.xlu0 %5807
      %5809 = vrot.lane.b32.xlu0 %v5191, 8
      %v5810 = vpop.permute.xlu0 %5809
      %5811 = vrot.lane.b32.xlu0 %v5192, 8
      %v5812 = vpop.permute.xlu0 %5811
      %5813 = vrot.lane.b32.xlu0 %v5193, 8
      %v5814 = vpop.permute.xlu0 %5813
      %5815 = vrot.lane.b32.xlu0 %v5194, 8
      %v5816 = vpop.permute.xlu0 %5815
      %5817 = vrot.lane.b32.xlu0 %v5195, 8
      %v5818 = vpop.permute.xlu0 %5817
      %5819 = vrot.lane.b32.xlu0 %v5196, 8
      %v5820 = vpop.permute.xlu0 %5819
      %5821 = vrot.lane.b32.xlu0 %v5197, 8
      %v5822 = vpop.permute.xlu0 %5821
      %5823 = vrot.lane.b32.xlu0 %v5198, 8
      %v5824 = vpop.permute.xlu0 %5823
      %5825 = vrot.lane.b32.xlu0 %v5199, 8
      %v5826 = vpop.permute.xlu0 %5825
      %5827 = vrot.lane.b32.xlu0 %v5200, 8
      %v5828 = vpop.permute.xlu0 %5827
      %5829 = vrot.lane.b32.xlu0 %v5201, 8
      %v5830 = vpop.permute.xlu0 %5829
      %5831 = vrot.lane.b32.xlu0 %v5202, 8
      %v5832 = vpop.permute.xlu0 %5831
      %5833 = vrot.lane.b32.xlu0 %v5203, 8
      %v5834 = vpop.permute.xlu0 %5833
      %5835 = vrot.lane.b32.xlu0 %v5204, 8
      %v5836 = vpop.permute.xlu0 %5835
      %5837 = vrot.lane.b32.xlu0 %v5205, 8
      %v5838 = vpop.permute.xlu0 %5837
      %5839 = vrot.lane.b32.xlu0 %v5206, 8
      %v5840 = vpop.permute.xlu0 %5839
      %5841 = vrot.lane.b32.xlu0 %v5207, 8
      %v5842 = vpop.permute.xlu0 %5841
      %5843 = vrot.lane.b32.xlu0 %v5208, 8
      %v5844 = vpop.permute.xlu0 %5843
      %5845 = vrot.lane.b32.xlu0 %v5209, 8
      %v5846 = vpop.permute.xlu0 %5845
      %5847 = vrot.lane.b32.xlu0 %v5210, 8
      %v5848 = vpop.permute.xlu0 %5847
      %5849 = vrot.lane.b32.xlu0 %v5211, 8
      %v5850 = vpop.permute.xlu0 %5849
      %5851 = vrot.lane.b32.xlu0 %v5212, 8
      %v5852 = vpop.permute.xlu0 %5851
      %5853 = vrot.lane.b32.xlu0 %v5213, 8
      %v5854 = vpop.permute.xlu0 %5853
      %5983 = vrot.lane.b32.xlu0 %v5214, 16
      %v5984 = vpop.permute.xlu0 %5983
      %5985 = vrot.lane.b32.xlu0 %v5215, 16
      %v5986 = vpop.permute.xlu0 %5985
      %5987 = vrot.lane.b32.xlu0 %v5216, 16
      %v5988 = vpop.permute.xlu0 %5987
      %5989 = vrot.lane.b32.xlu0 %v5217, 16
      %v5990 = vpop.permute.xlu0 %5989
      %5991 = vrot.lane.b32.xlu0 %v5218, 16
      %v5992 = vpop.permute.xlu0 %5991
      %5993 = vrot.lane.b32.xlu0 %v5219, 16
      %v5994 = vpop.permute.xlu0 %5993
      %5995 = vrot.lane.b32.xlu0 %v5220, 16
      %v5996 = vpop.permute.xlu0 %5995
      %5997 = vrot.lane.b32.xlu0 %v5221, 16
      %v5998 = vpop.permute.xlu0 %5997
      %5999 = vrot.lane.b32.xlu0 %v5222, 16
      %v6000 = vpop.permute.xlu0 %5999
      %6001 = vrot.lane.b32.xlu0 %v5223, 16
      %v6002 = vpop.permute.xlu0 %6001
      %6003 = vrot.lane.b32.xlu0 %v5224, 16
      %v6004 = vpop.permute.xlu0 %6003
      %6005 = vrot.lane.b32.xlu0 %v5225, 16
      %v6006 = vpop.permute.xlu0 %6005
      %6007 = vrot.lane.b32.xlu0 %v5226, 16
      %v6008 = vpop.permute.xlu0 %6007
      %6009 = vrot.lane.b32.xlu0 %v5227, 16
      %v6010 = vpop.permute.xlu0 %6009
      %6011 = vrot.lane.b32.xlu0 %v5228, 16
      %v6012 = vpop.permute.xlu0 %6011
      %6013 = vrot.lane.b32.xlu0 %v5229, 16
      %v6014 = vpop.permute.xlu0 %6013
      %6015 = vrot.lane.b32.xlu0 %v5230, 16
      %v6016 = vpop.permute.xlu0 %6015
      %6017 = vrot.lane.b32.xlu0 %v5231, 16
      %v6018 = vpop.permute.xlu0 %6017
      %6019 = vrot.lane.b32.xlu0 %v5232, 16
      %v6020 = vpop.permute.xlu0 %6019
      %6021 = vrot.lane.b32.xlu0 %v5233, 16
      %v6022 = vpop.permute.xlu0 %6021
      %6023 = vrot.lane.b32.xlu0 %v5234, 16
      %v6024 = vpop.permute.xlu0 %6023
      %6025 = vrot.lane.b32.xlu0 %v5235, 16
      %v6026 = vpop.permute.xlu0 %6025
      %6027 = vrot.lane.b32.xlu0 %v5236, 16
      %v6028 = vpop.permute.xlu0 %6027
      %6029 = vrot.lane.b32.xlu0 %v5237, 16
      %v6030 = vpop.permute.xlu0 %6029
      %6031 = vrot.lane.b32.xlu0 %v5238, 16
      %v6032 = vpop.permute.xlu0 %6031
      %6033 = vrot.lane.b32.xlu0 %v5239, 16
      %v6034 = vpop.permute.xlu0 %6033
      %6035 = vrot.lane.b32.xlu0 %v5240, 16
      %v6036 = vpop.permute.xlu0 %6035
      %6037 = vrot.lane.b32.xlu0 %v5241, 16
      %v6038 = vpop.permute.xlu0 %6037
      %6039 = vrot.lane.b32.xlu0 %v5242, 16
      %v6040 = vpop.permute.xlu0 %6039
      %6041 = vrot.lane.b32.xlu0 %v5243, 16
      %v6042 = vpop.permute.xlu0 %6041
      %6043 = vrot.lane.b32.xlu0 %v5244, 16
      %v6044 = vpop.permute.xlu0 %6043
      %6045 = vrot.lane.b32.xlu0 %v5245, 16
      %v6046 = vpop.permute.xlu0 %6045
      %6047 = vrot.lane.b32.xlu0 %v5246, 16
      %v6048 = vpop.permute.xlu0 %6047
      %6049 = vrot.lane.b32.xlu0 %v5247, 16
      %v6050 = vpop.permute.xlu0 %6049
      %6051 = vrot.lane.b32.xlu0 %v5248, 16
      %v6052 = vpop.permute.xlu0 %6051
      %6053 = vrot.lane.b32.xlu0 %v5249, 16
      %v6054 = vpop.permute.xlu0 %6053
      %6055 = vrot.lane.b32.xlu0 %v5250, 16
      %v6056 = vpop.permute.xlu0 %6055
      %6057 = vrot.lane.b32.xlu0 %v5251, 16
      %v6058 = vpop.permute.xlu0 %6057
      %6059 = vrot.lane.b32.xlu0 %v5252, 16
      %v6060 = vpop.permute.xlu0 %6059
      %6061 = vrot.lane.b32.xlu0 %v5253, 16
      %v6062 = vpop.permute.xlu0 %6061
      %6063 = vrot.lane.b32.xlu0 %v5254, 16
      %v6064 = vpop.permute.xlu0 %6063
      %6065 = vrot.lane.b32.xlu0 %v5255, 16
      %v6066 = vpop.permute.xlu0 %6065
      %6067 = vrot.lane.b32.xlu0 %v5256, 16
      %v6068 = vpop.permute.xlu0 %6067
      %6069 = vrot.lane.b32.xlu0 %v5257, 16
      %v6070 = vpop.permute.xlu0 %6069
      %6071 = vrot.lane.b32.xlu0 %v5258, 16
      %v6072 = vpop.permute.xlu0 %6071
      %6073 = vrot.lane.b32.xlu0 %v5259, 16
      %v6074 = vpop.permute.xlu0 %6073
      %6075 = vrot.lane.b32.xlu0 %v5260, 16
      %v6076 = vpop.permute.xlu0 %6075
      %6077 = vrot.lane.b32.xlu0 %v5261, 16
      %v6078 = vpop.permute.xlu0 %6077
      %6079 = vrot.lane.b32.xlu0 %v5262, 16
      %v6080 = vpop.permute.xlu0 %6079
      %6081 = vrot.lane.b32.xlu0 %v5263, 16
      %v6082 = vpop.permute.xlu0 %6081
      %6083 = vrot.lane.b32.xlu0 %v5264, 16
      %v6084 = vpop.permute.xlu0 %6083
      %6085 = vrot.lane.b32.xlu0 %v5265, 16
      %v6086 = vpop.permute.xlu0 %6085
      %6087 = vrot.lane.b32.xlu0 %v5266, 16
      %v6088 = vpop.permute.xlu0 %6087
      %6089 = vrot.lane.b32.xlu0 %v5267, 16
      %v6090 = vpop.permute.xlu0 %6089
      %6091 = vrot.lane.b32.xlu0 %v5268, 16
      %v6092 = vpop.permute.xlu0 %6091
      %6093 = vrot.lane.b32.xlu0 %v5269, 16
      %v6094 = vpop.permute.xlu0 %6093
      %6095 = vrot.lane.b32.xlu0 %v5270, 16
      %v6096 = vpop.permute.xlu0 %6095
      %6097 = vrot.lane.b32.xlu0 %v5271, 16
      %v6098 = vpop.permute.xlu0 %6097
      %6099 = vrot.lane.b32.xlu0 %v5272, 16
      %v6100 = vpop.permute.xlu0 %6099
      %6101 = vrot.lane.b32.xlu0 %v5273, 16
      %v6102 = vpop.permute.xlu0 %6101
      %6103 = vrot.lane.b32.xlu0 %v5274, 16
      %v6104 = vpop.permute.xlu0 %6103
      %6105 = vrot.lane.b32.xlu0 %v5275, 16
      %v6106 = vpop.permute.xlu0 %6105
      %6107 = vrot.lane.b32.xlu0 %v5276, 16
      %v6108 = vpop.permute.xlu0 %6107
      %6109 = vrot.lane.b32.xlu0 %v5277, 16
      %v6110 = vpop.permute.xlu0 %6109
      %6239 = vrot.lane.b32.xlu0 %v5278, 24
      %v6240 = vpop.permute.xlu0 %6239
      %6241 = vrot.lane.b32.xlu0 %v5279, 24
      %v6242 = vpop.permute.xlu0 %6241
      %6243 = vrot.lane.b32.xlu0 %v5280, 24
      %v6244 = vpop.permute.xlu0 %6243
      %6245 = vrot.lane.b32.xlu0 %v5281, 24
      %v6246 = vpop.permute.xlu0 %6245
      %6247 = vrot.lane.b32.xlu0 %v5282, 24
      %v6248 = vpop.permute.xlu0 %6247
      %6249 = vrot.lane.b32.xlu0 %v5283, 24
      %v6250 = vpop.permute.xlu0 %6249
      %6251 = vrot.lane.b32.xlu0 %v5284, 24
      %v6252 = vpop.permute.xlu0 %6251
      %6253 = vrot.lane.b32.xlu0 %v5285, 24
      %v6254 = vpop.permute.xlu0 %6253
      %6255 = vrot.lane.b32.xlu0 %v5286, 24
      %v6256 = vpop.permute.xlu0 %6255
      %6257 = vrot.lane.b32.xlu0 %v5287, 24
      %v6258 = vpop.permute.xlu0 %6257
      %6259 = vrot.lane.b32.xlu0 %v5288, 24
      %v6260 = vpop.permute.xlu0 %6259
      %6261 = vrot.lane.b32.xlu0 %v5289, 24
      %v6262 = vpop.permute.xlu0 %6261
      %6263 = vrot.lane.b32.xlu0 %v5290, 24
      %v6264 = vpop.permute.xlu0 %6263
      %6265 = vrot.lane.b32.xlu0 %v5291, 24
      %v6266 = vpop.permute.xlu0 %6265
      %6267 = vrot.lane.b32.xlu0 %v5292, 24
      %v6268 = vpop.permute.xlu0 %6267
      %6269 = vrot.lane.b32.xlu0 %v5293, 24
      %v6270 = vpop.permute.xlu0 %6269
      %6271 = vrot.lane.b32.xlu0 %v5294, 24
      %v6272 = vpop.permute.xlu0 %6271
      %6273 = vrot.lane.b32.xlu0 %v5295, 24
      %v6274 = vpop.permute.xlu0 %6273
      %6275 = vrot.lane.b32.xlu0 %v5296, 24
      %v6276 = vpop.permute.xlu0 %6275
      %6277 = vrot.lane.b32.xlu0 %v5297, 24
      %v6278 = vpop.permute.xlu0 %6277
      %6279 = vrot.lane.b32.xlu0 %v5298, 24
      %v6280 = vpop.permute.xlu0 %6279
      %6281 = vrot.lane.b32.xlu0 %v5299, 24
      %v6282 = vpop.permute.xlu0 %6281
      %6283 = vrot.lane.b32.xlu0 %v5300, 24
      %v6284 = vpop.permute.xlu0 %6283
      %6285 = vrot.lane.b32.xlu0 %v5301, 24
      %v6286 = vpop.permute.xlu0 %6285
      %6287 = vrot.lane.b32.xlu0 %v5302, 24
      %v6288 = vpop.permute.xlu0 %6287
      %6289 = vrot.lane.b32.xlu0 %v5303, 24
      %v6290 = vpop.permute.xlu0 %6289
      %6291 = vrot.lane.b32.xlu0 %v5304, 24
      %v6292 = vpop.permute.xlu0 %6291
      %6293 = vrot.lane.b32.xlu0 %v5305, 24
      %v6294 = vpop.permute.xlu0 %6293
      %6295 = vrot.lane.b32.xlu0 %v5306, 24
      %v6296 = vpop.permute.xlu0 %6295
      %6297 = vrot.lane.b32.xlu0 %v5307, 24
      %v6298 = vpop.permute.xlu0 %6297
      %6299 = vrot.lane.b32.xlu0 %v5308, 24
      %v6300 = vpop.permute.xlu0 %6299
      %6301 = vrot.lane.b32.xlu0 %v5309, 24
      %v6302 = vpop.permute.xlu0 %6301
      %6303 = vrot.lane.b32.xlu0 %v5310, 24
      %v6304 = vpop.permute.xlu0 %6303
      %6305 = vrot.lane.b32.xlu0 %v5311, 24
      %v6306 = vpop.permute.xlu0 %6305
      %6307 = vrot.lane.b32.xlu0 %v5312, 24
      %v6308 = vpop.permute.xlu0 %6307
      %6309 = vrot.lane.b32.xlu0 %v5313, 24
      %v6310 = vpop.permute.xlu0 %6309
      %6311 = vrot.lane.b32.xlu0 %v5314, 24
      %v6312 = vpop.permute.xlu0 %6311
      %6313 = vrot.lane.b32.xlu0 %v5315, 24
      %v6314 = vpop.permute.xlu0 %6313
      %6315 = vrot.lane.b32.xlu0 %v5316, 24
      %v6316 = vpop.permute.xlu0 %6315
      %6317 = vrot.lane.b32.xlu0 %v5317, 24
      %v6318 = vpop.permute.xlu0 %6317
      %6319 = vrot.lane.b32.xlu0 %v5318, 24
      %v6320 = vpop.permute.xlu0 %6319
      %6321 = vrot.lane.b32.xlu0 %v5319, 24
      %v6322 = vpop.permute.xlu0 %6321
      %6323 = vrot.lane.b32.xlu0 %v5320, 24
      %v6324 = vpop.permute.xlu0 %6323
      %6325 = vrot.lane.b32.xlu0 %v5321, 24
      %v6326 = vpop.permute.xlu0 %6325
      %6327 = vrot.lane.b32.xlu0 %v5322, 24
      %v6328 = vpop.permute.xlu0 %6327
      %6329 = vrot.lane.b32.xlu0 %v5323, 24
      %v6330 = vpop.permute.xlu0 %6329
      %6331 = vrot.lane.b32.xlu0 %v5324, 24
      %v6332 = vpop.permute.xlu0 %6331
      %6333 = vrot.lane.b32.xlu0 %v5325, 24
      %v6334 = vpop.permute.xlu0 %6333
      %6335 = vrot.lane.b32.xlu0 %v5326, 24
      %v6336 = vpop.permute.xlu0 %6335
      %6337 = vrot.lane.b32.xlu0 %v5327, 24
      %v6338 = vpop.permute.xlu0 %6337
      %6339 = vrot.lane.b32.xlu0 %v5328, 24
      %v6340 = vpop.permute.xlu0 %6339
      %6341 = vrot.lane.b32.xlu0 %v5329, 24
      %v6342 = vpop.permute.xlu0 %6341
      %6343 = vrot.lane.b32.xlu0 %v5330, 24
      %v6344 = vpop.permute.xlu0 %6343
      %6345 = vrot.lane.b32.xlu0 %v5331, 24
      %v6346 = vpop.permute.xlu0 %6345
      %6347 = vrot.lane.b32.xlu0 %v5332, 24
      %v6348 = vpop.permute.xlu0 %6347
      %6349 = vrot.lane.b32.xlu0 %v5333, 24
      %v6350 = vpop.permute.xlu0 %6349
      %6351 = vrot.lane.b32.xlu0 %v5334, 24
      %v6352 = vpop.permute.xlu0 %6351
      %6353 = vrot.lane.b32.xlu0 %v5335, 24
      %v6354 = vpop.permute.xlu0 %6353
      %6355 = vrot.lane.b32.xlu0 %v5336, 24
      %v6356 = vpop.permute.xlu0 %6355
      %6357 = vrot.lane.b32.xlu0 %v5337, 24
      %v6358 = vpop.permute.xlu0 %6357
      %6359 = vrot.lane.b32.xlu0 %v5338, 24
      %v6360 = vpop.permute.xlu0 %6359
      %6361 = vrot.lane.b32.xlu0 %v5339, 24
      %v6362 = vpop.permute.xlu0 %6361
      %6363 = vrot.lane.b32.xlu0 %v5340, 24
      %v6364 = vpop.permute.xlu0 %6363
      %6365 = vrot.lane.b32.xlu0 %v5341, 24
      %v6366 = vpop.permute.xlu0 %6365
      %6495 = vrot.lane.b32.xlu0 %v5342, 32
      %v6496 = vpop.permute.xlu0 %6495
      %6497 = vrot.lane.b32.xlu0 %v5343, 32
      %v6498 = vpop.permute.xlu0 %6497
      %6499 = vrot.lane.b32.xlu0 %v5344, 32
      %v6500 = vpop.permute.xlu0 %6499
      %6501 = vrot.lane.b32.xlu0 %v5345, 32
      %v6502 = vpop.permute.xlu0 %6501
      %6503 = vrot.lane.b32.xlu0 %v5346, 32
      %v6504 = vpop.permute.xlu0 %6503
      %6505 = vrot.lane.b32.xlu0 %v5347, 32
      %v6506 = vpop.permute.xlu0 %6505
      %6507 = vrot.lane.b32.xlu0 %v5348, 32
      %v6508 = vpop.permute.xlu0 %6507
      %6509 = vrot.lane.b32.xlu0 %v5349, 32
      %v6510 = vpop.permute.xlu0 %6509
      %6511 = vrot.lane.b32.xlu0 %v5350, 32
      %v6512 = vpop.permute.xlu0 %6511
      %6513 = vrot.lane.b32.xlu0 %v5351, 32
      %v6514 = vpop.permute.xlu0 %6513
      %6515 = vrot.lane.b32.xlu0 %v5352, 32
      %v6516 = vpop.permute.xlu0 %6515
      %6517 = vrot.lane.b32.xlu0 %v5353, 32
      %v6518 = vpop.permute.xlu0 %6517
      %6519 = vrot.lane.b32.xlu0 %v5354, 32
      %v6520 = vpop.permute.xlu0 %6519
      %6521 = vrot.lane.b32.xlu0 %v5355, 32
      %v6522 = vpop.permute.xlu0 %6521
      %6523 = vrot.lane.b32.xlu0 %v5356, 32
      %v6524 = vpop.permute.xlu0 %6523
      %6525 = vrot.lane.b32.xlu0 %v5357, 32
      %v6526 = vpop.permute.xlu0 %6525
      %6527 = vrot.lane.b32.xlu0 %v5358, 32
      %v6528 = vpop.permute.xlu0 %6527
      %6529 = vrot.lane.b32.xlu0 %v5359, 32
      %v6530 = vpop.permute.xlu0 %6529
      %6531 = vrot.lane.b32.xlu0 %v5360, 32
      %v6532 = vpop.permute.xlu0 %6531
      %6533 = vrot.lane.b32.xlu0 %v5361, 32
      %v6534 = vpop.permute.xlu0 %6533
      %6535 = vrot.lane.b32.xlu0 %v5362, 32
      %v6536 = vpop.permute.xlu0 %6535
      %6537 = vrot.lane.b32.xlu0 %v5363, 32
      %v6538 = vpop.permute.xlu0 %6537
      %6539 = vrot.lane.b32.xlu0 %v5364, 32
      %v6540 = vpop.permute.xlu0 %6539
      %6541 = vrot.lane.b32.xlu0 %v5365, 32
      %v6542 = vpop.permute.xlu0 %6541
      %6543 = vrot.lane.b32.xlu0 %v5366, 32
      %v6544 = vpop.permute.xlu0 %6543
      %6545 = vrot.lane.b32.xlu0 %v5367, 32
      %v6546 = vpop.permute.xlu0 %6545
      %6547 = vrot.lane.b32.xlu0 %v5368, 32
      %v6548 = vpop.permute.xlu0 %6547
      %6549 = vrot.lane.b32.xlu0 %v5369, 32
      %v6550 = vpop.permute.xlu0 %6549
      %6551 = vrot.lane.b32.xlu0 %v5370, 32
      %v6552 = vpop.permute.xlu0 %6551
      %6553 = vrot.lane.b32.xlu0 %v5371, 32
      %v6554 = vpop.permute.xlu0 %6553
      %6555 = vrot.lane.b32.xlu0 %v5372, 32
      %v6556 = vpop.permute.xlu0 %6555
      %6557 = vrot.lane.b32.xlu0 %v5373, 32
      %v6558 = vpop.permute.xlu0 %6557
      %6559 = vrot.lane.b32.xlu0 %v5374, 32
      %v6560 = vpop.permute.xlu0 %6559
      %6561 = vrot.lane.b32.xlu0 %v5375, 32
      %v6562 = vpop.permute.xlu0 %6561
      %6563 = vrot.lane.b32.xlu0 %v5376, 32
      %v6564 = vpop.permute.xlu0 %6563
      %6565 = vrot.lane.b32.xlu0 %v5377, 32
      %v6566 = vpop.permute.xlu0 %6565
      %6567 = vrot.lane.b32.xlu0 %v5378, 32
      %v6568 = vpop.permute.xlu0 %6567
      %6569 = vrot.lane.b32.xlu0 %v5379, 32
      %v6570 = vpop.permute.xlu0 %6569
      %6571 = vrot.lane.b32.xlu0 %v5380, 32
      %v6572 = vpop.permute.xlu0 %6571
      %6573 = vrot.lane.b32.xlu0 %v5381, 32
      %v6574 = vpop.permute.xlu0 %6573
      %6575 = vrot.lane.b32.xlu0 %v5382, 32
      %v6576 = vpop.permute.xlu0 %6575
      %6577 = vrot.lane.b32.xlu0 %v5383, 32
      %v6578 = vpop.permute.xlu0 %6577
      %6579 = vrot.lane.b32.xlu0 %v5384, 32
      %v6580 = vpop.permute.xlu0 %6579
      %6581 = vrot.lane.b32.xlu0 %v5385, 32
      %v6582 = vpop.permute.xlu0 %6581
      %6583 = vrot.lane.b32.xlu0 %v5386, 32
      %v6584 = vpop.permute.xlu0 %6583
      %6585 = vrot.lane.b32.xlu0 %v5387, 32
      %v6586 = vpop.permute.xlu0 %6585
      %6587 = vrot.lane.b32.xlu0 %v5388, 32
      %v6588 = vpop.permute.xlu0 %6587
      %6589 = vrot.lane.b32.xlu0 %v5389, 32
      %v6590 = vpop.permute.xlu0 %6589
      %6591 = vrot.lane.b32.xlu0 %v5390, 32
      %v6592 = vpop.permute.xlu0 %6591
      %6593 = vrot.lane.b32.xlu0 %v5391, 32
      %v6594 = vpop.permute.xlu0 %6593
      %6595 = vrot.lane.b32.xlu0 %v5392, 32
      %v6596 = vpop.permute.xlu0 %6595
      %6597 = vrot.lane.b32.xlu0 %v5393, 32
      %v6598 = vpop.permute.xlu0 %6597
      %6599 = vrot.lane.b32.xlu0 %v5394, 32
      %v6600 = vpop.permute.xlu0 %6599
      %6601 = vrot.lane.b32.xlu0 %v5395, 32
      %v6602 = vpop.permute.xlu0 %6601
      %6603 = vrot.lane.b32.xlu0 %v5396, 32
      %v6604 = vpop.permute.xlu0 %6603
      %6605 = vrot.lane.b32.xlu0 %v5397, 32
      %v6606 = vpop.permute.xlu0 %6605
      %6607 = vrot.lane.b32.xlu0 %v5398, 32
      %v6608 = vpop.permute.xlu0 %6607
      %6609 = vrot.lane.b32.xlu0 %v5399, 32
      %v6610 = vpop.permute.xlu0 %6609
      %6611 = vrot.lane.b32.xlu0 %v5400, 32
      %v6612 = vpop.permute.xlu0 %6611
      %6613 = vrot.lane.b32.xlu0 %v5401, 32
      %v6614 = vpop.permute.xlu0 %6613
      %6615 = vrot.lane.b32.xlu0 %v5402, 32
      %v6616 = vpop.permute.xlu0 %6615
      %6617 = vrot.lane.b32.xlu0 %v5403, 32
      %v6618 = vpop.permute.xlu0 %6617
      %6619 = vrot.lane.b32.xlu0 %v5404, 32
      %v6620 = vpop.permute.xlu0 %6619
      %6621 = vrot.lane.b32.xlu0 %v5405, 32
      %v6622 = vpop.permute.xlu0 %6621
      %6751 = vrot.lane.b32.xlu0 %v5406, 40
      %v6752 = vpop.permute.xlu0 %6751
      %6753 = vrot.lane.b32.xlu0 %v5407, 40
      %v6754 = vpop.permute.xlu0 %6753
      %6755 = vrot.lane.b32.xlu0 %v5408, 40
      %v6756 = vpop.permute.xlu0 %6755
      %6757 = vrot.lane.b32.xlu0 %v5409, 40
      %v6758 = vpop.permute.xlu0 %6757
      %6759 = vrot.lane.b32.xlu0 %v5410, 40
      %v6760 = vpop.permute.xlu0 %6759
      %6761 = vrot.lane.b32.xlu0 %v5411, 40
      %v6762 = vpop.permute.xlu0 %6761
      %6763 = vrot.lane.b32.xlu0 %v5412, 40
      %v6764 = vpop.permute.xlu0 %6763
      %6765 = vrot.lane.b32.xlu0 %v5413, 40
      %v6766 = vpop.permute.xlu0 %6765
      %6767 = vrot.lane.b32.xlu0 %v5414, 40
      %v6768 = vpop.permute.xlu0 %6767
      %6769 = vrot.lane.b32.xlu0 %v5415, 40
      %v6770 = vpop.permute.xlu0 %6769
      %6771 = vrot.lane.b32.xlu0 %v5416, 40
      %v6772 = vpop.permute.xlu0 %6771
      %6773 = vrot.lane.b32.xlu0 %v5417, 40
      %v6774 = vpop.permute.xlu0 %6773
      %6775 = vrot.lane.b32.xlu0 %v5418, 40
      %v6776 = vpop.permute.xlu0 %6775
      %6777 = vrot.lane.b32.xlu0 %v5419, 40
      %v6778 = vpop.permute.xlu0 %6777
      %6779 = vrot.lane.b32.xlu0 %v5420, 40
      %v6780 = vpop.permute.xlu0 %6779
      %6781 = vrot.lane.b32.xlu0 %v5421, 40
      %v6782 = vpop.permute.xlu0 %6781
      %6783 = vrot.lane.b32.xlu0 %v5422, 40
      %v6784 = vpop.permute.xlu0 %6783
      %6785 = vrot.lane.b32.xlu0 %v5423, 40
      %v6786 = vpop.permute.xlu0 %6785
      %6787 = vrot.lane.b32.xlu0 %v5424, 40
      %v6788 = vpop.permute.xlu0 %6787
      %6789 = vrot.lane.b32.xlu0 %v5425, 40
      %v6790 = vpop.permute.xlu0 %6789
      %6791 = vrot.lane.b32.xlu0 %v5426, 40
      %v6792 = vpop.permute.xlu0 %6791
      %6793 = vrot.lane.b32.xlu0 %v5427, 40
      %v6794 = vpop.permute.xlu0 %6793
      %6795 = vrot.lane.b32.xlu0 %v5428, 40
      %v6796 = vpop.permute.xlu0 %6795
      %6797 = vrot.lane.b32.xlu0 %v5429, 40
      %v6798 = vpop.permute.xlu0 %6797
      %6799 = vrot.lane.b32.xlu0 %v5430, 40
      %v6800 = vpop.permute.xlu0 %6799
      %6801 = vrot.lane.b32.xlu0 %v5431, 40
      %v6802 = vpop.permute.xlu0 %6801
      %6803 = vrot.lane.b32.xlu0 %v5432, 40
      %v6804 = vpop.permute.xlu0 %6803
      %6805 = vrot.lane.b32.xlu0 %v5433, 40
      %v6806 = vpop.permute.xlu0 %6805
      %6807 = vrot.lane.b32.xlu0 %v5434, 40
      %v6808 = vpop.permute.xlu0 %6807
      %6809 = vrot.lane.b32.xlu0 %v5435, 40
      %v6810 = vpop.permute.xlu0 %6809
      %6811 = vrot.lane.b32.xlu0 %v5436, 40
      %v6812 = vpop.permute.xlu0 %6811
      %6813 = vrot.lane.b32.xlu0 %v5437, 40
      %v6814 = vpop.permute.xlu0 %6813
      %6815 = vrot.lane.b32.xlu0 %v5438, 40
      %v6816 = vpop.permute.xlu0 %6815
      %6817 = vrot.lane.b32.xlu0 %v5439, 40
      %v6818 = vpop.permute.xlu0 %6817
      %6819 = vrot.lane.b32.xlu0 %v5440, 40
      %v6820 = vpop.permute.xlu0 %6819
      %6821 = vrot.lane.b32.xlu0 %v5441, 40
      %v6822 = vpop.permute.xlu0 %6821
      %6823 = vrot.lane.b32.xlu0 %v5442, 40
      %v6824 = vpop.permute.xlu0 %6823
      %6825 = vrot.lane.b32.xlu0 %v5443, 40
      %v6826 = vpop.permute.xlu0 %6825
      %6827 = vrot.lane.b32.xlu0 %v5444, 40
      %v6828 = vpop.permute.xlu0 %6827
      %6829 = vrot.lane.b32.xlu0 %v5445, 40
      %v6830 = vpop.permute.xlu0 %6829
      %6831 = vrot.lane.b32.xlu0 %v5446, 40
      %v6832 = vpop.permute.xlu0 %6831
      %6833 = vrot.lane.b32.xlu0 %v5447, 40
      %v6834 = vpop.permute.xlu0 %6833
      %6835 = vrot.lane.b32.xlu0 %v5448, 40
      %v6836 = vpop.permute.xlu0 %6835
      %6837 = vrot.lane.b32.xlu0 %v5449, 40
      %v6838 = vpop.permute.xlu0 %6837
      %6839 = vrot.lane.b32.xlu0 %v5450, 40
      %v6840 = vpop.permute.xlu0 %6839
      %6841 = vrot.lane.b32.xlu0 %v5451, 40
      %v6842 = vpop.permute.xlu0 %6841
      %6843 = vrot.lane.b32.xlu0 %v5452, 40
      %v6844 = vpop.permute.xlu0 %6843
      %6845 = vrot.lane.b32.xlu0 %v5453, 40
      %v6846 = vpop.permute.xlu0 %6845
      %6847 = vrot.lane.b32.xlu0 %v5454, 40
      %v6848 = vpop.permute.xlu0 %6847
      %6849 = vrot.lane.b32.xlu0 %v5455, 40
      %v6850 = vpop.permute.xlu0 %6849
      %6851 = vrot.lane.b32.xlu0 %v5456, 40
      %v6852 = vpop.permute.xlu0 %6851
      %6853 = vrot.lane.b32.xlu0 %v5457, 40
      %v6854 = vpop.permute.xlu0 %6853
      %6855 = vrot.lane.b32.xlu0 %v5458, 40
      %v6856 = vpop.permute.xlu0 %6855
      %6857 = vrot.lane.b32.xlu0 %v5459, 40
      %v6858 = vpop.permute.xlu0 %6857
      %6859 = vrot.lane.b32.xlu0 %v5460, 40
      %v6860 = vpop.permute.xlu0 %6859
      %6861 = vrot.lane.b32.xlu0 %v5461, 40
      %v6862 = vpop.permute.xlu0 %6861
      %6863 = vrot.lane.b32.xlu0 %v5462, 40
      %v6864 = vpop.permute.xlu0 %6863
      %6865 = vrot.lane.b32.xlu0 %v5463, 40
      %v6866 = vpop.permute.xlu0 %6865
      %6867 = vrot.lane.b32.xlu0 %v5464, 40
      %v6868 = vpop.permute.xlu0 %6867
      %6869 = vrot.lane.b32.xlu0 %v5465, 40
      %v6870 = vpop.permute.xlu0 %6869
      %6871 = vrot.lane.b32.xlu0 %v5466, 40
      %v6872 = vpop.permute.xlu0 %6871
      %6873 = vrot.lane.b32.xlu0 %v5467, 40
      %v6874 = vpop.permute.xlu0 %6873
      %6875 = vrot.lane.b32.xlu0 %v5468, 40
      %v6876 = vpop.permute.xlu0 %6875
      %6877 = vrot.lane.b32.xlu0 %v5469, 40
      %v6878 = vpop.permute.xlu0 %6877
      %7007 = vrot.lane.b32.xlu0 %v5471, 48
      %v7008 = vpop.permute.xlu0 %7007
      %7009 = vrot.lane.b32.xlu0 %v5472, 48
      %v7010 = vpop.permute.xlu0 %7009
      %7011 = vrot.lane.b32.xlu0 %v5473, 48
      %v7012 = vpop.permute.xlu0 %7011
      %7013 = vrot.lane.b32.xlu0 %v5474, 48
      %v7014 = vpop.permute.xlu0 %7013
      %7015 = vrot.lane.b32.xlu0 %v5475, 48
      %v7016 = vpop.permute.xlu0 %7015
      %7017 = vrot.lane.b32.xlu0 %v5476, 48
      %v7018 = vpop.permute.xlu0 %7017
      %7019 = vrot.lane.b32.xlu0 %v5477, 48
      %v7020 = vpop.permute.xlu0 %7019
      %7021 = vrot.lane.b32.xlu0 %v5478, 48
      %v7022 = vpop.permute.xlu0 %7021
      %7023 = vrot.lane.b32.xlu0 %v5479, 48
      %v7024 = vpop.permute.xlu0 %7023
      %7025 = vrot.lane.b32.xlu0 %v5480, 48
      %v7026 = vpop.permute.xlu0 %7025
      %7027 = vrot.lane.b32.xlu0 %v5481, 48
      %v7028 = vpop.permute.xlu0 %7027
      %7029 = vrot.lane.b32.xlu0 %v5482, 48
      %v7030 = vpop.permute.xlu0 %7029
      %7031 = vrot.lane.b32.xlu0 %v5483, 48
      %v7032 = vpop.permute.xlu0 %7031
      %7033 = vrot.lane.b32.xlu0 %v5484, 48
      %v7034 = vpop.permute.xlu0 %7033
      %7035 = vrot.lane.b32.xlu0 %v5485, 48
      %v7036 = vpop.permute.xlu0 %7035
      %7037 = vrot.lane.b32.xlu0 %v5486, 48
      %v7038 = vpop.permute.xlu0 %7037
      %7039 = vrot.lane.b32.xlu0 %v5487, 48
      %v7040 = vpop.permute.xlu0 %7039
      %7041 = vrot.lane.b32.xlu0 %v5488, 48
      %v7042 = vpop.permute.xlu0 %7041
      %7043 = vrot.lane.b32.xlu0 %v5489, 48
      %v7044 = vpop.permute.xlu0 %7043
      %7045 = vrot.lane.b32.xlu0 %v5490, 48
      %v7046 = vpop.permute.xlu0 %7045
      %7047 = vrot.lane.b32.xlu0 %v5491, 48
      %v7048 = vpop.permute.xlu0 %7047
      %7049 = vrot.lane.b32.xlu0 %v5492, 48
      %v7050 = vpop.permute.xlu0 %7049
      %7051 = vrot.lane.b32.xlu0 %v5493, 48
      %v7052 = vpop.permute.xlu0 %7051
      %7053 = vrot.lane.b32.xlu0 %v5494, 48
      %v7054 = vpop.permute.xlu0 %7053
      %7055 = vrot.lane.b32.xlu0 %v5495, 48
      %v7056 = vpop.permute.xlu0 %7055
      %7057 = vrot.lane.b32.xlu0 %v5496, 48
      %v7058 = vpop.permute.xlu0 %7057
      %7059 = vrot.lane.b32.xlu0 %v5497, 48
      %v7060 = vpop.permute.xlu0 %7059
      %7061 = vrot.lane.b32.xlu0 %v5498, 48
      %v7062 = vpop.permute.xlu0 %7061
      %7063 = vrot.lane.b32.xlu0 %v5499, 48
      %v7064 = vpop.permute.xlu0 %7063
      %7065 = vrot.lane.b32.xlu0 %v5500, 48
      %v7066 = vpop.permute.xlu0 %7065
      %7067 = vrot.lane.b32.xlu0 %v5501, 48
      %v7068 = vpop.permute.xlu0 %7067
      %7069 = vrot.lane.b32.xlu0 %v5502, 48
      %v7070 = vpop.permute.xlu0 %7069
      %7071 = vrot.lane.b32.xlu0 %v5503, 48
      %v7072 = vpop.permute.xlu0 %7071
      %7073 = vrot.lane.b32.xlu0 %v5504, 48
      %v7074 = vpop.permute.xlu0 %7073
      %7075 = vrot.lane.b32.xlu0 %v5505, 48
      %v7076 = vpop.permute.xlu0 %7075
      %7077 = vrot.lane.b32.xlu0 %v5506, 48
      %v7078 = vpop.permute.xlu0 %7077
      %7079 = vrot.lane.b32.xlu0 %v5507, 48
      %v7080 = vpop.permute.xlu0 %7079
      %7081 = vrot.lane.b32.xlu0 %v5508, 48
      %v7082 = vpop.permute.xlu0 %7081
      %7083 = vrot.lane.b32.xlu0 %v5509, 48
      %v7084 = vpop.permute.xlu0 %7083
      %7085 = vrot.lane.b32.xlu0 %v5510, 48
      %v7086 = vpop.permute.xlu0 %7085
      %7087 = vrot.lane.b32.xlu0 %v5511, 48
      %v7088 = vpop.permute.xlu0 %7087
      %7089 = vrot.lane.b32.xlu0 %v5512, 48
      %v7090 = vpop.permute.xlu0 %7089
      %7091 = vrot.lane.b32.xlu0 %v5513, 48
      %v7092 = vpop.permute.xlu0 %7091
      %7093 = vrot.lane.b32.xlu0 %v5514, 48
      %v7094 = vpop.permute.xlu0 %7093
      %7095 = vrot.lane.b32.xlu0 %v5515, 48
      %v7096 = vpop.permute.xlu0 %7095
      %7097 = vrot.lane.b32.xlu0 %v5516, 48
      %v7098 = vpop.permute.xlu0 %7097
      %7099 = vrot.lane.b32.xlu0 %v5517, 48
      %v7100 = vpop.permute.xlu0 %7099
      %7101 = vrot.lane.b32.xlu0 %v5518, 48
      %v7102 = vpop.permute.xlu0 %7101
      %7103 = vrot.lane.b32.xlu0 %v5519, 48
      %v7104 = vpop.permute.xlu0 %7103
      %7105 = vrot.lane.b32.xlu0 %v5520, 48
      %v7106 = vpop.permute.xlu0 %7105
      %7107 = vrot.lane.b32.xlu0 %v5521, 48
      %v7108 = vpop.permute.xlu0 %7107
      %7109 = vrot.lane.b32.xlu0 %v5522, 48
      %v7110 = vpop.permute.xlu0 %7109
      %7111 = vrot.lane.b32.xlu0 %v5523, 48
      %v7112 = vpop.permute.xlu0 %7111
      %7113 = vrot.lane.b32.xlu0 %v5524, 48
      %v7114 = vpop.permute.xlu0 %7113
      %7115 = vrot.lane.b32.xlu0 %v5525, 48
      %v7116 = vpop.permute.xlu0 %7115
      %7117 = vrot.lane.b32.xlu0 %v5526, 48
      %v7118 = vpop.permute.xlu0 %7117
      %7119 = vrot.lane.b32.xlu0 %v5527, 48
      %v7120 = vpop.permute.xlu0 %7119
      %7121 = vrot.lane.b32.xlu0 %v5528, 48
      %v7122 = vpop.permute.xlu0 %7121
      %7123 = vrot.lane.b32.xlu0 %v5529, 48
      %v7124 = vpop.permute.xlu0 %7123
      %7125 = vrot.lane.b32.xlu0 %v5530, 48
      %v7126 = vpop.permute.xlu0 %7125
      %7127 = vrot.lane.b32.xlu0 %v5531, 48
      %v7128 = vpop.permute.xlu0 %7127
      %7129 = vrot.lane.b32.xlu0 %v5532, 48
      %v7130 = vpop.permute.xlu0 %7129
      %7131 = vrot.lane.b32.xlu0 %v5533, 48
      %v7132 = vpop.permute.xlu0 %7131
      %7133 = vrot.lane.b32.xlu0 %v5534, 48
      %v7134 = vpop.permute.xlu0 %7133
      %7263 = vrot.lane.b32.xlu0 %v5535, 56
      %v7264 = vpop.permute.xlu0 %7263
      %7265 = vrot.lane.b32.xlu0 %v5536, 56
      %v7266 = vpop.permute.xlu0 %7265
      %7267 = vrot.lane.b32.xlu0 %v5537, 56
      %v7268 = vpop.permute.xlu0 %7267
      %7269 = vrot.lane.b32.xlu0 %v5538, 56
      %v7270 = vpop.permute.xlu0 %7269
      %7271 = vrot.lane.b32.xlu0 %v5539, 56
      %v7272 = vpop.permute.xlu0 %7271
      %7273 = vrot.lane.b32.xlu0 %v5540, 56
      %v7274 = vpop.permute.xlu0 %7273
      %7275 = vrot.lane.b32.xlu0 %v5541, 56
      %v7276 = vpop.permute.xlu0 %7275
      %7277 = vrot.lane.b32.xlu0 %v5542, 56
      %v7278 = vpop.permute.xlu0 %7277
      %7279 = vrot.lane.b32.xlu0 %v5543, 56
      %v7280 = vpop.permute.xlu0 %7279
      %7281 = vrot.lane.b32.xlu0 %v5544, 56
      %v7282 = vpop.permute.xlu0 %7281
      %7283 = vrot.lane.b32.xlu0 %v5545, 56
      %v7284 = vpop.permute.xlu0 %7283
      %7285 = vrot.lane.b32.xlu0 %v5546, 56
      %v7286 = vpop.permute.xlu0 %7285
      %7287 = vrot.lane.b32.xlu0 %v5547, 56
      %v7288 = vpop.permute.xlu0 %7287
      %7289 = vrot.lane.b32.xlu0 %v5548, 56
      %v7290 = vpop.permute.xlu0 %7289
      %7291 = vrot.lane.b32.xlu0 %v5549, 56
      %v7292 = vpop.permute.xlu0 %7291
      %7293 = vrot.lane.b32.xlu0 %v5550, 56
      %v7294 = vpop.permute.xlu0 %7293
      %7295 = vrot.lane.b32.xlu0 %v5551, 56
      %v7296 = vpop.permute.xlu0 %7295
      %7297 = vrot.lane.b32.xlu0 %v5552, 56
      %v7298 = vpop.permute.xlu0 %7297
      %7299 = vrot.lane.b32.xlu0 %v5553, 56
      %v7300 = vpop.permute.xlu0 %7299
      %7301 = vrot.lane.b32.xlu0 %v5554, 56
      %v7302 = vpop.permute.xlu0 %7301
      %7303 = vrot.lane.b32.xlu0 %v5555, 56
      %v7304 = vpop.permute.xlu0 %7303
      %7305 = vrot.lane.b32.xlu0 %v5556, 56
      %v7306 = vpop.permute.xlu0 %7305
      %7307 = vrot.lane.b32.xlu0 %v5557, 56
      %v7308 = vpop.permute.xlu0 %7307
      %7309 = vrot.lane.b32.xlu0 %v5558, 56
      %v7310 = vpop.permute.xlu0 %7309
      %7311 = vrot.lane.b32.xlu0 %v5559, 56
      %v7312 = vpop.permute.xlu0 %7311
      %7313 = vrot.lane.b32.xlu0 %v5560, 56
      %v7314 = vpop.permute.xlu0 %7313
      %7315 = vrot.lane.b32.xlu0 %v5561, 56
      %v7316 = vpop.permute.xlu0 %7315
      %7317 = vrot.lane.b32.xlu0 %v5562, 56
      %v7318 = vpop.permute.xlu0 %7317
      %7319 = vrot.lane.b32.xlu0 %v5563, 56
      %v7320 = vpop.permute.xlu0 %7319
      %7321 = vrot.lane.b32.xlu0 %v5564, 56
      %v7322 = vpop.permute.xlu0 %7321
      %7323 = vrot.lane.b32.xlu0 %v5565, 56
      %v7324 = vpop.permute.xlu0 %7323
      %7325 = vrot.lane.b32.xlu0 %v5566, 56
      %v7326 = vpop.permute.xlu0 %7325
      %7327 = vrot.lane.b32.xlu0 %v5567, 56
      %v7328 = vpop.permute.xlu0 %7327
      %7329 = vrot.lane.b32.xlu0 %v5568, 56
      %v7330 = vpop.permute.xlu0 %7329
      %7331 = vrot.lane.b32.xlu0 %v5569, 56
      %v7332 = vpop.permute.xlu0 %7331
      %7333 = vrot.lane.b32.xlu0 %v5570, 56
      %v7334 = vpop.permute.xlu0 %7333
      %7335 = vrot.lane.b32.xlu0 %v5571, 56
      %v7336 = vpop.permute.xlu0 %7335
      %7337 = vrot.lane.b32.xlu0 %v5572, 56
      %v7338 = vpop.permute.xlu0 %7337
      %7339 = vrot.lane.b32.xlu0 %v5573, 56
      %v7340 = vpop.permute.xlu0 %7339
      %7341 = vrot.lane.b32.xlu0 %v5574, 56
      %v7342 = vpop.permute.xlu0 %7341
      %7343 = vrot.lane.b32.xlu0 %v5575, 56
      %v7344 = vpop.permute.xlu0 %7343
      %7345 = vrot.lane.b32.xlu0 %v5576, 56
      %v7346 = vpop.permute.xlu0 %7345
      %7347 = vrot.lane.b32.xlu0 %v5577, 56
      %v7348 = vpop.permute.xlu0 %7347
      %7349 = vrot.lane.b32.xlu0 %v5578, 56
      %v7350 = vpop.permute.xlu0 %7349
      %7351 = vrot.lane.b32.xlu0 %v5579, 56
      %v7352 = vpop.permute.xlu0 %7351
      %7353 = vrot.lane.b32.xlu0 %v5580, 56
      %v7354 = vpop.permute.xlu0 %7353
      %7355 = vrot.lane.b32.xlu0 %v5581, 56
      %v7356 = vpop.permute.xlu0 %7355
      %7357 = vrot.lane.b32.xlu0 %v5582, 56
      %v7358 = vpop.permute.xlu0 %7357
      %7359 = vrot.lane.b32.xlu0 %v5583, 56
      %v7360 = vpop.permute.xlu0 %7359
      %7361 = vrot.lane.b32.xlu0 %v5584, 56
      %v7362 = vpop.permute.xlu0 %7361
      %7363 = vrot.lane.b32.xlu0 %v5585, 56
      %v7364 = vpop.permute.xlu0 %7363
      %7365 = vrot.lane.b32.xlu0 %v5586, 56
      %v7366 = vpop.permute.xlu0 %7365
      %7367 = vrot.lane.b32.xlu0 %v5587, 56
      %v7368 = vpop.permute.xlu0 %7367
      %7369 = vrot.lane.b32.xlu0 %v5588, 56
      %v7370 = vpop.permute.xlu0 %7369
      %7371 = vrot.lane.b32.xlu0 %v5589, 56
      %v7372 = vpop.permute.xlu0 %7371
      %7373 = vrot.lane.b32.xlu0 %v5590, 56
      %v7374 = vpop.permute.xlu0 %7373
      %7375 = vrot.lane.b32.xlu0 %v5591, 56
      %v7376 = vpop.permute.xlu0 %7375
      %7377 = vrot.lane.b32.xlu0 %v5592, 56
      %v7378 = vpop.permute.xlu0 %7377
      %7379 = vrot.lane.b32.xlu0 %v5593, 56
      %v7380 = vpop.permute.xlu0 %7379
      %7381 = vrot.lane.b32.xlu0 %v5594, 56
      %v7382 = vpop.permute.xlu0 %7381
      %7383 = vrot.lane.b32.xlu0 %v5595, 56
      %v7384 = vpop.permute.xlu0 %7383
      %7385 = vrot.lane.b32.xlu0 %v5596, 56
      %v7386 = vpop.permute.xlu0 %7385
      %7387 = vrot.lane.b32.xlu0 %v5597, 56
      %v7388 = vpop.permute.xlu0 %7387
      %7389 = vrot.lane.b32.xlu0 %v5598, 56
      %v7390 = vpop.permute.xlu0 %7389
      %7519 = vrot.lane.b32.xlu0 %v5599, 64
      %v7520 = vpop.permute.xlu0 %7519
      %7521 = vrot.lane.b32.xlu0 %v5600, 64
      %v7522 = vpop.permute.xlu0 %7521
      %7523 = vrot.lane.b32.xlu0 %v5601, 64
      %v7524 = vpop.permute.xlu0 %7523
      %7525 = vrot.lane.b32.xlu0 %v5602, 64
      %v7526 = vpop.permute.xlu0 %7525
      %7527 = vrot.lane.b32.xlu0 %v5603, 64
      %v7528 = vpop.permute.xlu0 %7527
      %7529 = vrot.lane.b32.xlu0 %v5604, 64
      %v7530 = vpop.permute.xlu0 %7529
      %7531 = vrot.lane.b32.xlu0 %v5605, 64
      %v7532 = vpop.permute.xlu0 %7531
      %7533 = vrot.lane.b32.xlu0 %v5606, 64
      %v7534 = vpop.permute.xlu0 %7533
      %7535 = vrot.lane.b32.xlu0 %v5607, 64
      %v7536 = vpop.permute.xlu0 %7535
      %7537 = vrot.lane.b32.xlu0 %v5608, 64
      %v7538 = vpop.permute.xlu0 %7537
      %7539 = vrot.lane.b32.xlu0 %v5609, 64
      %v7540 = vpop.permute.xlu0 %7539
      %7541 = vrot.lane.b32.xlu0 %v5610, 64
      %v7542 = vpop.permute.xlu0 %7541
      %7543 = vrot.lane.b32.xlu0 %v5611, 64
      %v7544 = vpop.permute.xlu0 %7543
      %7545 = vrot.lane.b32.xlu0 %v5612, 64
      %v7546 = vpop.permute.xlu0 %7545
      %7547 = vrot.lane.b32.xlu0 %v5613, 64
      %v7548 = vpop.permute.xlu0 %7547
      %7549 = vrot.lane.b32.xlu0 %v5614, 64
      %v7550 = vpop.permute.xlu0 %7549
      %7551 = vrot.lane.b32.xlu0 %v5615, 64
      %v7552 = vpop.permute.xlu0 %7551
      %7553 = vrot.lane.b32.xlu0 %v5616, 64
      %v7554 = vpop.permute.xlu0 %7553
      %7555 = vrot.lane.b32.xlu0 %v5617, 64
      %v7556 = vpop.permute.xlu0 %7555
      %7557 = vrot.lane.b32.xlu0 %v5618, 64
      %v7558 = vpop.permute.xlu0 %7557
      %7559 = vrot.lane.b32.xlu0 %v5619, 64
      %v7560 = vpop.permute.xlu0 %7559
      %7561 = vrot.lane.b32.xlu0 %v5620, 64
      %v7562 = vpop.permute.xlu0 %7561
      %7563 = vrot.lane.b32.xlu0 %v5621, 64
      %v7564 = vpop.permute.xlu0 %7563
      %7565 = vrot.lane.b32.xlu0 %v5622, 64
      %v7566 = vpop.permute.xlu0 %7565
      %7567 = vrot.lane.b32.xlu0 %v5623, 64
      %v7568 = vpop.permute.xlu0 %7567
      %7569 = vrot.lane.b32.xlu0 %v5624, 64
      %v7570 = vpop.permute.xlu0 %7569
      %7571 = vrot.lane.b32.xlu0 %v5625, 64
      %v7572 = vpop.permute.xlu0 %7571
      %7573 = vrot.lane.b32.xlu0 %v5626, 64
      %v7574 = vpop.permute.xlu0 %7573
      %7575 = vrot.lane.b32.xlu0 %v5627, 64
      %v7576 = vpop.permute.xlu0 %7575
      %7577 = vrot.lane.b32.xlu0 %v5628, 64
      %v7578 = vpop.permute.xlu0 %7577
      %7579 = vrot.lane.b32.xlu0 %v5629, 64
      %v7580 = vpop.permute.xlu0 %7579
      %7581 = vrot.lane.b32.xlu0 %v5630, 64
      %v7582 = vpop.permute.xlu0 %7581
      %7583 = vrot.lane.b32.xlu0 %v5631, 64
      %v7584 = vpop.permute.xlu0 %7583
      %7585 = vrot.lane.b32.xlu0 %v5632, 64
      %v7586 = vpop.permute.xlu0 %7585
      %7587 = vrot.lane.b32.xlu0 %v5633, 64
      %v7588 = vpop.permute.xlu0 %7587
      %7589 = vrot.lane.b32.xlu0 %v5634, 64
      %v7590 = vpop.permute.xlu0 %7589
      %7591 = vrot.lane.b32.xlu0 %v5635, 64
      %v7592 = vpop.permute.xlu0 %7591
      %7593 = vrot.lane.b32.xlu0 %v5636, 64
      %v7594 = vpop.permute.xlu0 %7593
      %7595 = vrot.lane.b32.xlu0 %v5637, 64
      %v7596 = vpop.permute.xlu0 %7595
      %7597 = vrot.lane.b32.xlu0 %v5638, 64
      %v7598 = vpop.permute.xlu0 %7597
      %7599 = vrot.lane.b32.xlu0 %v5639, 64
      %v7600 = vpop.permute.xlu0 %7599
      %7601 = vrot.lane.b32.xlu0 %v5640, 64
      %v7602 = vpop.permute.xlu0 %7601
      %7603 = vrot.lane.b32.xlu0 %v5641, 64
      %v7604 = vpop.permute.xlu0 %7603
      %7605 = vrot.lane.b32.xlu0 %v5642, 64
      %v7606 = vpop.permute.xlu0 %7605
      %7607 = vrot.lane.b32.xlu0 %v5643, 64
      %v7608 = vpop.permute.xlu0 %7607
      %7609 = vrot.lane.b32.xlu0 %v5644, 64
      %v7610 = vpop.permute.xlu0 %7609
      %7611 = vrot.lane.b32.xlu0 %v5645, 64
      %v7612 = vpop.permute.xlu0 %7611
      %7613 = vrot.lane.b32.xlu0 %v5646, 64
      %v7614 = vpop.permute.xlu0 %7613
      %7615 = vrot.lane.b32.xlu0 %v5647, 64
      %v7616 = vpop.permute.xlu0 %7615
      %7617 = vrot.lane.b32.xlu0 %v5648, 64
      %v7618 = vpop.permute.xlu0 %7617
      %7619 = vrot.lane.b32.xlu0 %v5649, 64
      %v7620 = vpop.permute.xlu0 %7619
      %7621 = vrot.lane.b32.xlu0 %v5650, 64
      %v7622 = vpop.permute.xlu0 %7621
      %7623 = vrot.lane.b32.xlu0 %v5651, 64
      %v7624 = vpop.permute.xlu0 %7623
      %7625 = vrot.lane.b32.xlu0 %v5652, 64
      %v7626 = vpop.permute.xlu0 %7625
      %7627 = vrot.lane.b32.xlu0 %v5653, 64
      %v7628 = vpop.permute.xlu0 %7627
      %7629 = vrot.lane.b32.xlu0 %v5654, 64
      %v7630 = vpop.permute.xlu0 %7629
      %7631 = vrot.lane.b32.xlu0 %v5655, 64
      %v7632 = vpop.permute.xlu0 %7631
      %7633 = vrot.lane.b32.xlu0 %v5656, 64
      %v7634 = vpop.permute.xlu0 %7633
      %7635 = vrot.lane.b32.xlu0 %v5657, 64
      %v7636 = vpop.permute.xlu0 %7635
      %7637 = vrot.lane.b32.xlu0 %v5658, 64
      %v7638 = vpop.permute.xlu0 %7637
      %7639 = vrot.lane.b32.xlu0 %v5659, 64
      %v7640 = vpop.permute.xlu0 %7639
      %7641 = vrot.lane.b32.xlu0 %v5660, 64
      %v7642 = vpop.permute.xlu0 %7641
      %7643 = vrot.lane.b32.xlu0 %v5661, 64
      %v7644 = vpop.permute.xlu0 %7643
      %7645 = vrot.lane.b32.xlu0 %v5662, 64
      %v7646 = vpop.permute.xlu0 %7645
      %v7711 = vsel %vm4309, %v5086, %v5728
      %v7712 = vsel %vm4309, %v5087, %v5730
      %v7713 = vsel %vm4309, %v5088, %v5732
      %v7714 = vsel %vm4309, %v5089, %v5734
      %v7715 = vsel %vm4309, %v5090, %v5736
      %v7716 = vsel %vm4309, %v5091, %v5738
      %v7717 = vsel %vm4309, %v5092, %v5740
      %v7718 = vsel %vm4309, %v5093, %v5742
      %v7719 = vsel %vm4309, %v5094, %v5744
      %v7720 = vsel %vm4309, %v5095, %v5746
      %v7721 = vsel %vm4309, %v5096, %v5748
      %v7722 = vsel %vm4309, %v5097, %v5750
      %v7723 = vsel %vm4309, %v5098, %v5752
      %v7724 = vsel %vm4309, %v5099, %v5754
      %v7725 = vsel %vm4309, %v5100, %v5756
      %v7726 = vsel %vm4309, %v5101, %v5758
      %v7727 = vsel %vm4309, %v5102, %v5760
      %v7728 = vsel %vm4309, %v5103, %v5762
      %v7729 = vsel %vm4309, %v5104, %v5764
      %v7730 = vsel %vm4309, %v5105, %v5766
      %v7731 = vsel %vm4309, %v5106, %v5768
      %v7732 = vsel %vm4309, %v5107, %v5770
      %v7733 = vsel %vm4309, %v5108, %v5772
      %v7734 = vsel %vm4309, %v5109, %v5774
      %v7735 = vsel %vm4309, %v5110, %v5776
      %v7736 = vsel %vm4309, %v5111, %v5778
      %v7737 = vsel %vm4309, %v5112, %v5780
      %v7738 = vsel %vm4309, %v5113, %v5782
      %v7739 = vsel %vm4309, %v5114, %v5784
      %v7740 = vsel %vm4309, %v5115, %v5786
      %v7741 = vsel %vm4309, %v5116, %v5788
      %v7742 = vsel %vm4309, %v5117, %v5790
      %v7743 = vsel %vm4309, %v5118, %v5792
      %v7744 = vsel %vm4309, %v5119, %v5794
      %v7745 = vsel %vm4309, %v5120, %v5796
      %v7746 = vsel %vm4309, %v5121, %v5798
      %v7747 = vsel %vm4309, %v5122, %v5800
      %v7748 = vsel %vm4309, %v5123, %v5802
      %v7749 = vsel %vm4309, %v5124, %v5804
      %v7750 = vsel %vm4309, %v5125, %v5806
      %v7751 = vsel %vm4309, %v5126, %v5808
      %v7752 = vsel %vm4309, %v5127, %v5810
      %v7753 = vsel %vm4309, %v5128, %v5812
      %v7754 = vsel %vm4309, %v5129, %v5814
      %v7755 = vsel %vm4309, %v5130, %v5816
      %v7756 = vsel %vm4309, %v5131, %v5818
      %v7757 = vsel %vm4309, %v5132, %v5820
      %v7758 = vsel %vm4309, %v5133, %v5822
      %v7759 = vsel %vm4309, %v5134, %v5824
      %v7760 = vsel %vm4309, %v5135, %v5826
      %v7761 = vsel %vm4309, %v5136, %v5828
      %v7762 = vsel %vm4309, %v5137, %v5830
      %v7763 = vsel %vm4309, %v5138, %v5832
      %v7764 = vsel %vm4309, %v5139, %v5834
      %v7765 = vsel %vm4309, %v5140, %v5836
      %v7766 = vsel %vm4309, %v5141, %v5838
      %v7767 = vsel %vm4309, %v5142, %v5840
      %v7768 = vsel %vm4309, %v5143, %v5842
      %v7769 = vsel %vm4309, %v5144, %v5844
      %v7770 = vsel %vm4309, %v5145, %v5846
      %v7771 = vsel %vm4309, %v5146, %v5848
      %v7772 = vsel %vm4309, %v5147, %v5850
      %v7773 = vsel %vm4309, %v5148, %v5852
      %v7774 = vsel %vm4309, %v5149, %v5854
      %vm7775 = vcmask 130048
      %v7776 = vsel %vm7775, %v7711, %v5984
      %v7777 = vsel %vm7775, %v7712, %v5986
      %v7778 = vsel %vm7775, %v7713, %v5988
      %v7779 = vsel %vm7775, %v7714, %v5990
      %v7780 = vsel %vm7775, %v7715, %v5992
      %v7781 = vsel %vm7775, %v7716, %v5994
      %v7782 = vsel %vm7775, %v7717, %v5996
      %v7783 = vsel %vm7775, %v7718, %v5998
      %v7784 = vsel %vm7775, %v7719, %v6000
      %v7785 = vsel %vm7775, %v7720, %v6002
      %v7786 = vsel %vm7775, %v7721, %v6004
      %v7787 = vsel %vm7775, %v7722, %v6006
      %v7788 = vsel %vm7775, %v7723, %v6008
      %v7789 = vsel %vm7775, %v7724, %v6010
      %v7790 = vsel %vm7775, %v7725, %v6012
      %v7791 = vsel %vm7775, %v7726, %v6014
      %v7792 = vsel %vm7775, %v7727, %v6016
      %v7793 = vsel %vm7775, %v7728, %v6018
      %v7794 = vsel %vm7775, %v7729, %v6020
      %v7795 = vsel %vm7775, %v7730, %v6022
      %v7796 = vsel %vm7775, %v7731, %v6024
      %v7797 = vsel %vm7775, %v7732, %v6026
      %v7798 = vsel %vm7775, %v7733, %v6028
      %v7799 = vsel %vm7775, %v7734, %v6030
      %v7800 = vsel %vm7775, %v7735, %v6032
      %v7801 = vsel %vm7775, %v7736, %v6034
      %v7802 = vsel %vm7775, %v7737, %v6036
      %v7803 = vsel %vm7775, %v7738, %v6038
      %v7804 = vsel %vm7775, %v7739, %v6040
      %v7805 = vsel %vm7775, %v7740, %v6042
      %v7806 = vsel %vm7775, %v7741, %v6044
      %v7807 = vsel %vm7775, %v7742, %v6046
      %v7808 = vsel %vm7775, %v7743, %v6048
      %v7809 = vsel %vm7775, %v7744, %v6050
      %v7810 = vsel %vm7775, %v7745, %v6052
      %v7811 = vsel %vm7775, %v7746, %v6054
      %v7812 = vsel %vm7775, %v7747, %v6056
      %v7813 = vsel %vm7775, %v7748, %v6058
      %v7814 = vsel %vm7775, %v7749, %v6060
      %v7815 = vsel %vm7775, %v7750, %v6062
      %v7816 = vsel %vm7775, %v7751, %v6064
      %v7817 = vsel %vm7775, %v7752, %v6066
      %v7818 = vsel %vm7775, %v7753, %v6068
      %v7819 = vsel %vm7775, %v7754, %v6070
      %v7820 = vsel %vm7775, %v7755, %v6072
      %v7821 = vsel %vm7775, %v7756, %v6074
      %v7822 = vsel %vm7775, %v7757, %v6076
      %v7823 = vsel %vm7775, %v7758, %v6078
      %v7824 = vsel %vm7775, %v7759, %v6080
      %v7825 = vsel %vm7775, %v7760, %v6082
      %v7826 = vsel %vm7775, %v7761, %v6084
      %v7827 = vsel %vm7775, %v7762, %v6086
      %v7828 = vsel %vm7775, %v7763, %v6088
      %v7829 = vsel %vm7775, %v7764, %v6090
      %v7830 = vsel %vm7775, %v7765, %v6092
      %v7831 = vsel %vm7775, %v7766, %v6094
      %v7832 = vsel %vm7775, %v7767, %v6096
      %v7833 = vsel %vm7775, %v7768, %v6098
      %v7834 = vsel %vm7775, %v7769, %v6100
      %v7835 = vsel %vm7775, %v7770, %v6102
      %v7836 = vsel %vm7775, %v7771, %v6104
      %v7837 = vsel %vm7775, %v7772, %v6106
      %v7838 = vsel %vm7775, %v7773, %v6108
      %v7839 = vsel %vm7775, %v7774, %v6110
      %v7840 = vsel %vm3797, %v7776, %v6240
      %v7841 = vsel %vm3797, %v7777, %v6242
      %v7842 = vsel %vm3797, %v7778, %v6244
      %v7843 = vsel %vm3797, %v7779, %v6246
      %v7844 = vsel %vm3797, %v7780, %v6248
      %v7845 = vsel %vm3797, %v7781, %v6250
      %v7846 = vsel %vm3797, %v7782, %v6252
      %v7847 = vsel %vm3797, %v7783, %v6254
      %v7848 = vsel %vm3797, %v7784, %v6256
      %v7849 = vsel %vm3797, %v7785, %v6258
      %v7850 = vsel %vm3797, %v7786, %v6260
      %v7851 = vsel %vm3797, %v7787, %v6262
      %v7852 = vsel %vm3797, %v7788, %v6264
      %v7853 = vsel %vm3797, %v7789, %v6266
      %v7854 = vsel %vm3797, %v7790, %v6268
      %v7855 = vsel %vm3797, %v7791, %v6270
      %v7856 = vsel %vm3797, %v7792, %v6272
      %v7857 = vsel %vm3797, %v7793, %v6274
      %v7858 = vsel %vm3797, %v7794, %v6276
      %v7859 = vsel %vm3797, %v7795, %v6278
      %v7860 = vsel %vm3797, %v7796, %v6280
      %v7861 = vsel %vm3797, %v7797, %v6282
      %v7862 = vsel %vm3797, %v7798, %v6284
      %v7863 = vsel %vm3797, %v7799, %v6286
      %v7864 = vsel %vm3797, %v7800, %v6288
      %v7865 = vsel %vm3797, %v7801, %v6290
      %v7866 = vsel %vm3797, %v7802, %v6292
      %v7867 = vsel %vm3797, %v7803, %v6294
      %v7868 = vsel %vm3797, %v7804, %v6296
      %v7869 = vsel %vm3797, %v7805, %v6298
      %v7870 = vsel %vm3797, %v7806, %v6300
      %v7871 = vsel %vm3797, %v7807, %v6302
      %v7872 = vsel %vm3797, %v7808, %v6304
      %v7873 = vsel %vm3797, %v7809, %v6306
      %v7874 = vsel %vm3797, %v7810, %v6308
      %v7875 = vsel %vm3797, %v7811, %v6310
      %v7876 = vsel %vm3797, %v7812, %v6312
      %v7877 = vsel %vm3797, %v7813, %v6314
      %v7878 = vsel %vm3797, %v7814, %v6316
      %v7879 = vsel %vm3797, %v7815, %v6318
      %v7880 = vsel %vm3797, %v7816, %v6320
      %v7881 = vsel %vm3797, %v7817, %v6322
      %v7882 = vsel %vm3797, %v7818, %v6324
      %v7883 = vsel %vm3797, %v7819, %v6326
      %v7884 = vsel %vm3797, %v7820, %v6328
      %v7885 = vsel %vm3797, %v7821, %v6330
      %v7886 = vsel %vm3797, %v7822, %v6332
      %v7887 = vsel %vm3797, %v7823, %v6334
      %v7888 = vsel %vm3797, %v7824, %v6336
      %v7889 = vsel %vm3797, %v7825, %v6338
      %v7890 = vsel %vm3797, %v7826, %v6340
      %v7891 = vsel %vm3797, %v7827, %v6342
      %v7892 = vsel %vm3797, %v7828, %v6344
      %v7893 = vsel %vm3797, %v7829, %v6346
      %v7894 = vsel %vm3797, %v7830, %v6348
      %v7895 = vsel %vm3797, %v7831, %v6350
      %v7896 = vsel %vm3797, %v7832, %v6352
      %v7897 = vsel %vm3797, %v7833, %v6354
      %v7898 = vsel %vm3797, %v7834, %v6356
      %v7899 = vsel %vm3797, %v7835, %v6358
      %v7900 = vsel %vm3797, %v7836, %v6360
      %v7901 = vsel %vm3797, %v7837, %v6362
      %v7902 = vsel %vm3797, %v7838, %v6364
      %v7903 = vsel %vm3797, %v7839, %v6366
      %vm7904 = vcmask 261120
      %v7905 = vsel %vm7904, %v7840, %v6496
      %v7906 = vsel %vm7904, %v7841, %v6498
      %v7907 = vsel %vm7904, %v7842, %v6500
      %v7908 = vsel %vm7904, %v7843, %v6502
      %v7909 = vsel %vm7904, %v7844, %v6504
      %v7910 = vsel %vm7904, %v7845, %v6506
      %v7911 = vsel %vm7904, %v7846, %v6508
      %v7912 = vsel %vm7904, %v7847, %v6510
      %v7913 = vsel %vm7904, %v7848, %v6512
      %v7914 = vsel %vm7904, %v7849, %v6514
      %v7915 = vsel %vm7904, %v7850, %v6516
      %v7916 = vsel %vm7904, %v7851, %v6518
      %v7917 = vsel %vm7904, %v7852, %v6520
      %v7918 = vsel %vm7904, %v7853, %v6522
      %v7919 = vsel %vm7904, %v7854, %v6524
      %v7920 = vsel %vm7904, %v7855, %v6526
      %v7921 = vsel %vm7904, %v7856, %v6528
      %v7922 = vsel %vm7904, %v7857, %v6530
      %v7923 = vsel %vm7904, %v7858, %v6532
      %v7924 = vsel %vm7904, %v7859, %v6534
      %v7925 = vsel %vm7904, %v7860, %v6536
      %v7926 = vsel %vm7904, %v7861, %v6538
      %v7927 = vsel %vm7904, %v7862, %v6540
      %v7928 = vsel %vm7904, %v7863, %v6542
      %v7929 = vsel %vm7904, %v7864, %v6544
      %v7930 = vsel %vm7904, %v7865, %v6546
      %v7931 = vsel %vm7904, %v7866, %v6548
      %v7932 = vsel %vm7904, %v7867, %v6550
      %v7933 = vsel %vm7904, %v7868, %v6552
      %v7934 = vsel %vm7904, %v7869, %v6554
      %v7935 = vsel %vm7904, %v7870, %v6556
      %v7936 = vsel %vm7904, %v7871, %v6558
      %v7937 = vsel %vm7904, %v7872, %v6560
      %v7938 = vsel %vm7904, %v7873, %v6562
      %v7939 = vsel %vm7904, %v7874, %v6564
      %v7940 = vsel %vm7904, %v7875, %v6566
      %v7941 = vsel %vm7904, %v7876, %v6568
      %v7942 = vsel %vm7904, %v7877, %v6570
      %v7943 = vsel %vm7904, %v7878, %v6572
      %v7944 = vsel %vm7904, %v7879, %v6574
      %v7945 = vsel %vm7904, %v7880, %v6576
      %v7946 = vsel %vm7904, %v7881, %v6578
      %v7947 = vsel %vm7904, %v7882, %v6580
      %v7948 = vsel %vm7904, %v7883, %v6582
      %v7949 = vsel %vm7904, %v7884, %v6584
      %v7950 = vsel %vm7904, %v7885, %v6586
      %v7951 = vsel %vm7904, %v7886, %v6588
      %v7952 = vsel %vm7904, %v7887, %v6590
      %v7953 = vsel %vm7904, %v7888, %v6592
      %v7954 = vsel %vm7904, %v7889, %v6594
      %v7955 = vsel %vm7904, %v7890, %v6596
      %v7956 = vsel %vm7904, %v7891, %v6598
      %v7957 = vsel %vm7904, %v7892, %v6600
      %v7958 = vsel %vm7904, %v7893, %v6602
      %v7959 = vsel %vm7904, %v7894, %v6604
      %v7960 = vsel %vm7904, %v7895, %v6606
      %v7961 = vsel %vm7904, %v7896, %v6608
      %v7962 = vsel %vm7904, %v7897, %v6610
      %v7963 = vsel %vm7904, %v7898, %v6612
      %v7964 = vsel %vm7904, %v7899, %v6614
      %v7965 = vsel %vm7904, %v7900, %v6616
      %v7966 = vsel %vm7904, %v7901, %v6618
      %v7967 = vsel %vm7904, %v7902, %v6620
      %v7968 = vsel %vm7904, %v7903, %v6622
      %vm7969 = vcmask 326656
      %v7970 = vsel %vm7969, %v7905, %v6752
      %v7971 = vsel %vm7969, %v7906, %v6754
      %v7972 = vsel %vm7969, %v7907, %v6756
      %v7973 = vsel %vm7969, %v7908, %v6758
      %v7974 = vsel %vm7969, %v7909, %v6760
      %v7975 = vsel %vm7969, %v7910, %v6762
      %v7976 = vsel %vm7969, %v7911, %v6764
      %v7977 = vsel %vm7969, %v7912, %v6766
      %v7978 = vsel %vm7969, %v7913, %v6768
      %v7979 = vsel %vm7969, %v7914, %v6770
      %v7980 = vsel %vm7969, %v7915, %v6772
      %v7981 = vsel %vm7969, %v7916, %v6774
      %v7982 = vsel %vm7969, %v7917, %v6776
      %v7983 = vsel %vm7969, %v7918, %v6778
      %v7984 = vsel %vm7969, %v7919, %v6780
      %v7985 = vsel %vm7969, %v7920, %v6782
      %v7986 = vsel %vm7969, %v7921, %v6784
      %v7987 = vsel %vm7969, %v7922, %v6786
      %v7988 = vsel %vm7969, %v7923, %v6788
      %v7989 = vsel %vm7969, %v7924, %v6790
      %v7990 = vsel %vm7969, %v7925, %v6792
      %v7991 = vsel %vm7969, %v7926, %v6794
      %v7992 = vsel %vm7969, %v7927, %v6796
      %v7993 = vsel %vm7969, %v7928, %v6798
      %v7994 = vsel %vm7969, %v7929, %v6800
      %v7995 = vsel %vm7969, %v7930, %v6802
      %v7996 = vsel %vm7969, %v7931, %v6804
      %v7997 = vsel %vm7969, %v7932, %v6806
      %v7998 = vsel %vm7969, %v7933, %v6808
      %v7999 = vsel %vm7969, %v7934, %v6810
      %v8000 = vsel %vm7969, %v7935, %v6812
      %v8001 = vsel %vm7969, %v7936, %v6814
      %v8002 = vsel %vm7969, %v7937, %v6816
      %v8003 = vsel %vm7969, %v7938, %v6818
      %v8004 = vsel %vm7969, %v7939, %v6820
      %v8005 = vsel %vm7969, %v7940, %v6822
      %v8006 = vsel %vm7969, %v7941, %v6824
      %v8007 = vsel %vm7969, %v7942, %v6826
      %v8008 = vsel %vm7969, %v7943, %v6828
      %v8009 = vsel %vm7969, %v7944, %v6830
      %v8010 = vsel %vm7969, %v7945, %v6832
      %v8011 = vsel %vm7969, %v7946, %v6834
      %v8012 = vsel %vm7969, %v7947, %v6836
      %v8013 = vsel %vm7969, %v7948, %v6838
      %v8014 = vsel %vm7969, %v7949, %v6840
      %v8015 = vsel %vm7969, %v7950, %v6842
      %v8016 = vsel %vm7969, %v7951, %v6844
      %v8017 = vsel %vm7969, %v7952, %v6846
      %v8018 = vsel %vm7969, %v7953, %v6848
      %v8019 = vsel %vm7969, %v7954, %v6850
      %v8020 = vsel %vm7969, %v7955, %v6852
      %v8021 = vsel %vm7969, %v7956, %v6854
      %v8022 = vsel %vm7969, %v7957, %v6856
      %v8023 = vsel %vm7969, %v7958, %v6858
      %v8024 = vsel %vm7969, %v7959, %v6860
      %v8025 = vsel %vm7969, %v7960, %v6862
      %v8026 = vsel %vm7969, %v7961, %v6864
      %v8027 = vsel %vm7969, %v7962, %v6866
      %v8028 = vsel %vm7969, %v7963, %v6868
      %v8029 = vsel %vm7969, %v7964, %v6870
      %v8030 = vsel %vm7969, %v7965, %v6872
      %v8031 = vsel %vm7969, %v7966, %v6874
      %v8032 = vsel %vm7969, %v7967, %v6876
      %v8033 = vsel %vm7969, %v7968, %v6878
      %vm8034 = vcmask 392192
      %v8035 = vsel %vm8034, %v7970, %v7008
      %v8036 = vsel %vm8034, %v7971, %v7010
      %v8037 = vsel %vm8034, %v7972, %v7012
      %v8038 = vsel %vm8034, %v7973, %v7014
      %v8039 = vsel %vm8034, %v7974, %v7016
      %v8040 = vsel %vm8034, %v7975, %v7018
      %v8041 = vsel %vm8034, %v7976, %v7020
      %v8042 = vsel %vm8034, %v7977, %v7022
      %v8043 = vsel %vm8034, %v7978, %v7024
      %v8044 = vsel %vm8034, %v7979, %v7026
      %v8045 = vsel %vm8034, %v7980, %v7028
      %v8046 = vsel %vm8034, %v7981, %v7030
      %v8047 = vsel %vm8034, %v7982, %v7032
      %v8048 = vsel %vm8034, %v7983, %v7034
      %v8049 = vsel %vm8034, %v7984, %v7036
      %v8050 = vsel %vm8034, %v7985, %v7038
      %v8051 = vsel %vm8034, %v7986, %v7040
      %v8052 = vsel %vm8034, %v7987, %v7042
      %v8053 = vsel %vm8034, %v7988, %v7044
      %v8054 = vsel %vm8034, %v7989, %v7046
      %v8055 = vsel %vm8034, %v7990, %v7048
      %v8056 = vsel %vm8034, %v7991, %v7050
      %v8057 = vsel %vm8034, %v7992, %v7052
      %v8058 = vsel %vm8034, %v7993, %v7054
      %v8059 = vsel %vm8034, %v7994, %v7056
      %v8060 = vsel %vm8034, %v7995, %v7058
      %v8061 = vsel %vm8034, %v7996, %v7060
      %v8062 = vsel %vm8034, %v7997, %v7062
      %v8063 = vsel %vm8034, %v7998, %v7064
      %v8064 = vsel %vm8034, %v7999, %v7066
      %v8065 = vsel %vm8034, %v8000, %v7068
      %v8066 = vsel %vm8034, %v8001, %v7070
      %v8067 = vsel %vm8034, %v8002, %v7072
      %v8068 = vsel %vm8034, %v8003, %v7074
      %v8069 = vsel %vm8034, %v8004, %v7076
      %v8070 = vsel %vm8034, %v8005, %v7078
      %v8071 = vsel %vm8034, %v8006, %v7080
      %v8072 = vsel %vm8034, %v8007, %v7082
      %v8073 = vsel %vm8034, %v8008, %v7084
      %v8074 = vsel %vm8034, %v8009, %v7086
      %v8075 = vsel %vm8034, %v8010, %v7088
      %v8076 = vsel %vm8034, %v8011, %v7090
      %v8077 = vsel %vm8034, %v8012, %v7092
      %v8078 = vsel %vm8034, %v8013, %v7094
      %v8079 = vsel %vm8034, %v8014, %v7096
      %v8080 = vsel %vm8034, %v8015, %v7098
      %v8081 = vsel %vm8034, %v8016, %v7100
      %v8082 = vsel %vm8034, %v8017, %v7102
      %v8083 = vsel %vm8034, %v8018, %v7104
      %v8084 = vsel %vm8034, %v8019, %v7106
      %v8085 = vsel %vm8034, %v8020, %v7108
      %v8086 = vsel %vm8034, %v8021, %v7110
      %v8087 = vsel %vm8034, %v8022, %v7112
      %v8088 = vsel %vm8034, %v8023, %v7114
      %v8089 = vsel %vm8034, %v8024, %v7116
      %v8090 = vsel %vm8034, %v8025, %v7118
      %v8091 = vsel %vm8034, %v8026, %v7120
      %v8092 = vsel %vm8034, %v8027, %v7122
      %v8093 = vsel %vm8034, %v8028, %v7124
      %v8094 = vsel %vm8034, %v8029, %v7126
      %v8095 = vsel %vm8034, %v8030, %v7128
      %v8096 = vsel %vm8034, %v8031, %v7130
      %v8097 = vsel %vm8034, %v8032, %v7132
      %v8098 = vsel %vm8034, %v8033, %v7134
      %vm8099 = vcmask 457728
      %v8100 = vsel %vm8099, %v8035, %v7264
      %v8101 = vsel %vm8099, %v8036, %v7266
      %v8102 = vsel %vm8099, %v8037, %v7268
      %v8103 = vsel %vm8099, %v8038, %v7270
      %v8104 = vsel %vm8099, %v8039, %v7272
      %v8105 = vsel %vm8099, %v8040, %v7274
      %v8106 = vsel %vm8099, %v8041, %v7276
      %v8107 = vsel %vm8099, %v8042, %v7278
      %v8108 = vsel %vm8099, %v8043, %v7280
      %v8109 = vsel %vm8099, %v8044, %v7282
      %v8110 = vsel %vm8099, %v8045, %v7284
      %v8111 = vsel %vm8099, %v8046, %v7286
      %v8112 = vsel %vm8099, %v8047, %v7288
      %v8113 = vsel %vm8099, %v8048, %v7290
      %v8114 = vsel %vm8099, %v8049, %v7292
      %v8115 = vsel %vm8099, %v8050, %v7294
      %v8116 = vsel %vm8099, %v8051, %v7296
      %v8117 = vsel %vm8099, %v8052, %v7298
      %v8118 = vsel %vm8099, %v8053, %v7300
      %v8119 = vsel %vm8099, %v8054, %v7302
      %v8120 = vsel %vm8099, %v8055, %v7304
      %v8121 = vsel %vm8099, %v8056, %v7306
      %v8122 = vsel %vm8099, %v8057, %v7308
      %v8123 = vsel %vm8099, %v8058, %v7310
      %v8124 = vsel %vm8099, %v8059, %v7312
      %v8125 = vsel %vm8099, %v8060, %v7314
      %v8126 = vsel %vm8099, %v8061, %v7316
      %v8127 = vsel %vm8099, %v8062, %v7318
      %v8128 = vsel %vm8099, %v8063, %v7320
      %v8129 = vsel %vm8099, %v8064, %v7322
      %v8130 = vsel %vm8099, %v8065, %v7324
      %v8131 = vsel %vm8099, %v8066, %v7326
      %v8132 = vsel %vm8099, %v8067, %v7328
      %v8133 = vsel %vm8099, %v8068, %v7330
      %v8134 = vsel %vm8099, %v8069, %v7332
      %v8135 = vsel %vm8099, %v8070, %v7334
      %v8136 = vsel %vm8099, %v8071, %v7336
      %v8137 = vsel %vm8099, %v8072, %v7338
      %v8138 = vsel %vm8099, %v8073, %v7340
      %v8139 = vsel %vm8099, %v8074, %v7342
      %v8140 = vsel %vm8099, %v8075, %v7344
      %v8141 = vsel %vm8099, %v8076, %v7346
      %v8142 = vsel %vm8099, %v8077, %v7348
      %v8143 = vsel %vm8099, %v8078, %v7350
      %v8144 = vsel %vm8099, %v8079, %v7352
      %v8145 = vsel %vm8099, %v8080, %v7354
      %v8146 = vsel %vm8099, %v8081, %v7356
      %v8147 = vsel %vm8099, %v8082, %v7358
      %v8148 = vsel %vm8099, %v8083, %v7360
      %v8149 = vsel %vm8099, %v8084, %v7362
      %v8150 = vsel %vm8099, %v8085, %v7364
      %v8151 = vsel %vm8099, %v8086, %v7366
      %v8152 = vsel %vm8099, %v8087, %v7368
      %v8153 = vsel %vm8099, %v8088, %v7370
      %v8154 = vsel %vm8099, %v8089, %v7372
      %v8155 = vsel %vm8099, %v8090, %v7374
      %v8156 = vsel %vm8099, %v8091, %v7376
      %v8157 = vsel %vm8099, %v8092, %v7378
      %v8158 = vsel %vm8099, %v8093, %v7380
      %v8159 = vsel %vm8099, %v8094, %v7382
      %v8160 = vsel %vm8099, %v8095, %v7384
      %v8161 = vsel %vm8099, %v8096, %v7386
      %v8162 = vsel %vm8099, %v8097, %v7388
      %v8163 = vsel %vm8099, %v8098, %v7390
      %vm8164 = vcmask 523264
      %v8165 = vsel %vm8164, %v8100, %v7520
      %v8166 = vsel %vm8164, %v8101, %v7522
      %v8167 = vsel %vm8164, %v8102, %v7524
      %v8168 = vsel %vm8164, %v8103, %v7526
      %v8169 = vsel %vm8164, %v8104, %v7528
      %v8170 = vsel %vm8164, %v8105, %v7530
      %v8171 = vsel %vm8164, %v8106, %v7532
      %v8172 = vsel %vm8164, %v8107, %v7534
      %v8173 = vsel %vm8164, %v8108, %v7536
      %v8174 = vsel %vm8164, %v8109, %v7538
      %v8175 = vsel %vm8164, %v8110, %v7540
      %v8176 = vsel %vm8164, %v8111, %v7542
      %v8177 = vsel %vm8164, %v8112, %v7544
      %v8178 = vsel %vm8164, %v8113, %v7546
      %v8179 = vsel %vm8164, %v8114, %v7548
      %v8180 = vsel %vm8164, %v8115, %v7550
      %v8181 = vsel %vm8164, %v8116, %v7552
      %v8182 = vsel %vm8164, %v8117, %v7554
      %v8183 = vsel %vm8164, %v8118, %v7556
      %v8184 = vsel %vm8164, %v8119, %v7558
      %v8185 = vsel %vm8164, %v8120, %v7560
      %v8186 = vsel %vm8164, %v8121, %v7562
      %v8187 = vsel %vm8164, %v8122, %v7564
      %v8188 = vsel %vm8164, %v8123, %v7566
      %v8189 = vsel %vm8164, %v8124, %v7568
      %v8190 = vsel %vm8164, %v8125, %v7570
      %v8191 = vsel %vm8164, %v8126, %v7572
      %v8192 = vsel %vm8164, %v8127, %v7574
      %v8193 = vsel %vm8164, %v8128, %v7576
      %v8194 = vsel %vm8164, %v8129, %v7578
      %v8195 = vsel %vm8164, %v8130, %v7580
      %v8196 = vsel %vm8164, %v8131, %v7582
      %v8197 = vsel %vm8164, %v8132, %v7584
      %v8198 = vsel %vm8164, %v8133, %v7586
      %v8199 = vsel %vm8164, %v8134, %v7588
      %v8200 = vsel %vm8164, %v8135, %v7590
      %v8201 = vsel %vm8164, %v8136, %v7592
      %v8202 = vsel %vm8164, %v8137, %v7594
      %v8203 = vsel %vm8164, %v8138, %v7596
      %v8204 = vsel %vm8164, %v8139, %v7598
      %v8205 = vsel %vm8164, %v8140, %v7600
      %v8206 = vsel %vm8164, %v8141, %v7602
      %v8207 = vsel %vm8164, %v8142, %v7604
      %v8208 = vsel %vm8164, %v8143, %v7606
      %v8209 = vsel %vm8164, %v8144, %v7608
      %v8210 = vsel %vm8164, %v8145, %v7610
      %v8211 = vsel %vm8164, %v8146, %v7612
      %v8212 = vsel %vm8164, %v8147, %v7614
      %v8213 = vsel %vm8164, %v8148, %v7616
      %v8214 = vsel %vm8164, %v8149, %v7618
      %v8215 = vsel %vm8164, %v8150, %v7620
      %v8216 = vsel %vm8164, %v8151, %v7622
      %v8217 = vsel %vm8164, %v8152, %v7624
      %v8218 = vsel %vm8164, %v8153, %v7626
      %v8219 = vsel %vm8164, %v8154, %v7628
      %v8220 = vsel %vm8164, %v8155, %v7630
      %v8221 = vsel %vm8164, %v8156, %v7632
      %v8222 = vsel %vm8164, %v8157, %v7634
      %v8223 = vsel %vm8164, %v8158, %v7636
      %v8224 = vsel %vm8164, %v8159, %v7638
      %v8225 = vsel %vm8164, %v8160, %v7640
      %v8226 = vsel %vm8164, %v8161, %v7642
      %v8227 = vsel %vm8164, %v8162, %v7644
      %v8228 = vsel %vm8164, %v8163, %v7646
      %v8229 = vpack.c.bf16 %v8166, %v8165
      %v8230 = vpack.c.bf16 %v8168, %v8167
      %v8231 = vpack.c.bf16 %v8170, %v8169
      %v8232 = vpack.c.bf16 %v8172, %v8171
      %v8233 = vpack.c.bf16 %v8174, %v8173
      %v8234 = vpack.c.bf16 %v8176, %v8175
      %v8235 = vpack.c.bf16 %v8178, %v8177
      %v8236 = vpack.c.bf16 %v8180, %v8179
      %v8237 = vpack.c.bf16 %v8182, %v8181
      %v8238 = vpack.c.bf16 %v8184, %v8183
      %v8239 = vpack.c.bf16 %v8186, %v8185
      %v8240 = vpack.c.bf16 %v8188, %v8187
      %v8241 = vpack.c.bf16 %v8190, %v8189
      %v8242 = vpack.c.bf16 %v8192, %v8191
      %v8243 = vpack.c.bf16 %v8194, %v8193
      %v8244 = vpack.c.bf16 %v8196, %v8195
      %v8245 = vpack.c.bf16 %v8198, %v8197
      %v8246 = vpack.c.bf16 %v8200, %v8199
      %v8247 = vpack.c.bf16 %v8202, %v8201
      %v8248 = vpack.c.bf16 %v8204, %v8203
      %v8249 = vpack.c.bf16 %v8206, %v8205
      %v8250 = vpack.c.bf16 %v8208, %v8207
      %v8251 = vpack.c.bf16 %v8210, %v8209
      %v8252 = vpack.c.bf16 %v8212, %v8211
      %v8253 = vpack.c.bf16 %v8214, %v8213
      %v8254 = vpack.c.bf16 %v8216, %v8215
      %v8255 = vpack.c.bf16 %v8218, %v8217
      %v8256 = vpack.c.bf16 %v8220, %v8219
      %v8257 = vpack.c.bf16 %v8222, %v8221
      %v8258 = vpack.c.bf16 %v8224, %v8223
      %v8259 = vpack.c.bf16 %v8226, %v8225
      %v8260 = vpack.c.bf16 %v8228, %v8227
      %v8261 = vld [vmem:[%s5] sm:$0xf]
      %v8262 = vld [vmem:[%s5 + $0x4] sm:$0xf]
      %v8263 = vld [vmem:[%s5 + $0x8] sm:$0xf]
      %v8264 = vld [vmem:[%s5 + $0xc] sm:$0xf]
      %v8265 = vld [vmem:[%s5 + $0x10] sm:$0xf]
      %v8266 = vld [vmem:[%s5 + $0x14] sm:$0xf]
      %v8267 = vld [vmem:[%s5 + $0x18] sm:$0xf]
      %v8268 = vld [vmem:[%s5 + $0x1c] sm:$0xf]
      %v8269 = vld [vmem:[%s5 + $0x20] sm:$0xf]
      %v8270 = vld [vmem:[%s6] sm:$0x1]
      %v8272 = vlaneseq
      %v8273 = vshrl.u32 %v8272, 7
      %v8274 = vsub.s32 0, %v8273
      %v8275 = vrot.slane %v8270, %v8274
      %v8286 = vunpack.c.l.b16 %v8261
      %v8287 = vunpack.c.l.b16 %v8262
      %v8288 = vunpack.c.l.b16 %v8263
      %v8289 = vunpack.c.l.b16 %v8264
      %v8290 = vunpack.c.l.b16 %v8265
      %v8291 = vunpack.c.l.b16 %v8266
      %v8292 = vunpack.c.l.b16 %v8267
      %v8293 = vunpack.c.l.b16 %v8268
      %v8294 = vunpack.c.l.b16 %v8269
      %v8295 = vpack.c.b16 %v8287, %v8286
      %v8296 = vpack.c.b16 %v8289, %v8288
      %v8297 = vpack.c.b16 %v8291, %v8290
      %v8298 = vpack.c.b16 %v8293, %v8292
      %v8299 = vpack.c.b16 %v8294, %v8294
      %vm8304 = vcmask 588800
      %v8306 = vsel %vm8304, %v8229, 0
      %v8309 = vsel %vm8304, %v8230, 0
      %v8312 = vsel %vm8304, %v8231, 0
      %v8315 = vsel %vm8304, %v8232, 0
      %v8318 = vsel %vm8304, %v8233, 0
      %v8321 = vsel %vm8304, %v8234, 0
      %v8324 = vsel %vm8304, %v8235, 0
      %v8327 = vsel %vm8304, %v8236, 0
      %v8330 = vsel %vm8304, %v8237, 0
      %v8333 = vsel %vm8304, %v8238, 0
      %v8336 = vsel %vm8304, %v8239, 0
      %v8339 = vsel %vm8304, %v8240, 0
      %v8342 = vsel %vm8304, %v8241, 0
      %v8345 = vsel %vm8304, %v8242, 0
      %v8348 = vsel %vm8304, %v8243, 0
      %v8351 = vsel %vm8304, %v8244, 0
      %v8354 = vsel %vm8304, %v8245, 0
      %v8357 = vsel %vm8304, %v8246, 0
      %v8360 = vsel %vm8304, %v8247, 0
      %v8363 = vsel %vm8304, %v8248, 0
      %v8366 = vsel %vm8304, %v8249, 0
      %v8369 = vsel %vm8304, %v8250, 0
      %v8372 = vsel %vm8304, %v8251, 0
      %v8375 = vsel %vm8304, %v8252, 0
      %v8378 = vsel %vm8304, %v8253, 0
      %v8381 = vsel %vm8304, %v8254, 0
      %v8384 = vsel %vm8304, %v8255, 0
      %v8387 = vsel %vm8304, %v8256, 0
      %v8390 = vsel %vm8304, %v8257, 0
      %v8393 = vsel %vm8304, %v8258, 0
      %v8396 = vsel %vm8304, %v8259, 0
      %v8399 = vsel %vm8304, %v8260, 0
      %vm8401 = vcmask 1043456
      %v8403 = vsel %vm8401, %v8299, 0
      %8405 = vmatprep.subr.bf16.mxu0 0
      %8406 = vmatpush1.bf16.msra.mxu0 %v8295
      %8407 = vmatprep.subr.bf16.mxu0 0
      %8408 = vmatpush1.bf16.msra.mxu0 %v8296
      %8409 = vmatprep.subr.bf16.mxu0 0
      %8410 = vmatpush1.bf16.msra.mxu0 %v8297
      %8411 = vmatprep.subr.bf16.mxu0 0
      %8412 = vmatpush1.bf16.msra.mxu0 %v8298
      %8413 = vmatprep.subr.bf16.mxu0 0
      %8414 = vmatpush1.bf16.msra.mxu0 %v8403
      %8415 = vmatprep.subr.bf16.mxu0 0
      %8416 = vmatpush1.bf16.msra.mxu0 0
      %8417 = vmatprep.subr.bf16.mxu0 0
      %8418 = vmatpush1.bf16.msra.mxu0 0
      %8419 = vmatprep.subr.bf16.mxu0 0
      %8420 = vmatpush1.bf16.msra.mxu0 0
      %8421 = vmatprep.subr.bf16.mxu0 0
      %8422 = vmatpush1.bf16.msra.mxu0 0
      %8423 = vmatprep.subr.bf16.mxu0 0
      %8424 = vmatpush1.bf16.msra.mxu0 0
      %8425 = vmatprep.subr.bf16.mxu0 0
      %8426 = vmatpush1.bf16.msra.mxu0 0
      %8427 = vmatprep.subr.bf16.mxu0 0
      %8428 = vmatpush1.bf16.msra.mxu0 0
      %8429 = vmatprep.subr.bf16.mxu0 0
      %8430 = vmatpush1.bf16.msra.mxu0 0
      %8431 = vmatprep.subr.bf16.mxu0 0
      %8432 = vmatpush1.bf16.msra.mxu0 0
      %8433 = vmatprep.subr.bf16.mxu0 0
      %8434 = vmatpush1.bf16.msra.mxu0 0
      %8435 = vmatprep.subr.bf16.mxu0 0
      %8436 = vmatpush1.bf16.msra.mxu0 0
      %8437 = vmatprep.mubr.bf16.mxu0 0
      %8438 = vmatmul.mubr.bf16.gmra.mrb[0].mxu0 %v8306
      %v8439 = vpop.f32.mrb[0].mxu0
      %v8440 = vadd.f32 %v8275, %v8439
      %v8441 = vpop.f32.mrb[0].mxu0
      %v8442 = vpop.f32.mrb[0].mxu0
      %v8443 = vadd.f32 %v8275, %v8442
      %v8444 = vpop.f32.mrb[0].mxu0
      %8445 = vmatprep.mubr.bf16.mxu0 0
      %8446 = vmatmul.mubr.bf16.gmra.mrb[0].mxu0 %v8309
      %v8447 = vpop.f32.mrb[0].mxu0
      %v8448 = vadd.f32 %v8275, %v8447
      %v8449 = vpop.f32.mrb[0].mxu0
      %v8450 = vpop.f32.mrb[0].mxu0
      %v8451 = vadd.f32 %v8275, %v8450
      %v8452 = vpop.f32.mrb[0].mxu0
      %8453 = vmatprep.mubr.bf16.mxu0 0
      %8454 = vmatmul.mubr.bf16.gmra.mrb[0].mxu0 %v8312
      %v8455 = vpop.f32.mrb[0].mxu0
      %v8456 = vadd.f32 %v8275, %v8455
      %v8457 = vpop.f32.mrb[0].mxu0
      %v8458 = vpop.f32.mrb[0].mxu0
      %v8459 = vadd.f32 %v8275, %v8458
      %v8460 = vpop.f32.mrb[0].mxu0
      %8461 = vmatprep.mubr.bf16.mxu0 0
      %8462 = vmatmul.mubr.bf16.gmra.mrb[0].mxu0 %v8315
      %v8463 = vpop.f32.mrb[0].mxu0
      %v8464 = vadd.f32 %v8275, %v8463
      %v8465 = vpop.f32.mrb[0].mxu0
      %v8466 = vpop.f32.mrb[0].mxu0
      %v8467 = vadd.f32 %v8275, %v8466
      %v8468 = vpop.f32.mrb[0].mxu0
      %8469 = vmatprep.mubr.bf16.mxu0 0
      %8470 = vmatmul.mubr.bf16.gmra.mrb[0].mxu0 %v8318
      %v8471 = vpop.f32.mrb[0].mxu0
      %v8472 = vadd.f32 %v8275, %v8471
      %v8473 = vpop.f32.mrb[0].mxu0
      %v8474 = vpop.f32.mrb[0].mxu0
      %v8475 = vadd.f32 %v8275, %v8474
      %v8476 = vpop.f32.mrb[0].mxu0
      %8477 = vmatprep.mubr.bf16.mxu0 0
      %8478 = vmatmul.mubr.bf16.gmra.mrb[0].mxu0 %v8321
      %v8479 = vpop.f32.mrb[0].mxu0
      %v8480 = vadd.f32 %v8275, %v8479
      %v8481 = vpop.f32.mrb[0].mxu0
      %v8482 = vpop.f32.mrb[0].mxu0
      %v8483 = vadd.f32 %v8275, %v8482
      %v8484 = vpop.f32.mrb[0].mxu0
      %8485 = vmatprep.mubr.bf16.mxu0 0
      %8486 = vmatmul.mubr.bf16.gmra.mrb[0].mxu0 %v8324
      %v8487 = vpop.f32.mrb[0].mxu0
      %v8488 = vadd.f32 %v8275, %v8487
      %v8489 = vpop.f32.mrb[0].mxu0
      %v8490 = vpop.f32.mrb[0].mxu0
      %v8491 = vadd.f32 %v8275, %v8490
      %v8492 = vpop.f32.mrb[0].mxu0
      %8493 = vmatprep.mubr.bf16.mxu0 0
      %8494 = vmatmul.mubr.bf16.gmra.mrb[0].mxu0 %v8327
      %v8495 = vpop.f32.mrb[0].mxu0
      %v8496 = vadd.f32 %v8275, %v8495
      %v8497 = vpop.f32.mrb[0].mxu0
      %v8498 = vpop.f32.mrb[0].mxu0
      %v8499 = vadd.f32 %v8275, %v8498
      %v8500 = vpop.f32.mrb[0].mxu0
      %8501 = vmatprep.mubr.bf16.mxu0 0
      %8502 = vmatmul.mubr.bf16.gmra.mrb[0].mxu0 %v8330
      %v8503 = vpop.f32.mrb[0].mxu0
      %v8504 = vadd.f32 %v8275, %v8503
      %v8505 = vpop.f32.mrb[0].mxu0
      %v8506 = vpop.f32.mrb[0].mxu0
      %v8507 = vadd.f32 %v8275, %v8506
      %v8508 = vpop.f32.mrb[0].mxu0
      %8509 = vmatprep.mubr.bf16.mxu0 0
      %8510 = vmatmul.mubr.bf16.gmra.mrb[0].mxu0 %v8333
      %v8511 = vpop.f32.mrb[0].mxu0
      %v8512 = vadd.f32 %v8275, %v8511
      %v8513 = vpop.f32.mrb[0].mxu0
      %v8514 = vpop.f32.mrb[0].mxu0
      %v8515 = vadd.f32 %v8275, %v8514
      %v8516 = vpop.f32.mrb[0].mxu0
      %8517 = vmatprep.mubr.bf16.mxu0 0
      %8518 = vmatmul.mubr.bf16.gmra.mrb[0].mxu0 %v8336
      %v8519 = vpop.f32.mrb[0].mxu0
      %v8520 = vadd.f32 %v8275, %v8519
      %v8521 = vpop.f32.mrb[0].mxu0
      %v8522 = vpop.f32.mrb[0].mxu0
      %v8523 = vadd.f32 %v8275, %v8522
      %v8524 = vpop.f32.mrb[0].mxu0
      %8525 = vmatprep.mubr.bf16.mxu0 0
      %8526 = vmatmul.mubr.bf16.gmra.mrb[0].mxu0 %v8339
      %v8527 = vpop.f32.mrb[0].mxu0
      %v8528 = vadd.f32 %v8275, %v8527
      %v8529 = vpop.f32.mrb[0].mxu0
      %v8530 = vpop.f32.mrb[0].mxu0
      %v8531 = vadd.f32 %v8275, %v8530
      %v8532 = vpop.f32.mrb[0].mxu0
      %8533 = vmatprep.mubr.bf16.mxu0 0
      %8534 = vmatmul.mubr.bf16.gmra.mrb[0].mxu0 %v8342
      %v8535 = vpop.f32.mrb[0].mxu0
      %v8536 = vadd.f32 %v8275, %v8535
      %v8537 = vpop.f32.mrb[0].mxu0
      %v8538 = vpop.f32.mrb[0].mxu0
      %v8539 = vadd.f32 %v8275, %v8538
      %v8540 = vpop.f32.mrb[0].mxu0
      %8541 = vmatprep.mubr.bf16.mxu0 0
      %8542 = vmatmul.mubr.bf16.gmra.mrb[0].mxu0 %v8345
      %v8543 = vpop.f32.mrb[0].mxu0
      %v8544 = vadd.f32 %v8275, %v8543
      %v8545 = vpop.f32.mrb[0].mxu0
      %v8546 = vpop.f32.mrb[0].mxu0
      %v8547 = vadd.f32 %v8275, %v8546
      %v8548 = vpop.f32.mrb[0].mxu0
      %8549 = vmatprep.mubr.bf16.mxu0 0
      %8550 = vmatmul.mubr.bf16.gmra.mrb[0].mxu0 %v8348
      %v8551 = vpop.f32.mrb[0].mxu0
      %v8552 = vadd.f32 %v8275, %v8551
      %v8553 = vpop.f32.mrb[0].mxu0
      %v8554 = vpop.f32.mrb[0].mxu0
      %v8555 = vadd.f32 %v8275, %v8554
      %v8556 = vpop.f32.mrb[0].mxu0
      %8557 = vmatprep.mubr.bf16.mxu0 0
      %8558 = vmatmul.mubr.bf16.gmra.mrb[0].mxu0 %v8351
      %v8559 = vpop.f32.mrb[0].mxu0
      %v8560 = vadd.f32 %v8275, %v8559
      %v8561 = vpop.f32.mrb[0].mxu0
      %v8562 = vpop.f32.mrb[0].mxu0
      %v8563 = vadd.f32 %v8275, %v8562
      %v8564 = vpop.f32.mrb[0].mxu0
      %8565 = vmatprep.mubr.bf16.mxu0 0
      %8566 = vmatmul.mubr.bf16.gmra.mrb[0].mxu0 %v8354
      %v8567 = vpop.f32.mrb[0].mxu0
      %v8568 = vadd.f32 %v8275, %v8567
      %v8569 = vpop.f32.mrb[0].mxu0
      %v8570 = vpop.f32.mrb[0].mxu0
      %v8571 = vadd.f32 %v8275, %v8570
      %v8572 = vpop.f32.mrb[0].mxu0
      %8573 = vmatprep.mubr.bf16.mxu0 0
      %8574 = vmatmul.mubr.bf16.gmra.mrb[0].mxu0 %v8357
      %v8575 = vpop.f32.mrb[0].mxu0
      %v8576 = vadd.f32 %v8275, %v8575
      %v8577 = vpop.f32.mrb[0].mxu0
      %v8578 = vpop.f32.mrb[0].mxu0
      %v8579 = vadd.f32 %v8275, %v8578
      %v8580 = vpop.f32.mrb[0].mxu0
      %8581 = vmatprep.mubr.bf16.mxu0 0
      %8582 = vmatmul.mubr.bf16.gmra.mrb[0].mxu0 %v8360
      %v8583 = vpop.f32.mrb[0].mxu0
      %v8584 = vadd.f32 %v8275, %v8583
      %v8585 = vpop.f32.mrb[0].mxu0
      %v8586 = vpop.f32.mrb[0].mxu0
      %v8587 = vadd.f32 %v8275, %v8586
      %v8588 = vpop.f32.mrb[0].mxu0
      %8589 = vmatprep.mubr.bf16.mxu0 0
      %8590 = vmatmul.mubr.bf16.gmra.mrb[0].mxu0 %v8363
      %v8591 = vpop.f32.mrb[0].mxu0
      %v8592 = vadd.f32 %v8275, %v8591
      %v8593 = vpop.f32.mrb[0].mxu0
      %v8594 = vpop.f32.mrb[0].mxu0
      %v8595 = vadd.f32 %v8275, %v8594
      %v8596 = vpop.f32.mrb[0].mxu0
      %8597 = vmatprep.mubr.bf16.mxu0 0
      %8598 = vmatmul.mubr.bf16.gmra.mrb[0].mxu0 %v8366
      %v8599 = vpop.f32.mrb[0].mxu0
      %v8600 = vadd.f32 %v8275, %v8599
      %v8601 = vpop.f32.mrb[0].mxu0
      %v8602 = vpop.f32.mrb[0].mxu0
      %v8603 = vadd.f32 %v8275, %v8602
      %v8604 = vpop.f32.mrb[0].mxu0
      %8605 = vmatprep.mubr.bf16.mxu0 0
      %8606 = vmatmul.mubr.bf16.gmra.mrb[0].mxu0 %v8369
      %v8607 = vpop.f32.mrb[0].mxu0
      %v8608 = vadd.f32 %v8275, %v8607
      %v8609 = vpop.f32.mrb[0].mxu0
      %v8610 = vpop.f32.mrb[0].mxu0
      %v8611 = vadd.f32 %v8275, %v8610
      %v8612 = vpop.f32.mrb[0].mxu0
      %8613 = vmatprep.mubr.bf16.mxu0 0
      %8614 = vmatmul.mubr.bf16.gmra.mrb[0].mxu0 %v8372
      %v8615 = vpop.f32.mrb[0].mxu0
      %v8616 = vadd.f32 %v8275, %v8615
      %v8617 = vpop.f32.mrb[0].mxu0
      %v8618 = vpop.f32.mrb[0].mxu0
      %v8619 = vadd.f32 %v8275, %v8618
      %v8620 = vpop.f32.mrb[0].mxu0
      %8621 = vmatprep.mubr.bf16.mxu0 0
      %8622 = vmatmul.mubr.bf16.gmra.mrb[0].mxu0 %v8375
      %v8623 = vpop.f32.mrb[0].mxu0
      %v8624 = vadd.f32 %v8275, %v8623
      %v8625 = vpop.f32.mrb[0].mxu0
      %v8626 = vpop.f32.mrb[0].mxu0
      %v8627 = vadd.f32 %v8275, %v8626
      %v8628 = vpop.f32.mrb[0].mxu0
      %8629 = vmatprep.mubr.bf16.mxu0 0
      %8630 = vmatmul.mubr.bf16.gmra.mrb[0].mxu0 %v8378
      %v8631 = vpop.f32.mrb[0].mxu0
      %v8632 = vadd.f32 %v8275, %v8631
      %v8633 = vpop.f32.mrb[0].mxu0
      %v8634 = vpop.f32.mrb[0].mxu0
      %v8635 = vadd.f32 %v8275, %v8634
      %v8636 = vpop.f32.mrb[0].mxu0
      %8637 = vmatprep.mubr.bf16.mxu0 0
      %8638 = vmatmul.mubr.bf16.gmra.mrb[0].mxu0 %v8381
      %v8639 = vpop.f32.mrb[0].mxu0
      %v8640 = vadd.f32 %v8275, %v8639
      %v8641 = vpop.f32.mrb[0].mxu0
      %v8642 = vpop.f32.mrb[0].mxu0
      %v8643 = vadd.f32 %v8275, %v8642
      %v8644 = vpop.f32.mrb[0].mxu0
      %8645 = vmatprep.mubr.bf16.mxu0 0
      %8646 = vmatmul.mubr.bf16.gmra.mrb[0].mxu0 %v8384
      %v8647 = vpop.f32.mrb[0].mxu0
      %v8648 = vadd.f32 %v8275, %v8647
      %v8649 = vpop.f32.mrb[0].mxu0
      %v8650 = vpop.f32.mrb[0].mxu0
      %v8651 = vadd.f32 %v8275, %v8650
      %v8652 = vpop.f32.mrb[0].mxu0
      %8653 = vmatprep.mubr.bf16.mxu0 0
      %8654 = vmatmul.mubr.bf16.gmra.mrb[0].mxu0 %v8387
      %v8655 = vpop.f32.mrb[0].mxu0
      %v8656 = vadd.f32 %v8275, %v8655
      %v8657 = vpop.f32.mrb[0].mxu0
      %v8658 = vpop.f32.mrb[0].mxu0
      %v8659 = vadd.f32 %v8275, %v8658
      %v8660 = vpop.f32.mrb[0].mxu0
      %8661 = vmatprep.mubr.bf16.mxu0 0
      %8662 = vmatmul.mubr.bf16.gmra.mrb[0].mxu0 %v8390
      %v8663 = vpop.f32.mrb[0].mxu0
      %v8664 = vadd.f32 %v8275, %v8663
      %v8665 = vpop.f32.mrb[0].mxu0
      %v8666 = vpop.f32.mrb[0].mxu0
      %v8667 = vadd.f32 %v8275, %v8666
      %v8668 = vpop.f32.mrb[0].mxu0
      %8669 = vmatprep.mubr.bf16.mxu0 0
      %8670 = vmatmul.mubr.bf16.gmra.mrb[0].mxu0 %v8393
      %v8671 = vpop.f32.mrb[0].mxu0
      %v8672 = vadd.f32 %v8275, %v8671
      %v8673 = vpop.f32.mrb[0].mxu0
      %v8674 = vpop.f32.mrb[0].mxu0
      %v8675 = vadd.f32 %v8275, %v8674
      %v8676 = vpop.f32.mrb[0].mxu0
      %8677 = vmatprep.mubr.bf16.mxu0 0
      %8678 = vmatmul.mubr.bf16.gmra.mrb[0].mxu0 %v8396
      %v8679 = vpop.f32.mrb[0].mxu0
      %v8680 = vadd.f32 %v8275, %v8679
      %v8681 = vpop.f32.mrb[0].mxu0
      %v8682 = vpop.f32.mrb[0].mxu0
      %v8683 = vadd.f32 %v8275, %v8682
      %v8684 = vpop.f32.mrb[0].mxu0
      %8685 = vmatprep.mubr.bf16.mxu0 0
      %8686 = vmatmul.mubr.bf16.gmra.mrb[0].mxu0 %v8399
      %v8687 = vpop.f32.mrb[0].mxu0
      %v8688 = vadd.f32 %v8275, %v8687
      %v8689 = vpop.f32.mrb[0].mxu0
      %v8690 = vpop.f32.mrb[0].mxu0
      %v8691 = vadd.f32 %v8275, %v8690
      %v8692 = vpop.f32.mrb[0].mxu0
      %8693 = vdwg.mxu0
      %vm8694 = vcmp.ge.f32.partialorder %v8440, 0.0
      %vm8695 = vcmp.ge.f32.partialorder %v8443, 0.0
      %vm8696 = vcmp.ge.f32.partialorder %v8448, 0.0
      %vm8697 = vcmp.ge.f32.partialorder %v8451, 0.0
      %vm8698 = vcmp.ge.f32.partialorder %v8456, 0.0
      %vm8699 = vcmp.ge.f32.partialorder %v8459, 0.0
      %vm8700 = vcmp.ge.f32.partialorder %v8464, 0.0
      %vm8701 = vcmp.ge.f32.partialorder %v8467, 0.0
      %vm8702 = vcmp.ge.f32.partialorder %v8472, 0.0
      %vm8703 = vcmp.ge.f32.partialorder %v8475, 0.0
      %vm8704 = vcmp.ge.f32.partialorder %v8480, 0.0
      %vm8705 = vcmp.ge.f32.partialorder %v8483, 0.0
      %vm8706 = vcmp.ge.f32.partialorder %v8488, 0.0
      %vm8707 = vcmp.ge.f32.partialorder %v8491, 0.0
      %vm8708 = vcmp.ge.f32.partialorder %v8496, 0.0
      %vm8709 = vcmp.ge.f32.partialorder %v8499, 0.0
      %vm8710 = vcmp.ge.f32.partialorder %v8504, 0.0
      %vm8711 = vcmp.ge.f32.partialorder %v8507, 0.0
      %vm8712 = vcmp.ge.f32.partialorder %v8512, 0.0
      %vm8713 = vcmp.ge.f32.partialorder %v8515, 0.0
      %vm8714 = vcmp.ge.f32.partialorder %v8520, 0.0
      %vm8715 = vcmp.ge.f32.partialorder %v8523, 0.0
      %vm8716 = vcmp.ge.f32.partialorder %v8528, 0.0
      %vm8717 = vcmp.ge.f32.partialorder %v8531, 0.0
      %vm8718 = vcmp.ge.f32.partialorder %v8536, 0.0
      %vm8719 = vcmp.ge.f32.partialorder %v8539, 0.0
      %vm8720 = vcmp.ge.f32.partialorder %v8544, 0.0
      %vm8721 = vcmp.ge.f32.partialorder %v8547, 0.0
      %vm8722 = vcmp.ge.f32.partialorder %v8552, 0.0
      %vm8723 = vcmp.ge.f32.partialorder %v8555, 0.0
      %vm8724 = vcmp.ge.f32.partialorder %v8560, 0.0
      %vm8725 = vcmp.ge.f32.partialorder %v8563, 0.0
      %vm8726 = vcmp.ge.f32.partialorder %v8568, 0.0
      %vm8727 = vcmp.ge.f32.partialorder %v8571, 0.0
      %vm8728 = vcmp.ge.f32.partialorder %v8576, 0.0
      %vm8729 = vcmp.ge.f32.partialorder %v8579, 0.0
      %vm8730 = vcmp.ge.f32.partialorder %v8584, 0.0
      %vm8731 = vcmp.ge.f32.partialorder %v8587, 0.0
      %vm8732 = vcmp.ge.f32.partialorder %v8592, 0.0
      %vm8733 = vcmp.ge.f32.partialorder %v8595, 0.0
      %vm8734 = vcmp.ge.f32.partialorder %v8600, 0.0
      %vm8735 = vcmp.ge.f32.partialorder %v8603, 0.0
      %vm8736 = vcmp.ge.f32.partialorder %v8608, 0.0
      %vm8737 = vcmp.ge.f32.partialorder %v8611, 0.0
      %vm8738 = vcmp.ge.f32.partialorder %v8616, 0.0
      %vm8739 = vcmp.ge.f32.partialorder %v8619, 0.0
      %vm8740 = vcmp.ge.f32.partialorder %v8624, 0.0
      %vm8741 = vcmp.ge.f32.partialorder %v8627, 0.0
      %vm8742 = vcmp.ge.f32.partialorder %v8632, 0.0
      %vm8743 = vcmp.ge.f32.partialorder %v8635, 0.0
      %vm8744 = vcmp.ge.f32.partialorder %v8640, 0.0
      %vm8745 = vcmp.ge.f32.partialorder %v8643, 0.0
      %vm8746 = vcmp.ge.f32.partialorder %v8648, 0.0
      %vm8747 = vcmp.ge.f32.partialorder %v8651, 0.0
      %vm8748 = vcmp.ge.f32.partialorder %v8656, 0.0
      %vm8749 = vcmp.ge.f32.partialorder %v8659, 0.0
      %vm8750 = vcmp.ge.f32.partialorder %v8664, 0.0
      %vm8751 = vcmp.ge.f32.partialorder %v8667, 0.0
      %vm8752 = vcmp.ge.f32.partialorder %v8672, 0.0
      %vm8753 = vcmp.ge.f32.partialorder %v8675, 0.0
      %vm8754 = vcmp.ge.f32.partialorder %v8680, 0.0
      %vm8755 = vcmp.ge.f32.partialorder %v8683, 0.0
      %vm8756 = vcmp.ge.f32.partialorder %v8688, 0.0
      %vm8757 = vcmp.ge.f32.partialorder %v8691, 0.0
      %v8758 = vmul.f32 %v8440, 0.2
      %v8759 = vmul.f32 %v8443, 0.2
      %v8760 = vmul.f32 %v8448, 0.2
      %v8761 = vmul.f32 %v8451, 0.2
      %v8762 = vmul.f32 %v8456, 0.2
      %v8763 = vmul.f32 %v8459, 0.2
      %v8764 = vmul.f32 %v8464, 0.2
      %v8765 = vmul.f32 %v8467, 0.2
      %v8766 = vmul.f32 %v8472, 0.2
      %v8767 = vmul.f32 %v8475, 0.2
      %v8768 = vmul.f32 %v8480, 0.2
      %v8769 = vmul.f32 %v8483, 0.2
      %v8770 = vmul.f32 %v8488, 0.2
      %v8771 = vmul.f32 %v8491, 0.2
      %v8772 = vmul.f32 %v8496, 0.2
      %v8773 = vmul.f32 %v8499, 0.2
      %v8774 = vmul.f32 %v8504, 0.2
      %v8775 = vmul.f32 %v8507, 0.2
      %v8776 = vmul.f32 %v8512, 0.2
      %v8777 = vmul.f32 %v8515, 0.2
      %v8778 = vmul.f32 %v8520, 0.2
      %v8779 = vmul.f32 %v8523, 0.2
      %v8780 = vmul.f32 %v8528, 0.2
      %v8781 = vmul.f32 %v8531, 0.2
      %v8782 = vmul.f32 %v8536, 0.2
      %v8783 = vmul.f32 %v8539, 0.2
      %v8784 = vmul.f32 %v8544, 0.2
      %v8785 = vmul.f32 %v8547, 0.2
      %v8786 = vmul.f32 %v8552, 0.2
      %v8787 = vmul.f32 %v8555, 0.2
      %v8788 = vmul.f32 %v8560, 0.2
      %v8789 = vmul.f32 %v8563, 0.2
      %v8790 = vmul.f32 %v8568, 0.2
      %v8791 = vmul.f32 %v8571, 0.2
      %v8792 = vmul.f32 %v8576, 0.2
      %v8793 = vmul.f32 %v8579, 0.2
      %v8794 = vmul.f32 %v8584, 0.2
      %v8795 = vmul.f32 %v8587, 0.2
      %v8796 = vmul.f32 %v8592, 0.2
      %v8797 = vmul.f32 %v8595, 0.2
      %v8798 = vmul.f32 %v8600, 0.2
      %v8799 = vmul.f32 %v8603, 0.2
      %v8800 = vmul.f32 %v8608, 0.2
      %v8801 = vmul.f32 %v8611, 0.2
      %v8802 = vmul.f32 %v8616, 0.2
      %v8803 = vmul.f32 %v8619, 0.2
      %v8804 = vmul.f32 %v8624, 0.2
      %v8805 = vmul.f32 %v8627, 0.2
      %v8806 = vmul.f32 %v8632, 0.2
      %v8807 = vmul.f32 %v8635, 0.2
      %v8808 = vmul.f32 %v8640, 0.2
      %v8809 = vmul.f32 %v8643, 0.2
      %v8810 = vmul.f32 %v8648, 0.2
      %v8811 = vmul.f32 %v8651, 0.2
      %v8812 = vmul.f32 %v8656, 0.2
      %v8813 = vmul.f32 %v8659, 0.2
      %v8814 = vmul.f32 %v8664, 0.2
      %v8815 = vmul.f32 %v8667, 0.2
      %v8816 = vmul.f32 %v8672, 0.2
      %v8817 = vmul.f32 %v8675, 0.2
      %v8818 = vmul.f32 %v8680, 0.2
      %v8819 = vmul.f32 %v8683, 0.2
      %v8820 = vmul.f32 %v8688, 0.2
      %v8821 = vmul.f32 %v8691, 0.2
      %v8822 = vsel %vm8694, %v8440, %v8758
      %v8823 = vsel %vm8695, %v8443, %v8759
      %v8824 = vsel %vm8696, %v8448, %v8760
      %v8825 = vsel %vm8697, %v8451, %v8761
      %v8826 = vsel %vm8698, %v8456, %v8762
      %v8827 = vsel %vm8699, %v8459, %v8763
      %v8828 = vsel %vm8700, %v8464, %v8764
      %v8829 = vsel %vm8701, %v8467, %v8765
      %v8830 = vsel %vm8702, %v8472, %v8766
      %v8831 = vsel %vm8703, %v8475, %v8767
      %v8832 = vsel %vm8704, %v8480, %v8768
      %v8833 = vsel %vm8705, %v8483, %v8769
      %v8834 = vsel %vm8706, %v8488, %v8770
      %v8835 = vsel %vm8707, %v8491, %v8771
      %v8836 = vsel %vm8708, %v8496, %v8772
      %v8837 = vsel %vm8709, %v8499, %v8773
      %v8838 = vsel %vm8710, %v8504, %v8774
      %v8839 = vsel %vm8711, %v8507, %v8775
      %v8840 = vsel %vm8712, %v8512, %v8776
      %v8841 = vsel %vm8713, %v8515, %v8777
      %v8842 = vsel %vm8714, %v8520, %v8778
      %v8843 = vsel %vm8715, %v8523, %v8779
      %v8844 = vsel %vm8716, %v8528, %v8780
      %v8845 = vsel %vm8717, %v8531, %v8781
      %v8846 = vsel %vm8718, %v8536, %v8782
      %v8847 = vsel %vm8719, %v8539, %v8783
      %v8848 = vsel %vm8720, %v8544, %v8784
      %v8849 = vsel %vm8721, %v8547, %v8785
      %v8850 = vsel %vm8722, %v8552, %v8786
      %v8851 = vsel %vm8723, %v8555, %v8787
      %v8852 = vsel %vm8724, %v8560, %v8788
      %v8853 = vsel %vm8725, %v8563, %v8789
      %v8854 = vsel %vm8726, %v8568, %v8790
      %v8855 = vsel %vm8727, %v8571, %v8791
      %v8856 = vsel %vm8728, %v8576, %v8792
      %v8857 = vsel %vm8729, %v8579, %v8793
      %v8858 = vsel %vm8730, %v8584, %v8794
      %v8859 = vsel %vm8731, %v8587, %v8795
      %v8860 = vsel %vm8732, %v8592, %v8796
      %v8861 = vsel %vm8733, %v8595, %v8797
      %v8862 = vsel %vm8734, %v8600, %v8798
      %v8863 = vsel %vm8735, %v8603, %v8799
      %v8864 = vsel %vm8736, %v8608, %v8800
      %v8865 = vsel %vm8737, %v8611, %v8801
      %v8866 = vsel %vm8738, %v8616, %v8802
      %v8867 = vsel %vm8739, %v8619, %v8803
      %v8868 = vsel %vm8740, %v8624, %v8804
      %v8869 = vsel %vm8741, %v8627, %v8805
      %v8870 = vsel %vm8742, %v8632, %v8806
      %v8871 = vsel %vm8743, %v8635, %v8807
      %v8872 = vsel %vm8744, %v8640, %v8808
      %v8873 = vsel %vm8745, %v8643, %v8809
      %v8874 = vsel %vm8746, %v8648, %v8810
      %v8875 = vsel %vm8747, %v8651, %v8811
      %v8876 = vsel %vm8748, %v8656, %v8812
      %v8877 = vsel %vm8749, %v8659, %v8813
      %v8878 = vsel %vm8750, %v8664, %v8814
      %v8879 = vsel %vm8751, %v8667, %v8815
      %v8880 = vsel %vm8752, %v8672, %v8816
      %v8881 = vsel %vm8753, %v8675, %v8817
      %v8882 = vsel %vm8754, %v8680, %v8818
      %v8883 = vsel %vm8755, %v8683, %v8819
      %v8884 = vsel %vm8756, %v8688, %v8820
      %v8885 = vsel %vm8757, %v8691, %v8821
      %v8886 = vadd.f32 %v8822, %v8824
      %v8887 = vadd.f32 %v8823, %v8825
      %v8888 = vadd.f32 %v8826, %v8828
      %v8889 = vadd.f32 %v8827, %v8829
      %v8890 = vadd.f32 %v8830, %v8832
      %v8891 = vadd.f32 %v8831, %v8833
      %v8892 = vadd.f32 %v8834, %v8836
      %v8893 = vadd.f32 %v8835, %v8837
      %v8894 = vadd.f32 %v8838, %v8840
      %v8895 = vadd.f32 %v8839, %v8841
      %v8896 = vadd.f32 %v8842, %v8844
      %v8897 = vadd.f32 %v8843, %v8845
      %v8898 = vadd.f32 %v8846, %v8848
      %v8899 = vadd.f32 %v8847, %v8849
      %v8900 = vadd.f32 %v8850, %v8852
      %v8901 = vadd.f32 %v8851, %v8853
      %v8902 = vadd.f32 %v8854, %v8856
      %v8903 = vadd.f32 %v8855, %v8857
      %v8904 = vadd.f32 %v8858, %v8860
      %v8905 = vadd.f32 %v8859, %v8861
      %v8906 = vadd.f32 %v8862, %v8864
      %v8907 = vadd.f32 %v8863, %v8865
      %v8908 = vadd.f32 %v8866, %v8868
      %v8909 = vadd.f32 %v8867, %v8869
      %v8910 = vadd.f32 %v8870, %v8872
      %v8911 = vadd.f32 %v8871, %v8873
      %v8912 = vadd.f32 %v8874, %v8876
      %v8913 = vadd.f32 %v8875, %v8877
      %v8914 = vadd.f32 %v8878, %v8880
      %v8915 = vadd.f32 %v8879, %v8881
      %v8916 = vadd.f32 %v8882, %v8884
      %v8917 = vadd.f32 %v8883, %v8885
      %8918 = vst.msk [vmem:[#allocation5] sm:$0xff] %vm7775, %v8886
      %8919 = vst.msk [vmem:[#allocation5 + $0x8] sm:$0xff] %vm7775, %v8887
      %8920 = vst.msk [vmem:[#allocation5 + $0x10] sm:$0xff] %vm7775, %v8888
      %8921 = vst.msk [vmem:[#allocation5 + $0x18] sm:$0xff] %vm7775, %v8889
      %8922 = vst.msk [vmem:[#allocation5 + $0x20] sm:$0xff] %vm7775, %v8890
      %8923 = vst.msk [vmem:[#allocation5 + $0x28] sm:$0xff] %vm7775, %v8891
      %8924 = vst.msk [vmem:[#allocation5 + $0x30] sm:$0xff] %vm7775, %v8892
      %8925 = vst.msk [vmem:[#allocation5 + $0x38] sm:$0xff] %vm7775, %v8893
      %8926 = vst.msk [vmem:[#allocation5 + $0x40] sm:$0xff] %vm7775, %v8894
      %8927 = vst.msk [vmem:[#allocation5 + $0x48] sm:$0xff] %vm7775, %v8895
      %8928 = vst.msk [vmem:[#allocation5 + $0x50] sm:$0xff] %vm7775, %v8896
      %8929 = vst.msk [vmem:[#allocation5 + $0x58] sm:$0xff] %vm7775, %v8897
      %8930 = vst.msk [vmem:[#allocation5 + $0x60] sm:$0xff] %vm7775, %v8898
      %8931 = vst.msk [vmem:[#allocation5 + $0x68] sm:$0xff] %vm7775, %v8899
      %8932 = vst.msk [vmem:[#allocation5 + $0x70] sm:$0xff] %vm7775, %v8900
      %8933 = vst.msk [vmem:[#allocation5 + $0x78] sm:$0xff] %vm7775, %v8901
      %8934 = vst.msk [vmem:[#allocation5 + $0x80] sm:$0xff] %vm7775, %v8902
      %8935 = vst.msk [vmem:[#allocation5 + $0x88] sm:$0xff] %vm7775, %v8903
      %8936 = vst.msk [vmem:[#allocation5 + $0x90] sm:$0xff] %vm7775, %v8904
      %8937 = vst.msk [vmem:[#allocation5 + $0x98] sm:$0xff] %vm7775, %v8905
      %8938 = vst.msk [vmem:[#allocation5 + $0xa0] sm:$0xff] %vm7775, %v8906
      %8939 = vst.msk [vmem:[#allocation5 + $0xa8] sm:$0xff] %vm7775, %v8907
      %8940 = vst.msk [vmem:[#allocation5 + $0xb0] sm:$0xff] %vm7775, %v8908
      %8941 = vst.msk [vmem:[#allocation5 + $0xb8] sm:$0xff] %vm7775, %v8909
      %8942 = vst.msk [vmem:[#allocation5 + $0xc0] sm:$0xff] %vm7775, %v8910
      %8943 = vst.msk [vmem:[#allocation5 + $0xc8] sm:$0xff] %vm7775, %v8911
      %8944 = vst.msk [vmem:[#allocation5 + $0xd0] sm:$0xff] %vm7775, %v8912
      %8945 = vst.msk [vmem:[#allocation5 + $0xd8] sm:$0xff] %vm7775, %v8913
      %8946 = vst.msk [vmem:[#allocation5 + $0xe0] sm:$0xff] %vm7775, %v8914
      %8947 = vst.msk [vmem:[#allocation5 + $0xe8] sm:$0xff] %vm7775, %v8915
      %8948 = vst.msk [vmem:[#allocation5 + $0xf0] sm:$0xff] %vm7775, %v8916
      %8949 = vst.msk [vmem:[#allocation5 + $0xf8] sm:$0xff] %vm7775, %v8917
      %v8950 = vld [vmem:[#allocation5] ss:$2 sm:$0xff]
      %s8951 = scalar_lea.vmem [#allocation5], 16
      %v8952 = vld [vmem:[%s8951] ss:$2 sm:$0xff]
      %s8953 = scalar_lea.vmem [#allocation5], 32
      %v8954 = vld [vmem:[%s8953] ss:$2 sm:$0xff]
      %s8955 = scalar_lea.vmem [#allocation5], 48
      %v8956 = vld [vmem:[%s8955] ss:$2 sm:$0xff]
      %s8957 = scalar_lea.vmem [#allocation5], 64
      %v8958 = vld [vmem:[%s8957] ss:$2 sm:$0xff]
      %s8959 = scalar_lea.vmem [#allocation5], 80
      %v8960 = vld [vmem:[%s8959] ss:$2 sm:$0xff]
      %s8961 = scalar_lea.vmem [#allocation5], 96
      %v8962 = vld [vmem:[%s8961] ss:$2 sm:$0xff]
      %s8963 = scalar_lea.vmem [#allocation5], 112
      %v8964 = vld [vmem:[%s8963] ss:$2 sm:$0xff]
      %s8965 = scalar_lea.vmem [#allocation5], 128
      %v8966 = vld [vmem:[%s8965] ss:$2 sm:$0xff]
      %s8967 = scalar_lea.vmem [#allocation5], 144
      %v8968 = vld [vmem:[%s8967] ss:$2 sm:$0xff]
      %s8969 = scalar_lea.vmem [#allocation5], 160
      %v8970 = vld [vmem:[%s8969] ss:$2 sm:$0xff]
      %s8971 = scalar_lea.vmem [#allocation5], 176
      %v8972 = vld [vmem:[%s8971] ss:$2 sm:$0xff]
      %s8973 = scalar_lea.vmem [#allocation5], 192
      %v8974 = vld [vmem:[%s8973] ss:$2 sm:$0xff]
      %s8975 = scalar_lea.vmem [#allocation5], 208
      %v8976 = vld [vmem:[%s8975] ss:$2 sm:$0xff]
      %s8977 = scalar_lea.vmem [#allocation5], 224
      %v8978 = vld [vmem:[%s8977] ss:$2 sm:$0xff]
      %s8979 = scalar_lea.vmem [#allocation5], 240
      %v8980 = vld [vmem:[%s8979] ss:$2 sm:$0xff]
      %s8981 = scalar_lea.vmem [#allocation5], 1
      %v8982 = vld [vmem:[%s8981] ss:$2 sm:$0xff]
      %s8983 = scalar_lea.vmem [#allocation5], 17
      %v8984 = vld [vmem:[%s8983] ss:$2 sm:$0xff]
      %s8985 = scalar_lea.vmem [#allocation5], 33
      %v8986 = vld [vmem:[%s8985] ss:$2 sm:$0xff]
      %s8987 = scalar_lea.vmem [#allocation5], 49
      %v8988 = vld [vmem:[%s8987] ss:$2 sm:$0xff]
      %s8989 = scalar_lea.vmem [#allocation5], 65
      %v8990 = vld [vmem:[%s8989] ss:$2 sm:$0xff]
      %s8991 = scalar_lea.vmem [#allocation5], 81
      %v8992 = vld [vmem:[%s8991] ss:$2 sm:$0xff]
      %s8993 = scalar_lea.vmem [#allocation5], 97
      %v8994 = vld [vmem:[%s8993] ss:$2 sm:$0xff]
      %s8995 = scalar_lea.vmem [#allocation5], 113
      %v8996 = vld [vmem:[%s8995] ss:$2 sm:$0xff]
      %s8997 = scalar_lea.vmem [#allocation5], 129
      %v8998 = vld [vmem:[%s8997] ss:$2 sm:$0xff]
      %s8999 = scalar_lea.vmem [#allocation5], 145
      %v9000 = vld [vmem:[%s8999] ss:$2 sm:$0xff]
      %s9001 = scalar_lea.vmem [#allocation5], 161
      %v9002 = vld [vmem:[%s9001] ss:$2 sm:$0xff]
      %s9003 = scalar_lea.vmem [#allocation5], 177
      %v9004 = vld [vmem:[%s9003] ss:$2 sm:$0xff]
      %s9005 = scalar_lea.vmem [#allocation5], 193
      %v9006 = vld [vmem:[%s9005] ss:$2 sm:$0xff]
      %s9007 = scalar_lea.vmem [#allocation5], 209
      %v9008 = vld [vmem:[%s9007] ss:$2 sm:$0xff]
      %s9009 = scalar_lea.vmem [#allocation5], 225
      %v9010 = vld [vmem:[%s9009] ss:$2 sm:$0xff]
      %s9011 = scalar_lea.vmem [#allocation5], 241
      %v9012 = vld [vmem:[%s9011] ss:$2 sm:$0xff]
      %v9013 = vadd.f32 %v8950, %v8982
      %v9014 = vadd.f32 %v8952, %v8984
      %v9015 = vadd.f32 %v8954, %v8986
      %v9016 = vadd.f32 %v8956, %v8988
      %v9017 = vadd.f32 %v8958, %v8990
      %v9018 = vadd.f32 %v8960, %v8992
      %v9019 = vadd.f32 %v8962, %v8994
      %v9020 = vadd.f32 %v8964, %v8996
      %v9021 = vadd.f32 %v8966, %v8998
      %v9022 = vadd.f32 %v8968, %v9000
      %v9023 = vadd.f32 %v8970, %v9002
      %v9024 = vadd.f32 %v8972, %v9004
      %v9025 = vadd.f32 %v8974, %v9006
      %v9026 = vadd.f32 %v8976, %v9008
      %v9027 = vadd.f32 %v8978, %v9010
      %v9028 = vadd.f32 %v8980, %v9012
      %v9029 = vmul.f32 %v9013, 0.25
      %v9030 = vmul.f32 %v9014, 0.25
      %v9031 = vmul.f32 %v9015, 0.25
      %v9032 = vmul.f32 %v9016, 0.25
      %v9033 = vmul.f32 %v9017, 0.25
      %v9034 = vmul.f32 %v9018, 0.25
      %v9035 = vmul.f32 %v9019, 0.25
      %v9036 = vmul.f32 %v9020, 0.25
      %v9037 = vmul.f32 %v9021, 0.25
      %v9038 = vmul.f32 %v9022, 0.25
      %v9039 = vmul.f32 %v9023, 0.25
      %v9040 = vmul.f32 %v9024, 0.25
      %v9041 = vmul.f32 %v9025, 0.25
      %v9042 = vmul.f32 %v9026, 0.25
      %v9043 = vmul.f32 %v9027, 0.25
      %v9044 = vmul.f32 %v9028, 0.25
      %v9045 = vsel %vm7775, %v9029, 0.0
      %v9046 = vsel %vm7775, %v9030, 0.0
      %v9047 = vadd.f32 %v9045, %v9046
      %v9048 = vsel %vm7775, %v9031, 0.0
      %v9049 = vadd.f32 %v9047, %v9048
      %v9050 = vsel %vm7775, %v9032, 0.0
      %v9051 = vadd.f32 %v9049, %v9050
      %v9052 = vsel %vm7775, %v9033, 0.0
      %v9053 = vadd.f32 %v9051, %v9052
      %v9054 = vsel %vm7775, %v9034, 0.0
      %v9055 = vadd.f32 %v9053, %v9054
      %v9056 = vsel %vm7775, %v9035, 0.0
      %v9057 = vadd.f32 %v9055, %v9056
      %v9058 = vsel %vm7775, %v9036, 0.0
      %v9059 = vadd.f32 %v9057, %v9058
      %v9060 = vrot.slane %v9059, 4
      %v9061 = vadd.f32 %v9059, %v9060
      %v9062 = vrot.slane %v9061, 2
      %v9063 = vadd.f32 %v9061, %v9062
      %v9064 = vrot.slane %v9063, 1
      %v9065 = vadd.f32 %v9063, %v9064
      %v9066 = vsel %vm7775, %v9037, 0.0
      %v9067 = vsel %vm7775, %v9038, 0.0
      %v9068 = vadd.f32 %v9066, %v9067
      %v9069 = vsel %vm7775, %v9039, 0.0
      %v9070 = vadd.f32 %v9068, %v9069
      %v9071 = vsel %vm7775, %v9040, 0.0
      %v9072 = vadd.f32 %v9070, %v9071
      %v9073 = vsel %vm7775, %v9041, 0.0
      %v9074 = vadd.f32 %v9072, %v9073
      %v9075 = vsel %vm7775, %v9042, 0.0
      %v9076 = vadd.f32 %v9074, %v9075
      %v9077 = vsel %vm7775, %v9043, 0.0
      %v9078 = vadd.f32 %v9076, %v9077
      %v9079 = vsel %vm7775, %v9044, 0.0
      %v9080 = vadd.f32 %v9078, %v9079
      %v9081 = vrot.slane %v9080, 4
      %v9082 = vadd.f32 %v9080, %v9081
      %v9083 = vrot.slane %v9082, 2
      %v9084 = vadd.f32 %v9082, %v9083
      %v9085 = vrot.slane %v9084, 1
      %v9086 = vadd.f32 %v9084, %v9085
      %v9087 = vmul.f32 %v9065, 0.015625
      %v9088 = vmul.f32 %v9086, 0.015625
      %v9089 = vmul.f32 %v9029, %v9029
      %v9090 = vmul.f32 %v9030, %v9030
      %v9091 = vmul.f32 %v9031, %v9031
      %v9092 = vmul.f32 %v9032, %v9032
      %v9093 = vmul.f32 %v9033, %v9033
      %v9094 = vmul.f32 %v9034, %v9034
      %v9095 = vmul.f32 %v9035, %v9035
      %v9096 = vmul.f32 %v9036, %v9036
      %v9097 = vmul.f32 %v9037, %v9037
      %v9098 = vmul.f32 %v9038, %v9038
      %v9099 = vmul.f32 %v9039, %v9039
      %v9100 = vmul.f32 %v9040, %v9040
      %v9101 = vmul.f32 %v9041, %v9041
      %v9102 = vmul.f32 %v9042, %v9042
      %v9103 = vmul.f32 %v9043, %v9043
      %v9104 = vmul.f32 %v9044, %v9044
      %v9105 = vsel %vm7775, %v9089, 0.0
      %v9106 = vsel %vm7775, %v9090, 0.0
      %v9107 = vadd.f32 %v9105, %v9106
      %v9108 = vsel %vm7775, %v9091, 0.0
      %v9109 = vadd.f32 %v9107, %v9108
      %v9110 = vsel %vm7775, %v9092, 0.0
      %v9111 = vadd.f32 %v9109, %v9110
      %v9112 = vsel %vm7775, %v9093, 0.0
      %v9113 = vadd.f32 %v9111, %v9112
      %v9114 = vsel %vm7775, %v9094, 0.0
      %v9115 = vadd.f32 %v9113, %v9114
      %v9116 = vsel %vm7775, %v9095, 0.0
      %v9117 = vadd.f32 %v9115, %v9116
      %v9118 = vsel %vm7775, %v9096, 0.0
      %v9119 = vadd.f32 %v9117, %v9118
      %v9120 = vrot.slane %v9119, 4
      %v9121 = vadd.f32 %v9119, %v9120
      %v9122 = vrot.slane %v9121, 2
      %v9123 = vadd.f32 %v9121, %v9122
      %v9124 = vrot.slane %v9123, 1
      %v9125 = vadd.f32 %v9123, %v9124
      %v9126 = vsel %vm7775, %v9097, 0.0
      %v9127 = vsel %vm7775, %v9098, 0.0
      %v9128 = vadd.f32 %v9126, %v9127
      %v9129 = vsel %vm7775, %v9099, 0.0
      %v9130 = vadd.f32 %v9128, %v9129
      %v9131 = vsel %vm7775, %v9100, 0.0
      %v9132 = vadd.f32 %v9130, %v9131
      %v9133 = vsel %vm7775, %v9101, 0.0
      %v9134 = vadd.f32 %v9132, %v9133
      %v9135 = vsel %vm7775, %v9102, 0.0
      %v9136 = vadd.f32 %v9134, %v9135
      %v9137 = vsel %vm7775, %v9103, 0.0
      %v9138 = vadd.f32 %v9136, %v9137
      %v9139 = vsel %vm7775, %v9104, 0.0
      %v9140 = vadd.f32 %v9138, %v9139
      %v9141 = vrot.slane %v9140, 4
      %v9142 = vadd.f32 %v9140, %v9141
      %v9143 = vrot.slane %v9142, 2
      %v9144 = vadd.f32 %v9142, %v9143
      %v9145 = vrot.slane %v9144, 1
      %v9146 = vadd.f32 %v9144, %v9145
      %v9147 = vmul.f32 %v9125, 0.015625
      %v9148 = vmul.f32 %v9146, 0.015625
      %v9149 = vmul.f32 %v9087, %v9087
      %v9150 = vmul.f32 %v9088, %v9088
      %v9151 = vsub.f32 %v9147, %v9149
      %v9152 = vsub.f32 %v9148, %v9150
      %v9153 = vmax.f32 %v9151, 0.0
      %v9154 = vmax.f32 %v9152, 0.0
      %v9155 = vsub.f32 %v9029, %v9087
      %v9156 = vsub.f32 %v9030, %v9087
      %v9157 = vsub.f32 %v9031, %v9087
      %v9158 = vsub.f32 %v9032, %v9087
      %v9159 = vsub.f32 %v9033, %v9087
      %v9160 = vsub.f32 %v9034, %v9087
      %v9161 = vsub.f32 %v9035, %v9087
      %v9162 = vsub.f32 %v9036, %v9087
      %v9163 = vsub.f32 %v9037, %v9088
      %v9164 = vsub.f32 %v9038, %v9088
      %v9165 = vsub.f32 %v9039, %v9088
      %v9166 = vsub.f32 %v9040, %v9088
      %v9167 = vsub.f32 %v9041, %v9088
      %v9168 = vsub.f32 %v9042, %v9088
      %v9169 = vsub.f32 %v9043, %v9088
      %v9170 = vsub.f32 %v9044, %v9088
      %v9171 = vadd.f32 %v9153, 1e-05
      %v9172 = vadd.f32 %v9154, 1e-05
      %v9173 = vrsqrt.pop %v9171
      %v9174 = vrsqrt.pop %v9172
      %v9175 = vmul.f32 %v9155, %v9173
      %v9176 = vmul.f32 %v9156, %v9173
      %v9177 = vmul.f32 %v9157, %v9173
      %v9178 = vmul.f32 %v9158, %v9173
      %v9179 = vmul.f32 %v9159, %v9173
      %v9180 = vmul.f32 %v9160, %v9173
      %v9181 = vmul.f32 %v9161, %v9173
      %v9182 = vmul.f32 %v9162, %v9173
      %v9183 = vmul.f32 %v9163, %v9174
      %v9184 = vmul.f32 %v9164, %v9174
      %v9185 = vmul.f32 %v9165, %v9174
      %v9186 = vmul.f32 %v9166, %v9174
      %v9187 = vmul.f32 %v9167, %v9174
      %v9188 = vmul.f32 %v9168, %v9174
      %v9189 = vmul.f32 %v9169, %v9174
      %v9190 = vmul.f32 %v9170, %v9174
      %v9191 = vld [vmem:[%s7] sm:$0x1]
      %v9193 = vlaneseq
      %v9194 = vshrl.u32 %v9193, 7
      %v9195 = vsub.s32 0, %v9194
      %v9196 = vrot.slane %v9191, %v9195
      %v9198 = vmul.f32 %v9175, %v9196
      %v9199 = vmul.f32 %v9176, %v9196
      %v9200 = vmul.f32 %v9177, %v9196
      %v9201 = vmul.f32 %v9178, %v9196
      %v9202 = vmul.f32 %v9179, %v9196
      %v9203 = vmul.f32 %v9180, %v9196
      %v9204 = vmul.f32 %v9181, %v9196
      %v9205 = vmul.f32 %v9182, %v9196
      %v9206 = vmul.f32 %v9183, %v9196
      %v9207 = vmul.f32 %v9184, %v9196
      %v9208 = vmul.f32 %v9185, %v9196
      %v9209 = vmul.f32 %v9186, %v9196
      %v9210 = vmul.f32 %v9187, %v9196
      %v9211 = vmul.f32 %v9188, %v9196
      %v9212 = vmul.f32 %v9189, %v9196
      %v9213 = vmul.f32 %v9190, %v9196
      %v9214 = vld [vmem:[%s8] sm:$0x1]
      %v9216 = vlaneseq
      %v9217 = vshrl.u32 %v9216, 7
      %v9218 = vsub.s32 0, %v9217
      %v9219 = vrot.slane %v9214, %v9218
      %v9221 = vadd.f32 %v9198, %v9219
      %v9222 = vadd.f32 %v9199, %v9219
      %v9223 = vadd.f32 %v9200, %v9219
      %v9224 = vadd.f32 %v9201, %v9219
      %v9225 = vadd.f32 %v9202, %v9219
      %v9226 = vadd.f32 %v9203, %v9219
      %v9227 = vadd.f32 %v9204, %v9219
      %v9228 = vadd.f32 %v9205, %v9219
      %v9229 = vadd.f32 %v9206, %v9219
      %v9230 = vadd.f32 %v9207, %v9219
      %v9231 = vadd.f32 %v9208, %v9219
      %v9232 = vadd.f32 %v9209, %v9219
      %v9233 = vadd.f32 %v9210, %v9219
      %v9234 = vadd.f32 %v9211, %v9219
      %v9235 = vadd.f32 %v9212, %v9219
      %v9236 = vadd.f32 %v9213, %v9219
      %9237 = vst.msk [vmem:[#allocation4] sm:$0xff] %vm7775, 0.0
      %vm9238 = vcmask 123904
      %9239 = vst.msk [vmem:[#allocation4 + $0x8] sm:$0x3] %vm9238, 0.0
      %9240 = vst.msk [vmem:[#allocation4 + $0xa0] sm:$0xff] %vm7775, 0.0
      %9241 = vst.msk [vmem:[#allocation4 + $0xa8] sm:$0x3] %vm9238, 0.0
      %s9242 = scalar_lea.vmem [#allocation4], 144
      %9243 = vst.msk [vmem:[%s9242] sm:$0xff] %vm7775, 0.0
      %9244 = vst.msk [vmem:[%s9242 + $0x8] sm:$0x3] %vm9238, 0.0
      %9245 = vst.msk [vmem:[%s9242 + $0xa0] sm:$0xff] %vm7775, 0.0
      %9246 = vst.msk [vmem:[%s9242 + $0xa8] sm:$0x3] %vm9238, 0.0
      %vm9247 = vcmask 122880
      %9248 = vst.msk [vmem:[#allocation4] sm:$0x1] %vm9247, 0.0
      %9249 = vst.msk [vmem:[#allocation4 + $0x10] sm:$0x1] %vm9247, 0.0
      %9250 = vst.msk [vmem:[#allocation4 + $0x20] sm:$0x1] %vm9247, 0.0
      %9251 = vst.msk [vmem:[#allocation4 + $0x30] sm:$0x1] %vm9247, 0.0
      %9252 = vst.msk [vmem:[#allocation4 + $0x40] sm:$0x1] %vm9247, 0.0
      %9253 = vst.msk [vmem:[#allocation4 + $0x50] sm:$0x1] %vm9247, 0.0
      %9254 = vst.msk [vmem:[#allocation4 + $0x60] sm:$0x1] %vm9247, 0.0
      %9255 = vst.msk [vmem:[#allocation4 + $0x70] sm:$0x1] %vm9247, 0.0
      %9256 = vst.msk [vmem:[#allocation4 + $0x80] sm:$0x1] %vm9247, 0.0
      %9257 = vst.msk [vmem:[#allocation4 + $0x90] sm:$0x1] %vm9247, 0.0
      %9258 = vst.msk [vmem:[#allocation4 + $0xa0] sm:$0x1] %vm9247, 0.0
      %9259 = vst.msk [vmem:[#allocation4 + $0xb0] sm:$0x1] %vm9247, 0.0
      %9260 = vst.msk [vmem:[#allocation4 + $0xc0] sm:$0x1] %vm9247, 0.0
      %9261 = vst.msk [vmem:[#allocation4 + $0xd0] sm:$0x1] %vm9247, 0.0
      %9262 = vst.msk [vmem:[#allocation4 + $0xe0] sm:$0x1] %vm9247, 0.0
      %9263 = vst.msk [vmem:[#allocation4 + $0xf0] sm:$0x1] %vm9247, 0.0
      %9264 = vst.msk [vmem:[#allocation4 + $0x100] sm:$0x1] %vm9247, 0.0
      %9265 = vst.msk [vmem:[#allocation4 + $0x110] sm:$0x1] %vm9247, 0.0
      %9266 = vst.msk [vmem:[#allocation4 + $0x120] sm:$0x1] %vm9247, 0.0
      %9267 = vst.msk [vmem:[#allocation4 + $0x130] sm:$0x1] %vm9247, 0.0
      %9268 = vst.msk [vmem:[#allocation4 + $0x9] sm:$0x1] %vm9247, 0.0
      %9269 = vst.msk [vmem:[#allocation4 + $0x19] sm:$0x1] %vm9247, 0.0
      %9270 = vst.msk [vmem:[#allocation4 + $0x29] sm:$0x1] %vm9247, 0.0
      %9271 = vst.msk [vmem:[#allocation4 + $0x39] sm:$0x1] %vm9247, 0.0
      %9272 = vst.msk [vmem:[#allocation4 + $0x49] sm:$0x1] %vm9247, 0.0
      %9273 = vst.msk [vmem:[#allocation4 + $0x59] sm:$0x1] %vm9247, 0.0
      %9274 = vst.msk [vmem:[#allocation4 + $0x69] sm:$0x1] %vm9247, 0.0
      %9275 = vst.msk [vmem:[#allocation4 + $0x79] sm:$0x1] %vm9247, 0.0
      %9276 = vst.msk [vmem:[#allocation4 + $0x89] sm:$0x1] %vm9247, 0.0
      %9277 = vst.msk [vmem:[#allocation4 + $0x99] sm:$0x1] %vm9247, 0.0
      %9278 = vst.msk [vmem:[#allocation4 + $0xa9] sm:$0x1] %vm9247, 0.0
      %9279 = vst.msk [vmem:[#allocation4 + $0xb9] sm:$0x1] %vm9247, 0.0
      %9280 = vst.msk [vmem:[#allocation4 + $0xc9] sm:$0x1] %vm9247, 0.0
      %9281 = vst.msk [vmem:[#allocation4 + $0xd9] sm:$0x1] %vm9247, 0.0
      %9282 = vst.msk [vmem:[#allocation4 + $0xe9] sm:$0x1] %vm9247, 0.0
      %9283 = vst.msk [vmem:[#allocation4 + $0xf9] sm:$0x1] %vm9247, 0.0
      %9284 = vst.msk [vmem:[#allocation4 + $0x109] sm:$0x1] %vm9247, 0.0
      %9285 = vst.msk [vmem:[#allocation4 + $0x119] sm:$0x1] %vm9247, 0.0
      %9286 = vst.msk [vmem:[#allocation4 + $0x129] sm:$0x1] %vm9247, 0.0
      %9287 = vst.msk [vmem:[#allocation4 + $0x139] sm:$0x1] %vm9247, 0.0
      %s9288 = scalar_lea.vmem [#allocation4], 16
      %9289 = vst.msk [vmem:[%s9288 + $0x1] sm:$0xff] %vm7775, %v9221
      %9290 = vst.msk [vmem:[%s9288 + $0x11] sm:$0xff] %vm7775, %v9222
      %9291 = vst.msk [vmem:[%s9288 + $0x21] sm:$0xff] %vm7775, %v9223
      %9292 = vst.msk [vmem:[%s9288 + $0x31] sm:$0xff] %vm7775, %v9224
      %9293 = vst.msk [vmem:[%s9288 + $0x41] sm:$0xff] %vm7775, %v9225
      %9294 = vst.msk [vmem:[%s9288 + $0x51] sm:$0xff] %vm7775, %v9226
      %9295 = vst.msk [vmem:[%s9288 + $0x61] sm:$0xff] %vm7775, %v9227
      %9296 = vst.msk [vmem:[%s9288 + $0x71] sm:$0xff] %vm7775, %v9228
      %9297 = vst.msk [vmem:[%s9288 + $0xa1] sm:$0xff] %vm7775, %v9229
      %9298 = vst.msk [vmem:[%s9288 + $0xb1] sm:$0xff] %vm7775, %v9230
      %9299 = vst.msk [vmem:[%s9288 + $0xc1] sm:$0xff] %vm7775, %v9231
      %9300 = vst.msk [vmem:[%s9288 + $0xd1] sm:$0xff] %vm7775, %v9232
      %9301 = vst.msk [vmem:[%s9288 + $0xe1] sm:$0xff] %vm7775, %v9233
      %9302 = vst.msk [vmem:[%s9288 + $0xf1] sm:$0xff] %vm7775, %v9234
      %9303 = vst.msk [vmem:[%s9288 + $0x101] sm:$0xff] %vm7775, %v9235
      %9304 = vst.msk [vmem:[%s9288 + $0x111] sm:$0xff] %vm7775, %v9236
      %v9305 = vld [vmem:[#allocation4] sm:$0xff]
      %v9306 = vld [vmem:[#allocation4 + $0x10] sm:$0xff]
      %v9307 = vld [vmem:[#allocation4 + $0x20] sm:$0xff]
      %v9308 = vld [vmem:[#allocation4 + $0x30] sm:$0xff]
      %v9309 = vld [vmem:[#allocation4 + $0x40] sm:$0xff]
      %v9310 = vld [vmem:[#allocation4 + $0x50] sm:$0xff]
      %v9311 = vld [vmem:[#allocation4 + $0x60] sm:$0xff]
      %v9312 = vld [vmem:[#allocation4 + $0x70] sm:$0xff]
      %v9313 = vld [vmem:[#allocation4 + $0xa0] sm:$0xff]
      %v9314 = vld [vmem:[#allocation4 + $0xb0] sm:$0xff]
      %v9315 = vld [vmem:[#allocation4 + $0xc0] sm:$0xff]
      %v9316 = vld [vmem:[#allocation4 + $0xd0] sm:$0xff]
      %v9317 = vld [vmem:[#allocation4 + $0xe0] sm:$0xff]
      %v9318 = vld [vmem:[#allocation4 + $0xf0] sm:$0xff]
      %v9319 = vld [vmem:[#allocation4 + $0x100] sm:$0xff]
      %v9320 = vld [vmem:[#allocation4 + $0x110] sm:$0xff]
      %v9321 = vld [vmem:[#allocation4 + $0x1] sm:$0xff]
      %v9322 = vld [vmem:[#allocation4 + $0x11] sm:$0xff]
      %v9323 = vld [vmem:[#allocation4 + $0x21] sm:$0xff]
      %v9324 = vld [vmem:[#allocation4 + $0x31] sm:$0xff]
      %v9325 = vld [vmem:[#allocation4 + $0x41] sm:$0xff]
      %v9326 = vld [vmem:[#allocation4 + $0x51] sm:$0xff]
      %v9327 = vld [vmem:[#allocation4 + $0x61] sm:$0xff]
      %v9328 = vld [vmem:[#allocation4 + $0x71] sm:$0xff]
      %v9329 = vld [vmem:[#allocation4 + $0xa1] sm:$0xff]
      %v9330 = vld [vmem:[#allocation4 + $0xb1] sm:$0xff]
      %v9331 = vld [vmem:[#allocation4 + $0xc1] sm:$0xff]
      %v9332 = vld [vmem:[#allocation4 + $0xd1] sm:$0xff]
      %v9333 = vld [vmem:[#allocation4 + $0xe1] sm:$0xff]
      %v9334 = vld [vmem:[#allocation4 + $0xf1] sm:$0xff]
      %v9335 = vld [vmem:[#allocation4 + $0x101] sm:$0xff]
      %v9336 = vld [vmem:[#allocation4 + $0x111] sm:$0xff]
      %v9337 = vld [vmem:[#allocation4 + $0x2] sm:$0xff]
      %v9338 = vld [vmem:[#allocation4 + $0x12] sm:$0xff]
      %v9339 = vld [vmem:[#allocation4 + $0x22] sm:$0xff]
      %v9340 = vld [vmem:[#allocation4 + $0x32] sm:$0xff]
      %v9341 = vld [vmem:[#allocation4 + $0x42] sm:$0xff]
      %v9342 = vld [vmem:[#allocation4 + $0x52] sm:$0xff]
      %v9343 = vld [vmem:[#allocation4 + $0x62] sm:$0xff]
      %v9344 = vld [vmem:[#allocation4 + $0x72] sm:$0xff]
      %v9345 = vld [vmem:[#allocation4 + $0xa2] sm:$0xff]
      %v9346 = vld [vmem:[#allocation4 + $0xb2] sm:$0xff]
      %v9347 = vld [vmem:[#allocation4 + $0xc2] sm:$0xff]
      %v9348 = vld [vmem:[#allocation4 + $0xd2] sm:$0xff]
      %v9349 = vld [vmem:[#allocation4 + $0xe2] sm:$0xff]
      %v9350 = vld [vmem:[#allocation4 + $0xf2] sm:$0xff]
      %v9351 = vld [vmem:[#allocation4 + $0x102] sm:$0xff]
      %v9352 = vld [vmem:[#allocation4 + $0x112] sm:$0xff]
      %v9353 = vld [vmem:[%s9288] sm:$0xff]
      %v9354 = vld [vmem:[%s9288 + $0x10] sm:$0xff]
      %v9355 = vld [vmem:[%s9288 + $0x20] sm:$0xff]
      %v9356 = vld [vmem:[%s9288 + $0x30] sm:$0xff]
      %v9357 = vld [vmem:[%s9288 + $0x40] sm:$0xff]
      %v9358 = vld [vmem:[%s9288 + $0x50] sm:$0xff]
      %v9359 = vld [vmem:[%s9288 + $0x60] sm:$0xff]
      %v9360 = vld [vmem:[%s9288 + $0x70] sm:$0xff]
      %v9361 = vld [vmem:[%s9288 + $0xa0] sm:$0xff]
      %v9362 = vld [vmem:[%s9288 + $0xb0] sm:$0xff]
      %v9363 = vld [vmem:[%s9288 + $0xc0] sm:$0xff]
      %v9364 = vld [vmem:[%s9288 + $0xd0] sm:$0xff]
      %v9365 = vld [vmem:[%s9288 + $0xe0] sm:$0xff]
      %v9366 = vld [vmem:[%s9288 + $0xf0] sm:$0xff]
      %v9367 = vld [vmem:[%s9288 + $0x100] sm:$0xff]
      %v9368 = vld [vmem:[%s9288 + $0x110] sm:$0xff]
      %v9369 = vld [vmem:[%s9288 + $0x1] sm:$0xff]
      %v9370 = vld [vmem:[%s9288 + $0x11] sm:$0xff]
      %v9371 = vld [vmem:[%s9288 + $0x21] sm:$0xff]
      %v9372 = vld [vmem:[%s9288 + $0x31] sm:$0xff]
      %v9373 = vld [vmem:[%s9288 + $0x41] sm:$0xff]
      %v9374 = vld [vmem:[%s9288 + $0x51] sm:$0xff]
      %v9375 = vld [vmem:[%s9288 + $0x61] sm:$0xff]
      %v9376 = vld [vmem:[%s9288 + $0x71] sm:$0xff]
      %v9377 = vld [vmem:[%s9288 + $0xa1] sm:$0xff]
      %v9378 = vld [vmem:[%s9288 + $0xb1] sm:$0xff]
      %v9379 = vld [vmem:[%s9288 + $0xc1] sm:$0xff]
      %v9380 = vld [vmem:[%s9288 + $0xd1] sm:$0xff]
      %v9381 = vld [vmem:[%s9288 + $0xe1] sm:$0xff]
      %v9382 = vld [vmem:[%s9288 + $0xf1] sm:$0xff]
      %v9383 = vld [vmem:[%s9288 + $0x101] sm:$0xff]
      %v9384 = vld [vmem:[%s9288 + $0x111] sm:$0xff]
      %v9385 = vld [vmem:[%s9288 + $0x2] sm:$0xff]
      %v9386 = vld [vmem:[%s9288 + $0x12] sm:$0xff]
      %v9387 = vld [vmem:[%s9288 + $0x22] sm:$0xff]
      %v9388 = vld [vmem:[%s9288 + $0x32] sm:$0xff]
      %v9389 = vld [vmem:[%s9288 + $0x42] sm:$0xff]
      %v9390 = vld [vmem:[%s9288 + $0x52] sm:$0xff]
      %v9391 = vld [vmem:[%s9288 + $0x62] sm:$0xff]
      %v9392 = vld [vmem:[%s9288 + $0x72] sm:$0xff]
      %v9393 = vld [vmem:[%s9288 + $0xa2] sm:$0xff]
      %v9394 = vld [vmem:[%s9288 + $0xb2] sm:$0xff]
      %v9395 = vld [vmem:[%s9288 + $0xc2] sm:$0xff]
      %v9396 = vld [vmem:[%s9288 + $0xd2] sm:$0xff]
      %v9397 = vld [vmem:[%s9288 + $0xe2] sm:$0xff]
      %v9398 = vld [vmem:[%s9288 + $0xf2] sm:$0xff]
      %v9399 = vld [vmem:[%s9288 + $0x102] sm:$0xff]
      %v9400 = vld [vmem:[%s9288 + $0x112] sm:$0xff]
      %s9401 = scalar_lea.vmem [#allocation4], 32
      %v9402 = vld [vmem:[%s9401] sm:$0xff]
      %v9403 = vld [vmem:[%s9401 + $0x10] sm:$0xff]
      %v9404 = vld [vmem:[%s9401 + $0x20] sm:$0xff]
      %v9405 = vld [vmem:[%s9401 + $0x30] sm:$0xff]
      %v9406 = vld [vmem:[%s9401 + $0x40] sm:$0xff]
      %v9407 = vld [vmem:[%s9401 + $0x50] sm:$0xff]
      %v9408 = vld [vmem:[%s9401 + $0x60] sm:$0xff]
      %v9409 = vld [vmem:[%s9401 + $0x70] sm:$0xff]
      %v9410 = vld [vmem:[%s9401 + $0xa0] sm:$0xff]
      %v9411 = vld [vmem:[%s9401 + $0xb0] sm:$0xff]
      %v9412 = vld [vmem:[%s9401 + $0xc0] sm:$0xff]
      %v9413 = vld [vmem:[%s9401 + $0xd0] sm:$0xff]
      %v9414 = vld [vmem:[%s9401 + $0xe0] sm:$0xff]
      %v9415 = vld [vmem:[%s9401 + $0xf0] sm:$0xff]
      %v9416 = vld [vmem:[%s9401 + $0x100] sm:$0xff]
      %v9417 = vld [vmem:[%s9401 + $0x110] sm:$0xff]
      %v9418 = vld [vmem:[%s9401 + $0x1] sm:$0xff]
      %v9419 = vld [vmem:[%s9401 + $0x11] sm:$0xff]
      %v9420 = vld [vmem:[%s9401 + $0x21] sm:$0xff]
      %v9421 = vld [vmem:[%s9401 + $0x31] sm:$0xff]
      %v9422 = vld [vmem:[%s9401 + $0x41] sm:$0xff]
      %v9423 = vld [vmem:[%s9401 + $0x51] sm:$0xff]
      %v9424 = vld [vmem:[%s9401 + $0x61] sm:$0xff]
      %v9425 = vld [vmem:[%s9401 + $0x71] sm:$0xff]
      %v9426 = vld [vmem:[%s9401 + $0xa1] sm:$0xff]
      %v9427 = vld [vmem:[%s9401 + $0xb1] sm:$0xff]
      %v9428 = vld [vmem:[%s9401 + $0xc1] sm:$0xff]
      %v9429 = vld [vmem:[%s9401 + $0xd1] sm:$0xff]
      %v9430 = vld [vmem:[%s9401 + $0xe1] sm:$0xff]
      %v9431 = vld [vmem:[%s9401 + $0xf1] sm:$0xff]
      %v9432 = vld [vmem:[%s9401 + $0x101] sm:$0xff]
      %v9433 = vld [vmem:[%s9401 + $0x111] sm:$0xff]
      %v9434 = vld [vmem:[%s9401 + $0x2] sm:$0xff]
      %v9435 = vld [vmem:[%s9401 + $0x12] sm:$0xff]
      %v9436 = vld [vmem:[%s9401 + $0x22] sm:$0xff]
      %v9437 = vld [vmem:[%s9401 + $0x32] sm:$0xff]
      %v9438 = vld [vmem:[%s9401 + $0x42] sm:$0xff]
      %v9439 = vld [vmem:[%s9401 + $0x52] sm:$0xff]
      %v9440 = vld [vmem:[%s9401 + $0x62] sm:$0xff]
      %v9441 = vld [vmem:[%s9401 + $0x72] sm:$0xff]
      %v9442 = vld [vmem:[%s9401 + $0xa2] sm:$0xff]
      %v9443 = vld [vmem:[%s9401 + $0xb2] sm:$0xff]
      %v9444 = vld [vmem:[%s9401 + $0xc2] sm:$0xff]
      %v9445 = vld [vmem:[%s9401 + $0xd2] sm:$0xff]
      %v9446 = vld [vmem:[%s9401 + $0xe2] sm:$0xff]
      %v9447 = vld [vmem:[%s9401 + $0xf2] sm:$0xff]
      %v9448 = vld [vmem:[%s9401 + $0x102] sm:$0xff]
      %v9449 = vld [vmem:[%s9401 + $0x112] sm:$0xff]
      %9466 = vrot.lane.b32.xlu0 %v9321, 16
      %v9467 = vpop.permute.xlu0 %9466
      %9468 = vrot.lane.b32.xlu0 %v9322, 16
      %v9469 = vpop.permute.xlu0 %9468
      %9470 = vrot.lane.b32.xlu0 %v9323, 16
      %v9471 = vpop.permute.xlu0 %9470
      %9472 = vrot.lane.b32.xlu0 %v9324, 16
      %v9473 = vpop.permute.xlu0 %9472
      %9474 = vrot.lane.b32.xlu0 %v9325, 16
      %v9475 = vpop.permute.xlu0 %9474
      %9476 = vrot.lane.b32.xlu0 %v9326, 16
      %v9477 = vpop.permute.xlu0 %9476
      %9478 = vrot.lane.b32.xlu0 %v9327, 16
      %v9479 = vpop.permute.xlu0 %9478
      %9480 = vrot.lane.b32.xlu0 %v9328, 16
      %v9481 = vpop.permute.xlu0 %9480
      %9482 = vrot.lane.b32.xlu0 %v9329, 16
      %v9483 = vpop.permute.xlu0 %9482
      %9484 = vrot.lane.b32.xlu0 %v9330, 16
      %v9485 = vpop.permute.xlu0 %9484
      %9486 = vrot.lane.b32.xlu0 %v9331, 16
      %v9487 = vpop.permute.xlu0 %9486
      %9488 = vrot.lane.b32.xlu0 %v9332, 16
      %v9489 = vpop.permute.xlu0 %9488
      %9490 = vrot.lane.b32.xlu0 %v9333, 16
      %v9491 = vpop.permute.xlu0 %9490
      %9492 = vrot.lane.b32.xlu0 %v9334, 16
      %v9493 = vpop.permute.xlu0 %9492
      %9494 = vrot.lane.b32.xlu0 %v9335, 16
      %v9495 = vpop.permute.xlu0 %9494
      %9496 = vrot.lane.b32.xlu0 %v9336, 16
      %v9497 = vpop.permute.xlu0 %9496
      %9530 = vrot.lane.b32.xlu0 %v9337, 32
      %v9531 = vpop.permute.xlu0 %9530
      %9532 = vrot.lane.b32.xlu0 %v9338, 32
      %v9533 = vpop.permute.xlu0 %9532
      %9534 = vrot.lane.b32.xlu0 %v9339, 32
      %v9535 = vpop.permute.xlu0 %9534
      %9536 = vrot.lane.b32.xlu0 %v9340, 32
      %v9537 = vpop.permute.xlu0 %9536
      %9538 = vrot.lane.b32.xlu0 %v9341, 32
      %v9539 = vpop.permute.xlu0 %9538
      %9540 = vrot.lane.b32.xlu0 %v9342, 32
      %v9541 = vpop.permute.xlu0 %9540
      %9542 = vrot.lane.b32.xlu0 %v9343, 32
      %v9543 = vpop.permute.xlu0 %9542
      %9544 = vrot.lane.b32.xlu0 %v9344, 32
      %v9545 = vpop.permute.xlu0 %9544
      %9546 = vrot.lane.b32.xlu0 %v9345, 32
      %v9547 = vpop.permute.xlu0 %9546
      %9548 = vrot.lane.b32.xlu0 %v9346, 32
      %v9549 = vpop.permute.xlu0 %9548
      %9550 = vrot.lane.b32.xlu0 %v9347, 32
      %v9551 = vpop.permute.xlu0 %9550
      %9552 = vrot.lane.b32.xlu0 %v9348, 32
      %v9553 = vpop.permute.xlu0 %9552
      %9554 = vrot.lane.b32.xlu0 %v9349, 32
      %v9555 = vpop.permute.xlu0 %9554
      %9556 = vrot.lane.b32.xlu0 %v9350, 32
      %v9557 = vpop.permute.xlu0 %9556
      %9558 = vrot.lane.b32.xlu0 %v9351, 32
      %v9559 = vpop.permute.xlu0 %9558
      %9560 = vrot.lane.b32.xlu0 %v9352, 32
      %v9561 = vpop.permute.xlu0 %9560
      %9594 = vrot.lane.b32.xlu0 %v9353, 48
      %v9595 = vpop.permute.xlu0 %9594
      %9596 = vrot.lane.b32.xlu0 %v9354, 48
      %v9597 = vpop.permute.xlu0 %9596
      %9598 = vrot.lane.b32.xlu0 %v9355, 48
      %v9599 = vpop.permute.xlu0 %9598
      %9600 = vrot.lane.b32.xlu0 %v9356, 48
      %v9601 = vpop.permute.xlu0 %9600
      %9602 = vrot.lane.b32.xlu0 %v9357, 48
      %v9603 = vpop.permute.xlu0 %9602
      %9604 = vrot.lane.b32.xlu0 %v9358, 48
      %v9605 = vpop.permute.xlu0 %9604
      %9606 = vrot.lane.b32.xlu0 %v9359, 48
      %v9607 = vpop.permute.xlu0 %9606
      %9608 = vrot.lane.b32.xlu0 %v9360, 48
      %v9609 = vpop.permute.xlu0 %9608
      %9610 = vrot.lane.b32.xlu0 %v9361, 48
      %v9611 = vpop.permute.xlu0 %9610
      %9612 = vrot.lane.b32.xlu0 %v9362, 48
      %v9613 = vpop.permute.xlu0 %9612
      %9614 = vrot.lane.b32.xlu0 %v9363, 48
      %v9615 = vpop.permute.xlu0 %9614
      %9616 = vrot.lane.b32.xlu0 %v9364, 48
      %v9617 = vpop.permute.xlu0 %9616
      %9618 = vrot.lane.b32.xlu0 %v9365, 48
      %v9619 = vpop.permute.xlu0 %9618
      %9620 = vrot.lane.b32.xlu0 %v9366, 48
      %v9621 = vpop.permute.xlu0 %9620
      %9622 = vrot.lane.b32.xlu0 %v9367, 48
      %v9623 = vpop.permute.xlu0 %9622
      %9624 = vrot.lane.b32.xlu0 %v9368, 48
      %v9625 = vpop.permute.xlu0 %9624
      %9658 = vrot.lane.b32.xlu0 %v9369, 64
      %v9659 = vpop.permute.xlu0 %9658
      %9660 = vrot.lane.b32.xlu0 %v9370, 64
      %v9661 = vpop.permute.xlu0 %9660
      %9662 = vrot.lane.b32.xlu0 %v9371, 64
      %v9663 = vpop.permute.xlu0 %9662
      %9664 = vrot.lane.b32.xlu0 %v9372, 64
      %v9665 = vpop.permute.xlu0 %9664
      %9666 = vrot.lane.b32.xlu0 %v9373, 64
      %v9667 = vpop.permute.xlu0 %9666
      %9668 = vrot.lane.b32.xlu0 %v9374, 64
      %v9669 = vpop.permute.xlu0 %9668
      %9670 = vrot.lane.b32.xlu0 %v9375, 64
      %v9671 = vpop.permute.xlu0 %9670
      %9672 = vrot.lane.b32.xlu0 %v9376, 64
      %v9673 = vpop.permute.xlu0 %9672
      %9674 = vrot.lane.b32.xlu0 %v9377, 64
      %v9675 = vpop.permute.xlu0 %9674
      %9676 = vrot.lane.b32.xlu0 %v9378, 64
      %v9677 = vpop.permute.xlu0 %9676
      %9678 = vrot.lane.b32.xlu0 %v9379, 64
      %v9679 = vpop.permute.xlu0 %9678
      %9680 = vrot.lane.b32.xlu0 %v9380, 64
      %v9681 = vpop.permute.xlu0 %9680
      %9682 = vrot.lane.b32.xlu0 %v9381, 64
      %v9683 = vpop.permute.xlu0 %9682
      %9684 = vrot.lane.b32.xlu0 %v9382, 64
      %v9685 = vpop.permute.xlu0 %9684
      %9686 = vrot.lane.b32.xlu0 %v9383, 64
      %v9687 = vpop.permute.xlu0 %9686
      %9688 = vrot.lane.b32.xlu0 %v9384, 64
      %v9689 = vpop.permute.xlu0 %9688
      %9722 = vrot.lane.b32.xlu0 %v9385, 80
      %v9723 = vpop.permute.xlu0 %9722
      %9724 = vrot.lane.b32.xlu0 %v9386, 80
      %v9725 = vpop.permute.xlu0 %9724
      %9726 = vrot.lane.b32.xlu0 %v9387, 80
      %v9727 = vpop.permute.xlu0 %9726
      %9728 = vrot.lane.b32.xlu0 %v9388, 80
      %v9729 = vpop.permute.xlu0 %9728
      %9730 = vrot.lane.b32.xlu0 %v9389, 80
      %v9731 = vpop.permute.xlu0 %9730
      %9732 = vrot.lane.b32.xlu0 %v9390, 80
      %v9733 = vpop.permute.xlu0 %9732
      %9734 = vrot.lane.b32.xlu0 %v9391, 80
      %v9735 = vpop.permute.xlu0 %9734
      %9736 = vrot.lane.b32.xlu0 %v9392, 80
      %v9737 = vpop.permute.xlu0 %9736
      %9738 = vrot.lane.b32.xlu0 %v9393, 80
      %v9739 = vpop.permute.xlu0 %9738
      %9740 = vrot.lane.b32.xlu0 %v9394, 80
      %v9741 = vpop.permute.xlu0 %9740
      %9742 = vrot.lane.b32.xlu0 %v9395, 80
      %v9743 = vpop.permute.xlu0 %9742
      %9744 = vrot.lane.b32.xlu0 %v9396, 80
      %v9745 = vpop.permute.xlu0 %9744
      %9746 = vrot.lane.b32.xlu0 %v9397, 80
      %v9747 = vpop.permute.xlu0 %9746
      %9748 = vrot.lane.b32.xlu0 %v9398, 80
      %v9749 = vpop.permute.xlu0 %9748
      %9750 = vrot.lane.b32.xlu0 %v9399, 80
      %v9751 = vpop.permute.xlu0 %9750
      %9752 = vrot.lane.b32.xlu0 %v9400, 80
      %v9753 = vpop.permute.xlu0 %9752
      %9786 = vrot.lane.b32.xlu0 %v9402, 96
      %v9787 = vpop.permute.xlu0 %9786
      %9788 = vrot.lane.b32.xlu0 %v9403, 96
      %v9789 = vpop.permute.xlu0 %9788
      %9790 = vrot.lane.b32.xlu0 %v9404, 96
      %v9791 = vpop.permute.xlu0 %9790
      %9792 = vrot.lane.b32.xlu0 %v9405, 96
      %v9793 = vpop.permute.xlu0 %9792
      %9794 = vrot.lane.b32.xlu0 %v9406, 96
      %v9795 = vpop.permute.xlu0 %9794
      %9796 = vrot.lane.b32.xlu0 %v9407, 96
      %v9797 = vpop.permute.xlu0 %9796
      %9798 = vrot.lane.b32.xlu0 %v9408, 96
      %v9799 = vpop.permute.xlu0 %9798
      %9800 = vrot.lane.b32.xlu0 %v9409, 96
      %v9801 = vpop.permute.xlu0 %9800
      %9802 = vrot.lane.b32.xlu0 %v9410, 96
      %v9803 = vpop.permute.xlu0 %9802
      %9804 = vrot.lane.b32.xlu0 %v9411, 96
      %v9805 = vpop.permute.xlu0 %9804
      %9806 = vrot.lane.b32.xlu0 %v9412, 96
      %v9807 = vpop.permute.xlu0 %9806
      %9808 = vrot.lane.b32.xlu0 %v9413, 96
      %v9809 = vpop.permute.xlu0 %9808
      %9810 = vrot.lane.b32.xlu0 %v9414, 96
      %v9811 = vpop.permute.xlu0 %9810
      %9812 = vrot.lane.b32.xlu0 %v9415, 96
      %v9813 = vpop.permute.xlu0 %9812
      %9814 = vrot.lane.b32.xlu0 %v9416, 96
      %v9815 = vpop.permute.xlu0 %9814
      %9816 = vrot.lane.b32.xlu0 %v9417, 96
      %v9817 = vpop.permute.xlu0 %9816
      %9850 = vrot.lane.b32.xlu0 %v9418, 112
      %v9851 = vpop.permute.xlu0 %9850
      %9852 = vrot.lane.b32.xlu0 %v9419, 112
      %v9853 = vpop.permute.xlu0 %9852
      %9854 = vrot.lane.b32.xlu0 %v9420, 112
      %v9855 = vpop.permute.xlu0 %9854
      %9856 = vrot.lane.b32.xlu0 %v9421, 112
      %v9857 = vpop.permute.xlu0 %9856
      %9858 = vrot.lane.b32.xlu0 %v9422, 112
      %v9859 = vpop.permute.xlu0 %9858
      %9860 = vrot.lane.b32.xlu0 %v9423, 112
      %v9861 = vpop.permute.xlu0 %9860
      %9862 = vrot.lane.b32.xlu0 %v9424, 112
      %v9863 = vpop.permute.xlu0 %9862
      %9864 = vrot.lane.b32.xlu0 %v9425, 112
      %v9865 = vpop.permute.xlu0 %9864
      %9866 = vrot.lane.b32.xlu0 %v9426, 112
      %v9867 = vpop.permute.xlu0 %9866
      %9868 = vrot.lane.b32.xlu0 %v9427, 112
      %v9869 = vpop.permute.xlu0 %9868
      %9870 = vrot.lane.b32.xlu0 %v9428, 112
      %v9871 = vpop.permute.xlu0 %9870
      %9872 = vrot.lane.b32.xlu0 %v9429, 112
      %v9873 = vpop.permute.xlu0 %9872
      %9874 = vrot.lane.b32.xlu0 %v9430, 112
      %v9875 = vpop.permute.xlu0 %9874
      %9876 = vrot.lane.b32.xlu0 %v9431, 112
      %v9877 = vpop.permute.xlu0 %9876
      %9878 = vrot.lane.b32.xlu0 %v9432, 112
      %v9879 = vpop.permute.xlu0 %9878
      %9880 = vrot.lane.b32.xlu0 %v9433, 112
      %v9881 = vpop.permute.xlu0 %9880
      %v9898 = vsel %vm7775, %v9305, %v9467
      %v9899 = vsel %vm7775, %v9306, %v9469
      %v9900 = vsel %vm7775, %v9307, %v9471
      %v9901 = vsel %vm7775, %v9308, %v9473
      %v9902 = vsel %vm7775, %v9309, %v9475
      %v9903 = vsel %vm7775, %v9310, %v9477
      %v9904 = vsel %vm7775, %v9311, %v9479
      %v9905 = vsel %vm7775, %v9312, %v9481
      %v9906 = vsel %vm7775, %v9313, %v9483
      %v9907 = vsel %vm7775, %v9314, %v9485
      %v9908 = vsel %vm7775, %v9315, %v9487
      %v9909 = vsel %vm7775, %v9316, %v9489
      %v9910 = vsel %vm7775, %v9317, %v9491
      %v9911 = vsel %vm7775, %v9318, %v9493
      %v9912 = vsel %vm7775, %v9319, %v9495
      %v9913 = vsel %vm7775, %v9320, %v9497
      %v9914 = vsel %vm7904, %v9898, %v9531
      %v9915 = vsel %vm7904, %v9899, %v9533
      %v9916 = vsel %vm7904, %v9900, %v9535
      %v9917 = vsel %vm7904, %v9901, %v9537
      %v9918 = vsel %vm7904, %v9902, %v9539
      %v9919 = vsel %vm7904, %v9903, %v9541
      %v9920 = vsel %vm7904, %v9904, %v9543
      %v9921 = vsel %vm7904, %v9905, %v9545
      %v9922 = vsel %vm7904, %v9906, %v9547
      %v9923 = vsel %vm7904, %v9907, %v9549
      %v9924 = vsel %vm7904, %v9908, %v9551
      %v9925 = vsel %vm7904, %v9909, %v9553
      %v9926 = vsel %vm7904, %v9910, %v9555
      %v9927 = vsel %vm7904, %v9911, %v9557
      %v9928 = vsel %vm7904, %v9912, %v9559
      %v9929 = vsel %vm7904, %v9913, %v9561
      %v9930 = vsel %vm8034, %v9914, %v9595
      %v9931 = vsel %vm8034, %v9915, %v9597
      %v9932 = vsel %vm8034, %v9916, %v9599
      %v9933 = vsel %vm8034, %v9917, %v9601
      %v9934 = vsel %vm8034, %v9918, %v9603
      %v9935 = vsel %vm8034, %v9919, %v9605
      %v9936 = vsel %vm8034, %v9920, %v9607
      %v9937 = vsel %vm8034, %v9921, %v9609
      %v9938 = vsel %vm8034, %v9922, %v9611
      %v9939 = vsel %vm8034, %v9923, %v9613
      %v9940 = vsel %vm8034, %v9924, %v9615
      %v9941 = vsel %vm8034, %v9925, %v9617
      %v9942 = vsel %vm8034, %v9926, %v9619
      %v9943 = vsel %vm8034, %v9927, %v9621
      %v9944 = vsel %vm8034, %v9928, %v9623
      %v9945 = vsel %vm8034, %v9929, %v9625
      %v9946 = vsel %vm8164, %v9930, %v9659
      %v9947 = vsel %vm8164, %v9931, %v9661
      %v9948 = vsel %vm8164, %v9932, %v9663
      %v9949 = vsel %vm8164, %v9933, %v9665
      %v9950 = vsel %vm8164, %v9934, %v9667
      %v9951 = vsel %vm8164, %v9935, %v9669
      %v9952 = vsel %vm8164, %v9936, %v9671
      %v9953 = vsel %vm8164, %v9937, %v9673
      %v9954 = vsel %vm8164, %v9938, %v9675
      %v9955 = vsel %vm8164, %v9939, %v9677
      %v9956 = vsel %vm8164, %v9940, %v9679
      %v9957 = vsel %vm8164, %v9941, %v9681
      %v9958 = vsel %vm8164, %v9942, %v9683
      %v9959 = vsel %vm8164, %v9943, %v9685
      %v9960 = vsel %vm8164, %v9944, %v9687
      %v9961 = vsel %vm8164, %v9945, %v9689
      %vm9962 = vcmask 654336
      %v9963 = vsel %vm9962, %v9946, %v9723
      %v9964 = vsel %vm9962, %v9947, %v9725
      %v9965 = vsel %vm9962, %v9948, %v9727
      %v9966 = vsel %vm9962, %v9949, %v9729
      %v9967 = vsel %vm9962, %v9950, %v9731
      %v9968 = vsel %vm9962, %v9951, %v9733
      %v9969 = vsel %vm9962, %v9952, %v9735
      %v9970 = vsel %vm9962, %v9953, %v9737
      %v9971 = vsel %vm9962, %v9954, %v9739
      %v9972 = vsel %vm9962, %v9955, %v9741
      %v9973 = vsel %vm9962, %v9956, %v9743
      %v9974 = vsel %vm9962, %v9957, %v9745
      %v9975 = vsel %vm9962, %v9958, %v9747
      %v9976 = vsel %vm9962, %v9959, %v9749
      %v9977 = vsel %vm9962, %v9960, %v9751
      %v9978 = vsel %vm9962, %v9961, %v9753
      %vm9979 = vcmask 785408
      %v9980 = vsel %vm9979, %v9963, %v9787
      %v9981 = vsel %vm9979, %v9964, %v9789
      %v9982 = vsel %vm9979, %v9965, %v9791
      %v9983 = vsel %vm9979, %v9966, %v9793
      %v9984 = vsel %vm9979, %v9967, %v9795
      %v9985 = vsel %vm9979, %v9968, %v9797
      %v9986 = vsel %vm9979, %v9969, %v9799
      %v9987 = vsel %vm9979, %v9970, %v9801
      %v9988 = vsel %vm9979, %v9971, %v9803
      %v9989 = vsel %vm9979, %v9972, %v9805
      %v9990 = vsel %vm9979, %v9973, %v9807
      %v9991 = vsel %vm9979, %v9974, %v9809
      %v9992 = vsel %vm9979, %v9975, %v9811
      %v9993 = vsel %vm9979, %v9976, %v9813
      %v9994 = vsel %vm9979, %v9977, %v9815
      %v9995 = vsel %vm9979, %v9978, %v9817
      %vm9996 = vcmask 916480
      %v9997 = vsel %vm9996, %v9980, %v9851
      %v9998 = vsel %vm9996, %v9981, %v9853
      %v9999 = vsel %vm9996, %v9982, %v9855
      %v10000 = vsel %vm9996, %v9983, %v9857
      %v10001 = vsel %vm9996, %v9984, %v9859
      %v10002 = vsel %vm9996, %v9985, %v9861
      %v10003 = vsel %vm9996, %v9986, %v9863
      %v10004 = vsel %vm9996, %v9987, %v9865
      %v10005 = vsel %vm9996, %v9988, %v9867
      %v10006 = vsel %vm9996, %v9989, %v9869
      %v10007 = vsel %vm9996, %v9990, %v9871
      %v10008 = vsel %vm9996, %v9991, %v9873
      %v10009 = vsel %vm9996, %v9992, %v9875
      %v10010 = vsel %vm9996, %v9993, %v9877
      %v10011 = vsel %vm9996, %v9994, %v9879
      %v10012 = vsel %vm9996, %v9995, %v9881
      %v10013 = vpack.c.bf16 %v9998, %v9997
      %v10014 = vpack.c.bf16 %v9435, %v9434
      %v10015 = vpack.c.bf16 %v10000, %v9999
      %v10016 = vpack.c.bf16 %v9437, %v9436
      %v10017 = vpack.c.bf16 %v10002, %v10001
      %v10018 = vpack.c.bf16 %v9439, %v9438
      %v10019 = vpack.c.bf16 %v10004, %v10003
      %v10020 = vpack.c.bf16 %v9441, %v9440
      %v10021 = vpack.c.bf16 %v10006, %v10005
      %v10022 = vpack.c.bf16 %v9443, %v9442
      %v10023 = vpack.c.bf16 %v10008, %v10007
      %v10024 = vpack.c.bf16 %v9445, %v9444
      %v10025 = vpack.c.bf16 %v10010, %v10009
      %v10026 = vpack.c.bf16 %v9447, %v9446
      %v10027 = vpack.c.bf16 %v10012, %v10011
      %v10028 = vpack.c.bf16 %v9449, %v9448
      %v10029 = vld [vmem:[%s9] sm:$0xf]
      %v10030 = vld [vmem:[%s9 + $0x4] sm:$0xf]
      %v10031 = vld [vmem:[%s9 + $0x8] sm:$0xf]
      %v10032 = vld [vmem:[%s9 + $0xc] sm:$0xf]
      %v10033 = vld [vmem:[%s9 + $0x10] sm:$0xf]
      %v10034 = vld [vmem:[%s9 + $0x14] sm:$0xf]
      %v10035 = vld [vmem:[%s9 + $0x18] sm:$0xf]
      %v10036 = vld [vmem:[%s9 + $0x1c] sm:$0xf]
      %v10037 = vld [vmem:[%s9 + $0x20] sm:$0xf]
      %v10038 = vld [vmem:[%s9 + $0x24] sm:$0xf]
      %v10039 = vld [vmem:[%s9 + $0x28] sm:$0xf]
      %v10040 = vld [vmem:[%s9 + $0x2c] sm:$0xf]
      %v10041 = vld [vmem:[%s9 + $0x30] sm:$0xf]
      %v10042 = vld [vmem:[%s9 + $0x34] sm:$0xf]
      %v10043 = vld [vmem:[%s9 + $0x38] sm:$0xf]
      %v10044 = vld [vmem:[%s9 + $0x3c] sm:$0xf]
      %v10045 = vld [vmem:[%s9 + $0x40] sm:$0xf]
      %v10046 = vld [vmem:[%s9 + $0x44] sm:$0xf]
      %v10047 = vld [vmem:[%s10] sm:$0x1]
      %v10049 = vlaneseq
      %v10050 = vshrl.u32 %v10049, 7
      %v10051 = vsub.s32 0, %v10050
      %v10052 = vrot.slane %v10047, %v10051
      %v10072 = vunpack.c.l.b16 %v10029
      %v10073 = vunpack.c.l.b16 %v10030
      %v10074 = vunpack.c.l.b16 %v10031
      %v10075 = vunpack.c.l.b16 %v10032
      %v10076 = vunpack.c.l.b16 %v10033
      %v10077 = vunpack.c.l.b16 %v10034
      %v10078 = vunpack.c.l.b16 %v10035
      %v10079 = vunpack.c.l.b16 %v10036
      %v10080 = vunpack.c.l.b16 %v10037
      %v10081 = vunpack.c.l.b16 %v10038
      %v10082 = vunpack.c.l.b16 %v10039
      %v10083 = vunpack.c.l.b16 %v10040
      %v10084 = vunpack.c.l.b16 %v10041
      %v10085 = vunpack.c.l.b16 %v10042
      %v10086 = vunpack.c.l.b16 %v10043
      %v10087 = vunpack.c.l.b16 %v10044
      %v10088 = vunpack.c.l.b16 %v10045
      %v10089 = vunpack.c.l.b16 %v10046
      %v10090 = vpack.c.b16 %v10073, %v10072
      %v10091 = vpack.c.b16 %v10075, %v10074
      %v10092 = vpack.c.b16 %v10077, %v10076
      %v10093 = vpack.c.b16 %v10079, %v10078
      %v10094 = vpack.c.b16 %v10081, %v10080
      %v10095 = vpack.c.b16 %v10083, %v10082
      %v10096 = vpack.c.b16 %v10085, %v10084
      %v10097 = vpack.c.b16 %v10087, %v10086
      %v10098 = vpack.c.b16 %v10089, %v10088
      %v10109 = vsel %vm7775, %v10014, 0
      %v10112 = vsel %vm7775, %v10016, 0
      %v10115 = vsel %vm7775, %v10018, 0
      %v10118 = vsel %vm7775, %v10020, 0
      %v10121 = vsel %vm7775, %v10022, 0
      %v10124 = vsel %vm7775, %v10024, 0
      %v10127 = vsel %vm7775, %v10026, 0
      %v10130 = vsel %vm7775, %v10028, 0
      %10132 = vmatprep.subr.bf16.mxu0 0
      %10133 = vmatpush1.bf16.msra.mxu0 %v10090
      %10134 = vmatprep.subr.bf16.mxu0 0
      %10135 = vmatpush1.bf16.msra.mxu0 %v10091
      %10136 = vmatprep.subr.bf16.mxu0 0
      %10137 = vmatpush1.bf16.msra.mxu0 %v10092
      %10138 = vmatprep.subr.bf16.mxu0 0
      %10139 = vmatpush1.bf16.msra.mxu0 %v10093
      %10140 = vmatprep.subr.bf16.mxu0 0
      %10141 = vmatpush1.bf16.msra.mxu0 %v10094
      %10142 = vmatprep.subr.bf16.mxu0 0
      %10143 = vmatpush1.bf16.msra.mxu0 %v10095
      %10144 = vmatprep.subr.bf16.mxu0 0
      %10145 = vmatpush1.bf16.msra.mxu0 %v10096
      %10146 = vmatprep.subr.bf16.mxu0 0
      %10147 = vmatpush1.bf16.msra.mxu0 %v10097
      %10148 = vmatprep.subr.bf16.mxu0 0
      %10149 = vmatpush1.bf16.msra.mxu0 %v10098
      %10150 = vmatprep.subr.bf16.mxu0 0
      %10151 = vmatpush1.bf16.msra.mxu0 0
      %10152 = vmatprep.subr.bf16.mxu0 0
      %10153 = vmatpush1.bf16.msra.mxu0 0
      %10154 = vmatprep.subr.bf16.mxu0 0
      %10155 = vmatpush1.bf16.msra.mxu0 0
      %10156 = vmatprep.subr.bf16.mxu0 0
      %10157 = vmatpush1.bf16.msra.mxu0 0
      %10158 = vmatprep.subr.bf16.mxu0 0
      %10159 = vmatpush1.bf16.msra.mxu0 0
      %10160 = vmatprep.subr.bf16.mxu0 0
      %10161 = vmatpush1.bf16.msra.mxu0 0
      %10162 = vmatprep.subr.bf16.mxu0 0
      %10163 = vmatpush1.bf16.msra.mxu0 0
      %10164 = vmatprep.mubr.bf16.mxu0 %v10109
      %10165 = vmatmul.mubr.bf16.gmra.mrb[0].mxu0 %v10013
      %v10166 = vpop.f32.mrb[0].mxu0
      %v10167 = vadd.f32 %v10052, %v10166
      %v10168 = vpop.f32.mrb[0].mxu0
      %v10169 = vpop.f32.mrb[0].mxu0
      %v10170 = vadd.f32 %v10052, %v10169
      %v10171 = vpop.f32.mrb[0].mxu0
      %10172 = vmatprep.mubr.bf16.mxu0 %v10112
      %10173 = vmatmul.mubr.bf16.gmra.mrb[0].mxu0 %v10015
      %v10174 = vpop.f32.mrb[0].mxu0
      %v10175 = vadd.f32 %v10052, %v10174
      %v10176 = vpop.f32.mrb[0].mxu0
      %v10177 = vpop.f32.mrb[0].mxu0
      %v10178 = vadd.f32 %v10052, %v10177
      %v10179 = vpop.f32.mrb[0].mxu0
      %10180 = vmatprep.mubr.bf16.mxu0 %v10115
      %10181 = vmatmul.mubr.bf16.gmra.mrb[0].mxu0 %v10017
      %v10182 = vpop.f32.mrb[0].mxu0
      %v10183 = vadd.f32 %v10052, %v10182
      %v10184 = vpop.f32.mrb[0].mxu0
      %v10185 = vpop.f32.mrb[0].mxu0
      %v10186 = vadd.f32 %v10052, %v10185
      %v10187 = vpop.f32.mrb[0].mxu0
      %10188 = vmatprep.mubr.bf16.mxu0 %v10118
      %10189 = vmatmul.mubr.bf16.gmra.mrb[0].mxu0 %v10019
      %v10190 = vpop.f32.mrb[0].mxu0
      %v10191 = vadd.f32 %v10052, %v10190
      %v10192 = vpop.f32.mrb[0].mxu0
      %v10193 = vpop.f32.mrb[0].mxu0
      %v10194 = vadd.f32 %v10052, %v10193
      %v10195 = vpop.f32.mrb[0].mxu0
      %10196 = vmatprep.mubr.bf16.mxu0 %v10121
      %10197 = vmatmul.mubr.bf16.gmra.mrb[0].mxu0 %v10021
      %v10198 = vpop.f32.mrb[0].mxu0
      %v10199 = vadd.f32 %v10052, %v10198
      %v10200 = vpop.f32.mrb[0].mxu0
      %v10201 = vpop.f32.mrb[0].mxu0
      %v10202 = vadd.f32 %v10052, %v10201
      %v10203 = vpop.f32.mrb[0].mxu0
      %10204 = vmatprep.mubr.bf16.mxu0 %v10124
      %10205 = vmatmul.mubr.bf16.gmra.mrb[0].mxu0 %v10023
      %v10206 = vpop.f32.mrb[0].mxu0
      %v10207 = vadd.f32 %v10052, %v10206
      %v10208 = vpop.f32.mrb[0].mxu0
      %v10209 = vpop.f32.mrb[0].mxu0
      %v10210 = vadd.f32 %v10052, %v10209
      %v10211 = vpop.f32.mrb[0].mxu0
      %10212 = vmatprep.mubr.bf16.mxu0 %v10127
      %10213 = vmatmul.mubr.bf16.gmra.mrb[0].mxu0 %v10025
      %v10214 = vpop.f32.mrb[0].mxu0
      %v10215 = vadd.f32 %v10052, %v10214
      %v10216 = vpop.f32.mrb[0].mxu0
      %v10217 = vpop.f32.mrb[0].mxu0
      %v10218 = vadd.f32 %v10052, %v10217
      %v10219 = vpop.f32.mrb[0].mxu0
      %10220 = vmatprep.mubr.bf16.mxu0 %v10130
      %10221 = vmatmul.mubr.bf16.gmra.mrb[0].mxu0 %v10027
      %v10222 = vpop.f32.mrb[0].mxu0
      %v10223 = vadd.f32 %v10052, %v10222
      %v10224 = vpop.f32.mrb[0].mxu0
      %v10225 = vpop.f32.mrb[0].mxu0
      %v10226 = vadd.f32 %v10052, %v10225
      %v10227 = vpop.f32.mrb[0].mxu0
      %10228 = vdwg.mxu0
      %vm10229 = vcmp.ge.f32.partialorder %v10167, 0.0
      %vm10230 = vcmp.ge.f32.partialorder %v10170, 0.0
      %vm10231 = vcmp.ge.f32.partialorder %v10175, 0.0
      %vm10232 = vcmp.ge.f32.partialorder %v10178, 0.0
      %vm10233 = vcmp.ge.f32.partialorder %v10183, 0.0
      %vm10234 = vcmp.ge.f32.partialorder %v10186, 0.0
      %vm10235 = vcmp.ge.f32.partialorder %v10191, 0.0
      %vm10236 = vcmp.ge.f32.partialorder %v10194, 0.0
      %vm10237 = vcmp.ge.f32.partialorder %v10199, 0.0
      %vm10238 = vcmp.ge.f32.partialorder %v10202, 0.0
      %vm10239 = vcmp.ge.f32.partialorder %v10207, 0.0
      %vm10240 = vcmp.ge.f32.partialorder %v10210, 0.0
      %vm10241 = vcmp.ge.f32.partialorder %v10215, 0.0
      %vm10242 = vcmp.ge.f32.partialorder %v10218, 0.0
      %vm10243 = vcmp.ge.f32.partialorder %v10223, 0.0
      %vm10244 = vcmp.ge.f32.partialorder %v10226, 0.0
      %v10245 = vmul.f32 %v10167, 0.2
      %v10246 = vmul.f32 %v10170, 0.2
      %v10247 = vmul.f32 %v10175, 0.2
      %v10248 = vmul.f32 %v10178, 0.2
      %v10249 = vmul.f32 %v10183, 0.2
      %v10250 = vmul.f32 %v10186, 0.2
      %v10251 = vmul.f32 %v10191, 0.2
      %v10252 = vmul.f32 %v10194, 0.2
      %v10253 = vmul.f32 %v10199, 0.2
      %v10254 = vmul.f32 %v10202, 0.2
      %v10255 = vmul.f32 %v10207, 0.2
      %v10256 = vmul.f32 %v10210, 0.2
      %v10257 = vmul.f32 %v10215, 0.2
      %v10258 = vmul.f32 %v10218, 0.2
      %v10259 = vmul.f32 %v10223, 0.2
      %v10260 = vmul.f32 %v10226, 0.2
      %v10261 = vsel %vm10229, %v10167, %v10245
      %v10262 = vsel %vm10230, %v10170, %v10246
      %v10263 = vsel %vm10231, %v10175, %v10247
      %v10264 = vsel %vm10232, %v10178, %v10248
      %v10265 = vsel %vm10233, %v10183, %v10249
      %v10266 = vsel %vm10234, %v10186, %v10250
      %v10267 = vsel %vm10235, %v10191, %v10251
      %v10268 = vsel %vm10236, %v10194, %v10252
      %v10269 = vsel %vm10237, %v10199, %v10253
      %v10270 = vsel %vm10238, %v10202, %v10254
      %v10271 = vsel %vm10239, %v10207, %v10255
      %v10272 = vsel %vm10240, %v10210, %v10256
      %v10273 = vsel %vm10241, %v10215, %v10257
      %v10274 = vsel %vm10242, %v10218, %v10258
      %v10275 = vsel %vm10243, %v10223, %v10259
      %v10276 = vsel %vm10244, %v10226, %v10260
      %v10277 = vadd.f32 %v10261, %v10262
      %v10278 = vadd.f32 %v10263, %v10264
      %v10279 = vadd.f32 %v10265, %v10266
      %v10280 = vadd.f32 %v10267, %v10268
      %v10281 = vadd.f32 %v10269, %v10270
      %v10282 = vadd.f32 %v10271, %v10272
      %v10283 = vadd.f32 %v10273, %v10274
      %v10284 = vadd.f32 %v10275, %v10276
      %10285 = vst.msk [vmem:[#allocation6] sm:$0xff] %vm7775, %v10277
      %10286 = vst.msk [vmem:[#allocation6 + $0x8] sm:$0xff] %vm7775, %v10278
      %10287 = vst.msk [vmem:[#allocation6 + $0x10] sm:$0xff] %vm7775, %v10279
      %10288 = vst.msk [vmem:[#allocation6 + $0x18] sm:$0xff] %vm7775, %v10280
      %10289 = vst.msk [vmem:[#allocation6 + $0x20] sm:$0xff] %vm7775, %v10281
      %10290 = vst.msk [vmem:[#allocation6 + $0x28] sm:$0xff] %vm7775, %v10282
      %10291 = vst.msk [vmem:[#allocation6 + $0x30] sm:$0xff] %vm7775, %v10283
      %10292 = vst.msk [vmem:[#allocation6 + $0x38] sm:$0xff] %vm7775, %v10284
      %v10293 = vld [vmem:[#allocation6] ss:$2 sm:$0xf]
      %s10294 = scalar_lea.vmem [#allocation6], 8
      %v10295 = vld [vmem:[%s10294] ss:$2 sm:$0xf]
      %s10296 = scalar_lea.vmem [#allocation6], 16
      %v10297 = vld [vmem:[%s10296] ss:$2 sm:$0xf]
      %s10298 = scalar_lea.vmem [#allocation6], 24
      %v10299 = vld [vmem:[%s10298] ss:$2 sm:$0xf]
      %s10300 = scalar_lea.vmem [#allocation6], 32
      %v10301 = vld [vmem:[%s10300] ss:$2 sm:$0xf]
      %s10302 = scalar_lea.vmem [#allocation6], 40
      %v10303 = vld [vmem:[%s10302] ss:$2 sm:$0xf]
      %s10304 = scalar_lea.vmem [#allocation6], 48
      %v10305 = vld [vmem:[%s10304] ss:$2 sm:$0xf]
      %s10306 = scalar_lea.vmem [#allocation6], 56
      %v10307 = vld [vmem:[%s10306] ss:$2 sm:$0xf]
      %s10308 = scalar_lea.vmem [#allocation6], 1
      %v10309 = vld [vmem:[%s10308] ss:$2 sm:$0xf]
      %s10310 = scalar_lea.vmem [#allocation6], 9
      %v10311 = vld [vmem:[%s10310] ss:$2 sm:$0xf]
      %s10312 = scalar_lea.vmem [#allocation6], 17
      %v10313 = vld [vmem:[%s10312] ss:$2 sm:$0xf]
      %s10314 = scalar_lea.vmem [#allocation6], 25
      %v10315 = vld [vmem:[%s10314] ss:$2 sm:$0xf]
      %s10316 = scalar_lea.vmem [#allocation6], 33
      %v10317 = vld [vmem:[%s10316] ss:$2 sm:$0xf]
      %s10318 = scalar_lea.vmem [#allocation6], 41
      %v10319 = vld [vmem:[%s10318] ss:$2 sm:$0xf]
      %s10320 = scalar_lea.vmem [#allocation6], 49
      %v10321 = vld [vmem:[%s10320] ss:$2 sm:$0xf]
      %s10322 = scalar_lea.vmem [#allocation6], 57
      %v10323 = vld [vmem:[%s10322] ss:$2 sm:$0xf]
      %v10324 = vadd.f32 %v10293, %v10309
      %v10325 = vadd.f32 %v10295, %v10311
      %v10326 = vadd.f32 %v10297, %v10313
      %v10327 = vadd.f32 %v10299, %v10315
      %v10328 = vadd.f32 %v10301, %v10317
      %v10329 = vadd.f32 %v10303, %v10319
      %v10330 = vadd.f32 %v10305, %v10321
      %v10331 = vadd.f32 %v10307, %v10323
      %v10332 = vmul.f32 %v10324, 0.25
      %v10333 = vmul.f32 %v10325, 0.25
      %v10334 = vmul.f32 %v10326, 0.25
      %v10335 = vmul.f32 %v10327, 0.25
      %v10336 = vmul.f32 %v10328, 0.25
      %v10337 = vmul.f32 %v10329, 0.25
      %v10338 = vmul.f32 %v10330, 0.25
      %v10339 = vmul.f32 %v10331, 0.25
      %vm10340 = vcmp.ge.f32.partialorder %v10332, 0.0
      %vm10341 = vcmp.ge.f32.partialorder %v10333, 0.0
      %vm10342 = vcmp.ge.f32.partialorder %v10334, 0.0
      %vm10343 = vcmp.ge.f32.partialorder %v10335, 0.0
      %vm10344 = vcmp.ge.f32.partialorder %v10336, 0.0
      %vm10345 = vcmp.ge.f32.partialorder %v10337, 0.0
      %vm10346 = vcmp.ge.f32.partialorder %v10338, 0.0
      %vm10347 = vcmp.ge.f32.partialorder %v10339, 0.0
      %v10348 = vmul.f32 %v10332, 0.2
      %v10349 = vmul.f32 %v10333, 0.2
      %v10350 = vmul.f32 %v10334, 0.2
      %v10351 = vmul.f32 %v10335, 0.2
      %v10352 = vmul.f32 %v10336, 0.2
      %v10353 = vmul.f32 %v10337, 0.2
      %v10354 = vmul.f32 %v10338, 0.2
      %v10355 = vmul.f32 %v10339, 0.2
      %v10356 = vsel %vm10340, %v10332, %v10348
      %v10357 = vsel %vm10341, %v10333, %v10349
      %v10358 = vsel %vm10342, %v10334, %v10350
      %v10359 = vsel %vm10343, %v10335, %v10351
      %v10360 = vsel %vm10344, %v10336, %v10352
      %v10361 = vsel %vm10345, %v10337, %v10353
      %v10362 = vsel %vm10346, %v10338, %v10354
      %v10363 = vsel %vm10347, %v10339, %v10355
      %v10365 = vrot.slane %v10356, 1
      %10366 = vrot.lane.b32.xlu0 %v10365, 16
      %v10367 = vpop.permute.xlu0 %10366
      %v10369 = vrot.slane %v10356, 2
      %10370 = vrot.lane.b32.xlu0 %v10369, 32
      %v10371 = vpop.permute.xlu0 %10370
      %v10373 = vrot.slane %v10356, 3
      %10374 = vrot.lane.b32.xlu0 %v10373, 48
      %v10375 = vpop.permute.xlu0 %10374
      %10378 = vrot.lane.b32.xlu0 %v10357, 64
      %v10379 = vpop.permute.xlu0 %10378
      %v10381 = vrot.slane %v10357, 1
      %10382 = vrot.lane.b32.xlu0 %v10381, 80
      %v10383 = vpop.permute.xlu0 %10382
      %v10385 = vrot.slane %v10357, 2
      %10386 = vrot.lane.b32.xlu0 %v10385, 96
      %v10387 = vpop.permute.xlu0 %10386
      %v10389 = vrot.slane %v10357, 3
      %10390 = vrot.lane.b32.xlu0 %v10389, 112
      %v10391 = vpop.permute.xlu0 %10390
      %v10394 = vrot.slane %v10358, 1
      %10395 = vrot.lane.b32.xlu0 %v10394, 16
      %v10396 = vpop.permute.xlu0 %10395
      %v10398 = vrot.slane %v10358, 2
      %10399 = vrot.lane.b32.xlu0 %v10398, 32
      %v10400 = vpop.permute.xlu0 %10399
      %v10402 = vrot.slane %v10358, 3
      %10403 = vrot.lane.b32.xlu0 %v10402, 48
      %v10404 = vpop.permute.xlu0 %10403
      %10407 = vrot.lane.b32.xlu0 %v10359, 64
      %v10408 = vpop.permute.xlu0 %10407
      %v10410 = vrot.slane %v10359, 1
      %10411 = vrot.lane.b32.xlu0 %v10410, 80
      %v10412 = vpop.permute.xlu0 %10411
      %v10414 = vrot.slane %v10359, 2
      %10415 = vrot.lane.b32.xlu0 %v10414, 96
      %v10416 = vpop.permute.xlu0 %10415
      %v10418 = vrot.slane %v10359, 3
      %10419 = vrot.lane.b32.xlu0 %v10418, 112
      %v10420 = vpop.permute.xlu0 %10419
      %v10422 = vsel %vm7775, %v10356, %v10367
      %v10423 = vsel %vm7904, %v10422, %v10371
      %v10424 = vsel %vm8034, %v10423, %v10375
      %v10425 = vsel %vm8164, %v10424, %v10379
      %v10426 = vsel %vm9962, %v10425, %v10383
      %v10427 = vsel %vm9979, %v10426, %v10387
      %v10428 = vsel %vm9996, %v10427, %v10391
      %v10429 = vsel %vm7775, %v10358, %v10396
      %v10430 = vsel %vm7904, %v10429, %v10400
      %v10431 = vsel %vm8034, %v10430, %v10404
      %v10432 = vsel %vm8164, %v10431, %v10408
      %v10433 = vsel %vm9962, %v10432, %v10412
      %v10434 = vsel %vm9979, %v10433, %v10416
      %v10435 = vsel %vm9996, %v10434, %v10420
      %v10437 = vrot.slane %v10360, 1
      %10438 = vrot.lane.b32.xlu0 %v10437, 16
      %v10439 = vpop.permute.xlu0 %10438
      %v10441 = vrot.slane %v10360, 2
      %10442 = vrot.lane.b32.xlu0 %v10441, 32
      %v10443 = vpop.permute.xlu0 %10442
      %v10445 = vrot.slane %v10360, 3
      %10446 = vrot.lane.b32.xlu0 %v10445, 48
      %v10447 = vpop.permute.xlu0 %10446
      %10450 = vrot.lane.b32.xlu0 %v10361, 64
      %v10451 = vpop.permute.xlu0 %10450
      %v10453 = vrot.slane %v10361, 1
      %10454 = vrot.lane.b32.xlu0 %v10453, 80
      %v10455 = vpop.permute.xlu0 %10454
      %v10457 = vrot.slane %v10361, 2
      %10458 = vrot.lane.b32.xlu0 %v10457, 96
      %v10459 = vpop.permute.xlu0 %10458
      %v10461 = vrot.slane %v10361, 3
      %10462 = vrot.lane.b32.xlu0 %v10461, 112
      %v10463 = vpop.permute.xlu0 %10462
      %v10466 = vrot.slane %v10362, 1
      %10467 = vrot.lane.b32.xlu0 %v10466, 16
      %v10468 = vpop.permute.xlu0 %10467
      %v10470 = vrot.slane %v10362, 2
      %10471 = vrot.lane.b32.xlu0 %v10470, 32
      %v10472 = vpop.permute.xlu0 %10471
      %v10474 = vrot.slane %v10362, 3
      %10475 = vrot.lane.b32.xlu0 %v10474, 48
      %v10476 = vpop.permute.xlu0 %10475
      %10479 = vrot.lane.b32.xlu0 %v10363, 64
      %v10480 = vpop.permute.xlu0 %10479
      %v10482 = vrot.slane %v10363, 1
      %10483 = vrot.lane.b32.xlu0 %v10482, 80
      %v10484 = vpop.permute.xlu0 %10483
      %v10486 = vrot.slane %v10363, 2
      %10487 = vrot.lane.b32.xlu0 %v10486, 96
      %v10488 = vpop.permute.xlu0 %10487
      %v10490 = vrot.slane %v10363, 3
      %10491 = vrot.lane.b32.xlu0 %v10490, 112
      %v10492 = vpop.permute.xlu0 %10491
      %v10494 = vsel %vm7775, %v10360, %v10439
      %v10495 = vsel %vm7904, %v10494, %v10443
      %v10496 = vsel %vm8034, %v10495, %v10447
      %v10497 = vsel %vm8164, %v10496, %v10451
      %v10498 = vsel %vm9962, %v10497, %v10455
      %v10499 = vsel %vm9979, %v10498, %v10459
      %v10500 = vsel %vm9996, %v10499, %v10463
      %v10501 = vsel %vm7775, %v10362, %v10468
      %v10502 = vsel %vm7904, %v10501, %v10472
      %v10503 = vsel %vm8034, %v10502, %v10476
      %v10504 = vsel %vm8164, %v10503, %v10480
      %v10505 = vsel %vm9962, %v10504, %v10484
      %v10506 = vsel %vm9979, %v10505, %v10488
      %v10507 = vsel %vm9996, %v10506, %v10492
      %v10510 = vrot.slane %v10500, 7
      %v10511 = vrot.slane %v10507, 7
      %vm10514 = vcmask 1040384
      %v10515 = vsel %vm10514, %v10428, %v10510
      %v10516 = vsel %vm10514, %v10435, %v10511
      %v10517 = vpack.c.bf16 %v10515, %v10515
      %v10518 = vpack.c.bf16 %v10516, %v10516
      %v10519 = vld [vmem:[%s11] sm:$0xf]
      %v10520 = vld [vmem:[%s11 + $0x4] sm:$0xf]
      %v10521 = vld [vmem:[%s11 + $0x8] sm:$0xf]
      %v10522 = vld [vmem:[%s11 + $0xc] sm:$0xf]
      %v10523 = vld [vmem:[%s11 + $0x10] sm:$0xf]
      %v10524 = vld [vmem:[%s11 + $0x14] sm:$0xf]
      %v10525 = vld [vmem:[%s11 + $0x18] sm:$0xf]
      %v10526 = vld [vmem:[%s11 + $0x1c] sm:$0xf]
      %v10527 = vld [vmem:[%s11 + $0x20] sm:$0xf]
      %v10528 = vld [vmem:[%s11 + $0x24] sm:$0xf]
      %v10529 = vld [vmem:[%s11 + $0x28] sm:$0xf]
      %v10530 = vld [vmem:[%s11 + $0x2c] sm:$0xf]
      %v10531 = vld [vmem:[%s11 + $0x30] sm:$0xf]
      %v10532 = vld [vmem:[%s11 + $0x34] sm:$0xf]
      %v10533 = vld [vmem:[%s11 + $0x38] sm:$0xf]
      %v10534 = vld [vmem:[%s11 + $0x3c] sm:$0xf]
      %v10535 = vld [vmem:[%s11 + $0x40] sm:$0xf]
      %v10536 = vld [vmem:[%s11 + $0x44] sm:$0xf]
      %v10537 = vld [vmem:[%s11 + $0x48] sm:$0xf]
      %v10538 = vld [vmem:[%s11 + $0x4c] sm:$0xf]
      %v10539 = vld [vmem:[%s11 + $0x50] sm:$0xf]
      %v10540 = vld [vmem:[%s11 + $0x54] sm:$0xf]
      %v10541 = vld [vmem:[%s11 + $0x58] sm:$0xf]
      %v10542 = vld [vmem:[%s11 + $0x5c] sm:$0xf]
      %v10543 = vld [vmem:[%s11 + $0x60] sm:$0xf]
      %v10544 = vld [vmem:[%s11 + $0x64] sm:$0xf]
      %v10545 = vld [vmem:[%s11 + $0x68] sm:$0xf]
      %v10546 = vld [vmem:[%s11 + $0x6c] sm:$0xf]
      %v10547 = vld [vmem:[%s11 + $0x70] sm:$0xf]
      %v10548 = vld [vmem:[%s11 + $0x74] sm:$0xf]
      %v10549 = vld [vmem:[%s11 + $0x78] sm:$0xf]
      %v10550 = vld [vmem:[%s11 + $0x7c] sm:$0xf]
      %v10551 = vld [vmem:[%s12] sm:$0x1]
      %v10553 = vlaneseq
      %v10554 = vshrl.u32 %v10553, 7
      %v10555 = vsub.s32 0, %v10554
      %v10556 = vrot.slane %v10551, %v10555
      %v10590 = vunpack.c.l.b16 %v10519
      %v10591 = vunpack.c.l.b16 %v10520
      %v10592 = vunpack.c.l.b16 %v10521
      %v10593 = vunpack.c.l.b16 %v10522
      %v10594 = vunpack.c.l.b16 %v10523
      %v10595 = vunpack.c.l.b16 %v10524
      %v10596 = vunpack.c.l.b16 %v10525
      %v10597 = vunpack.c.l.b16 %v10526
      %v10598 = vunpack.c.l.b16 %v10527
      %v10599 = vunpack.c.l.b16 %v10528
      %v10600 = vunpack.c.l.b16 %v10529
      %v10601 = vunpack.c.l.b16 %v10530
      %v10602 = vunpack.c.l.b16 %v10531
      %v10603 = vunpack.c.l.b16 %v10532
      %v10604 = vunpack.c.l.b16 %v10533
      %v10605 = vunpack.c.l.b16 %v10534
      %v10606 = vunpack.c.l.b16 %v10535
      %v10607 = vunpack.c.l.b16 %v10536
      %v10608 = vunpack.c.l.b16 %v10537
      %v10609 = vunpack.c.l.b16 %v10538
      %v10610 = vunpack.c.l.b16 %v10539
      %v10611 = vunpack.c.l.b16 %v10540
      %v10612 = vunpack.c.l.b16 %v10541
      %v10613 = vunpack.c.l.b16 %v10542
      %v10614 = vunpack.c.l.b16 %v10543
      %v10615 = vunpack.c.l.b16 %v10544
      %v10616 = vunpack.c.l.b16 %v10545
      %v10617 = vunpack.c.l.b16 %v10546
      %v10618 = vunpack.c.l.b16 %v10547
      %v10619 = vunpack.c.l.b16 %v10548
      %v10620 = vunpack.c.l.b16 %v10549
      %v10621 = vunpack.c.l.b16 %v10550
      %v10622 = vpack.c.b16 %v10591, %v10590
      %v10623 = vpack.c.b16 %v10593, %v10592
      %v10624 = vpack.c.b16 %v10595, %v10594
      %v10625 = vpack.c.b16 %v10597, %v10596
      %v10626 = vpack.c.b16 %v10599, %v10598
      %v10627 = vpack.c.b16 %v10601, %v10600
      %v10628 = vpack.c.b16 %v10603, %v10602
      %v10629 = vpack.c.b16 %v10605, %v10604
      %v10630 = vpack.c.b16 %v10607, %v10606
      %v10631 = vpack.c.b16 %v10609, %v10608
      %v10632 = vpack.c.b16 %v10611, %v10610
      %v10633 = vpack.c.b16 %v10613, %v10612
      %v10634 = vpack.c.b16 %v10615, %v10614
      %v10635 = vpack.c.b16 %v10617, %v10616
      %v10636 = vpack.c.b16 %v10619, %v10618
      %v10637 = vpack.c.b16 %v10621, %v10620
      %10654 = vmatprep.subr.bf16.mxu0 0
      %10655 = vmatpush1.bf16.msra.mxu0 %v10622
      %10656 = vmatprep.subr.bf16.mxu0 0
      %10657 = vmatpush1.bf16.msra.mxu0 %v10623
      %10658 = vmatprep.subr.bf16.mxu0 0
      %10659 = vmatpush1.bf16.msra.mxu0 %v10624
      %10660 = vmatprep.subr.bf16.mxu0 0
      %10661 = vmatpush1.bf16.msra.mxu0 %v10625
      %10662 = vmatprep.subr.bf16.mxu0 0
      %10663 = vmatpush1.bf16.msra.mxu0 %v10626
      %10664 = vmatprep.subr.bf16.mxu0 0
      %10665 = vmatpush1.bf16.msra.mxu0 %v10627
      %10666 = vmatprep.subr.bf16.mxu0 0
      %10667 = vmatpush1.bf16.msra.mxu0 %v10628
      %10668 = vmatprep.subr.bf16.mxu0 0
      %10669 = vmatpush1.bf16.msra.mxu0 %v10629
      %10670 = vmatprep.subr.bf16.mxu0 0
      %10671 = vmatpush1.bf16.msra.mxu0 %v10630
      %10672 = vmatprep.subr.bf16.mxu0 0
      %10673 = vmatpush1.bf16.msra.mxu0 %v10631
      %10674 = vmatprep.subr.bf16.mxu0 0
      %10675 = vmatpush1.bf16.msra.mxu0 %v10632
      %10676 = vmatprep.subr.bf16.mxu0 0
      %10677 = vmatpush1.bf16.msra.mxu0 %v10633
      %10678 = vmatprep.subr.bf16.mxu0 0
      %10679 = vmatpush1.bf16.msra.mxu0 %v10634
      %10680 = vmatprep.subr.bf16.mxu0 0
      %10681 = vmatpush1.bf16.msra.mxu0 %v10635
      %10682 = vmatprep.subr.bf16.mxu0 0
      %10683 = vmatpush1.bf16.msra.mxu0 %v10636
      %10684 = vmatprep.subr.bf16.mxu0 0
      %10685 = vmatpush1.bf16.msra.mxu0 %v10637
      %10686 = vmatprep.mubr.bf16.mxu0 %v10518
      %10687 = vmatmul.mubr.bf16.gmra.mrb[0].mxu0 %v10517
      %v10688 = vpop.f32.mrb[0].mxu0
      %v10689 = vadd.f32 %v10556, %v10688
      %v10690 = vpop.f32.mrb[0].mxu0
      %v10691 = vpop.f32.mrb[0].mxu0
      %v10692 = vpop.f32.mrb[0].mxu0
      %10693 = vdwg.mxu0
      %vm10694 = vcmp.ge.f32.partialorder %v10689, 0.0
      %v10695 = vmul.f32 %v10689, 0.2
      %v10696 = vsel %vm10694, %v10689, %v10695
      %v10697 = vpack.c.bf16 %v10696, %v10696
      %v10698 = vld [vmem:[%s13] sm:$0xf]
      %v10699 = vld [vmem:[%s13 + $0x4] sm:$0xf]
      %v10700 = vld [vmem:[#allocation7] sm:$0x1]
      %v10702 = vlaneseq
      %v10703 = vshrl.u32 %v10702, 7
      %v10704 = vsub.s32 0, %v10703
      %v10705 = vrot.slane %v10700, %v10704
      %v10709 = vunpack.c.l.b16 %v10698
      %v10710 = vunpack.c.l.b16 %v10699
      %v10711 = vpack.c.b16 %v10710, %v10709
      %v10714 = vsel %vm7775, %v10697, 0
      %10716 = vmatprep.subr.bf16.mxu0 0
      %10717 = vmatpush1.bf16.msra.mxu0 %v10711
      %10718 = vmatprep.subr.bf16.mxu0 0
      %10719 = vmatpush1.bf16.msra.mxu0 0
      %10720 = vmatprep.subr.bf16.mxu0 0
      %10721 = vmatpush1.bf16.msra.mxu0 0
      %10722 = vmatprep.subr.bf16.mxu0 0
      %10723 = vmatpush1.bf16.msra.mxu0 0
      %10724 = vmatprep.subr.bf16.mxu0 0
      %10725 = vmatpush1.bf16.msra.mxu0 0
      %10726 = vmatprep.subr.bf16.mxu0 0
      %10727 = vmatpush1.bf16.msra.mxu0 0
      %10728 = vmatprep.subr.bf16.mxu0 0
      %10729 = vmatpush1.bf16.msra.mxu0 0
      %10730 = vmatprep.subr.bf16.mxu0 0
      %10731 = vmatpush1.bf16.msra.mxu0 0
      %10732 = vmatprep.subr.bf16.mxu0 0
      %10733 = vmatpush1.bf16.msra.mxu0 0
      %10734 = vmatprep.subr.bf16.mxu0 0
      %10735 = vmatpush1.bf16.msra.mxu0 0
      %10736 = vmatprep.subr.bf16.mxu0 0
      %10737 = vmatpush1.bf16.msra.mxu0 0
      %10738 = vmatprep.subr.bf16.mxu0 0
      %10739 = vmatpush1.bf16.msra.mxu0 0
      %10740 = vmatprep.subr.bf16.mxu0 0
      %10741 = vmatpush1.bf16.msra.mxu0 0
      %10742 = vmatprep.subr.bf16.mxu0 0
      %10743 = vmatpush1.bf16.msra.mxu0 0
      %10744 = vmatprep.subr.bf16.mxu0 0
      %10745 = vmatpush1.bf16.msra.mxu0 0
      %10746 = vmatprep.subr.bf16.mxu0 0
      %10747 = vmatpush1.bf16.msra.mxu0 0
      %10748 = vmatprep.mubr.bf16.mxu0 0
      %10749 = vmatmul.mubr.bf16.gmra.mrb[0].mxu0 %v10714
      %v10750 = vpop.f32.mrb[0].mxu0
      %v10751 = vadd.f32 %v10705, %v10750
      %v10752 = vpop.f32.mrb[0].mxu0
      %v10753 = vpop.f32.mrb[0].mxu0
      %v10754 = vpop.f32.mrb[0].mxu0
      %10755 = vdwg.mxu0
      %vm10756 = vcmask 1024
      %10757 = vst.msk [vmem:[%s499] sm:$0x3] %vm10756, %v10751
      %p10758 = scmp.lt.s32.totalorder %s28, 1
      %s10759 = scalar_select %p10758, %s28, 1
      %s10760 = smul.addr %s10759, 2
      %s10761 = scalar_lea.vmem %s15, %s10760
      // Predicated region
      $region81: #{tpu_custom_call.1} parent=79 // pred_check
        %p10762 = pneg %p366
      $region82: #{tpu_custom_call.1} parent=79 // pred_check_branch
        %10764 = sbr.rel (%p10762) target = $region84
      $region83: #{tpu_custom_call.1} parent=79 // pred_region
        _
      $region84: #{tpu_custom_call.1} parent=79 // pred_fallthru
        _
    $region80: #{tpu_custom_call.1} parent=5 // pred_fallthru
      _
    %p10765 = scmp.le.s32.totalorder 2, %s23
    // Predicated region
    $region85: #{tpu_custom_call.1} parent=5 // pred_check
      %p10766 = pneg %p10765
    $region86: #{tpu_custom_call.1} parent=5 // pred_check_branch
      %10768 = sbr.rel (%p10766) target = $region88
    $region87: #{tpu_custom_call.1} parent=5 // pred_region
      %s10769 = ssub.s32 %s23, 2
      // Predicated region
      $region89: #{tpu_custom_call.1} parent=87 // pred_check
        %p10770 = pneg %p372
      $region90: #{tpu_custom_call.1} parent=87 // pred_check_branch
        %10772 = sbr.rel (%p10770) target = $region92
      $region91: #{tpu_custom_call.1} parent=87 // pred_region
        %p10773 = scmp.lt.s32.totalorder %s29, 1
        %s10774 = scalar_select %p10773, %s29, 1
        %s10775 = smul.addr %s10774, 2
        %s10776 = scalar_lea.vmem %s15, %s10775
      $region92: #{tpu_custom_call.1} parent=87 // pred_fallthru
        _
    $region88: #{tpu_custom_call.1} parent=5 // pred_fallthru
      _
  $region6: #{tpu_custom_call.1} parent=0 // loop_footer
    %s27 = sadd.s32 1, %s23
  $region7: #{tpu_custom_call.1} parent=0 // loop_footer_branch
    %22 = sbr.rel target = $region3
  $region8: #{tpu_custom_call.1} parent=0 // loop_exit
    _

</llo_original>
